<compile_context>
chip_gen: v7x
topology: tpu7x:2x2x1
jax: 0.10.0
libtpu: 0.0.40
codegen_flags: <defaults>
</compile_context>

<pallas_src>
import jax
import jax.numpy as jnp
from jax.experimental import pallas as pl
from jax.experimental.pallas import tpu as pltpu

LANE = 128   # TPU lane width; channel (minor) dims are padded to this.
WL = 16      # left W-halo of the staged conv1 buffer (bf16 sublane-tile aligned)


def _round_up(x, m):
    return (x + m - 1) // m * m


def _pick_row_tile(ho, wo, target_rows=512):
    """Largest divisor of ho that keeps the matmul M dimension <= target_rows."""
    best = 1
    for t in range(1, ho + 1):
        if ho % t == 0 and t * wo <= target_rows:
            best = t
    return best


# ----------------------------------------------------------------------------
# Fused BasicBlock kernel (one grid step == one batch sample).
# ----------------------------------------------------------------------------
def _make_block_kernel(*, stride, downsample, Ho, Wo, Cin_p, Cout_p, TR):
    s = stride
    n_tiles = Ho // TR
    WT = WL + Wo + 1  # staged-buffer W extent (left halo WL, right halo 1)

    def kernel(*refs):
        if downsample:
            (x_ref, w1_ref, b1_ref, w2_ref, b2_ref,
             wp_ref, bp_ref, o_ref, h_ref) = refs
        else:
            x_ref, w1_ref, b1_ref, w2_ref, b2_ref, o_ref, h_ref = refs

        # ---- zero only the thin halo strips conv2 actually reads ----------
        # (interior is fully overwritten below; columns < WL-1 are never read)
        h_ref[0:1, :, :] = jnp.zeros((1, WT, Cout_p), h_ref.dtype)
        h_ref[Ho + 1:Ho + 2, :, :] = jnp.zeros((1, WT, Cout_p), h_ref.dtype)
        h_ref[:, WL - 1:WL, :] = jnp.zeros((Ho + 2, 1, Cout_p), h_ref.dtype)
        h_ref[:, WL + Wo:WL + Wo + 1, :] = jnp.zeros((Ho + 2, 1, Cout_p), h_ref.dtype)

        def conv3x3_rows(read_patch, wf_ref):
            """Implicit GEMM over one row tile, kh taps fused into K = 3*C."""
            acc = None
            for kw in range(3):
                cat = jnp.concatenate(
                    [read_patch(kh, kw) for kh in range(3)], axis=-1)
                p = cat.reshape(TR * Wo, cat.shape[-1])          # bf16 operand
                d = jnp.dot(p, wf_ref[kw],
                            preferred_element_type=jnp.float32)
                acc = d if acc is None else acc + d
            return acc                                            # f32 (TR*Wo, Cout_p)

        # ---- conv1: 3x3 / stride s / pad 1, BN1 folded, ReLU ---------------
        # Staged (bf16) with a zero halo in VMEM; never touches HBM.
        for t in range(n_tiles):
            r0 = t * TR

            def x_patch(kh, kw, r0=r0):
                ph = (kh % s) * s + (kw % s)
                hs = kh // s + r0
                ws = kw // s
                return x_ref[ph, hs:hs + TR, ws:ws + Wo, :]

            a1 = conv3x3_rows(x_patch, w1_ref) + b1_ref[...]
            out1 = jnp.maximum(a1, 0.0).astype(h_ref.dtype)
            h_ref[1 + r0:1 + r0 + TR, WL:WL + Wo, :] = out1.reshape(TR, Wo, Cout_p)

        # ---- conv2: 3x3 / stride 1 / pad 1, BN2 folded; +residual; ReLU ----
        for t in range(n_tiles):
            r0 = t * TR

            def h_patch(kh, kw, r0=r0):
                return h_ref[r0 + kh:r0 + kh + TR,
                             WL - 1 + kw:WL - 1 + kw + Wo, :]

            out2 = conv3x3_rows(h_patch, w2_ref) + b2_ref[...]

            if downsample:
                # 1x1 / stride s projection on the original x:
                # x[s*i, s*j] lives at padded position (1 + s*i, 1 + s*j).
                ph = (1 % s) * s + (1 % s)
                rp = x_ref[ph, 1 // s + r0:1 // s + r0 + TR,
                           1 // s:1 // s + Wo, :]
                res = (jnp.dot(rp.reshape(TR * Wo, Cin_p), wp_ref[...],
                               preferred_element_type=jnp.float32)
                       + bp_ref[...])
            else:
                # identity shortcut (stride == 1 and Cin == Cout, checked in wrapper)
                rp = x_ref[0, 1 + r0:1 + r0 + TR, 1:1 + Wo, :]
                res = rp.reshape(TR * Wo, Cin_p).astype(jnp.float32)

            out = jnp.maximum(out2 + res, 0.0)
            o_ref[r0:r0 + TR, :, :] = out.reshape(TR, Wo, Cout_p).astype(o_ref.dtype)

    return kernel


# ----------------------------------------------------------------------------
# Wrapper-side prep (plain JAX): spatial pad, stride phase split, BN folding.
# ----------------------------------------------------------------------------
def _phase_decompose(x_pad, s):
    """[N,Hp,Wp,C] -> [N, s*s, ceil(Hp/s), ceil(Wp/s), C] with
    out[n, a*s+b, i, j] = x_pad[n, a + s*i, b + s*j] (zero padded at the end)."""
    if s == 1:
        return x_pad[:, None]          # single phase -> skip the HBM shuffle
    N, Hp, Wp, C = x_pad.shape
    Hq = -(-Hp // s)
    Wq = -(-Wp // s)
    x_pad = jnp.pad(x_pad, ((0, 0), (0, Hq * s - Hp), (0, Wq * s - Wp), (0, 0)))
    x_ph = x_pad.reshape(N, Hq, s, Wq, s, C).transpose(0, 2, 4, 1, 3, 5)
    return x_ph.reshape(N, s * s, Hq, Wq, C)


def _fold_conv_bn(w_oihw, conv_b, gamma, beta, mean, var, cin_p, cout_p, eps=1e-5):
    """Fold eval-mode BN into the conv: bf16 [KH,KW,Cin_p,Cout_p] weights
    (scale folded into output columns) and f32 [1,Cout_p] bias."""
    scale = gamma / jnp.sqrt(var + eps)                      # [Cout]
    bias = beta + (conv_b - mean) * scale                    # [Cout]
    w = jnp.transpose(w_oihw, (2, 3, 1, 0)) * scale          # [KH,KW,Cin,Cout]
    kh, kw, cin, cout = w.shape
    w = jnp.pad(w, ((0, 0), (0, 0), (0, cin_p - cin), (0, cout_p - cout)))
    bias = jnp.pad(bias, (0, cout_p - cout)).reshape(1, cout_p)
    return w.astype(jnp.bfloat16), bias.astype(jnp.float32)


def _fuse_kh_taps(w):
    """[3,3,C,Co] -> [3 (kw), 3*C, Co]; rows ordered kh-major to match the
    in-kernel channel concatenation of the kh-shifted patches."""
    return jnp.transpose(w, (1, 0, 2, 3)).reshape(3, 3 * w.shape[2], w.shape[3])


def basic_block_forward_nhwc(x_nhwc, p, stride, downsample):
    """Fused BasicBlock forward. Returns channel-padded bf16 NHWC
    [N, Ho, Wo, Cout_p] (the cheap inter-block format)."""
    N, H, W, Cin = x_nhwc.shape
    Cout = p["conv1_w"].shape[0]
    if not downsample and (stride != 1 or Cin != Cout):
        raise ValueError("identity shortcut requires stride == 1 and Cin == Cout; "
                         "use downsample=True otherwise")
    s = int(stride)
    Ho = (H - 1) // s + 1
    Wo = (W - 1) // s + 1
    Cin_p = _round_up(Cin, LANE)
    Cout_p = _round_up(Cout, LANE)
    TR = _pick_row_tile(Ho, Wo)

    # Spatial pad=1 + lane-dense channel pad, activations kept bf16 in HBM.
    x_pad = jnp.pad(x_nhwc.astype(jnp.bfloat16),
                    ((0, 0), (1, 1), (1, 1), (0, Cin_p - Cin)))
    x_ph = _phase_decompose(x_pad, s)
    _, _, Hq, Wq, _ = x_ph.shape

    w1, b1 = _fold_conv_bn(p["conv1_w"], p["conv1_b"], p["bn1_gamma"], p["bn1_beta"],
                           p["bn1_mean"], p["bn1_var"], Cin_p, Cout_p)
    w2, b2 = _fold_conv_bn(p["conv2_w"], p["conv2_b"], p["bn2_gamma"], p["bn2_beta"],
                           p["bn2_mean"], p["bn2_var"], Cout_p, Cout_p)
    w1f = _fuse_kh_taps(w1)   # [3, 3*Cin_p,  Cout_p]
    w2f = _fuse_kh_taps(w2)   # [3, 3*Cout_p, Cout_p]

    in_specs = [
        pl.BlockSpec((None, s * s, Hq, Wq, Cin_p), lambda n: (n, 0, 0, 0, 0)),
        pl.BlockSpec((3, 3 * Cin_p, Cout_p), lambda n: (0, 0, 0)),
        pl.BlockSpec((1, Cout_p), lambda n: (0, 0)),
        pl.BlockSpec((3, 3 * Cout_p, Cout_p), lambda n: (0, 0, 0)),
        pl.BlockSpec((1, Cout_p), lambda n: (0, 0)),
    ]
    args = [x_ph, w1f, b1, w2f, b2]
    if downsample:
        wp, bp = _fold_conv_bn(p["proj_w"], p["proj_b"], p["bnp_gamma"], p["bnp_beta"],
                               p["bnp_mean"], p["bnp_var"], Cin_p, Cout_p)
        wp = wp.reshape(Cin_p, Cout_p)  # 1x1 kernel
        in_specs += [
            pl.BlockSpec((Cin_p, Cout_p), lambda n: (0, 0)),
            pl.BlockSpec((1, Cout_p), lambda n: (0, 0)),
        ]
        args += [wp, bp]

    kernel = _make_block_kernel(stride=s, downsample=downsample, Ho=Ho, Wo=Wo,
                                Cin_p=Cin_p, Cout_p=Cout_p, TR=TR)

    out = pl.pallas_call(
        kernel,
        out_shape=jax.ShapeDtypeStruct((N, Ho, Wo, Cout_p), jnp.bfloat16),
        grid=(N,),
        in_specs=in_specs,
        out_specs=pl.BlockSpec((None, Ho, Wo, Cout_p), lambda n: (n, 0, 0, 0)),
        scratch_shapes=[pltpu.VMEM((Ho + 2, WL + Wo + 1, Cout_p), jnp.bfloat16)],
        compiler_params=pltpu.CompilerParams(
            dimension_semantics=("parallel",),
            vmem_limit_bytes=40 * 1024 * 1024),
    )(*args)

    return out


def basic_block_forward(x_nchw, p, stride, downsample):
    # NCHW / f32 at the PyTorch boundary.
    # TODO(synk): keep activations as padded-channel bf16 NHWC across blocks;
    # this adapter's transpose/slice/cast passes are only needed at the edges.
    x = jnp.transpose(x_nchw, (0, 2, 3, 1))
    out = basic_block_forward_nhwc(x, p, stride, downsample)
    Cout = p["conv1_w"].shape[0]
    out = out[..., :Cout].astype(jnp.float32)
    return jnp.transpose(out, (0, 3, 1, 2))


# ----------------------------------------------------------------------------
# Pure-JAX reference (eval-mode BN) for correctness check
# ----------------------------------------------------------------------------
def ref_basic_block(x, p, stride, downsample, eps=1e-5):
    def conv(x, w, b, s, pad):
        y = jax.lax.conv_general_dilated(
            x, w, window_strides=(s, s), padding=[(pad, pad), (pad, pad)],
            dimension_numbers=("NCHW", "OIHW", "NCHW"))
        return y + b[None, :, None, None]

    def bn(x, g, beta, m, v):
        sc = (g / jnp.sqrt(v + eps))[None, :, None, None]
        return (x - m[None, :, None, None]) * sc + beta[None, :, None, None]

    out = jax.nn.relu(bn(conv(x, p["conv1_w"], p["conv1_b"], stride, 1),
                         p["bn1_gamma"], p["bn1_beta"], p["bn1_mean"], p["bn1_var"]))
    out = bn(conv(out, p["conv2_w"], p["conv2_b"], 1, 1),
             p["bn2_gamma"], p["bn2_beta"], p["bn2_mean"], p["bn2_var"])
    if downsample:
        res = bn(conv(x, p["proj_w"], p["proj_b"], stride, 0),
                 p["bnp_gamma"], p["bnp_beta"], p["bnp_mean"], p["bnp_var"])
    else:
        res = x
    return jax.nn.relu(out + res)


# ----------------------------------------------------------------------------
# Deterministic parameter init (shapes from BasicBlock.__init__)
# ----------------------------------------------------------------------------
def init_params(key, cin, cout, downsample):
    ks = jax.random.split(key, 18)

    def bn_p(k0, k1, k2, k3, c):
        return (jax.random.uniform(k0, (c,), jnp.float32, 0.5, 1.5),   # gamma
                jax.random.normal(k1, (c,), jnp.float32) * 0.1,        # beta
                jax.random.normal(k2, (c,), jnp.float32) * 0.1,        # running_mean
                jax.random.uniform(k3, (c,), jnp.float32, 0.5, 1.5))   # running_var

    p = {}
    p["conv1_w"] = jax.random.normal(ks[0], (cout, cin, 3, 3), jnp.float32) * 0.2
    p["conv1_b"] = jax.random.normal(ks[1], (cout,), jnp.float32) * 0.1
    p["bn1_gamma"], p["bn1_beta"], p["bn1_mean"], p["bn1_var"] = bn_p(ks[2], ks[3], ks[4], ks[5], cout)
    p["conv2_w"] = jax.random.normal(ks[6], (cout, cout, 3, 3), jnp.float32) * 0.2
    p["conv2_b"] = jax.random.normal(ks[7], (cout,), jnp.float32) * 0.1
    p["bn2_gamma"], p["bn2_beta"], p["bn2_mean"], p["bn2_var"] = bn_p(ks[8], ks[9], ks[10], ks[11], cout)
    if downsample:
        p["proj_w"] = jax.random.normal(ks[12], (cout, cin, 1, 1), jnp.float32) * 0.2
        p["proj_b"] = jax.random.normal(ks[13], (cout,), jnp.float32) * 0.1
        p["bnp_gamma"], p["bnp_beta"], p["bnp_mean"], p["bnp_var"] = bn_p(ks[14], ks[15], ks[16], ks[17], cout)
    return p


if __name__ == "__main__":
    key = jax.random.PRNGKey(0)
    kx, kp1, kp2 = jax.random.split(key, 3)
    x = jax.random.normal(kx, (2, 4, 16, 16), jnp.float32)  # NCHW

    # Case 1: identity shortcut (in==out, stride=1, downsample=False)
    params1 = init_params(kp1, 4, 4, downsample=False)
    y1 = basic_block_forward(x, params1, stride=1, downsample=False)

    # Case 2: projection shortcut (4 -> 8 channels, stride=2, downsample=True)
    params2 = init_params(kp2, 4, 8, downsample=True)
    y2 = basic_block_forward(x, params2, stride=2, downsample=True)

    jax.block_until_ready((y1, y2))

    # bf16-consistent reference: the kernel quantizes x to bf16, so the
    # reference gets the same quantized input (keeps the tolerance honest).
    x_q = x.astype(jnp.bfloat16).astype(jnp.float32)
    r1 = ref_basic_block(x_q, params1, 1, False)
    r2 = ref_basic_block(x_q, params2, 2, True)

    assert y1.shape == (2, 4, 16, 16), y1.shape
    assert y2.shape == (2, 8, 8, 8), y2.shape
    # bf16 MXU operands + bf16 staged intermediate (f32 accumulation).
    assert jnp.allclose(y1, r1, atol=1.5e-1, rtol=5e-2), "mismatch vs reference (identity block)"
    assert jnp.allclose(y2, r2, atol=1.5e-1, rtol=5e-2), "mismatch vs reference (downsample block)"
    print("KERNEL_OK")
</pallas_src>

<mosaic_0001>
module attributes {stable_mosaic.version = 11 : i64} {
  func.func @kernel(%arg0: i32, %arg1: memref<1x1x18x18x128xbf16, #tpu.memory_space<vmem>>, %arg2: memref<3x384x128xbf16, #tpu.memory_space<vmem>>, %arg3: memref<1x128xf32, #tpu.memory_space<vmem>>, %arg4: memref<3x384x128xbf16, #tpu.memory_space<vmem>>, %arg5: memref<1x128xf32, #tpu.memory_space<vmem>>, %arg6: memref<1x16x16x128xbf16, #tpu.memory_space<vmem>>, %arg7: memref<18x33x128xbf16, #tpu.memory_space<vmem>>) attributes {dimension_semantics = [#tpu.dimension_semantics<parallel>], iteration_bounds = array<i64: 2>, scalar_prefetch = 0 : i64, scratch_operands = 1 : i64, tpu.core_type = #tpu.core_type<tc>, window_params = [{transform_indices = @transform_0, window_bounds = array<i64: 1, 1, 18, 18, 128>}, {pipeline_mode = #tpu.pipeline_mode<synchronous>, transform_indices = @transform_1, window_bounds = array<i64: 3, 384, 128>}, {pipeline_mode = #tpu.pipeline_mode<synchronous>, transform_indices = @transform_2, window_bounds = array<i64: 1, 128>}, {pipeline_mode = #tpu.pipeline_mode<synchronous>, transform_indices = @transform_3, window_bounds = array<i64: 3, 384, 128>}, {pipeline_mode = #tpu.pipeline_mode<synchronous>, transform_indices = @transform_4, window_bounds = array<i64: 1, 128>}, {transform_indices = @transform_5, window_bounds = array<i64: 1, 16, 16, 128>}]} {
    %cst = arith.constant 0.000000e+00 : bf16
    %0 = vector.broadcast %cst : bf16 to vector<1x33x128xbf16>
    %c0 = arith.constant 0 : index
    %c0_0 = arith.constant 0 : index
    %c0_1 = arith.constant 0 : index
    %1 = vector.load %arg7[%c0, %c0_0, %c0_1] : memref<18x33x128xbf16, #tpu.memory_space<vmem>>, vector<1x33x128xbf16>
    tpu.vector_store %arg7[%c0, %c0_0, %c0_1], %0 {strides = array<i32>} : memref<18x33x128xbf16, #tpu.memory_space<vmem>>, vector<1x33x128xbf16>,
    %cst_2 = arith.constant 0.000000e+00 : bf16
    %2 = vector.broadcast %cst_2 : bf16 to vector<1x33x128xbf16>
    %c17 = arith.constant 17 : index
    %c0_3 = arith.constant 0 : index
    %c0_4 = arith.constant 0 : index
    %3 = vector.load %arg7[%c17, %c0_3, %c0_4] : memref<18x33x128xbf16, #tpu.memory_space<vmem>>, vector<1x33x128xbf16>
    tpu.vector_store %arg7[%c17, %c0_3, %c0_4], %2 {strides = array<i32>} : memref<18x33x128xbf16, #tpu.memory_space<vmem>>, vector<1x33x128xbf16>,
    %cst_5 = arith.constant 0.000000e+00 : bf16
    %4 = vector.broadcast %cst_5 : bf16 to vector<18x1x128xbf16>
    %c0_6 = arith.constant 0 : index
    %c15 = arith.constant 15 : index
    %c0_7 = arith.constant 0 : index
    %5 = vector.load %arg7[%c0_6, %c15, %c0_7] : memref<18x33x128xbf16, #tpu.memory_space<vmem>>, vector<18x1x128xbf16>
    tpu.vector_store %arg7[%c0_6, %c15, %c0_7], %4 {strides = array<i32>} : memref<18x33x128xbf16, #tpu.memory_space<vmem>>, vector<18x1x128xbf16>,
    %cst_8 = arith.constant 0.000000e+00 : bf16
    %6 = vector.broadcast %cst_8 : bf16 to vector<18x1x128xbf16>
    %c0_9 = arith.constant 0 : index
    %c32 = arith.constant 32 : index
    %c0_10 = arith.constant 0 : index
    %7 = vector.load %arg7[%c0_9, %c32, %c0_10] : memref<18x33x128xbf16, #tpu.memory_space<vmem>>, vector<18x1x128xbf16>
    tpu.vector_store %arg7[%c0_9, %c32, %c0_10], %6 {strides = array<i32>} : memref<18x33x128xbf16, #tpu.memory_space<vmem>>, vector<18x1x128xbf16>,
    %c0_11 = arith.constant 0 : index
    %c0_12 = arith.constant 0 : index
    %c0_13 = arith.constant 0 : index
    %c0_14 = arith.constant 0 : index
    %c0_15 = arith.constant 0 : index
    %8 = vector.load %arg1[%c0_11, %c0_12, %c0_13, %c0_14, %c0_15] : memref<1x1x18x18x128xbf16, #tpu.memory_space<vmem>>, vector<1x1x16x16x128xbf16>
    %9 = vector.shape_cast %8 : vector<1x1x16x16x128xbf16> to vector<16x16x128xbf16>
    %c0_16 = arith.constant 0 : index
    %c0_17 = arith.constant 0 : index
    %c1 = arith.constant 1 : index
    %c0_18 = arith.constant 0 : index
    %c0_19 = arith.constant 0 : index
    %10 = vector.load %arg1[%c0_16, %c0_17, %c1, %c0_18, %c0_19] : memref<1x1x18x18x128xbf16, #tpu.memory_space<vmem>>, vector<1x1x16x16x128xbf16>
    %11 = vector.shape_cast %10 : vector<1x1x16x16x128xbf16> to vector<16x16x128xbf16>
    %c0_20 = arith.constant 0 : index
    %c0_21 = arith.constant 0 : index
    %c2 = arith.constant 2 : index
    %c0_22 = arith.constant 0 : index
    %c0_23 = arith.constant 0 : index
    %12 = vector.load %arg1[%c0_20, %c0_21, %c2, %c0_22, %c0_23] : memref<1x1x18x18x128xbf16, #tpu.memory_space<vmem>>, vector<1x1x16x16x128xbf16>
    %13 = vector.shape_cast %12 : vector<1x1x16x16x128xbf16> to vector<16x16x128xbf16>
    %14 = tpu.concatenate %9, %11, %13 in 2 : vector<16x16x128xbf16>, vector<16x16x128xbf16>, vector<16x16x128xbf16> -> vector<16x16x384xbf16>
    %15 = vector.shape_cast %14 : vector<16x16x384xbf16> to vector<256x384xbf16>
    %c0_24 = arith.constant 0 : index
    %c0_25 = arith.constant 0 : index
    %c0_26 = arith.constant 0 : index
    %16 = vector.load %arg2[%c0_24, %c0_25, %c0_26] : memref<3x384x128xbf16, #tpu.memory_space<vmem>>, vector<1x384x128xbf16>
    %17 = vector.shape_cast %16 : vector<1x384x128xbf16> to vector<384x128xbf16>
    %cst_27 = arith.constant dense<0.000000e+00> : vector<256x128xf32>
    %18 = tpu.matmul %15, %17, %cst_27 {dimension_numbers = #tpu.dot_dimension_numbers<[1], [0], [0], [1], [0, 0, 1, 1], [], []>} : vector<256x384xbf16>, vector<384x128xbf16>, vector<256x128xf32> -> vector<256x128xf32>
    %c0_28 = arith.constant 0 : index
    %c0_29 = arith.constant 0 : index
    %c0_30 = arith.constant 0 : index
    %c1_31 = arith.constant 1 : index
    %c0_32 = arith.constant 0 : index
    %19 = vector.load %arg1[%c0_28, %c0_29, %c0_30, %c1_31, %c0_32] : memref<1x1x18x18x128xbf16, #tpu.memory_space<vmem>>, vector<1x1x16x16x128xbf16>
    %20 = vector.shape_cast %19 : vector<1x1x16x16x128xbf16> to vector<16x16x128xbf16>
    %c0_33 = arith.constant 0 : index
    %c0_34 = arith.constant 0 : index
    %c1_35 = arith.constant 1 : index
    %c1_36 = arith.constant 1 : index
    %c0_37 = arith.constant 0 : index
    %21 = vector.load %arg1[%c0_33, %c0_34, %c1_35, %c1_36, %c0_37] : memref<1x1x18x18x128xbf16, #tpu.memory_space<vmem>>, vector<1x1x16x16x128xbf16>
    %22 = vector.shape_cast %21 : vector<1x1x16x16x128xbf16> to vector<16x16x128xbf16>
    %c0_38 = arith.constant 0 : index
    %c0_39 = arith.constant 0 : index
    %c2_40 = arith.constant 2 : index
    %c1_41 = arith.constant 1 : index
    %c0_42 = arith.constant 0 : index
    %23 = vector.load %arg1[%c0_38, %c0_39, %c2_40, %c1_41, %c0_42] : memref<1x1x18x18x128xbf16, #tpu.memory_space<vmem>>, vector<1x1x16x16x128xbf16>
    %24 = vector.shape_cast %23 : vector<1x1x16x16x128xbf16> to vector<16x16x128xbf16>
    %25 = tpu.concatenate %20, %22, %24 in 2 : vector<16x16x128xbf16>, vector<16x16x128xbf16>, vector<16x16x128xbf16> -> vector<16x16x384xbf16>
    %26 = vector.shape_cast %25 : vector<16x16x384xbf16> to vector<256x384xbf16>
    %c1_43 = arith.constant 1 : index
    %c0_44 = arith.constant 0 : index
    %c0_45 = arith.constant 0 : index
    %27 = vector.load %arg2[%c1_43, %c0_44, %c0_45] : memref<3x384x128xbf16, #tpu.memory_space<vmem>>, vector<1x384x128xbf16>
    %28 = vector.shape_cast %27 : vector<1x384x128xbf16> to vector<384x128xbf16>
    %cst_46 = arith.constant dense<0.000000e+00> : vector<256x128xf32>
    %29 = tpu.matmul %26, %28, %cst_46 {dimension_numbers = #tpu.dot_dimension_numbers<[1], [0], [0], [1], [0, 0, 1, 1], [], []>} : vector<256x384xbf16>, vector<384x128xbf16>, vector<256x128xf32> -> vector<256x128xf32>
    %30 = arith.addf %18, %29 : vector<256x128xf32>
    %c0_47 = arith.constant 0 : index
    %c0_48 = arith.constant 0 : index
    %c0_49 = arith.constant 0 : index
    %c2_50 = arith.constant 2 : index
    %c0_51 = arith.constant 0 : index
    %31 = vector.load %arg1[%c0_47, %c0_48, %c0_49, %c2_50, %c0_51] : memref<1x1x18x18x128xbf16, #tpu.memory_space<vmem>>, vector<1x1x16x16x128xbf16>
    %32 = vector.shape_cast %31 : vector<1x1x16x16x128xbf16> to vector<16x16x128xbf16>
    %c0_52 = arith.constant 0 : index
    %c0_53 = arith.constant 0 : index
    %c1_54 = arith.constant 1 : index
    %c2_55 = arith.constant 2 : index
    %c0_56 = arith.constant 0 : index
    %33 = vector.load %arg1[%c0_52, %c0_53, %c1_54, %c2_55, %c0_56] : memref<1x1x18x18x128xbf16, #tpu.memory_space<vmem>>, vector<1x1x16x16x128xbf16>
    %34 = vector.shape_cast %33 : vector<1x1x16x16x128xbf16> to vector<16x16x128xbf16>
    %c0_57 = arith.constant 0 : index
    %c0_58 = arith.constant 0 : index
    %c2_59 = arith.constant 2 : index
    %c2_60 = arith.constant 2 : index
    %c0_61 = arith.constant 0 : index
    %35 = vector.load %arg1[%c0_57, %c0_58, %c2_59, %c2_60, %c0_61] : memref<1x1x18x18x128xbf16, #tpu.memory_space<vmem>>, vector<1x1x16x16x128xbf16>
    %36 = vector.shape_cast %35 : vector<1x1x16x16x128xbf16> to vector<16x16x128xbf16>
    %37 = tpu.concatenate %32, %34, %36 in 2 : vector<16x16x128xbf16>, vector<16x16x128xbf16>, vector<16x16x128xbf16> -> vector<16x16x384xbf16>
    %38 = vector.shape_cast %37 : vector<16x16x384xbf16> to vector<256x384xbf16>
    %c2_62 = arith.constant 2 : index
    %c0_63 = arith.constant 0 : index
    %c0_64 = arith.constant 0 : index
    %39 = vector.load %arg2[%c2_62, %c0_63, %c0_64] : memref<3x384x128xbf16, #tpu.memory_space<vmem>>, vector<1x384x128xbf16>
    %40 = vector.shape_cast %39 : vector<1x384x128xbf16> to vector<384x128xbf16>
    %cst_65 = arith.constant dense<0.000000e+00> : vector<256x128xf32>
    %41 = tpu.matmul %38, %40, %cst_65 {dimension_numbers = #tpu.dot_dimension_numbers<[1], [0], [0], [1], [0, 0, 1, 1], [], []>} : vector<256x384xbf16>, vector<384x128xbf16>, vector<256x128xf32> -> vector<256x128xf32>
    %42 = arith.addf %30, %41 : vector<256x128xf32>
    %c0_66 = arith.constant 0 : index
    %c0_67 = arith.constant 0 : index
    %43 = vector.load %arg3[%c0_66, %c0_67] : memref<1x128xf32, #tpu.memory_space<vmem>>, vector<1x128xf32>
    %44 = vector.broadcast %43 : vector<1x128xf32> to vector<256x128xf32>
    %45 = arith.addf %42, %44 : vector<256x128xf32>
    %cst_68 = arith.constant 0.000000e+00 : f32
    %46 = vector.broadcast %cst_68 : f32 to vector<256x128xf32>
    %47 = arith.maximumf %45, %46 : vector<256x128xf32>
    %48 = arith.truncf %47 : vector<256x128xf32> to vector<256x128xbf16>
    %49 = vector.shape_cast %48 : vector<256x128xbf16> to vector<16x16x128xbf16>
    %c1_69 = arith.constant 1 : index
    %c16 = arith.constant 16 : index
    %c0_70 = arith.constant 0 : index
    %50 = vector.load %arg7[%c1_69, %c16, %c0_70] : memref<18x33x128xbf16, #tpu.memory_space<vmem>>, vector<16x16x128xbf16>
    tpu.vector_store %arg7[%c1_69, %c16, %c0_70], %49 {strides = array<i32>} : memref<18x33x128xbf16, #tpu.memory_space<vmem>>, vector<16x16x128xbf16>,
    %c0_71 = arith.constant 0 : index
    %c15_72 = arith.constant 15 : index
    %c0_73 = arith.constant 0 : index
    %51 = vector.load %arg7[%c0_71, %c15_72, %c0_73] : memref<18x33x128xbf16, #tpu.memory_space<vmem>>, vector<16x16x128xbf16>
    %c1_74 = arith.constant 1 : index
    %c15_75 = arith.constant 15 : index
    %c0_76 = arith.constant 0 : index
    %52 = vector.load %arg7[%c1_74, %c15_75, %c0_76] : memref<18x33x128xbf16, #tpu.memory_space<vmem>>, vector<16x16x128xbf16>
    %c2_77 = arith.constant 2 : index
    %c15_78 = arith.constant 15 : index
    %c0_79 = arith.constant 0 : index
    %53 = vector.load %arg7[%c2_77, %c15_78, %c0_79] : memref<18x33x128xbf16, #tpu.memory_space<vmem>>, vector<16x16x128xbf16>
    %54 = tpu.concatenate %51, %52, %53 in 2 : vector<16x16x128xbf16>, vector<16x16x128xbf16>, vector<16x16x128xbf16> -> vector<16x16x384xbf16>
    %55 = vector.shape_cast %54 : vector<16x16x384xbf16> to vector<256x384xbf16>
    %c0_80 = arith.constant 0 : index
    %c0_81 = arith.constant 0 : index
    %c0_82 = arith.constant 0 : index
    %56 = vector.load %arg4[%c0_80, %c0_81, %c0_82] : memref<3x384x128xbf16, #tpu.memory_space<vmem>>, vector<1x384x128xbf16>
    %57 = vector.shape_cast %56 : vector<1x384x128xbf16> to vector<384x128xbf16>
    %cst_83 = arith.constant dense<0.000000e+00> : vector<256x128xf32>
    %58 = tpu.matmul %55, %57, %cst_83 {dimension_numbers = #tpu.dot_dimension_numbers<[1], [0], [0], [1], [0, 0, 1, 1], [], []>} : vector<256x384xbf16>, vector<384x128xbf16>, vector<256x128xf32> -> vector<256x128xf32>
    %c0_84 = arith.constant 0 : index
    %c16_85 = arith.constant 16 : index
    %c0_86 = arith.constant 0 : index
    %59 = vector.load %arg7[%c0_84, %c16_85, %c0_86] : memref<18x33x128xbf16, #tpu.memory_space<vmem>>, vector<16x16x128xbf16>
    %c1_87 = arith.constant 1 : index
    %c16_88 = arith.constant 16 : index
    %c0_89 = arith.constant 0 : index
    %60 = vector.load %arg7[%c1_87, %c16_88, %c0_89] : memref<18x33x128xbf16, #tpu.memory_space<vmem>>, vector<16x16x128xbf16>
    %c2_90 = arith.constant 2 : index
    %c16_91 = arith.constant 16 : index
    %c0_92 = arith.constant 0 : index
    %61 = vector.load %arg7[%c2_90, %c16_91, %c0_92] : memref<18x33x128xbf16, #tpu.memory_space<vmem>>, vector<16x16x128xbf16>
    %62 = tpu.concatenate %59, %60, %61 in 2 : vector<16x16x128xbf16>, vector<16x16x128xbf16>, vector<16x16x128xbf16> -> vector<16x16x384xbf16>
    %63 = vector.shape_cast %62 : vector<16x16x384xbf16> to vector<256x384xbf16>
    %c1_93 = arith.constant 1 : index
    %c0_94 = arith.constant 0 : index
    %c0_95 = arith.constant 0 : index
    %64 = vector.load %arg4[%c1_93, %c0_94, %c0_95] : memref<3x384x128xbf16, #tpu.memory_space<vmem>>, vector<1x384x128xbf16>
    %65 = vector.shape_cast %64 : vector<1x384x128xbf16> to vector<384x128xbf16>
    %cst_96 = arith.constant dense<0.000000e+00> : vector<256x128xf32>
    %66 = tpu.matmul %63, %65, %cst_96 {dimension_numbers = #tpu.dot_dimension_numbers<[1], [0], [0], [1], [0, 0, 1, 1], [], []>} : vector<256x384xbf16>, vector<384x128xbf16>, vector<256x128xf32> -> vector<256x128xf32>
    %67 = arith.addf %58, %66 : vector<256x128xf32>
    %c0_97 = arith.constant 0 : index
    %c17_98 = arith.constant 17 : index
    %c0_99 = arith.constant 0 : index
    %68 = vector.load %arg7[%c0_97, %c17_98, %c0_99] : memref<18x33x128xbf16, #tpu.memory_space<vmem>>, vector<16x16x128xbf16>
    %c1_100 = arith.constant 1 : index
    %c17_101 = arith.constant 17 : index
    %c0_102 = arith.constant 0 : index
    %69 = vector.load %arg7[%c1_100, %c17_101, %c0_102] : memref<18x33x128xbf16, #tpu.memory_space<vmem>>, vector<16x16x128xbf16>
    %c2_103 = arith.constant 2 : index
    %c17_104 = arith.constant 17 : index
    %c0_105 = arith.constant 0 : index
    %70 = vector.load %arg7[%c2_103, %c17_104, %c0_105] : memref<18x33x128xbf16, #tpu.memory_space<vmem>>, vector<16x16x128xbf16>
    %71 = tpu.concatenate %68, %69, %70 in 2 : vector<16x16x128xbf16>, vector<16x16x128xbf16>, vector<16x16x128xbf16> -> vector<16x16x384xbf16>
    %72 = vector.shape_cast %71 : vector<16x16x384xbf16> to vector<256x384xbf16>
    %c2_106 = arith.constant 2 : index
    %c0_107 = arith.constant 0 : index
    %c0_108 = arith.constant 0 : index
    %73 = vector.load %arg4[%c2_106, %c0_107, %c0_108] : memref<3x384x128xbf16, #tpu.memory_space<vmem>>, vector<1x384x128xbf16>
    %74 = vector.shape_cast %73 : vector<1x384x128xbf16> to vector<384x128xbf16>
    %cst_109 = arith.constant dense<0.000000e+00> : vector<256x128xf32>
    %75 = tpu.matmul %72, %74, %cst_109 {dimension_numbers = #tpu.dot_dimension_numbers<[1], [0], [0], [1], [0, 0, 1, 1], [], []>} : vector<256x384xbf16>, vector<384x128xbf16>, vector<256x128xf32> -> vector<256x128xf32>
    %76 = arith.addf %67, %75 : vector<256x128xf32>
    %c0_110 = arith.constant 0 : index
    %c0_111 = arith.constant 0 : index
    %77 = vector.load %arg5[%c0_110, %c0_111] : memref<1x128xf32, #tpu.memory_space<vmem>>, vector<1x128xf32>
    %78 = vector.broadcast %77 : vector<1x128xf32> to vector<256x128xf32>
    %79 = arith.addf %76, %78 : vector<256x128xf32>
    %c0_112 = arith.constant 0 : index
    %c0_113 = arith.constant 0 : index
    %c1_114 = arith.constant 1 : index
    %c1_115 = arith.constant 1 : index
    %c0_116 = arith.constant 0 : index
    %80 = vector.load %arg1[%c0_112, %c0_113, %c1_114, %c1_115, %c0_116] : memref<1x1x18x18x128xbf16, #tpu.memory_space<vmem>>, vector<1x1x16x16x128xbf16>
    %81 = vector.shape_cast %80 : vector<1x1x16x16x128xbf16> to vector<16x16x128xbf16>
    %82 = vector.shape_cast %81 : vector<16x16x128xbf16> to vector<256x128xbf16>
    %83 = arith.extf %82 : vector<256x128xbf16> to vector<256x128xf32>
    %84 = arith.addf %79, %83 : vector<256x128xf32>
    %cst_117 = arith.constant 0.000000e+00 : f32
    %85 = vector.broadcast %cst_117 : f32 to vector<256x128xf32>
    %86 = arith.maximumf %84, %85 : vector<256x128xf32>
    %87 = vector.shape_cast %86 : vector<256x128xf32> to vector<16x16x128xf32>
    %88 = arith.truncf %87 : vector<16x16x128xf32> to vector<16x16x128xbf16>
    %c0_118 = arith.constant 0 : index
    %c0_119 = arith.constant 0 : index
    %c0_120 = arith.constant 0 : index
    %c0_121 = arith.constant 0 : index
    %89 = vector.load %arg6[%c0_118, %c0_119, %c0_120, %c0_121] : memref<1x16x16x128xbf16, #tpu.memory_space<vmem>>, vector<1x16x16x128xbf16>
    %90 = vector.shape_cast %89 : vector<1x16x16x128xbf16> to vector<16x16x128xbf16>
    %91 = vector.shape_cast %88 : vector<16x16x128xbf16> to vector<1x16x16x128xbf16>
    tpu.vector_store %arg6[%c0_118, %c0_119, %c0_120, %c0_121], %91 {strides = array<i32>} : memref<1x16x16x128xbf16, #tpu.memory_space<vmem>>, vector<1x16x16x128xbf16>,
    return
  }
  func.func @transform_0(%arg0: i32) -> (i32, i32, i32, i32, i32) {
    %c0_i32 = arith.constant 0 : i32
    %c0_i32_0 = arith.constant 0 : i32
    %c0_i32_1 = arith.constant 0 : i32
    %c0_i32_2 = arith.constant 0 : i32
    %c0_i32_3 = arith.constant 0 : i32
    return %arg0, %c0_i32, %c0_i32_0, %c0_i32_1, %c0_i32_2 : i32, i32, i32, i32, i32
  }
  func.func @transform_1(%arg0: i32) -> (i32, i32, i32) {
    %c0_i32 = arith.constant 0 : i32
    %c0_i32_0 = arith.constant 0 : i32
    %c0_i32_1 = arith.constant 0 : i32
    %c0_i32_2 = arith.constant 0 : i32
    return %c0_i32, %c0_i32_0, %c0_i32_1 : i32, i32, i32
  }
  func.func @transform_2(%arg0: i32) -> (i32, i32) {
    %c0_i32 = arith.constant 0 : i32
    %c0_i32_0 = arith.constant 0 : i32
    %c0_i32_1 = arith.constant 0 : i32
    return %c0_i32, %c0_i32_0 : i32, i32
  }
  func.func @transform_3(%arg0: i32) -> (i32, i32, i32) {
    %c0_i32 = arith.constant 0 : i32
    %c0_i32_0 = arith.constant 0 : i32
    %c0_i32_1 = arith.constant 0 : i32
    %c0_i32_2 = arith.constant 0 : i32
    return %c0_i32, %c0_i32_0, %c0_i32_1 : i32, i32, i32
  }
  func.func @transform_4(%arg0: i32) -> (i32, i32) {
    %c0_i32 = arith.constant 0 : i32
    %c0_i32_0 = arith.constant 0 : i32
    %c0_i32_1 = arith.constant 0 : i32
    return %c0_i32, %c0_i32_0 : i32, i32
  }
  func.func @transform_5(%arg0: i32) -> (i32, i32, i32, i32) {
    %c0_i32 = arith.constant 0 : i32
    %c0_i32_0 = arith.constant 0 : i32
    %c0_i32_1 = arith.constant 0 : i32
    %c0_i32_2 = arith.constant 0 : i32
    return %arg0, %c0_i32, %c0_i32_0, %c0_i32_1 : i32, i32, i32, i32
  }
}

</mosaic_0001>

<llo_original>
// kernel: tpu_custom_call.1
$region0: #{tpu_custom_call.1}
  #allocation0 [shape = 'u32[]', space=smem, size = 0x4, offset = 0x4, fixed_abs, tag = 'smem constant byte address 0x4 - core index']
  #allocation1 [shape = 'u32[144,128]{1,0:T(1,128)}', space=vmem, size = 0x12000, scoped, tag = 'internal scratch']
  #allocation2 [shape = 'bf16[18,33,128]{2,1,0:T(8,128)(2,1)}', space=vmem, size = 0x2d000, scoped, tag = 'scratch operand']
  %s0 = inlined_call_operand.vmem [shape: bf16[2,1,18,18,128], index: 0, kind: input, shape index: {}]
  %s1 = inlined_call_operand.vmem [shape: bf16[3,384,128], index: 1, kind: input, shape index: {}]
  %s2 = inlined_call_operand.vmem [shape: f32[1,128], index: 2, kind: input, shape index: {}]
  %s3 = inlined_call_operand.hbm [shape: bf16[3,384,128], index: 3, kind: input, shape index: {}]
  %s4 = inlined_call_operand.vmem [shape: f32[1,128], index: 4, kind: input, shape index: {}]
  %s5 = inlined_call_operand.hbm [shape: bf16[2,16,16,128], index: 5, kind: output, shape index: {}]
  %s6 = sld [smem:[#allocation0]]
  $region57: #{tpu_custom_call.1} parent=0
    _
  %s8 = ssub.s32 1, %s6
  %s9 = scalar_select 0, %s8, %s6
  $region1: #{tpu_custom_call.1} parent=0
    #allocation3 [shape = 'u8[294912]{0}', space=vmem, size = 0x48000, scoped, tag = 'input window, operand 3, single buffered']
    #allocation4 [shape = 's32[2]{0}', space=sflag, size = 0x8, scoped, tag = 'scoped memory for tpu_custom_call.1']
    #allocation5 [shape = 's32[2]{0}', space=sflag, size = 0x8, scoped, tag = 'scoped memory for tpu_custom_call.1']
    #allocation6 [shape = 'u8[131072]{0}', space=vmem, size = 0x20000, scoped, tag = 'output window, operand 0']
    %10 = vsyncpa [#allocation4], 0
    %11 = vsyncpa [#allocation5], 0
    %s12 = scalar_lea.sflag [#allocation5], 1
    %13 = vsyncpa %s12, 0
    loop: start=0, step=1, limit=4
    $region2: #{tpu_custom_call.1} parent=1 // loop_pre_header
      _
    $region3: #{tpu_custom_call.1} parent=1 // loop_header
      %s15 = sphi 0, %s19
      %p16 = scmp.ge.s32.totalorder %s15, 4
      %s25 = sphi 0, %s27
      %s28 = sphi 0, %s25
      %s29 = sphi 0, %s28
      %s45 = sphi 0, %s29
      %s49 = sphi 0, %s49
      %s51 = sphi 0, %s49
      %s52 = sphi 0, %s51
      %s66 = sphi 0, %s52
      %s70 = sphi 0, %s70
      %s72 = sphi 0, %s70
      %s73 = sphi 0, %s72
      %s87 = sphi 0, %s73
      %s91 = sphi 0, %s91
      %s93 = sphi 0, %s91
      %s94 = sphi 0, %s93
      %s108 = sphi 0, %s94
      %s112 = sphi 0, %s112
      %s114 = sphi 0, %s112
      %s115 = sphi 0, %s114
      %s129 = sphi 0, %s115
      %s135 = sphi 0, %s137
      %s138 = sphi 0, %s135
      %s139 = sphi 0, %s138
      %s155 = sphi 0, %s139
    $region4: #{tpu_custom_call.1} parent=1 // loop_header_branch
      %18 = sbr.rel (%p16) target = $region8
    $region5: #{tpu_custom_call.1} parent=1 // loop_body
      %s20 = ssub.s32 %s15, 1
      %s21 = ssub.s32 %s15, 2
      %s22 = sadd.s32 %s15, 1
      %s23 = ssub.s32 %s15, %s22
      %p24 = scmp.eq.s32.totalorder %s23, 0
      %s26 = sadd.s32 %s25, 1
      %s27 = scalar_select %p24, %s25, %s26
      %p30 = pneg %p24
      %p31 = scmp.eq.s32.totalorder %s15, 1
      %p32 = por %p30, %p31
      %p33 = scmp.ne.s32.totalorder %s25, %s28
      %p34 = scmp.eq.s32.totalorder %s15, 0
      %p35 = por %p33, %p34
      %p36 = scmp.ne.s32.totalorder %s25, %s28
      %p37 = scmp.eq.s32.totalorder %s20, 1
      %p38 = por %p36, %p37
      %p39 = scmp.ne.s32.totalorder %s28, %s29
      %p40 = scmp.eq.s32.totalorder %s20, 0
      %p41 = por %p39, %p40
      %p42 = scmp.ne.s32.totalorder %s28, %s29
      %p43 = scmp.eq.s32.totalorder %s21, 1
      %p44 = por %p42, %p43
      %p46 = scmp.ne.s32.totalorder %s29, %s45
      %p47 = scmp.eq.s32.totalorder %s21, 0
      %p48 = por %p46, %p47
      %s50 = sadd.s32 %s49, 1
      %p53 = scmp.eq.s32.totalorder %s15, 1
      %p54 = scmp.ne.s32.totalorder %s49, %s51
      %p55 = scmp.eq.s32.totalorder %s15, 0
      %p56 = por %p54, %p55
      %p57 = scmp.ne.s32.totalorder %s49, %s51
      %p58 = scmp.eq.s32.totalorder %s20, 1
      %p59 = por %p57, %p58
      %p60 = scmp.ne.s32.totalorder %s51, %s52
      %p61 = scmp.eq.s32.totalorder %s20, 0
      %p62 = por %p60, %p61
      %p63 = scmp.ne.s32.totalorder %s51, %s52
      %p64 = scmp.eq.s32.totalorder %s21, 1
      %p65 = por %p63, %p64
      %p67 = scmp.ne.s32.totalorder %s52, %s66
      %p68 = scmp.eq.s32.totalorder %s21, 0
      %p69 = por %p67, %p68
      %s71 = sadd.s32 %s70, 1
      %p74 = scmp.eq.s32.totalorder %s15, 1
      %p75 = scmp.ne.s32.totalorder %s70, %s72
      %p76 = scmp.eq.s32.totalorder %s15, 0
      %p77 = por %p75, %p76
      %p78 = scmp.ne.s32.totalorder %s70, %s72
      %p79 = scmp.eq.s32.totalorder %s20, 1
      %p80 = por %p78, %p79
      %p81 = scmp.ne.s32.totalorder %s72, %s73
      %p82 = scmp.eq.s32.totalorder %s20, 0
      %p83 = por %p81, %p82
      %p84 = scmp.ne.s32.totalorder %s72, %s73
      %p85 = scmp.eq.s32.totalorder %s21, 1
      %p86 = por %p84, %p85
      %p88 = scmp.ne.s32.totalorder %s73, %s87
      %p89 = scmp.eq.s32.totalorder %s21, 0
      %p90 = por %p88, %p89
      %s92 = sadd.s32 %s91, 1
      %p95 = scmp.eq.s32.totalorder %s15, 1
      %p96 = scmp.ne.s32.totalorder %s91, %s93
      %p97 = scmp.eq.s32.totalorder %s15, 0
      %p98 = por %p96, %p97
      %p99 = scmp.ne.s32.totalorder %s91, %s93
      %p100 = scmp.eq.s32.totalorder %s20, 1
      %p101 = por %p99, %p100
      %p102 = scmp.ne.s32.totalorder %s93, %s94
      %p103 = scmp.eq.s32.totalorder %s20, 0
      %p104 = por %p102, %p103
      %p105 = scmp.ne.s32.totalorder %s93, %s94
      %p106 = scmp.eq.s32.totalorder %s21, 1
      %p107 = por %p105, %p106
      %p109 = scmp.ne.s32.totalorder %s94, %s108
      %p110 = scmp.eq.s32.totalorder %s21, 0
      %p111 = por %p109, %p110
      %s113 = sadd.s32 %s112, 1
      %p116 = scmp.eq.s32.totalorder %s15, 1
      %p117 = scmp.ne.s32.totalorder %s112, %s114
      %p118 = scmp.eq.s32.totalorder %s15, 0
      %p119 = por %p117, %p118
      %p120 = scmp.ne.s32.totalorder %s112, %s114
      %p121 = scmp.eq.s32.totalorder %s20, 1
      %p122 = por %p120, %p121
      %p123 = scmp.ne.s32.totalorder %s114, %s115
      %p124 = scmp.eq.s32.totalorder %s20, 0
      %p125 = por %p123, %p124
      %p126 = scmp.ne.s32.totalorder %s114, %s115
      %p127 = scmp.eq.s32.totalorder %s21, 1
      %p128 = por %p126, %p127
      %p130 = scmp.ne.s32.totalorder %s115, %s129
      %p131 = scmp.eq.s32.totalorder %s21, 0
      %p132 = por %p130, %p131
      %s133 = ssub.s32 %s15, %s22
      %p134 = scmp.eq.s32.totalorder %s133, 0
      %s136 = sadd.s32 %s135, 1
      %s137 = scalar_select %p134, %s135, %s136
      %p140 = pneg %p134
      %p141 = scmp.eq.s32.totalorder %s15, 1
      %p142 = por %p140, %p141
      %p143 = scmp.ne.s32.totalorder %s135, %s138
      %p144 = scmp.eq.s32.totalorder %s15, 0
      %p145 = por %p143, %p144
      %p146 = scmp.ne.s32.totalorder %s135, %s138
      %p147 = scmp.eq.s32.totalorder %s20, 1
      %p148 = por %p146, %p147
      %p149 = scmp.ne.s32.totalorder %s138, %s139
      %p150 = scmp.eq.s32.totalorder %s20, 0
      %p151 = por %p149, %p150
      %p152 = scmp.ne.s32.totalorder %s138, %s139
      %p153 = scmp.eq.s32.totalorder %s21, 1
      %p154 = por %p152, %p153
      %p156 = scmp.ne.s32.totalorder %s139, %s155
      %p157 = scmp.eq.s32.totalorder %s21, 0
      %p158 = por %p156, %p157
      %p159 = scmp.le.s32.totalorder 1, %s15
      %p160 = scmp.lt.s32.totalorder %s15, 3
      %p161 = pnand %p159, %p160
      %p162 = pneg %p161
      // Predicated region
      $region9: #{tpu_custom_call.1} parent=5 // pred_check
        _
      $region10: #{tpu_custom_call.1} parent=5 // pred_check_branch
        %164 = sbr.rel (%p161) target = $region12
      $region11: #{tpu_custom_call.1} parent=5 // pred_region
        %s165 = ssub.s32 %s15, 1
        // Predicated region
        $region13: #{tpu_custom_call.1} parent=11 // pred_check
          %p166 = pneg %p62
        $region14: #{tpu_custom_call.1} parent=11 // pred_check_branch
          %168 = sbr.rel (%p166) target = $region16
        $region15: #{tpu_custom_call.1} parent=11 // pred_region
          _
        $region16: #{tpu_custom_call.1} parent=11 // pred_fallthru
          _
        // Predicated region
        $region17: #{tpu_custom_call.1} parent=11 // pred_check
          %p169 = pneg %p83
        $region18: #{tpu_custom_call.1} parent=11 // pred_check_branch
          %171 = sbr.rel (%p169) target = $region20
        $region19: #{tpu_custom_call.1} parent=11 // pred_region
          _
        $region20: #{tpu_custom_call.1} parent=11 // pred_fallthru
          _
        // Predicated region
        $region21: #{tpu_custom_call.1} parent=11 // pred_check
          %p172 = pneg %p104
        $region22: #{tpu_custom_call.1} parent=11 // pred_check_branch
          %174 = sbr.rel (%p172) target = $region24
        $region23: #{tpu_custom_call.1} parent=11 // pred_region
          %s176 = ssub.s32 9216, 9216
          %177 = vsyncadd [#allocation4], %s176
          %s178 = sshll.u32 [#allocation3], 4
          %s179 = int_to_ptr.vmem [resolvable:$true] %s178
          %184 = dma.hbm_to_vmem [thread:$0]  %s3, 9216, %s179, [#allocation4], 64, 64, 4
        $region24: #{tpu_custom_call.1} parent=11 // pred_fallthru
          _
        // Predicated region
        $region25: #{tpu_custom_call.1} parent=11 // pred_check
          %p185 = pneg %p125
        $region26: #{tpu_custom_call.1} parent=11 // pred_check_branch
          %187 = sbr.rel (%p185) target = $region28
        $region27: #{tpu_custom_call.1} parent=11 // pred_region
          _
        $region28: #{tpu_custom_call.1} parent=11 // pred_fallthru
          _
      $region12: #{tpu_custom_call.1} parent=5 // pred_fallthru
        _
      %p188 = scmp.lt.s32.totalorder %s15, 2
      // Predicated region
      $region29: #{tpu_custom_call.1} parent=5 // pred_check
        %p189 = pneg %p188
      $region30: #{tpu_custom_call.1} parent=5 // pred_check_branch
        %191 = sbr.rel (%p189) target = $region32
      $region31: #{tpu_custom_call.1} parent=5 // pred_region
        // Predicated region
        $region33: #{tpu_custom_call.1} parent=31 // pred_check
          %p192 = pneg %p35
        $region34: #{tpu_custom_call.1} parent=31 // pred_check_branch
          %194 = sbr.rel (%p192) target = $region36
        $region35: #{tpu_custom_call.1} parent=31 // pred_region
          %p195 = scmp.lt.s32.totalorder %s15, 1
          %s196 = scalar_select %p195, %s15, 1
          %s197 = smul.addr %s196, 54
          %s198 = smul.addr %s197, 4
          %s199 = scalar_lea.vmem %s0, %s198
        $region36: #{tpu_custom_call.1} parent=31 // pred_fallthru
          _
      $region32: #{tpu_custom_call.1} parent=5 // pred_fallthru
        _
      %p200 = scmp.le.s32.totalorder 1, %s15
      %p201 = scmp.lt.s32.totalorder %s15, 3
      %p202 = pnand %p200, %p201
      %p203 = pneg %p202
      // Predicated region
      $region37: #{tpu_custom_call.1} parent=5 // pred_check
        _
      $region38: #{tpu_custom_call.1} parent=5 // pred_check_branch
        %205 = sbr.rel (%p202) target = $region40
      $region39: #{tpu_custom_call.1} parent=5 // pred_region
        %s206 = ssub.s32 %s15, 1
        // Predicated region
        $region41: #{tpu_custom_call.1} parent=39 // pred_check
          %p207 = pneg %p104
        $region42: #{tpu_custom_call.1} parent=39 // pred_check_branch
          %209 = sbr.rel (%p207) target = $region44
        $region43: #{tpu_custom_call.1} parent=39 // pred_region
          %210 = dma.done [#allocation4], 9216
        $region44: #{tpu_custom_call.1} parent=39 // pred_fallthru
          _
        %p211 = scmp.lt.s32.totalorder %s20, 1
        %s212 = scalar_select %p211, %s20, 1
        %s213 = smul.addr %s212, 54
        %s214 = smul.addr %s213, 4
        %s215 = scalar_lea.vmem %s0, %s214
        %p216 = pneg %p41
        %p217 = pneg %p38
        %p218 = pneg %p62
        %p219 = pneg %p59
        %p220 = pneg %p83
        %p221 = pneg %p80
        %p222 = pneg %p104
        %p223 = pneg %p101
        %p224 = pneg %p125
        %p225 = pneg %p122
        %p226 = pneg %p151
        %p227 = pneg %p148
        %s228 = sand.u32 %s138, 1
        %s229 = scalar_lea.sflag [#allocation5], %s228
        %s230 = sand.u32 %s138, 1
        %s231 = smul.addr %s230, 128
        %s232 = scalar_lea.vmem [#allocation6], %s231
        %p233 = scmp.lt.s32.totalorder %s20, 1
        %s234 = scalar_select %p233, %s20, 1
        %s235 = smul.addr %s234, 54
        %s236 = smul.addr %s235, 4
        %s237 = scalar_lea.vmem %s0, %s236
        %239 = vst [vmem:[#allocation2] sm:$0xf] 0
        %240 = vst [vmem:[#allocation2 + $0x4] sm:$0xf] 0
        %241 = vst [vmem:[#allocation2 + $0x8] sm:$0xf] 0
        %242 = vst [vmem:[#allocation2 + $0xc] sm:$0xf] 0
        %vm243 = vcmask 1040384
        %vm244 = vsmask.f32 256
        %vm245 = vmand %vm243, %vm244
        %v246 = vld [vmem:[#allocation2 + $0x10] sm:$0x1]
        %v247 = vsel %vm245, 0, %v246
        %248 = vst [vmem:[#allocation2 + $0x10] sm:$0x1] %v247
        %s249 = scalar_lea.vmem [#allocation2], 340
        %250 = vst [vmem:[%s249] sm:$0xf] 0
        %251 = vst [vmem:[%s249 + $0x4] sm:$0xf] 0
        %252 = vst [vmem:[%s249 + $0x8] sm:$0xf] 0
        %253 = vst [vmem:[%s249 + $0xc] sm:$0xf] 0
        %v254 = vld [vmem:[%s249 + $0x10] sm:$0x1]
        %v255 = vsel %vm245, 0, %v254
        %256 = vst [vmem:[%s249 + $0x10] sm:$0x1] %v255
        %vm257 = vcmask 1043459
        %vm258 = vsmask.f32 7950
        %vm259 = vmand %vm257, %vm258
        %v260 = vld [vmem:[#allocation2 + $0x4] sm:$0x8]
        %v261 = vsel %vm259, 0, %v260
        %262 = vst [vmem:[#allocation2 + $0x4] sm:$0x8] %v261
        %v263 = vld [vmem:[#allocation2 + $0x18] sm:$0x8]
        %v264 = vsel %vm259, 0, %v263
        %265 = vst [vmem:[#allocation2 + $0x18] sm:$0x8] %v264
        %v266 = vld [vmem:[#allocation2 + $0x2c] sm:$0x8]
        %v267 = vsel %vm259, 0, %v266
        %268 = vst [vmem:[#allocation2 + $0x2c] sm:$0x8] %v267
        %v269 = vld [vmem:[#allocation2 + $0x40] sm:$0x8]
        %v270 = vsel %vm259, 0, %v269
        %271 = vst [vmem:[#allocation2 + $0x40] sm:$0x8] %v270
        %v272 = vld [vmem:[#allocation2 + $0x54] sm:$0x8]
        %v273 = vsel %vm259, 0, %v272
        %274 = vst [vmem:[#allocation2 + $0x54] sm:$0x8] %v273
        %v275 = vld [vmem:[#allocation2 + $0x68] sm:$0x8]
        %v276 = vsel %vm259, 0, %v275
        %277 = vst [vmem:[#allocation2 + $0x68] sm:$0x8] %v276
        %v278 = vld [vmem:[#allocation2 + $0x7c] sm:$0x8]
        %v279 = vsel %vm259, 0, %v278
        %280 = vst [vmem:[#allocation2 + $0x7c] sm:$0x8] %v279
        %v281 = vld [vmem:[#allocation2 + $0x90] sm:$0x8]
        %v282 = vsel %vm259, 0, %v281
        %283 = vst [vmem:[#allocation2 + $0x90] sm:$0x8] %v282
        %v284 = vld [vmem:[#allocation2 + $0xa4] sm:$0x8]
        %v285 = vsel %vm259, 0, %v284
        %286 = vst [vmem:[#allocation2 + $0xa4] sm:$0x8] %v285
        %v287 = vld [vmem:[#allocation2 + $0xb8] sm:$0x8]
        %v288 = vsel %vm259, 0, %v287
        %289 = vst [vmem:[#allocation2 + $0xb8] sm:$0x8] %v288
        %v290 = vld [vmem:[#allocation2 + $0xcc] sm:$0x8]
        %v291 = vsel %vm259, 0, %v290
        %292 = vst [vmem:[#allocation2 + $0xcc] sm:$0x8] %v291
        %v293 = vld [vmem:[#allocation2 + $0xe0] sm:$0x8]
        %v294 = vsel %vm259, 0, %v293
        %295 = vst [vmem:[#allocation2 + $0xe0] sm:$0x8] %v294
        %v296 = vld [vmem:[#allocation2 + $0xf4] sm:$0x8]
        %v297 = vsel %vm259, 0, %v296
        %298 = vst [vmem:[#allocation2 + $0xf4] sm:$0x8] %v297
        %v299 = vld [vmem:[#allocation2 + $0x108] sm:$0x8]
        %v300 = vsel %vm259, 0, %v299
        %301 = vst [vmem:[#allocation2 + $0x108] sm:$0x8] %v300
        %v302 = vld [vmem:[#allocation2 + $0x11c] sm:$0x8]
        %v303 = vsel %vm259, 0, %v302
        %304 = vst [vmem:[#allocation2 + $0x11c] sm:$0x8] %v303
        %v305 = vld [vmem:[#allocation2 + $0x130] sm:$0x8]
        %v306 = vsel %vm259, 0, %v305
        %307 = vst [vmem:[#allocation2 + $0x130] sm:$0x8] %v306
        %v308 = vld [vmem:[#allocation2 + $0x144] sm:$0x8]
        %v309 = vsel %vm259, 0, %v308
        %310 = vst [vmem:[#allocation2 + $0x144] sm:$0x8] %v309
        %v311 = vld [vmem:[#allocation2 + $0x158] sm:$0x8]
        %v312 = vsel %vm259, 0, %v311
        %313 = vst [vmem:[#allocation2 + $0x158] sm:$0x8] %v312
        %v314 = vld [vmem:[#allocation2 + $0x10] sm:$0x1]
        %v315 = vsel %vm245, 0, %v314
        %316 = vst [vmem:[#allocation2 + $0x10] sm:$0x1] %v315
        %v317 = vld [vmem:[#allocation2 + $0x24] sm:$0x1]
        %v318 = vsel %vm245, 0, %v317
        %319 = vst [vmem:[#allocation2 + $0x24] sm:$0x1] %v318
        %v320 = vld [vmem:[#allocation2 + $0x38] sm:$0x1]
        %v321 = vsel %vm245, 0, %v320
        %322 = vst [vmem:[#allocation2 + $0x38] sm:$0x1] %v321
        %v323 = vld [vmem:[#allocation2 + $0x4c] sm:$0x1]
        %v324 = vsel %vm245, 0, %v323
        %325 = vst [vmem:[#allocation2 + $0x4c] sm:$0x1] %v324
        %v326 = vld [vmem:[#allocation2 + $0x60] sm:$0x1]
        %v327 = vsel %vm245, 0, %v326
        %328 = vst [vmem:[#allocation2 + $0x60] sm:$0x1] %v327
        %v329 = vld [vmem:[#allocation2 + $0x74] sm:$0x1]
        %v330 = vsel %vm245, 0, %v329
        %331 = vst [vmem:[#allocation2 + $0x74] sm:$0x1] %v330
        %v332 = vld [vmem:[#allocation2 + $0x88] sm:$0x1]
        %v333 = vsel %vm245, 0, %v332
        %334 = vst [vmem:[#allocation2 + $0x88] sm:$0x1] %v333
        %v335 = vld [vmem:[#allocation2 + $0x9c] sm:$0x1]
        %v336 = vsel %vm245, 0, %v335
        %337 = vst [vmem:[#allocation2 + $0x9c] sm:$0x1] %v336
        %v338 = vld [vmem:[#allocation2 + $0xb0] sm:$0x1]
        %v339 = vsel %vm245, 0, %v338
        %340 = vst [vmem:[#allocation2 + $0xb0] sm:$0x1] %v339
        %v341 = vld [vmem:[#allocation2 + $0xc4] sm:$0x1]
        %v342 = vsel %vm245, 0, %v341
        %343 = vst [vmem:[#allocation2 + $0xc4] sm:$0x1] %v342
        %v344 = vld [vmem:[#allocation2 + $0xd8] sm:$0x1]
        %v345 = vsel %vm245, 0, %v344
        %346 = vst [vmem:[#allocation2 + $0xd8] sm:$0x1] %v345
        %v347 = vld [vmem:[#allocation2 + $0xec] sm:$0x1]
        %v348 = vsel %vm245, 0, %v347
        %349 = vst [vmem:[#allocation2 + $0xec] sm:$0x1] %v348
        %v350 = vld [vmem:[#allocation2 + $0x100] sm:$0x1]
        %v351 = vsel %vm245, 0, %v350
        %352 = vst [vmem:[#allocation2 + $0x100] sm:$0x1] %v351
        %v353 = vld [vmem:[#allocation2 + $0x114] sm:$0x1]
        %v354 = vsel %vm245, 0, %v353
        %355 = vst [vmem:[#allocation2 + $0x114] sm:$0x1] %v354
        %v356 = vld [vmem:[#allocation2 + $0x128] sm:$0x1]
        %v357 = vsel %vm245, 0, %v356
        %358 = vst [vmem:[#allocation2 + $0x128] sm:$0x1] %v357
        %v359 = vld [vmem:[#allocation2 + $0x13c] sm:$0x1]
        %v360 = vsel %vm245, 0, %v359
        %361 = vst [vmem:[#allocation2 + $0x13c] sm:$0x1] %v360
        %v362 = vld [vmem:[#allocation2 + $0x150] sm:$0x1]
        %v363 = vsel %vm245, 0, %v362
        %364 = vst [vmem:[#allocation2 + $0x150] sm:$0x1] %v363
        %v365 = vld [vmem:[#allocation2 + $0x164] sm:$0x1]
        %v366 = vsel %vm245, 0, %v365
        %367 = vst [vmem:[#allocation2 + $0x164] sm:$0x1] %v366
        %v368 = vld [vmem:[%s237] sm:$0xf]
        %v369 = vld [vmem:[%s237 + $0x4] sm:$0xf]
        %v370 = vld [vmem:[%s237 + $0xc] sm:$0xf]
        %v371 = vld [vmem:[%s237 + $0x10] sm:$0xf]
        %v372 = vld [vmem:[%s237 + $0x18] sm:$0xf]
        %v373 = vld [vmem:[%s237 + $0x1c] sm:$0xf]
        %v374 = vld [vmem:[%s237 + $0x24] sm:$0xf]
        %v375 = vld [vmem:[%s237 + $0x28] sm:$0xf]
        %v376 = vld [vmem:[%s237 + $0x30] sm:$0xf]
        %v377 = vld [vmem:[%s237 + $0x34] sm:$0xf]
        %v378 = vld [vmem:[%s237 + $0x3c] sm:$0xf]
        %v379 = vld [vmem:[%s237 + $0x40] sm:$0xf]
        %v380 = vld [vmem:[%s237 + $0x48] sm:$0xf]
        %v381 = vld [vmem:[%s237 + $0x4c] sm:$0xf]
        %v382 = vld [vmem:[%s237 + $0x54] sm:$0xf]
        %v383 = vld [vmem:[%s237 + $0x58] sm:$0xf]
        %v384 = vld [vmem:[%s237 + $0x60] sm:$0xf]
        %v385 = vld [vmem:[%s237 + $0x64] sm:$0xf]
        %v386 = vld [vmem:[%s237 + $0x6c] sm:$0xf]
        %v387 = vld [vmem:[%s237 + $0x70] sm:$0xf]
        %v388 = vld [vmem:[%s237 + $0x78] sm:$0xf]
        %v389 = vld [vmem:[%s237 + $0x7c] sm:$0xf]
        %v390 = vld [vmem:[%s237 + $0x84] sm:$0xf]
        %v391 = vld [vmem:[%s237 + $0x88] sm:$0xf]
        %v392 = vld [vmem:[%s237 + $0x90] sm:$0xf]
        %v393 = vld [vmem:[%s237 + $0x94] sm:$0xf]
        %v394 = vld [vmem:[%s237 + $0x9c] sm:$0xf]
        %v395 = vld [vmem:[%s237 + $0xa0] sm:$0xf]
        %v396 = vld [vmem:[%s237 + $0xa8] sm:$0xf]
        %v397 = vld [vmem:[%s237 + $0xac] sm:$0xf]
        %v398 = vld [vmem:[%s237 + $0xb4] sm:$0xf]
        %v399 = vld [vmem:[%s237 + $0xb8] sm:$0xf]
        %s400 = scalar_lea.vmem %s237, 12
        %v401 = vld [vmem:[%s400] sm:$0xf]
        %v402 = vld [vmem:[%s400 + $0x4] sm:$0xf]
        %v403 = vld [vmem:[%s400 + $0xc] sm:$0xf]
        %v404 = vld [vmem:[%s400 + $0x10] sm:$0xf]
        %v405 = vld [vmem:[%s400 + $0x18] sm:$0xf]
        %v406 = vld [vmem:[%s400 + $0x1c] sm:$0xf]
        %v407 = vld [vmem:[%s400 + $0x24] sm:$0xf]
        %v408 = vld [vmem:[%s400 + $0x28] sm:$0xf]
        %v409 = vld [vmem:[%s400 + $0x30] sm:$0xf]
        %v410 = vld [vmem:[%s400 + $0x34] sm:$0xf]
        %v411 = vld [vmem:[%s400 + $0x3c] sm:$0xf]
        %v412 = vld [vmem:[%s400 + $0x40] sm:$0xf]
        %v413 = vld [vmem:[%s400 + $0x48] sm:$0xf]
        %v414 = vld [vmem:[%s400 + $0x4c] sm:$0xf]
        %v415 = vld [vmem:[%s400 + $0x54] sm:$0xf]
        %v416 = vld [vmem:[%s400 + $0x58] sm:$0xf]
        %v417 = vld [vmem:[%s400 + $0x60] sm:$0xf]
        %v418 = vld [vmem:[%s400 + $0x64] sm:$0xf]
        %v419 = vld [vmem:[%s400 + $0x6c] sm:$0xf]
        %v420 = vld [vmem:[%s400 + $0x70] sm:$0xf]
        %v421 = vld [vmem:[%s400 + $0x78] sm:$0xf]
        %v422 = vld [vmem:[%s400 + $0x7c] sm:$0xf]
        %v423 = vld [vmem:[%s400 + $0x84] sm:$0xf]
        %v424 = vld [vmem:[%s400 + $0x88] sm:$0xf]
        %v425 = vld [vmem:[%s400 + $0x90] sm:$0xf]
        %v426 = vld [vmem:[%s400 + $0x94] sm:$0xf]
        %v427 = vld [vmem:[%s400 + $0x9c] sm:$0xf]
        %v428 = vld [vmem:[%s400 + $0xa0] sm:$0xf]
        %v429 = vld [vmem:[%s400 + $0xa8] sm:$0xf]
        %v430 = vld [vmem:[%s400 + $0xac] sm:$0xf]
        %v431 = vld [vmem:[%s400 + $0xb4] sm:$0xf]
        %v432 = vld [vmem:[%s400 + $0xb8] sm:$0xf]
        %s433 = scalar_lea.vmem %s237, 24
        %v434 = vld [vmem:[%s433] sm:$0xf]
        %v435 = vld [vmem:[%s433 + $0x4] sm:$0xf]
        %v436 = vld [vmem:[%s433 + $0xc] sm:$0xf]
        %v437 = vld [vmem:[%s433 + $0x10] sm:$0xf]
        %v438 = vld [vmem:[%s433 + $0x18] sm:$0xf]
        %v439 = vld [vmem:[%s433 + $0x1c] sm:$0xf]
        %v440 = vld [vmem:[%s433 + $0x24] sm:$0xf]
        %v441 = vld [vmem:[%s433 + $0x28] sm:$0xf]
        %v442 = vld [vmem:[%s433 + $0x30] sm:$0xf]
        %v443 = vld [vmem:[%s433 + $0x34] sm:$0xf]
        %v444 = vld [vmem:[%s433 + $0x3c] sm:$0xf]
        %v445 = vld [vmem:[%s433 + $0x40] sm:$0xf]
        %v446 = vld [vmem:[%s433 + $0x48] sm:$0xf]
        %v447 = vld [vmem:[%s433 + $0x4c] sm:$0xf]
        %v448 = vld [vmem:[%s433 + $0x54] sm:$0xf]
        %v449 = vld [vmem:[%s433 + $0x58] sm:$0xf]
        %v450 = vld [vmem:[%s433 + $0x60] sm:$0xf]
        %v451 = vld [vmem:[%s433 + $0x64] sm:$0xf]
        %v452 = vld [vmem:[%s433 + $0x6c] sm:$0xf]
        %v453 = vld [vmem:[%s433 + $0x70] sm:$0xf]
        %v454 = vld [vmem:[%s433 + $0x78] sm:$0xf]
        %v455 = vld [vmem:[%s433 + $0x7c] sm:$0xf]
        %v456 = vld [vmem:[%s433 + $0x84] sm:$0xf]
        %v457 = vld [vmem:[%s433 + $0x88] sm:$0xf]
        %v458 = vld [vmem:[%s433 + $0x90] sm:$0xf]
        %v459 = vld [vmem:[%s433 + $0x94] sm:$0xf]
        %v460 = vld [vmem:[%s433 + $0x9c] sm:$0xf]
        %v461 = vld [vmem:[%s433 + $0xa0] sm:$0xf]
        %v462 = vld [vmem:[%s433 + $0xa8] sm:$0xf]
        %v463 = vld [vmem:[%s433 + $0xac] sm:$0xf]
        %v464 = vld [vmem:[%s433 + $0xb4] sm:$0xf]
        %v465 = vld [vmem:[%s433 + $0xb8] sm:$0xf]
        %v498 = vunpack.c.l.b16 %v368
        %v499 = vunpack.c.l.b16 %v369
        %v500 = vunpack.c.l.b16 %v370
        %v501 = vunpack.c.l.b16 %v371
        %v502 = vunpack.c.l.b16 %v372
        %v503 = vunpack.c.l.b16 %v373
        %v504 = vunpack.c.l.b16 %v374
        %v505 = vunpack.c.l.b16 %v375
        %v506 = vunpack.c.l.b16 %v376
        %v507 = vunpack.c.l.b16 %v377
        %v508 = vunpack.c.l.b16 %v378
        %v509 = vunpack.c.l.b16 %v379
        %v510 = vunpack.c.l.b16 %v380
        %v511 = vunpack.c.l.b16 %v381
        %v512 = vunpack.c.l.b16 %v382
        %v513 = vunpack.c.l.b16 %v383
        %v514 = vunpack.c.l.b16 %v384
        %v515 = vunpack.c.l.b16 %v385
        %v516 = vunpack.c.l.b16 %v386
        %v517 = vunpack.c.l.b16 %v387
        %v518 = vunpack.c.l.b16 %v388
        %v519 = vunpack.c.l.b16 %v389
        %v520 = vunpack.c.l.b16 %v390
        %v521 = vunpack.c.l.b16 %v391
        %v522 = vunpack.c.l.b16 %v392
        %v523 = vunpack.c.l.b16 %v393
        %v524 = vunpack.c.l.b16 %v394
        %v525 = vunpack.c.l.b16 %v395
        %v526 = vunpack.c.l.b16 %v396
        %v527 = vunpack.c.l.b16 %v397
        %v528 = vunpack.c.l.b16 %v398
        %v529 = vunpack.c.l.b16 %v399
        %v530 = vpack.c.b16 %v499, %v498
        %v531 = vpack.c.b16 %v501, %v500
        %v532 = vpack.c.b16 %v503, %v502
        %v533 = vpack.c.b16 %v505, %v504
        %v534 = vpack.c.b16 %v507, %v506
        %v535 = vpack.c.b16 %v509, %v508
        %v536 = vpack.c.b16 %v511, %v510
        %v537 = vpack.c.b16 %v513, %v512
        %v538 = vpack.c.b16 %v515, %v514
        %v539 = vpack.c.b16 %v517, %v516
        %v540 = vpack.c.b16 %v519, %v518
        %v541 = vpack.c.b16 %v521, %v520
        %v542 = vpack.c.b16 %v523, %v522
        %v543 = vpack.c.b16 %v525, %v524
        %v544 = vpack.c.b16 %v527, %v526
        %v545 = vpack.c.b16 %v529, %v528
        %v594 = vunpack.c.l.b16 %v401
        %v595 = vunpack.c.l.b16 %v402
        %v596 = vunpack.c.l.b16 %v403
        %v597 = vunpack.c.l.b16 %v404
        %v598 = vunpack.c.l.b16 %v405
        %v599 = vunpack.c.l.b16 %v406
        %v600 = vunpack.c.l.b16 %v407
        %v601 = vunpack.c.l.b16 %v408
        %v602 = vunpack.c.l.b16 %v409
        %v603 = vunpack.c.l.b16 %v410
        %v604 = vunpack.c.l.b16 %v411
        %v605 = vunpack.c.l.b16 %v412
        %v606 = vunpack.c.l.b16 %v413
        %v607 = vunpack.c.l.b16 %v414
        %v608 = vunpack.c.l.b16 %v415
        %v609 = vunpack.c.l.b16 %v416
        %v610 = vunpack.c.l.b16 %v417
        %v611 = vunpack.c.l.b16 %v418
        %v612 = vunpack.c.l.b16 %v419
        %v613 = vunpack.c.l.b16 %v420
        %v614 = vunpack.c.l.b16 %v421
        %v615 = vunpack.c.l.b16 %v422
        %v616 = vunpack.c.l.b16 %v423
        %v617 = vunpack.c.l.b16 %v424
        %v618 = vunpack.c.l.b16 %v425
        %v619 = vunpack.c.l.b16 %v426
        %v620 = vunpack.c.l.b16 %v427
        %v621 = vunpack.c.l.b16 %v428
        %v622 = vunpack.c.l.b16 %v429
        %v623 = vunpack.c.l.b16 %v430
        %v624 = vunpack.c.l.b16 %v431
        %v625 = vunpack.c.l.b16 %v432
        %v626 = vpack.c.b16 %v595, %v594
        %v627 = vpack.c.b16 %v597, %v596
        %v628 = vpack.c.b16 %v599, %v598
        %v629 = vpack.c.b16 %v601, %v600
        %v630 = vpack.c.b16 %v603, %v602
        %v631 = vpack.c.b16 %v605, %v604
        %v632 = vpack.c.b16 %v607, %v606
        %v633 = vpack.c.b16 %v609, %v608
        %v634 = vpack.c.b16 %v611, %v610
        %v635 = vpack.c.b16 %v613, %v612
        %v636 = vpack.c.b16 %v615, %v614
        %v637 = vpack.c.b16 %v617, %v616
        %v638 = vpack.c.b16 %v619, %v618
        %v639 = vpack.c.b16 %v621, %v620
        %v640 = vpack.c.b16 %v623, %v622
        %v641 = vpack.c.b16 %v625, %v624
        %v690 = vunpack.c.l.b16 %v434
        %v691 = vunpack.c.l.b16 %v435
        %v692 = vunpack.c.l.b16 %v436
        %v693 = vunpack.c.l.b16 %v437
        %v694 = vunpack.c.l.b16 %v438
        %v695 = vunpack.c.l.b16 %v439
        %v696 = vunpack.c.l.b16 %v440
        %v697 = vunpack.c.l.b16 %v441
        %v698 = vunpack.c.l.b16 %v442
        %v699 = vunpack.c.l.b16 %v443
        %v700 = vunpack.c.l.b16 %v444
        %v701 = vunpack.c.l.b16 %v445
        %v702 = vunpack.c.l.b16 %v446
        %v703 = vunpack.c.l.b16 %v447
        %v704 = vunpack.c.l.b16 %v448
        %v705 = vunpack.c.l.b16 %v449
        %v706 = vunpack.c.l.b16 %v450
        %v707 = vunpack.c.l.b16 %v451
        %v708 = vunpack.c.l.b16 %v452
        %v709 = vunpack.c.l.b16 %v453
        %v710 = vunpack.c.l.b16 %v454
        %v711 = vunpack.c.l.b16 %v455
        %v712 = vunpack.c.l.b16 %v456
        %v713 = vunpack.c.l.b16 %v457
        %v714 = vunpack.c.l.b16 %v458
        %v715 = vunpack.c.l.b16 %v459
        %v716 = vunpack.c.l.b16 %v460
        %v717 = vunpack.c.l.b16 %v461
        %v718 = vunpack.c.l.b16 %v462
        %v719 = vunpack.c.l.b16 %v463
        %v720 = vunpack.c.l.b16 %v464
        %v721 = vunpack.c.l.b16 %v465
        %v722 = vpack.c.b16 %v691, %v690
        %v723 = vpack.c.b16 %v693, %v692
        %v724 = vpack.c.b16 %v695, %v694
        %v725 = vpack.c.b16 %v697, %v696
        %v726 = vpack.c.b16 %v699, %v698
        %v727 = vpack.c.b16 %v701, %v700
        %v728 = vpack.c.b16 %v703, %v702
        %v729 = vpack.c.b16 %v705, %v704
        %v730 = vpack.c.b16 %v707, %v706
        %v731 = vpack.c.b16 %v709, %v708
        %v732 = vpack.c.b16 %v711, %v710
        %v733 = vpack.c.b16 %v713, %v712
        %v734 = vpack.c.b16 %v715, %v714
        %v735 = vpack.c.b16 %v717, %v716
        %v736 = vpack.c.b16 %v719, %v718
        %v737 = vpack.c.b16 %v721, %v720
        %v754 = vld [vmem:[%s1] sm:$0xf]
        %v755 = vld [vmem:[%s1 + $0x4] sm:$0xf]
        %v756 = vld [vmem:[%s1 + $0x8] sm:$0xf]
        %v757 = vld [vmem:[%s1 + $0xc] sm:$0xf]
        %v758 = vld [vmem:[%s1 + $0x10] sm:$0xf]
        %v759 = vld [vmem:[%s1 + $0x14] sm:$0xf]
        %v760 = vld [vmem:[%s1 + $0x18] sm:$0xf]
        %v761 = vld [vmem:[%s1 + $0x1c] sm:$0xf]
        %v762 = vld [vmem:[%s1 + $0x20] sm:$0xf]
        %v763 = vld [vmem:[%s1 + $0x24] sm:$0xf]
        %v764 = vld [vmem:[%s1 + $0x28] sm:$0xf]
        %v765 = vld [vmem:[%s1 + $0x2c] sm:$0xf]
        %v766 = vld [vmem:[%s1 + $0x30] sm:$0xf]
        %v767 = vld [vmem:[%s1 + $0x34] sm:$0xf]
        %v768 = vld [vmem:[%s1 + $0x38] sm:$0xf]
        %v769 = vld [vmem:[%s1 + $0x3c] sm:$0xf]
        %v770 = vld [vmem:[%s1 + $0x40] sm:$0xf]
        %v771 = vld [vmem:[%s1 + $0x44] sm:$0xf]
        %v772 = vld [vmem:[%s1 + $0x48] sm:$0xf]
        %v773 = vld [vmem:[%s1 + $0x4c] sm:$0xf]
        %v774 = vld [vmem:[%s1 + $0x50] sm:$0xf]
        %v775 = vld [vmem:[%s1 + $0x54] sm:$0xf]
        %v776 = vld [vmem:[%s1 + $0x58] sm:$0xf]
        %v777 = vld [vmem:[%s1 + $0x5c] sm:$0xf]
        %v778 = vld [vmem:[%s1 + $0x60] sm:$0xf]
        %v779 = vld [vmem:[%s1 + $0x64] sm:$0xf]
        %v780 = vld [vmem:[%s1 + $0x68] sm:$0xf]
        %v781 = vld [vmem:[%s1 + $0x6c] sm:$0xf]
        %v782 = vld [vmem:[%s1 + $0x70] sm:$0xf]
        %v783 = vld [vmem:[%s1 + $0x74] sm:$0xf]
        %v784 = vld [vmem:[%s1 + $0x78] sm:$0xf]
        %v785 = vld [vmem:[%s1 + $0x7c] sm:$0xf]
        %v786 = vld [vmem:[%s1 + $0x80] sm:$0xf]
        %v787 = vld [vmem:[%s1 + $0x84] sm:$0xf]
        %v788 = vld [vmem:[%s1 + $0x88] sm:$0xf]
        %v789 = vld [vmem:[%s1 + $0x8c] sm:$0xf]
        %v790 = vld [vmem:[%s1 + $0x90] sm:$0xf]
        %v791 = vld [vmem:[%s1 + $0x94] sm:$0xf]
        %v792 = vld [vmem:[%s1 + $0x98] sm:$0xf]
        %v793 = vld [vmem:[%s1 + $0x9c] sm:$0xf]
        %v794 = vld [vmem:[%s1 + $0xa0] sm:$0xf]
        %v795 = vld [vmem:[%s1 + $0xa4] sm:$0xf]
        %v796 = vld [vmem:[%s1 + $0xa8] sm:$0xf]
        %v797 = vld [vmem:[%s1 + $0xac] sm:$0xf]
        %v798 = vld [vmem:[%s1 + $0xb0] sm:$0xf]
        %v799 = vld [vmem:[%s1 + $0xb4] sm:$0xf]
        %v800 = vld [vmem:[%s1 + $0xb8] sm:$0xf]
        %v801 = vld [vmem:[%s1 + $0xbc] sm:$0xf]
        %v802 = vld [vmem:[%s237 + $0x8] sm:$0x1]
        %v803 = vld [vmem:[%s237 + $0x14] sm:$0x1]
        %v804 = vld [vmem:[%s237 + $0x20] sm:$0x1]
        %v805 = vld [vmem:[%s237 + $0x2c] sm:$0x1]
        %v806 = vld [vmem:[%s237 + $0x38] sm:$0x1]
        %v807 = vld [vmem:[%s237 + $0x44] sm:$0x1]
        %v808 = vld [vmem:[%s237 + $0x50] sm:$0x1]
        %v809 = vld [vmem:[%s237 + $0x5c] sm:$0x1]
        %v810 = vld [vmem:[%s237 + $0x68] sm:$0x1]
        %v811 = vld [vmem:[%s237 + $0x74] sm:$0x1]
        %v812 = vld [vmem:[%s237 + $0x80] sm:$0x1]
        %v813 = vld [vmem:[%s237 + $0x8c] sm:$0x1]
        %v814 = vld [vmem:[%s237 + $0x98] sm:$0x1]
        %v815 = vld [vmem:[%s237 + $0xa4] sm:$0x1]
        %v816 = vld [vmem:[%s237 + $0xb0] sm:$0x1]
        %v817 = vld [vmem:[%s237 + $0xbc] sm:$0x1]
        %v818 = vld [vmem:[%s400 + $0x8] sm:$0x1]
        %v819 = vld [vmem:[%s400 + $0x14] sm:$0x1]
        %v820 = vld [vmem:[%s400 + $0x20] sm:$0x1]
        %v821 = vld [vmem:[%s400 + $0x2c] sm:$0x1]
        %v822 = vld [vmem:[%s400 + $0x38] sm:$0x1]
        %v823 = vld [vmem:[%s400 + $0x44] sm:$0x1]
        %v824 = vld [vmem:[%s400 + $0x50] sm:$0x1]
        %v825 = vld [vmem:[%s400 + $0x5c] sm:$0x1]
        %v826 = vld [vmem:[%s400 + $0x68] sm:$0x1]
        %v827 = vld [vmem:[%s400 + $0x74] sm:$0x1]
        %v828 = vld [vmem:[%s400 + $0x80] sm:$0x1]
        %v829 = vld [vmem:[%s400 + $0x8c] sm:$0x1]
        %v830 = vld [vmem:[%s400 + $0x98] sm:$0x1]
        %v831 = vld [vmem:[%s400 + $0xa4] sm:$0x1]
        %v832 = vld [vmem:[%s400 + $0xb0] sm:$0x1]
        %v833 = vld [vmem:[%s400 + $0xbc] sm:$0x1]
        %v834 = vld [vmem:[%s433 + $0x8] sm:$0x1]
        %v835 = vld [vmem:[%s433 + $0x14] sm:$0x1]
        %v836 = vld [vmem:[%s433 + $0x20] sm:$0x1]
        %v837 = vld [vmem:[%s433 + $0x2c] sm:$0x1]
        %v838 = vld [vmem:[%s433 + $0x38] sm:$0x1]
        %v839 = vld [vmem:[%s433 + $0x44] sm:$0x1]
        %v840 = vld [vmem:[%s433 + $0x50] sm:$0x1]
        %v841 = vld [vmem:[%s433 + $0x5c] sm:$0x1]
        %v842 = vld [vmem:[%s433 + $0x68] sm:$0x1]
        %v843 = vld [vmem:[%s433 + $0x74] sm:$0x1]
        %v844 = vld [vmem:[%s433 + $0x80] sm:$0x1]
        %v845 = vld [vmem:[%s433 + $0x8c] sm:$0x1]
        %v846 = vld [vmem:[%s433 + $0x98] sm:$0x1]
        %v847 = vld [vmem:[%s433 + $0xa4] sm:$0x1]
        %v848 = vld [vmem:[%s433 + $0xb0] sm:$0x1]
        %v849 = vld [vmem:[%s433 + $0xbc] sm:$0x1]
        %v866 = vunpack.c.l.b16 %v802
        %v867 = vunpack.c.l.b16 %v803
        %v868 = vunpack.c.l.b16 %v804
        %v869 = vunpack.c.l.b16 %v805
        %v870 = vunpack.c.l.b16 %v806
        %v871 = vunpack.c.l.b16 %v807
        %v872 = vunpack.c.l.b16 %v808
        %v873 = vunpack.c.l.b16 %v809
        %v874 = vunpack.c.l.b16 %v810
        %v875 = vunpack.c.l.b16 %v811
        %v876 = vunpack.c.l.b16 %v812
        %v877 = vunpack.c.l.b16 %v813
        %v878 = vunpack.c.l.b16 %v814
        %v879 = vunpack.c.l.b16 %v815
        %v880 = vunpack.c.l.b16 %v816
        %v881 = vunpack.c.l.b16 %v817
        %v882 = vpack.c.b16 %v866, %v866
        %v883 = vpack.c.b16 %v867, %v867
        %v884 = vpack.c.b16 %v868, %v868
        %v885 = vpack.c.b16 %v869, %v869
        %v886 = vpack.c.b16 %v870, %v870
        %v887 = vpack.c.b16 %v871, %v871
        %v888 = vpack.c.b16 %v872, %v872
        %v889 = vpack.c.b16 %v873, %v873
        %v890 = vpack.c.b16 %v874, %v874
        %v891 = vpack.c.b16 %v875, %v875
        %v892 = vpack.c.b16 %v876, %v876
        %v893 = vpack.c.b16 %v877, %v877
        %v894 = vpack.c.b16 %v878, %v878
        %v895 = vpack.c.b16 %v879, %v879
        %v896 = vpack.c.b16 %v880, %v880
        %v897 = vpack.c.b16 %v881, %v881
        %v914 = vunpack.c.l.b16 %v818
        %v915 = vunpack.c.l.b16 %v819
        %v916 = vunpack.c.l.b16 %v820
        %v917 = vunpack.c.l.b16 %v821
        %v918 = vunpack.c.l.b16 %v822
        %v919 = vunpack.c.l.b16 %v823
        %v920 = vunpack.c.l.b16 %v824
        %v921 = vunpack.c.l.b16 %v825
        %v922 = vunpack.c.l.b16 %v826
        %v923 = vunpack.c.l.b16 %v827
        %v924 = vunpack.c.l.b16 %v828
        %v925 = vunpack.c.l.b16 %v829
        %v926 = vunpack.c.l.b16 %v830
        %v927 = vunpack.c.l.b16 %v831
        %v928 = vunpack.c.l.b16 %v832
        %v929 = vunpack.c.l.b16 %v833
        %v930 = vpack.c.b16 %v914, %v914
        %v931 = vpack.c.b16 %v915, %v915
        %v932 = vpack.c.b16 %v916, %v916
        %v933 = vpack.c.b16 %v917, %v917
        %v934 = vpack.c.b16 %v918, %v918
        %v935 = vpack.c.b16 %v919, %v919
        %v936 = vpack.c.b16 %v920, %v920
        %v937 = vpack.c.b16 %v921, %v921
        %v938 = vpack.c.b16 %v922, %v922
        %v939 = vpack.c.b16 %v923, %v923
        %v940 = vpack.c.b16 %v924, %v924
        %v941 = vpack.c.b16 %v925, %v925
        %v942 = vpack.c.b16 %v926, %v926
        %v943 = vpack.c.b16 %v927, %v927
        %v944 = vpack.c.b16 %v928, %v928
        %v945 = vpack.c.b16 %v929, %v929
        %v962 = vunpack.c.l.b16 %v834
        %v963 = vunpack.c.l.b16 %v835
        %v964 = vunpack.c.l.b16 %v836
        %v965 = vunpack.c.l.b16 %v837
        %v966 = vunpack.c.l.b16 %v838
        %v967 = vunpack.c.l.b16 %v839
        %v968 = vunpack.c.l.b16 %v840
        %v969 = vunpack.c.l.b16 %v841
        %v970 = vunpack.c.l.b16 %v842
        %v971 = vunpack.c.l.b16 %v843
        %v972 = vunpack.c.l.b16 %v844
        %v973 = vunpack.c.l.b16 %v845
        %v974 = vunpack.c.l.b16 %v846
        %v975 = vunpack.c.l.b16 %v847
        %v976 = vunpack.c.l.b16 %v848
        %v977 = vunpack.c.l.b16 %v849
        %v978 = vpack.c.b16 %v962, %v962
        %v979 = vpack.c.b16 %v963, %v963
        %v980 = vpack.c.b16 %v964, %v964
        %v981 = vpack.c.b16 %v965, %v965
        %v982 = vpack.c.b16 %v966, %v966
        %v983 = vpack.c.b16 %v967, %v967
        %v984 = vpack.c.b16 %v968, %v968
        %v985 = vpack.c.b16 %v969, %v969
        %v986 = vpack.c.b16 %v970, %v970
        %v987 = vpack.c.b16 %v971, %v971
        %v988 = vpack.c.b16 %v972, %v972
        %v989 = vpack.c.b16 %v973, %v973
        %v990 = vpack.c.b16 %v974, %v974
        %v991 = vpack.c.b16 %v975, %v975
        %v992 = vpack.c.b16 %v976, %v976
        %v993 = vpack.c.b16 %v977, %v977
        %vm994 = vsmask.f32 7424
        %v996 = vshrl.u32 %v530, 16
        %v998 = vshll.u32 %v530, 16
        %v1000 = vrot.slane %v998, 1
        %v1001 = vor.u32 %v996, %v1000
        %v1003 = vshll.u32 %v882, 16
        %v1005 = vrot.slane %v1003, 1
        %v1006 = vsel %vm994, %v1001, %v1005
        %v1008 = vshrl.u32 %v626, 16
        %v1010 = vshll.u32 %v626, 16
        %v1012 = vrot.slane %v1010, 1
        %v1013 = vor.u32 %v1008, %v1012
        %v1015 = vshll.u32 %v930, 16
        %v1017 = vrot.slane %v1015, 1
        %v1018 = vsel %vm994, %v1013, %v1017
        %v1020 = vshrl.u32 %v722, 16
        %v1022 = vshll.u32 %v722, 16
        %v1024 = vrot.slane %v1022, 1
        %v1025 = vor.u32 %v1020, %v1024
        %v1027 = vshll.u32 %v978, 16
        %v1029 = vrot.slane %v1027, 1
        %v1030 = vsel %vm994, %v1025, %v1029
        %v1032 = vshrl.u32 %v531, 16
        %v1034 = vshll.u32 %v531, 16
        %v1036 = vrot.slane %v1034, 1
        %v1037 = vor.u32 %v1032, %v1036
        %v1039 = vshll.u32 %v883, 16
        %v1041 = vrot.slane %v1039, 1
        %v1042 = vsel %vm994, %v1037, %v1041
        %v1044 = vshrl.u32 %v627, 16
        %v1046 = vshll.u32 %v627, 16
        %v1048 = vrot.slane %v1046, 1
        %v1049 = vor.u32 %v1044, %v1048
        %v1051 = vshll.u32 %v931, 16
        %v1053 = vrot.slane %v1051, 1
        %v1054 = vsel %vm994, %v1049, %v1053
        %v1056 = vshrl.u32 %v723, 16
        %v1058 = vshll.u32 %v723, 16
        %v1060 = vrot.slane %v1058, 1
        %v1061 = vor.u32 %v1056, %v1060
        %v1063 = vshll.u32 %v979, 16
        %v1065 = vrot.slane %v1063, 1
        %v1066 = vsel %vm994, %v1061, %v1065
        %v1068 = vshrl.u32 %v532, 16
        %v1070 = vshll.u32 %v532, 16
        %v1072 = vrot.slane %v1070, 1
        %v1073 = vor.u32 %v1068, %v1072
        %v1075 = vshll.u32 %v884, 16
        %v1077 = vrot.slane %v1075, 1
        %v1078 = vsel %vm994, %v1073, %v1077
        %v1080 = vshrl.u32 %v628, 16
        %v1082 = vshll.u32 %v628, 16
        %v1084 = vrot.slane %v1082, 1
        %v1085 = vor.u32 %v1080, %v1084
        %v1087 = vshll.u32 %v932, 16
        %v1089 = vrot.slane %v1087, 1
        %v1090 = vsel %vm994, %v1085, %v1089
        %v1092 = vshrl.u32 %v724, 16
        %v1094 = vshll.u32 %v724, 16
        %v1096 = vrot.slane %v1094, 1
        %v1097 = vor.u32 %v1092, %v1096
        %v1099 = vshll.u32 %v980, 16
        %v1101 = vrot.slane %v1099, 1
        %v1102 = vsel %vm994, %v1097, %v1101
        %v1104 = vshrl.u32 %v533, 16
        %v1106 = vshll.u32 %v533, 16
        %v1108 = vrot.slane %v1106, 1
        %v1109 = vor.u32 %v1104, %v1108
        %v1111 = vshll.u32 %v885, 16
        %v1113 = vrot.slane %v1111, 1
        %v1114 = vsel %vm994, %v1109, %v1113
        %v1116 = vshrl.u32 %v629, 16
        %v1118 = vshll.u32 %v629, 16
        %v1120 = vrot.slane %v1118, 1
        %v1121 = vor.u32 %v1116, %v1120
        %v1123 = vshll.u32 %v933, 16
        %v1125 = vrot.slane %v1123, 1
        %v1126 = vsel %vm994, %v1121, %v1125
        %v1128 = vshrl.u32 %v725, 16
        %v1130 = vshll.u32 %v725, 16
        %v1132 = vrot.slane %v1130, 1
        %v1133 = vor.u32 %v1128, %v1132
        %v1135 = vshll.u32 %v981, 16
        %v1137 = vrot.slane %v1135, 1
        %v1138 = vsel %vm994, %v1133, %v1137
        %v1140 = vshrl.u32 %v534, 16
        %v1142 = vshll.u32 %v534, 16
        %v1144 = vrot.slane %v1142, 1
        %v1145 = vor.u32 %v1140, %v1144
        %v1147 = vshll.u32 %v886, 16
        %v1149 = vrot.slane %v1147, 1
        %v1150 = vsel %vm994, %v1145, %v1149
        %v1152 = vshrl.u32 %v630, 16
        %v1154 = vshll.u32 %v630, 16
        %v1156 = vrot.slane %v1154, 1
        %v1157 = vor.u32 %v1152, %v1156
        %v1159 = vshll.u32 %v934, 16
        %v1161 = vrot.slane %v1159, 1
        %v1162 = vsel %vm994, %v1157, %v1161
        %v1164 = vshrl.u32 %v726, 16
        %v1166 = vshll.u32 %v726, 16
        %v1168 = vrot.slane %v1166, 1
        %v1169 = vor.u32 %v1164, %v1168
        %v1171 = vshll.u32 %v982, 16
        %v1173 = vrot.slane %v1171, 1
        %v1174 = vsel %vm994, %v1169, %v1173
        %v1176 = vshrl.u32 %v535, 16
        %v1178 = vshll.u32 %v535, 16
        %v1180 = vrot.slane %v1178, 1
        %v1181 = vor.u32 %v1176, %v1180
        %v1183 = vshll.u32 %v887, 16
        %v1185 = vrot.slane %v1183, 1
        %v1186 = vsel %vm994, %v1181, %v1185
        %v1188 = vshrl.u32 %v631, 16
        %v1190 = vshll.u32 %v631, 16
        %v1192 = vrot.slane %v1190, 1
        %v1193 = vor.u32 %v1188, %v1192
        %v1195 = vshll.u32 %v935, 16
        %v1197 = vrot.slane %v1195, 1
        %v1198 = vsel %vm994, %v1193, %v1197
        %v1200 = vshrl.u32 %v727, 16
        %v1202 = vshll.u32 %v727, 16
        %v1204 = vrot.slane %v1202, 1
        %v1205 = vor.u32 %v1200, %v1204
        %v1207 = vshll.u32 %v983, 16
        %v1209 = vrot.slane %v1207, 1
        %v1210 = vsel %vm994, %v1205, %v1209
        %v1212 = vshrl.u32 %v536, 16
        %v1214 = vshll.u32 %v536, 16
        %v1216 = vrot.slane %v1214, 1
        %v1217 = vor.u32 %v1212, %v1216
        %v1219 = vshll.u32 %v888, 16
        %v1221 = vrot.slane %v1219, 1
        %v1222 = vsel %vm994, %v1217, %v1221
        %v1224 = vshrl.u32 %v632, 16
        %v1226 = vshll.u32 %v632, 16
        %v1228 = vrot.slane %v1226, 1
        %v1229 = vor.u32 %v1224, %v1228
        %v1231 = vshll.u32 %v936, 16
        %v1233 = vrot.slane %v1231, 1
        %v1234 = vsel %vm994, %v1229, %v1233
        %v1236 = vshrl.u32 %v728, 16
        %v1238 = vshll.u32 %v728, 16
        %v1240 = vrot.slane %v1238, 1
        %v1241 = vor.u32 %v1236, %v1240
        %v1243 = vshll.u32 %v984, 16
        %v1245 = vrot.slane %v1243, 1
        %v1246 = vsel %vm994, %v1241, %v1245
        %v1248 = vshrl.u32 %v537, 16
        %v1250 = vshll.u32 %v537, 16
        %v1252 = vrot.slane %v1250, 1
        %v1253 = vor.u32 %v1248, %v1252
        %v1255 = vshll.u32 %v889, 16
        %v1257 = vrot.slane %v1255, 1
        %v1258 = vsel %vm994, %v1253, %v1257
        %v1260 = vshrl.u32 %v633, 16
        %v1262 = vshll.u32 %v633, 16
        %v1264 = vrot.slane %v1262, 1
        %v1265 = vor.u32 %v1260, %v1264
        %v1267 = vshll.u32 %v937, 16
        %v1269 = vrot.slane %v1267, 1
        %v1270 = vsel %vm994, %v1265, %v1269
        %v1272 = vshrl.u32 %v729, 16
        %v1274 = vshll.u32 %v729, 16
        %v1276 = vrot.slane %v1274, 1
        %v1277 = vor.u32 %v1272, %v1276
        %v1279 = vshll.u32 %v985, 16
        %v1281 = vrot.slane %v1279, 1
        %v1282 = vsel %vm994, %v1277, %v1281
        %v1284 = vshrl.u32 %v538, 16
        %v1286 = vshll.u32 %v538, 16
        %v1288 = vrot.slane %v1286, 1
        %v1289 = vor.u32 %v1284, %v1288
        %v1291 = vshll.u32 %v890, 16
        %v1293 = vrot.slane %v1291, 1
        %v1294 = vsel %vm994, %v1289, %v1293
        %v1296 = vshrl.u32 %v634, 16
        %v1298 = vshll.u32 %v634, 16
        %v1300 = vrot.slane %v1298, 1
        %v1301 = vor.u32 %v1296, %v1300
        %v1303 = vshll.u32 %v938, 16
        %v1305 = vrot.slane %v1303, 1
        %v1306 = vsel %vm994, %v1301, %v1305
        %v1308 = vshrl.u32 %v730, 16
        %v1310 = vshll.u32 %v730, 16
        %v1312 = vrot.slane %v1310, 1
        %v1313 = vor.u32 %v1308, %v1312
        %v1315 = vshll.u32 %v986, 16
        %v1317 = vrot.slane %v1315, 1
        %v1318 = vsel %vm994, %v1313, %v1317
        %v1320 = vshrl.u32 %v539, 16
        %v1322 = vshll.u32 %v539, 16
        %v1324 = vrot.slane %v1322, 1
        %v1325 = vor.u32 %v1320, %v1324
        %v1327 = vshll.u32 %v891, 16
        %v1329 = vrot.slane %v1327, 1
        %v1330 = vsel %vm994, %v1325, %v1329
        %v1332 = vshrl.u32 %v635, 16
        %v1334 = vshll.u32 %v635, 16
        %v1336 = vrot.slane %v1334, 1
        %v1337 = vor.u32 %v1332, %v1336
        %v1339 = vshll.u32 %v939, 16
        %v1341 = vrot.slane %v1339, 1
        %v1342 = vsel %vm994, %v1337, %v1341
        %v1344 = vshrl.u32 %v731, 16
        %v1346 = vshll.u32 %v731, 16
        %v1348 = vrot.slane %v1346, 1
        %v1349 = vor.u32 %v1344, %v1348
        %v1351 = vshll.u32 %v987, 16
        %v1353 = vrot.slane %v1351, 1
        %v1354 = vsel %vm994, %v1349, %v1353
        %v1356 = vshrl.u32 %v540, 16
        %v1358 = vshll.u32 %v540, 16
        %v1360 = vrot.slane %v1358, 1
        %v1361 = vor.u32 %v1356, %v1360
        %v1363 = vshll.u32 %v892, 16
        %v1365 = vrot.slane %v1363, 1
        %v1366 = vsel %vm994, %v1361, %v1365
        %v1368 = vshrl.u32 %v636, 16
        %v1370 = vshll.u32 %v636, 16
        %v1372 = vrot.slane %v1370, 1
        %v1373 = vor.u32 %v1368, %v1372
        %v1375 = vshll.u32 %v940, 16
        %v1377 = vrot.slane %v1375, 1
        %v1378 = vsel %vm994, %v1373, %v1377
        %v1380 = vshrl.u32 %v732, 16
        %v1382 = vshll.u32 %v732, 16
        %v1384 = vrot.slane %v1382, 1
        %v1385 = vor.u32 %v1380, %v1384
        %v1387 = vshll.u32 %v988, 16
        %v1389 = vrot.slane %v1387, 1
        %v1390 = vsel %vm994, %v1385, %v1389
        %v1392 = vshrl.u32 %v541, 16
        %v1394 = vshll.u32 %v541, 16
        %v1396 = vrot.slane %v1394, 1
        %v1397 = vor.u32 %v1392, %v1396
        %v1399 = vshll.u32 %v893, 16
        %v1401 = vrot.slane %v1399, 1
        %v1402 = vsel %vm994, %v1397, %v1401
        %v1404 = vshrl.u32 %v637, 16
        %v1406 = vshll.u32 %v637, 16
        %v1408 = vrot.slane %v1406, 1
        %v1409 = vor.u32 %v1404, %v1408
        %v1411 = vshll.u32 %v941, 16
        %v1413 = vrot.slane %v1411, 1
        %v1414 = vsel %vm994, %v1409, %v1413
        %v1416 = vshrl.u32 %v733, 16
        %v1418 = vshll.u32 %v733, 16
        %v1420 = vrot.slane %v1418, 1
        %v1421 = vor.u32 %v1416, %v1420
        %v1423 = vshll.u32 %v989, 16
        %v1425 = vrot.slane %v1423, 1
        %v1426 = vsel %vm994, %v1421, %v1425
        %v1428 = vshrl.u32 %v542, 16
        %v1430 = vshll.u32 %v542, 16
        %v1432 = vrot.slane %v1430, 1
        %v1433 = vor.u32 %v1428, %v1432
        %v1435 = vshll.u32 %v894, 16
        %v1437 = vrot.slane %v1435, 1
        %v1438 = vsel %vm994, %v1433, %v1437
        %v1440 = vshrl.u32 %v638, 16
        %v1442 = vshll.u32 %v638, 16
        %v1444 = vrot.slane %v1442, 1
        %v1445 = vor.u32 %v1440, %v1444
        %v1447 = vshll.u32 %v942, 16
        %v1449 = vrot.slane %v1447, 1
        %v1450 = vsel %vm994, %v1445, %v1449
        %v1452 = vshrl.u32 %v734, 16
        %v1454 = vshll.u32 %v734, 16
        %v1456 = vrot.slane %v1454, 1
        %v1457 = vor.u32 %v1452, %v1456
        %v1459 = vshll.u32 %v990, 16
        %v1461 = vrot.slane %v1459, 1
        %v1462 = vsel %vm994, %v1457, %v1461
        %v1464 = vshrl.u32 %v543, 16
        %v1466 = vshll.u32 %v543, 16
        %v1468 = vrot.slane %v1466, 1
        %v1469 = vor.u32 %v1464, %v1468
        %v1471 = vshll.u32 %v895, 16
        %v1473 = vrot.slane %v1471, 1
        %v1474 = vsel %vm994, %v1469, %v1473
        %v1476 = vshrl.u32 %v639, 16
        %v1478 = vshll.u32 %v639, 16
        %v1480 = vrot.slane %v1478, 1
        %v1481 = vor.u32 %v1476, %v1480
        %v1483 = vshll.u32 %v943, 16
        %v1485 = vrot.slane %v1483, 1
        %v1486 = vsel %vm994, %v1481, %v1485
        %v1488 = vshrl.u32 %v735, 16
        %v1490 = vshll.u32 %v735, 16
        %v1492 = vrot.slane %v1490, 1
        %v1493 = vor.u32 %v1488, %v1492
        %v1495 = vshll.u32 %v991, 16
        %v1497 = vrot.slane %v1495, 1
        %v1498 = vsel %vm994, %v1493, %v1497
        %v1500 = vshrl.u32 %v544, 16
        %v1502 = vshll.u32 %v544, 16
        %v1504 = vrot.slane %v1502, 1
        %v1505 = vor.u32 %v1500, %v1504
        %v1507 = vshll.u32 %v896, 16
        %v1509 = vrot.slane %v1507, 1
        %v1510 = vsel %vm994, %v1505, %v1509
        %v1512 = vshrl.u32 %v640, 16
        %v1514 = vshll.u32 %v640, 16
        %v1516 = vrot.slane %v1514, 1
        %v1517 = vor.u32 %v1512, %v1516
        %v1519 = vshll.u32 %v944, 16
        %v1521 = vrot.slane %v1519, 1
        %v1522 = vsel %vm994, %v1517, %v1521
        %v1524 = vshrl.u32 %v736, 16
        %v1526 = vshll.u32 %v736, 16
        %v1528 = vrot.slane %v1526, 1
        %v1529 = vor.u32 %v1524, %v1528
        %v1531 = vshll.u32 %v992, 16
        %v1533 = vrot.slane %v1531, 1
        %v1534 = vsel %vm994, %v1529, %v1533
        %v1536 = vshrl.u32 %v545, 16
        %v1538 = vshll.u32 %v545, 16
        %v1540 = vrot.slane %v1538, 1
        %v1541 = vor.u32 %v1536, %v1540
        %v1543 = vshll.u32 %v897, 16
        %v1545 = vrot.slane %v1543, 1
        %v1546 = vsel %vm994, %v1541, %v1545
        %v1548 = vshrl.u32 %v641, 16
        %v1550 = vshll.u32 %v641, 16
        %v1552 = vrot.slane %v1550, 1
        %v1553 = vor.u32 %v1548, %v1552
        %v1555 = vshll.u32 %v945, 16
        %v1557 = vrot.slane %v1555, 1
        %v1558 = vsel %vm994, %v1553, %v1557
        %v1560 = vshrl.u32 %v737, 16
        %v1562 = vshll.u32 %v737, 16
        %v1564 = vrot.slane %v1562, 1
        %v1565 = vor.u32 %v1560, %v1564
        %v1567 = vshll.u32 %v993, 16
        %v1569 = vrot.slane %v1567, 1
        %v1570 = vsel %vm994, %v1565, %v1569
        %s1619 = scalar_lea.vmem %s1, 192
        %v1620 = vld [vmem:[%s1619] sm:$0xf]
        %v1621 = vld [vmem:[%s1619 + $0x4] sm:$0xf]
        %v1622 = vld [vmem:[%s1619 + $0x8] sm:$0xf]
        %v1623 = vld [vmem:[%s1619 + $0xc] sm:$0xf]
        %v1624 = vld [vmem:[%s1619 + $0x10] sm:$0xf]
        %v1625 = vld [vmem:[%s1619 + $0x14] sm:$0xf]
        %v1626 = vld [vmem:[%s1619 + $0x18] sm:$0xf]
        %v1627 = vld [vmem:[%s1619 + $0x1c] sm:$0xf]
        %v1628 = vld [vmem:[%s1619 + $0x20] sm:$0xf]
        %v1629 = vld [vmem:[%s1619 + $0x24] sm:$0xf]
        %v1630 = vld [vmem:[%s1619 + $0x28] sm:$0xf]
        %v1631 = vld [vmem:[%s1619 + $0x2c] sm:$0xf]
        %v1632 = vld [vmem:[%s1619 + $0x30] sm:$0xf]
        %v1633 = vld [vmem:[%s1619 + $0x34] sm:$0xf]
        %v1634 = vld [vmem:[%s1619 + $0x38] sm:$0xf]
        %v1635 = vld [vmem:[%s1619 + $0x3c] sm:$0xf]
        %v1636 = vld [vmem:[%s1619 + $0x40] sm:$0xf]
        %v1637 = vld [vmem:[%s1619 + $0x44] sm:$0xf]
        %v1638 = vld [vmem:[%s1619 + $0x48] sm:$0xf]
        %v1639 = vld [vmem:[%s1619 + $0x4c] sm:$0xf]
        %v1640 = vld [vmem:[%s1619 + $0x50] sm:$0xf]
        %v1641 = vld [vmem:[%s1619 + $0x54] sm:$0xf]
        %v1642 = vld [vmem:[%s1619 + $0x58] sm:$0xf]
        %v1643 = vld [vmem:[%s1619 + $0x5c] sm:$0xf]
        %v1644 = vld [vmem:[%s1619 + $0x60] sm:$0xf]
        %v1645 = vld [vmem:[%s1619 + $0x64] sm:$0xf]
        %v1646 = vld [vmem:[%s1619 + $0x68] sm:$0xf]
        %v1647 = vld [vmem:[%s1619 + $0x6c] sm:$0xf]
        %v1648 = vld [vmem:[%s1619 + $0x70] sm:$0xf]
        %v1649 = vld [vmem:[%s1619 + $0x74] sm:$0xf]
        %v1650 = vld [vmem:[%s1619 + $0x78] sm:$0xf]
        %v1651 = vld [vmem:[%s1619 + $0x7c] sm:$0xf]
        %v1652 = vld [vmem:[%s1619 + $0x80] sm:$0xf]
        %v1653 = vld [vmem:[%s1619 + $0x84] sm:$0xf]
        %v1654 = vld [vmem:[%s1619 + $0x88] sm:$0xf]
        %v1655 = vld [vmem:[%s1619 + $0x8c] sm:$0xf]
        %v1656 = vld [vmem:[%s1619 + $0x90] sm:$0xf]
        %v1657 = vld [vmem:[%s1619 + $0x94] sm:$0xf]
        %v1658 = vld [vmem:[%s1619 + $0x98] sm:$0xf]
        %v1659 = vld [vmem:[%s1619 + $0x9c] sm:$0xf]
        %v1660 = vld [vmem:[%s1619 + $0xa0] sm:$0xf]
        %v1661 = vld [vmem:[%s1619 + $0xa4] sm:$0xf]
        %v1662 = vld [vmem:[%s1619 + $0xa8] sm:$0xf]
        %v1663 = vld [vmem:[%s1619 + $0xac] sm:$0xf]
        %v1664 = vld [vmem:[%s1619 + $0xb0] sm:$0xf]
        %v1665 = vld [vmem:[%s1619 + $0xb4] sm:$0xf]
        %v1666 = vld [vmem:[%s1619 + $0xb8] sm:$0xf]
        %v1667 = vld [vmem:[%s1619 + $0xbc] sm:$0xf]
        %v1716 = vunpack.c.l.b16 %v1620
        %v1717 = vunpack.c.l.b16 %v1621
        %v1718 = vunpack.c.l.b16 %v1622
        %v1719 = vunpack.c.l.b16 %v1623
        %v1720 = vunpack.c.l.b16 %v1624
        %v1721 = vunpack.c.l.b16 %v1625
        %v1722 = vunpack.c.l.b16 %v1626
        %v1723 = vunpack.c.l.b16 %v1627
        %v1724 = vunpack.c.l.b16 %v1628
        %v1725 = vunpack.c.l.b16 %v1629
        %v1726 = vunpack.c.l.b16 %v1630
        %v1727 = vunpack.c.l.b16 %v1631
        %v1728 = vunpack.c.l.b16 %v1632
        %v1729 = vunpack.c.l.b16 %v1633
        %v1730 = vunpack.c.l.b16 %v1634
        %v1731 = vunpack.c.l.b16 %v1635
        %v1732 = vunpack.c.l.b16 %v1636
        %v1733 = vunpack.c.l.b16 %v1637
        %v1734 = vunpack.c.l.b16 %v1638
        %v1735 = vunpack.c.l.b16 %v1639
        %v1736 = vunpack.c.l.b16 %v1640
        %v1737 = vunpack.c.l.b16 %v1641
        %v1738 = vunpack.c.l.b16 %v1642
        %v1739 = vunpack.c.l.b16 %v1643
        %v1740 = vunpack.c.l.b16 %v1644
        %v1741 = vunpack.c.l.b16 %v1645
        %v1742 = vunpack.c.l.b16 %v1646
        %v1743 = vunpack.c.l.b16 %v1647
        %v1744 = vunpack.c.l.b16 %v1648
        %v1745 = vunpack.c.l.b16 %v1649
        %v1746 = vunpack.c.l.b16 %v1650
        %v1747 = vunpack.c.l.b16 %v1651
        %v1748 = vunpack.c.l.b16 %v1652
        %v1749 = vunpack.c.l.b16 %v1653
        %v1750 = vunpack.c.l.b16 %v1654
        %v1751 = vunpack.c.l.b16 %v1655
        %v1752 = vunpack.c.l.b16 %v1656
        %v1753 = vunpack.c.l.b16 %v1657
        %v1754 = vunpack.c.l.b16 %v1658
        %v1755 = vunpack.c.l.b16 %v1659
        %v1756 = vunpack.c.l.b16 %v1660
        %v1757 = vunpack.c.l.b16 %v1661
        %v1758 = vunpack.c.l.b16 %v1662
        %v1759 = vunpack.c.l.b16 %v1663
        %v1760 = vunpack.c.l.b16 %v1664
        %v1761 = vunpack.c.l.b16 %v1665
        %v1762 = vunpack.c.l.b16 %v1666
        %v1763 = vunpack.c.l.b16 %v1667
        %v1764 = vpack.c.b16 %v1717, %v1716
        %v1765 = vpack.c.b16 %v1719, %v1718
        %v1766 = vpack.c.b16 %v1721, %v1720
        %v1767 = vpack.c.b16 %v1723, %v1722
        %v1768 = vpack.c.b16 %v1725, %v1724
        %v1769 = vpack.c.b16 %v1727, %v1726
        %v1770 = vpack.c.b16 %v1729, %v1728
        %v1771 = vpack.c.b16 %v1731, %v1730
        %v1772 = vpack.c.b16 %v1733, %v1732
        %v1773 = vpack.c.b16 %v1735, %v1734
        %v1774 = vpack.c.b16 %v1737, %v1736
        %v1775 = vpack.c.b16 %v1739, %v1738
        %v1776 = vpack.c.b16 %v1741, %v1740
        %v1777 = vpack.c.b16 %v1743, %v1742
        %v1778 = vpack.c.b16 %v1745, %v1744
        %v1779 = vpack.c.b16 %v1747, %v1746
        %v1780 = vpack.c.b16 %v1749, %v1748
        %v1781 = vpack.c.b16 %v1751, %v1750
        %v1782 = vpack.c.b16 %v1753, %v1752
        %v1783 = vpack.c.b16 %v1755, %v1754
        %v1784 = vpack.c.b16 %v1757, %v1756
        %v1785 = vpack.c.b16 %v1759, %v1758
        %v1786 = vpack.c.b16 %v1761, %v1760
        %v1787 = vpack.c.b16 %v1763, %v1762
        %1812 = vmatprep.subr.bf16.mxu0 0
        %1813 = vmatpush1.bf16.msra.mxu0 %v1764
        %1814 = vmatprep.subr.bf16.mxu0 0
        %1815 = vmatpush1.bf16.msra.mxu0 %v1765
        %1816 = vmatprep.subr.bf16.mxu0 0
        %1817 = vmatpush1.bf16.msra.mxu0 %v1766
        %1818 = vmatprep.subr.bf16.mxu0 0
        %1819 = vmatpush1.bf16.msra.mxu0 %v1767
        %1820 = vmatprep.subr.bf16.mxu0 0
        %1821 = vmatpush1.bf16.msra.mxu0 %v1768
        %1822 = vmatprep.subr.bf16.mxu0 0
        %1823 = vmatpush1.bf16.msra.mxu0 %v1769
        %1824 = vmatprep.subr.bf16.mxu0 0
        %1825 = vmatpush1.bf16.msra.mxu0 %v1770
        %1826 = vmatprep.subr.bf16.mxu0 0
        %1827 = vmatpush1.bf16.msra.mxu0 %v1771
        %1828 = vmatprep.subr.bf16.mxu0 0
        %1829 = vmatpush1.bf16.msra.mxu0 %v1772
        %1830 = vmatprep.subr.bf16.mxu0 0
        %1831 = vmatpush1.bf16.msra.mxu0 %v1773
        %1832 = vmatprep.subr.bf16.mxu0 0
        %1833 = vmatpush1.bf16.msra.mxu0 %v1774
        %1834 = vmatprep.subr.bf16.mxu0 0
        %1835 = vmatpush1.bf16.msra.mxu0 %v1775
        %1836 = vmatprep.subr.bf16.mxu0 0
        %1837 = vmatpush1.bf16.msra.mxu0 %v1776
        %1838 = vmatprep.subr.bf16.mxu0 0
        %1839 = vmatpush1.bf16.msra.mxu0 %v1777
        %1840 = vmatprep.subr.bf16.mxu0 0
        %1841 = vmatpush1.bf16.msra.mxu0 %v1778
        %1842 = vmatprep.subr.bf16.mxu0 0
        %1843 = vmatpush1.bf16.msra.mxu0 %v1779
        %1844 = vmatprep.mubr.bf16.mxu0 %v1018
        %1845 = vmatmul.mubr.bf16.gmra.mrb[0].mxu0 %v1006
        %v1846 = vpop.f32.mrb[0].mxu0
        %v1847 = vadd.f32 0.0, %v1846
        %v1848 = vpop.f32.mrb[0].mxu0
        %v1849 = vpop.f32.mrb[0].mxu0
        %v1850 = vadd.f32 0.0, %v1849
        %v1851 = vpop.f32.mrb[0].mxu0
        %1852 = vmatprep.mubr.bf16.mxu0 %v1054
        %1853 = vmatmul.mubr.bf16.gmra.mrb[0].mxu0 %v1042
        %v1854 = vpop.f32.mrb[0].mxu0
        %v1855 = vadd.f32 0.0, %v1854
        %v1856 = vpop.f32.mrb[0].mxu0
        %v1857 = vpop.f32.mrb[0].mxu0
        %v1858 = vadd.f32 0.0, %v1857
        %v1859 = vpop.f32.mrb[0].mxu0
        %1860 = vmatprep.mubr.bf16.mxu0 %v1090
        %1861 = vmatmul.mubr.bf16.gmra.mrb[0].mxu0 %v1078
        %v1862 = vpop.f32.mrb[0].mxu0
        %v1863 = vadd.f32 0.0, %v1862
        %v1864 = vpop.f32.mrb[0].mxu0
        %v1865 = vpop.f32.mrb[0].mxu0
        %v1866 = vadd.f32 0.0, %v1865
        %v1867 = vpop.f32.mrb[0].mxu0
        %1868 = vmatprep.mubr.bf16.mxu0 %v1126
        %1869 = vmatmul.mubr.bf16.gmra.mrb[0].mxu0 %v1114
        %v1870 = vpop.f32.mrb[0].mxu0
        %v1871 = vadd.f32 0.0, %v1870
        %v1872 = vpop.f32.mrb[0].mxu0
        %v1873 = vpop.f32.mrb[0].mxu0
        %v1874 = vadd.f32 0.0, %v1873
        %v1875 = vpop.f32.mrb[0].mxu0
        %1876 = vmatprep.mubr.bf16.mxu0 %v1162
        %1877 = vmatmul.mubr.bf16.gmra.mrb[0].mxu0 %v1150
        %v1878 = vpop.f32.mrb[0].mxu0
        %v1879 = vadd.f32 0.0, %v1878
        %v1880 = vpop.f32.mrb[0].mxu0
        %v1881 = vpop.f32.mrb[0].mxu0
        %v1882 = vadd.f32 0.0, %v1881
        %v1883 = vpop.f32.mrb[0].mxu0
        %1884 = vmatprep.mubr.bf16.mxu0 %v1198
        %1885 = vmatmul.mubr.bf16.gmra.mrb[0].mxu0 %v1186
        %v1886 = vpop.f32.mrb[0].mxu0
        %v1887 = vadd.f32 0.0, %v1886
        %v1888 = vpop.f32.mrb[0].mxu0
        %v1889 = vpop.f32.mrb[0].mxu0
        %v1890 = vadd.f32 0.0, %v1889
        %v1891 = vpop.f32.mrb[0].mxu0
        %1892 = vmatprep.mubr.bf16.mxu0 %v1234
        %1893 = vmatmul.mubr.bf16.gmra.mrb[0].mxu0 %v1222
        %v1894 = vpop.f32.mrb[0].mxu0
        %v1895 = vadd.f32 0.0, %v1894
        %v1896 = vpop.f32.mrb[0].mxu0
        %v1897 = vpop.f32.mrb[0].mxu0
        %v1898 = vadd.f32 0.0, %v1897
        %v1899 = vpop.f32.mrb[0].mxu0
        %1900 = vmatprep.mubr.bf16.mxu0 %v1270
        %1901 = vmatmul.mubr.bf16.gmra.mrb[0].mxu0 %v1258
        %v1902 = vpop.f32.mrb[0].mxu0
        %v1903 = vadd.f32 0.0, %v1902
        %v1904 = vpop.f32.mrb[0].mxu0
        %v1905 = vpop.f32.mrb[0].mxu0
        %v1906 = vadd.f32 0.0, %v1905
        %v1907 = vpop.f32.mrb[0].mxu0
        %1908 = vmatprep.mubr.bf16.mxu0 %v1306
        %1909 = vmatmul.mubr.bf16.gmra.mrb[0].mxu0 %v1294
        %v1910 = vpop.f32.mrb[0].mxu0
        %v1911 = vadd.f32 0.0, %v1910
        %v1912 = vpop.f32.mrb[0].mxu0
        %v1913 = vpop.f32.mrb[0].mxu0
        %v1914 = vadd.f32 0.0, %v1913
        %v1915 = vpop.f32.mrb[0].mxu0
        %1916 = vmatprep.mubr.bf16.mxu0 %v1342
        %1917 = vmatmul.mubr.bf16.gmra.mrb[0].mxu0 %v1330
        %v1918 = vpop.f32.mrb[0].mxu0
        %v1919 = vadd.f32 0.0, %v1918
        %v1920 = vpop.f32.mrb[0].mxu0
        %v1921 = vpop.f32.mrb[0].mxu0
        %v1922 = vadd.f32 0.0, %v1921
        %v1923 = vpop.f32.mrb[0].mxu0
        %1924 = vmatprep.mubr.bf16.mxu0 %v1378
        %1925 = vmatmul.mubr.bf16.gmra.mrb[0].mxu0 %v1366
        %v1926 = vpop.f32.mrb[0].mxu0
        %v1927 = vadd.f32 0.0, %v1926
        %v1928 = vpop.f32.mrb[0].mxu0
        %v1929 = vpop.f32.mrb[0].mxu0
        %v1930 = vadd.f32 0.0, %v1929
        %v1931 = vpop.f32.mrb[0].mxu0
        %1932 = vmatprep.mubr.bf16.mxu0 %v1414
        %1933 = vmatmul.mubr.bf16.gmra.mrb[0].mxu0 %v1402
        %v1934 = vpop.f32.mrb[0].mxu0
        %v1935 = vadd.f32 0.0, %v1934
        %v1936 = vpop.f32.mrb[0].mxu0
        %v1937 = vpop.f32.mrb[0].mxu0
        %v1938 = vadd.f32 0.0, %v1937
        %v1939 = vpop.f32.mrb[0].mxu0
        %1940 = vmatprep.mubr.bf16.mxu0 %v1450
        %1941 = vmatmul.mubr.bf16.gmra.mrb[0].mxu0 %v1438
        %v1942 = vpop.f32.mrb[0].mxu0
        %v1943 = vadd.f32 0.0, %v1942
        %v1944 = vpop.f32.mrb[0].mxu0
        %v1945 = vpop.f32.mrb[0].mxu0
        %v1946 = vadd.f32 0.0, %v1945
        %v1947 = vpop.f32.mrb[0].mxu0
        %1948 = vmatprep.mubr.bf16.mxu0 %v1486
        %1949 = vmatmul.mubr.bf16.gmra.mrb[0].mxu0 %v1474
        %v1950 = vpop.f32.mrb[0].mxu0
        %v1951 = vadd.f32 0.0, %v1950
        %v1952 = vpop.f32.mrb[0].mxu0
        %v1953 = vpop.f32.mrb[0].mxu0
        %v1954 = vadd.f32 0.0, %v1953
        %v1955 = vpop.f32.mrb[0].mxu0
        %1956 = vmatprep.mubr.bf16.mxu0 %v1522
        %1957 = vmatmul.mubr.bf16.gmra.mrb[0].mxu0 %v1510
        %v1958 = vpop.f32.mrb[0].mxu0
        %v1959 = vadd.f32 0.0, %v1958
        %v1960 = vpop.f32.mrb[0].mxu0
        %v1961 = vpop.f32.mrb[0].mxu0
        %v1962 = vadd.f32 0.0, %v1961
        %v1963 = vpop.f32.mrb[0].mxu0
        %1964 = vmatprep.mubr.bf16.mxu0 %v1558
        %1965 = vmatmul.mubr.bf16.gmra.mrb[0].mxu0 %v1546
        %v1966 = vpop.f32.mrb[0].mxu0
        %v1967 = vadd.f32 0.0, %v1966
        %v1968 = vpop.f32.mrb[0].mxu0
        %v1969 = vpop.f32.mrb[0].mxu0
        %v1970 = vadd.f32 0.0, %v1969
        %v1971 = vpop.f32.mrb[0].mxu0
        %1972 = vdwg.mxu0
        %1973 = vmatprep.subr.bf16.mxu0 0
        %1974 = vmatpush1.bf16.msra.mxu0 %v1780
        %1975 = vmatprep.subr.bf16.mxu0 0
        %1976 = vmatpush1.bf16.msra.mxu0 %v1781
        %1977 = vmatprep.subr.bf16.mxu0 0
        %1978 = vmatpush1.bf16.msra.mxu0 %v1782
        %1979 = vmatprep.subr.bf16.mxu0 0
        %1980 = vmatpush1.bf16.msra.mxu0 %v1783
        %1981 = vmatprep.subr.bf16.mxu0 0
        %1982 = vmatpush1.bf16.msra.mxu0 %v1784
        %1983 = vmatprep.subr.bf16.mxu0 0
        %1984 = vmatpush1.bf16.msra.mxu0 %v1785
        %1985 = vmatprep.subr.bf16.mxu0 0
        %1986 = vmatpush1.bf16.msra.mxu0 %v1786
        %1987 = vmatprep.subr.bf16.mxu0 0
        %1988 = vmatpush1.bf16.msra.mxu0 %v1787
        %1989 = vmatprep.subr.bf16.mxu0 0
        %1990 = vmatpush1.bf16.msra.mxu0 0
        %1991 = vmatprep.subr.bf16.mxu0 0
        %1992 = vmatpush1.bf16.msra.mxu0 0
        %1993 = vmatprep.subr.bf16.mxu0 0
        %1994 = vmatpush1.bf16.msra.mxu0 0
        %1995 = vmatprep.subr.bf16.mxu0 0
        %1996 = vmatpush1.bf16.msra.mxu0 0
        %1997 = vmatprep.subr.bf16.mxu0 0
        %1998 = vmatpush1.bf16.msra.mxu0 0
        %1999 = vmatprep.subr.bf16.mxu0 0
        %2000 = vmatpush1.bf16.msra.mxu0 0
        %2001 = vmatprep.subr.bf16.mxu0 0
        %2002 = vmatpush1.bf16.msra.mxu0 0
        %2003 = vmatprep.subr.bf16.mxu0 0
        %2004 = vmatpush1.bf16.msra.mxu0 0
        %2005 = vmatprep.mubr.bf16.mxu0 0
        %2006 = vmatmul.mubr.bf16.gmra.mrb[0].mxu0 %v1030
        %v2007 = vpop.f32.mrb[0].mxu0
        %v2008 = vadd.f32 %v1847, %v2007
        %v2009 = vpop.f32.mrb[0].mxu0
        %v2010 = vpop.f32.mrb[0].mxu0
        %v2011 = vadd.f32 %v1850, %v2010
        %v2012 = vpop.f32.mrb[0].mxu0
        %2013 = vmatprep.mubr.bf16.mxu0 0
        %2014 = vmatmul.mubr.bf16.gmra.mrb[0].mxu0 %v1066
        %v2015 = vpop.f32.mrb[0].mxu0
        %v2016 = vadd.f32 %v1855, %v2015
        %v2017 = vpop.f32.mrb[0].mxu0
        %v2018 = vpop.f32.mrb[0].mxu0
        %v2019 = vadd.f32 %v1858, %v2018
        %v2020 = vpop.f32.mrb[0].mxu0
        %2021 = vmatprep.mubr.bf16.mxu0 0
        %2022 = vmatmul.mubr.bf16.gmra.mrb[0].mxu0 %v1102
        %v2023 = vpop.f32.mrb[0].mxu0
        %v2024 = vadd.f32 %v1863, %v2023
        %v2025 = vpop.f32.mrb[0].mxu0
        %v2026 = vpop.f32.mrb[0].mxu0
        %v2027 = vadd.f32 %v1866, %v2026
        %v2028 = vpop.f32.mrb[0].mxu0
        %2029 = vmatprep.mubr.bf16.mxu0 0
        %2030 = vmatmul.mubr.bf16.gmra.mrb[0].mxu0 %v1138
        %v2031 = vpop.f32.mrb[0].mxu0
        %v2032 = vadd.f32 %v1871, %v2031
        %v2033 = vpop.f32.mrb[0].mxu0
        %v2034 = vpop.f32.mrb[0].mxu0
        %v2035 = vadd.f32 %v1874, %v2034
        %v2036 = vpop.f32.mrb[0].mxu0
        %2037 = vmatprep.mubr.bf16.mxu0 0
        %2038 = vmatmul.mubr.bf16.gmra.mrb[0].mxu0 %v1174
        %v2039 = vpop.f32.mrb[0].mxu0
        %v2040 = vadd.f32 %v1879, %v2039
        %v2041 = vpop.f32.mrb[0].mxu0
        %v2042 = vpop.f32.mrb[0].mxu0
        %v2043 = vadd.f32 %v1882, %v2042
        %v2044 = vpop.f32.mrb[0].mxu0
        %2045 = vmatprep.mubr.bf16.mxu0 0
        %2046 = vmatmul.mubr.bf16.gmra.mrb[0].mxu0 %v1210
        %v2047 = vpop.f32.mrb[0].mxu0
        %v2048 = vadd.f32 %v1887, %v2047
        %v2049 = vpop.f32.mrb[0].mxu0
        %v2050 = vpop.f32.mrb[0].mxu0
        %v2051 = vadd.f32 %v1890, %v2050
        %v2052 = vpop.f32.mrb[0].mxu0
        %2053 = vmatprep.mubr.bf16.mxu0 0
        %2054 = vmatmul.mubr.bf16.gmra.mrb[0].mxu0 %v1246
        %v2055 = vpop.f32.mrb[0].mxu0
        %v2056 = vadd.f32 %v1895, %v2055
        %v2057 = vpop.f32.mrb[0].mxu0
        %v2058 = vpop.f32.mrb[0].mxu0
        %v2059 = vadd.f32 %v1898, %v2058
        %v2060 = vpop.f32.mrb[0].mxu0
        %2061 = vmatprep.mubr.bf16.mxu0 0
        %2062 = vmatmul.mubr.bf16.gmra.mrb[0].mxu0 %v1282
        %v2063 = vpop.f32.mrb[0].mxu0
        %v2064 = vadd.f32 %v1903, %v2063
        %v2065 = vpop.f32.mrb[0].mxu0
        %v2066 = vpop.f32.mrb[0].mxu0
        %v2067 = vadd.f32 %v1906, %v2066
        %v2068 = vpop.f32.mrb[0].mxu0
        %2069 = vmatprep.mubr.bf16.mxu0 0
        %2070 = vmatmul.mubr.bf16.gmra.mrb[0].mxu0 %v1318
        %v2071 = vpop.f32.mrb[0].mxu0
        %v2072 = vadd.f32 %v1911, %v2071
        %v2073 = vpop.f32.mrb[0].mxu0
        %v2074 = vpop.f32.mrb[0].mxu0
        %v2075 = vadd.f32 %v1914, %v2074
        %v2076 = vpop.f32.mrb[0].mxu0
        %2077 = vmatprep.mubr.bf16.mxu0 0
        %2078 = vmatmul.mubr.bf16.gmra.mrb[0].mxu0 %v1354
        %v2079 = vpop.f32.mrb[0].mxu0
        %v2080 = vadd.f32 %v1919, %v2079
        %v2081 = vpop.f32.mrb[0].mxu0
        %v2082 = vpop.f32.mrb[0].mxu0
        %v2083 = vadd.f32 %v1922, %v2082
        %v2084 = vpop.f32.mrb[0].mxu0
        %2085 = vmatprep.mubr.bf16.mxu0 0
        %2086 = vmatmul.mubr.bf16.gmra.mrb[0].mxu0 %v1390
        %v2087 = vpop.f32.mrb[0].mxu0
        %v2088 = vadd.f32 %v1927, %v2087
        %v2089 = vpop.f32.mrb[0].mxu0
        %v2090 = vpop.f32.mrb[0].mxu0
        %v2091 = vadd.f32 %v1930, %v2090
        %v2092 = vpop.f32.mrb[0].mxu0
        %2093 = vmatprep.mubr.bf16.mxu0 0
        %2094 = vmatmul.mubr.bf16.gmra.mrb[0].mxu0 %v1426
        %v2095 = vpop.f32.mrb[0].mxu0
        %v2096 = vadd.f32 %v1935, %v2095
        %v2097 = vpop.f32.mrb[0].mxu0
        %v2098 = vpop.f32.mrb[0].mxu0
        %v2099 = vadd.f32 %v1938, %v2098
        %v2100 = vpop.f32.mrb[0].mxu0
        %2101 = vmatprep.mubr.bf16.mxu0 0
        %2102 = vmatmul.mubr.bf16.gmra.mrb[0].mxu0 %v1462
        %v2103 = vpop.f32.mrb[0].mxu0
        %v2104 = vadd.f32 %v1943, %v2103
        %v2105 = vpop.f32.mrb[0].mxu0
        %v2106 = vpop.f32.mrb[0].mxu0
        %v2107 = vadd.f32 %v1946, %v2106
        %v2108 = vpop.f32.mrb[0].mxu0
        %2109 = vmatprep.mubr.bf16.mxu0 0
        %2110 = vmatmul.mubr.bf16.gmra.mrb[0].mxu0 %v1498
        %v2111 = vpop.f32.mrb[0].mxu0
        %v2112 = vadd.f32 %v1951, %v2111
        %v2113 = vpop.f32.mrb[0].mxu0
        %v2114 = vpop.f32.mrb[0].mxu0
        %v2115 = vadd.f32 %v1954, %v2114
        %v2116 = vpop.f32.mrb[0].mxu0
        %2117 = vmatprep.mubr.bf16.mxu0 0
        %2118 = vmatmul.mubr.bf16.gmra.mrb[0].mxu0 %v1534
        %v2119 = vpop.f32.mrb[0].mxu0
        %v2120 = vadd.f32 %v1959, %v2119
        %v2121 = vpop.f32.mrb[0].mxu0
        %v2122 = vpop.f32.mrb[0].mxu0
        %v2123 = vadd.f32 %v1962, %v2122
        %v2124 = vpop.f32.mrb[0].mxu0
        %2125 = vmatprep.mubr.bf16.mxu0 0
        %2126 = vmatmul.mubr.bf16.gmra.mrb[0].mxu0 %v1570
        %v2127 = vpop.f32.mrb[0].mxu0
        %v2128 = vadd.f32 %v1967, %v2127
        %v2129 = vpop.f32.mrb[0].mxu0
        %v2130 = vpop.f32.mrb[0].mxu0
        %v2131 = vadd.f32 %v1970, %v2130
        %v2132 = vpop.f32.mrb[0].mxu0
        %2133 = vdwg.mxu0
        %v2182 = vunpack.c.l.b16 %v754
        %v2183 = vunpack.c.l.b16 %v755
        %v2184 = vunpack.c.l.b16 %v756
        %v2185 = vunpack.c.l.b16 %v757
        %v2186 = vunpack.c.l.b16 %v758
        %v2187 = vunpack.c.l.b16 %v759
        %v2188 = vunpack.c.l.b16 %v760
        %v2189 = vunpack.c.l.b16 %v761
        %v2190 = vunpack.c.l.b16 %v762
        %v2191 = vunpack.c.l.b16 %v763
        %v2192 = vunpack.c.l.b16 %v764
        %v2193 = vunpack.c.l.b16 %v765
        %v2194 = vunpack.c.l.b16 %v766
        %v2195 = vunpack.c.l.b16 %v767
        %v2196 = vunpack.c.l.b16 %v768
        %v2197 = vunpack.c.l.b16 %v769
        %v2198 = vunpack.c.l.b16 %v770
        %v2199 = vunpack.c.l.b16 %v771
        %v2200 = vunpack.c.l.b16 %v772
        %v2201 = vunpack.c.l.b16 %v773
        %v2202 = vunpack.c.l.b16 %v774
        %v2203 = vunpack.c.l.b16 %v775
        %v2204 = vunpack.c.l.b16 %v776
        %v2205 = vunpack.c.l.b16 %v777
        %v2206 = vunpack.c.l.b16 %v778
        %v2207 = vunpack.c.l.b16 %v779
        %v2208 = vunpack.c.l.b16 %v780
        %v2209 = vunpack.c.l.b16 %v781
        %v2210 = vunpack.c.l.b16 %v782
        %v2211 = vunpack.c.l.b16 %v783
        %v2212 = vunpack.c.l.b16 %v784
        %v2213 = vunpack.c.l.b16 %v785
        %v2214 = vunpack.c.l.b16 %v786
        %v2215 = vunpack.c.l.b16 %v787
        %v2216 = vunpack.c.l.b16 %v788
        %v2217 = vunpack.c.l.b16 %v789
        %v2218 = vunpack.c.l.b16 %v790
        %v2219 = vunpack.c.l.b16 %v791
        %v2220 = vunpack.c.l.b16 %v792
        %v2221 = vunpack.c.l.b16 %v793
        %v2222 = vunpack.c.l.b16 %v794
        %v2223 = vunpack.c.l.b16 %v795
        %v2224 = vunpack.c.l.b16 %v796
        %v2225 = vunpack.c.l.b16 %v797
        %v2226 = vunpack.c.l.b16 %v798
        %v2227 = vunpack.c.l.b16 %v799
        %v2228 = vunpack.c.l.b16 %v800
        %v2229 = vunpack.c.l.b16 %v801
        %v2230 = vpack.c.b16 %v2183, %v2182
        %v2231 = vpack.c.b16 %v2185, %v2184
        %v2232 = vpack.c.b16 %v2187, %v2186
        %v2233 = vpack.c.b16 %v2189, %v2188
        %v2234 = vpack.c.b16 %v2191, %v2190
        %v2235 = vpack.c.b16 %v2193, %v2192
        %v2236 = vpack.c.b16 %v2195, %v2194
        %v2237 = vpack.c.b16 %v2197, %v2196
        %v2238 = vpack.c.b16 %v2199, %v2198
        %v2239 = vpack.c.b16 %v2201, %v2200
        %v2240 = vpack.c.b16 %v2203, %v2202
        %v2241 = vpack.c.b16 %v2205, %v2204
        %v2242 = vpack.c.b16 %v2207, %v2206
        %v2243 = vpack.c.b16 %v2209, %v2208
        %v2244 = vpack.c.b16 %v2211, %v2210
        %v2245 = vpack.c.b16 %v2213, %v2212
        %v2246 = vpack.c.b16 %v2215, %v2214
        %v2247 = vpack.c.b16 %v2217, %v2216
        %v2248 = vpack.c.b16 %v2219, %v2218
        %v2249 = vpack.c.b16 %v2221, %v2220
        %v2250 = vpack.c.b16 %v2223, %v2222
        %v2251 = vpack.c.b16 %v2225, %v2224
        %v2252 = vpack.c.b16 %v2227, %v2226
        %v2253 = vpack.c.b16 %v2229, %v2228
        %2278 = vmatprep.subr.bf16.mxu0 0
        %2279 = vmatpush1.bf16.msra.mxu0 %v2230
        %2280 = vmatprep.subr.bf16.mxu0 0
        %2281 = vmatpush1.bf16.msra.mxu0 %v2231
        %2282 = vmatprep.subr.bf16.mxu0 0
        %2283 = vmatpush1.bf16.msra.mxu0 %v2232
        %2284 = vmatprep.subr.bf16.mxu0 0
        %2285 = vmatpush1.bf16.msra.mxu0 %v2233
        %2286 = vmatprep.subr.bf16.mxu0 0
        %2287 = vmatpush1.bf16.msra.mxu0 %v2234
        %2288 = vmatprep.subr.bf16.mxu0 0
        %2289 = vmatpush1.bf16.msra.mxu0 %v2235
        %2290 = vmatprep.subr.bf16.mxu0 0
        %2291 = vmatpush1.bf16.msra.mxu0 %v2236
        %2292 = vmatprep.subr.bf16.mxu0 0
        %2293 = vmatpush1.bf16.msra.mxu0 %v2237
        %2294 = vmatprep.subr.bf16.mxu0 0
        %2295 = vmatpush1.bf16.msra.mxu0 %v2238
        %2296 = vmatprep.subr.bf16.mxu0 0
        %2297 = vmatpush1.bf16.msra.mxu0 %v2239
        %2298 = vmatprep.subr.bf16.mxu0 0
        %2299 = vmatpush1.bf16.msra.mxu0 %v2240
        %2300 = vmatprep.subr.bf16.mxu0 0
        %2301 = vmatpush1.bf16.msra.mxu0 %v2241
        %2302 = vmatprep.subr.bf16.mxu0 0
        %2303 = vmatpush1.bf16.msra.mxu0 %v2242
        %2304 = vmatprep.subr.bf16.mxu0 0
        %2305 = vmatpush1.bf16.msra.mxu0 %v2243
        %2306 = vmatprep.subr.bf16.mxu0 0
        %2307 = vmatpush1.bf16.msra.mxu0 %v2244
        %2308 = vmatprep.subr.bf16.mxu0 0
        %2309 = vmatpush1.bf16.msra.mxu0 %v2245
        %2310 = vmatprep.mubr.bf16.mxu0 %v626
        %2311 = vmatmul.mubr.bf16.gmra.mrb[0].mxu0 %v530
        %v2312 = vpop.f32.mrb[0].mxu0
        %v2313 = vadd.f32 %v2008, %v2312
        %v2314 = vpop.f32.mrb[0].mxu0
        %v2315 = vpop.f32.mrb[0].mxu0
        %v2316 = vadd.f32 %v2011, %v2315
        %v2317 = vpop.f32.mrb[0].mxu0
        %2318 = vmatprep.mubr.bf16.mxu0 %v627
        %2319 = vmatmul.mubr.bf16.gmra.mrb[0].mxu0 %v531
        %v2320 = vpop.f32.mrb[0].mxu0
        %v2321 = vadd.f32 %v2016, %v2320
        %v2322 = vpop.f32.mrb[0].mxu0
        %v2323 = vpop.f32.mrb[0].mxu0
        %v2324 = vadd.f32 %v2019, %v2323
        %v2325 = vpop.f32.mrb[0].mxu0
        %2326 = vmatprep.mubr.bf16.mxu0 %v628
        %2327 = vmatmul.mubr.bf16.gmra.mrb[0].mxu0 %v532
        %v2328 = vpop.f32.mrb[0].mxu0
        %v2329 = vadd.f32 %v2024, %v2328
        %v2330 = vpop.f32.mrb[0].mxu0
        %v2331 = vpop.f32.mrb[0].mxu0
        %v2332 = vadd.f32 %v2027, %v2331
        %v2333 = vpop.f32.mrb[0].mxu0
        %2334 = vmatprep.mubr.bf16.mxu0 %v629
        %2335 = vmatmul.mubr.bf16.gmra.mrb[0].mxu0 %v533
        %v2336 = vpop.f32.mrb[0].mxu0
        %v2337 = vadd.f32 %v2032, %v2336
        %v2338 = vpop.f32.mrb[0].mxu0
        %v2339 = vpop.f32.mrb[0].mxu0
        %v2340 = vadd.f32 %v2035, %v2339
        %v2341 = vpop.f32.mrb[0].mxu0
        %2342 = vmatprep.mubr.bf16.mxu0 %v630
        %2343 = vmatmul.mubr.bf16.gmra.mrb[0].mxu0 %v534
        %v2344 = vpop.f32.mrb[0].mxu0
        %v2345 = vadd.f32 %v2040, %v2344
        %v2346 = vpop.f32.mrb[0].mxu0
        %v2347 = vpop.f32.mrb[0].mxu0
        %v2348 = vadd.f32 %v2043, %v2347
        %v2349 = vpop.f32.mrb[0].mxu0
        %2350 = vmatprep.mubr.bf16.mxu0 %v631
        %2351 = vmatmul.mubr.bf16.gmra.mrb[0].mxu0 %v535
        %v2352 = vpop.f32.mrb[0].mxu0
        %v2353 = vadd.f32 %v2048, %v2352
        %v2354 = vpop.f32.mrb[0].mxu0
        %v2355 = vpop.f32.mrb[0].mxu0
        %v2356 = vadd.f32 %v2051, %v2355
        %v2357 = vpop.f32.mrb[0].mxu0
        %2358 = vmatprep.mubr.bf16.mxu0 %v632
        %2359 = vmatmul.mubr.bf16.gmra.mrb[0].mxu0 %v536
        %v2360 = vpop.f32.mrb[0].mxu0
        %v2361 = vadd.f32 %v2056, %v2360
        %v2362 = vpop.f32.mrb[0].mxu0
        %v2363 = vpop.f32.mrb[0].mxu0
        %v2364 = vadd.f32 %v2059, %v2363
        %v2365 = vpop.f32.mrb[0].mxu0
        %2366 = vmatprep.mubr.bf16.mxu0 %v633
        %2367 = vmatmul.mubr.bf16.gmra.mrb[0].mxu0 %v537
        %v2368 = vpop.f32.mrb[0].mxu0
        %v2369 = vadd.f32 %v2064, %v2368
        %v2370 = vpop.f32.mrb[0].mxu0
        %v2371 = vpop.f32.mrb[0].mxu0
        %v2372 = vadd.f32 %v2067, %v2371
        %v2373 = vpop.f32.mrb[0].mxu0
        %2374 = vmatprep.mubr.bf16.mxu0 %v634
        %2375 = vmatmul.mubr.bf16.gmra.mrb[0].mxu0 %v538
        %v2376 = vpop.f32.mrb[0].mxu0
        %v2377 = vadd.f32 %v2072, %v2376
        %v2378 = vpop.f32.mrb[0].mxu0
        %v2379 = vpop.f32.mrb[0].mxu0
        %v2380 = vadd.f32 %v2075, %v2379
        %v2381 = vpop.f32.mrb[0].mxu0
        %2382 = vmatprep.mubr.bf16.mxu0 %v635
        %2383 = vmatmul.mubr.bf16.gmra.mrb[0].mxu0 %v539
        %v2384 = vpop.f32.mrb[0].mxu0
        %v2385 = vadd.f32 %v2080, %v2384
        %v2386 = vpop.f32.mrb[0].mxu0
        %v2387 = vpop.f32.mrb[0].mxu0
        %v2388 = vadd.f32 %v2083, %v2387
        %v2389 = vpop.f32.mrb[0].mxu0
        %2390 = vmatprep.mubr.bf16.mxu0 %v636
        %2391 = vmatmul.mubr.bf16.gmra.mrb[0].mxu0 %v540
        %v2392 = vpop.f32.mrb[0].mxu0
        %v2393 = vadd.f32 %v2088, %v2392
        %v2394 = vpop.f32.mrb[0].mxu0
        %v2395 = vpop.f32.mrb[0].mxu0
        %v2396 = vadd.f32 %v2091, %v2395
        %v2397 = vpop.f32.mrb[0].mxu0
        %2398 = vmatprep.mubr.bf16.mxu0 %v637
        %2399 = vmatmul.mubr.bf16.gmra.mrb[0].mxu0 %v541
        %v2400 = vpop.f32.mrb[0].mxu0
        %v2401 = vadd.f32 %v2096, %v2400
        %v2402 = vpop.f32.mrb[0].mxu0
        %v2403 = vpop.f32.mrb[0].mxu0
        %v2404 = vadd.f32 %v2099, %v2403
        %v2405 = vpop.f32.mrb[0].mxu0
        %2406 = vmatprep.mubr.bf16.mxu0 %v638
        %2407 = vmatmul.mubr.bf16.gmra.mrb[0].mxu0 %v542
        %v2408 = vpop.f32.mrb[0].mxu0
        %v2409 = vadd.f32 %v2104, %v2408
        %v2410 = vpop.f32.mrb[0].mxu0
        %v2411 = vpop.f32.mrb[0].mxu0
        %v2412 = vadd.f32 %v2107, %v2411
        %v2413 = vpop.f32.mrb[0].mxu0
        %2414 = vmatprep.mubr.bf16.mxu0 %v639
        %2415 = vmatmul.mubr.bf16.gmra.mrb[0].mxu0 %v543
        %v2416 = vpop.f32.mrb[0].mxu0
        %v2417 = vadd.f32 %v2112, %v2416
        %v2418 = vpop.f32.mrb[0].mxu0
        %v2419 = vpop.f32.mrb[0].mxu0
        %v2420 = vadd.f32 %v2115, %v2419
        %v2421 = vpop.f32.mrb[0].mxu0
        %2422 = vmatprep.mubr.bf16.mxu0 %v640
        %2423 = vmatmul.mubr.bf16.gmra.mrb[0].mxu0 %v544
        %v2424 = vpop.f32.mrb[0].mxu0
        %v2425 = vadd.f32 %v2120, %v2424
        %v2426 = vpop.f32.mrb[0].mxu0
        %v2427 = vpop.f32.mrb[0].mxu0
        %v2428 = vadd.f32 %v2123, %v2427
        %v2429 = vpop.f32.mrb[0].mxu0
        %2430 = vmatprep.mubr.bf16.mxu0 %v641
        %2431 = vmatmul.mubr.bf16.gmra.mrb[0].mxu0 %v545
        %v2432 = vpop.f32.mrb[0].mxu0
        %v2433 = vadd.f32 %v2128, %v2432
        %v2434 = vpop.f32.mrb[0].mxu0
        %v2435 = vpop.f32.mrb[0].mxu0
        %v2436 = vadd.f32 %v2131, %v2435
        %v2437 = vpop.f32.mrb[0].mxu0
        %2438 = vdwg.mxu0
        %2439 = vmatprep.subr.bf16.mxu0 0
        %2440 = vmatpush1.bf16.msra.mxu0 %v2246
        %2441 = vmatprep.subr.bf16.mxu0 0
        %2442 = vmatpush1.bf16.msra.mxu0 %v2247
        %2443 = vmatprep.subr.bf16.mxu0 0
        %2444 = vmatpush1.bf16.msra.mxu0 %v2248
        %2445 = vmatprep.subr.bf16.mxu0 0
        %2446 = vmatpush1.bf16.msra.mxu0 %v2249
        %2447 = vmatprep.subr.bf16.mxu0 0
        %2448 = vmatpush1.bf16.msra.mxu0 %v2250
        %2449 = vmatprep.subr.bf16.mxu0 0
        %2450 = vmatpush1.bf16.msra.mxu0 %v2251
        %2451 = vmatprep.subr.bf16.mxu0 0
        %2452 = vmatpush1.bf16.msra.mxu0 %v2252
        %2453 = vmatprep.subr.bf16.mxu0 0
        %2454 = vmatpush1.bf16.msra.mxu0 %v2253
        %2455 = vmatprep.subr.bf16.mxu0 0
        %2456 = vmatpush1.bf16.msra.mxu0 0
        %2457 = vmatprep.subr.bf16.mxu0 0
        %2458 = vmatpush1.bf16.msra.mxu0 0
        %2459 = vmatprep.subr.bf16.mxu0 0
        %2460 = vmatpush1.bf16.msra.mxu0 0
        %2461 = vmatprep.subr.bf16.mxu0 0
        %2462 = vmatpush1.bf16.msra.mxu0 0
        %2463 = vmatprep.subr.bf16.mxu0 0
        %2464 = vmatpush1.bf16.msra.mxu0 0
        %2465 = vmatprep.subr.bf16.mxu0 0
        %2466 = vmatpush1.bf16.msra.mxu0 0
        %2467 = vmatprep.subr.bf16.mxu0 0
        %2468 = vmatpush1.bf16.msra.mxu0 0
        %2469 = vmatprep.subr.bf16.mxu0 0
        %2470 = vmatpush1.bf16.msra.mxu0 0
        %2471 = vmatprep.mubr.bf16.mxu0 0
        %2472 = vmatmul.mubr.bf16.gmra.mrb[0].mxu0 %v722
        %v2473 = vpop.f32.mrb[0].mxu0
        %v2474 = vadd.f32 %v2313, %v2473
        %v2475 = vpop.f32.mrb[0].mxu0
        %v2476 = vpop.f32.mrb[0].mxu0
        %v2477 = vadd.f32 %v2316, %v2476
        %v2478 = vpop.f32.mrb[0].mxu0
        %2479 = vmatprep.mubr.bf16.mxu0 0
        %2480 = vmatmul.mubr.bf16.gmra.mrb[0].mxu0 %v723
        %v2481 = vpop.f32.mrb[0].mxu0
        %v2482 = vadd.f32 %v2321, %v2481
        %v2483 = vpop.f32.mrb[0].mxu0
        %v2484 = vpop.f32.mrb[0].mxu0
        %v2485 = vadd.f32 %v2324, %v2484
        %v2486 = vpop.f32.mrb[0].mxu0
        %2487 = vmatprep.mubr.bf16.mxu0 0
        %2488 = vmatmul.mubr.bf16.gmra.mrb[0].mxu0 %v724
        %v2489 = vpop.f32.mrb[0].mxu0
        %v2490 = vadd.f32 %v2329, %v2489
        %v2491 = vpop.f32.mrb[0].mxu0
        %v2492 = vpop.f32.mrb[0].mxu0
        %v2493 = vadd.f32 %v2332, %v2492
        %v2494 = vpop.f32.mrb[0].mxu0
        %2495 = vmatprep.mubr.bf16.mxu0 0
        %2496 = vmatmul.mubr.bf16.gmra.mrb[0].mxu0 %v725
        %v2497 = vpop.f32.mrb[0].mxu0
        %v2498 = vadd.f32 %v2337, %v2497
        %v2499 = vpop.f32.mrb[0].mxu0
        %v2500 = vpop.f32.mrb[0].mxu0
        %v2501 = vadd.f32 %v2340, %v2500
        %v2502 = vpop.f32.mrb[0].mxu0
        %2503 = vmatprep.mubr.bf16.mxu0 0
        %2504 = vmatmul.mubr.bf16.gmra.mrb[0].mxu0 %v726
        %v2505 = vpop.f32.mrb[0].mxu0
        %v2506 = vadd.f32 %v2345, %v2505
        %v2507 = vpop.f32.mrb[0].mxu0
        %v2508 = vpop.f32.mrb[0].mxu0
        %v2509 = vadd.f32 %v2348, %v2508
        %v2510 = vpop.f32.mrb[0].mxu0
        %2511 = vmatprep.mubr.bf16.mxu0 0
        %2512 = vmatmul.mubr.bf16.gmra.mrb[0].mxu0 %v727
        %v2513 = vpop.f32.mrb[0].mxu0
        %v2514 = vadd.f32 %v2353, %v2513
        %v2515 = vpop.f32.mrb[0].mxu0
        %v2516 = vpop.f32.mrb[0].mxu0
        %v2517 = vadd.f32 %v2356, %v2516
        %v2518 = vpop.f32.mrb[0].mxu0
        %2519 = vmatprep.mubr.bf16.mxu0 0
        %2520 = vmatmul.mubr.bf16.gmra.mrb[0].mxu0 %v728
        %v2521 = vpop.f32.mrb[0].mxu0
        %v2522 = vadd.f32 %v2361, %v2521
        %v2523 = vpop.f32.mrb[0].mxu0
        %v2524 = vpop.f32.mrb[0].mxu0
        %v2525 = vadd.f32 %v2364, %v2524
        %v2526 = vpop.f32.mrb[0].mxu0
        %2527 = vmatprep.mubr.bf16.mxu0 0
        %2528 = vmatmul.mubr.bf16.gmra.mrb[0].mxu0 %v729
        %v2529 = vpop.f32.mrb[0].mxu0
        %v2530 = vadd.f32 %v2369, %v2529
        %v2531 = vpop.f32.mrb[0].mxu0
        %v2532 = vpop.f32.mrb[0].mxu0
        %v2533 = vadd.f32 %v2372, %v2532
        %v2534 = vpop.f32.mrb[0].mxu0
        %2535 = vmatprep.mubr.bf16.mxu0 0
        %2536 = vmatmul.mubr.bf16.gmra.mrb[0].mxu0 %v730
        %v2537 = vpop.f32.mrb[0].mxu0
        %v2538 = vadd.f32 %v2377, %v2537
        %v2539 = vpop.f32.mrb[0].mxu0
        %v2540 = vpop.f32.mrb[0].mxu0
        %v2541 = vadd.f32 %v2380, %v2540
        %v2542 = vpop.f32.mrb[0].mxu0
        %2543 = vmatprep.mubr.bf16.mxu0 0
        %2544 = vmatmul.mubr.bf16.gmra.mrb[0].mxu0 %v731
        %v2545 = vpop.f32.mrb[0].mxu0
        %v2546 = vadd.f32 %v2385, %v2545
        %v2547 = vpop.f32.mrb[0].mxu0
        %v2548 = vpop.f32.mrb[0].mxu0
        %v2549 = vadd.f32 %v2388, %v2548
        %v2550 = vpop.f32.mrb[0].mxu0
        %2551 = vmatprep.mubr.bf16.mxu0 0
        %2552 = vmatmul.mubr.bf16.gmra.mrb[0].mxu0 %v732
        %v2553 = vpop.f32.mrb[0].mxu0
        %v2554 = vadd.f32 %v2393, %v2553
        %v2555 = vpop.f32.mrb[0].mxu0
        %v2556 = vpop.f32.mrb[0].mxu0
        %v2557 = vadd.f32 %v2396, %v2556
        %v2558 = vpop.f32.mrb[0].mxu0
        %2559 = vmatprep.mubr.bf16.mxu0 0
        %2560 = vmatmul.mubr.bf16.gmra.mrb[0].mxu0 %v733
        %v2561 = vpop.f32.mrb[0].mxu0
        %v2562 = vadd.f32 %v2401, %v2561
        %v2563 = vpop.f32.mrb[0].mxu0
        %v2564 = vpop.f32.mrb[0].mxu0
        %v2565 = vadd.f32 %v2404, %v2564
        %v2566 = vpop.f32.mrb[0].mxu0
        %2567 = vmatprep.mubr.bf16.mxu0 0
        %2568 = vmatmul.mubr.bf16.gmra.mrb[0].mxu0 %v734
        %v2569 = vpop.f32.mrb[0].mxu0
        %v2570 = vadd.f32 %v2409, %v2569
        %v2571 = vpop.f32.mrb[0].mxu0
        %v2572 = vpop.f32.mrb[0].mxu0
        %v2573 = vadd.f32 %v2412, %v2572
        %v2574 = vpop.f32.mrb[0].mxu0
        %2575 = vmatprep.mubr.bf16.mxu0 0
        %2576 = vmatmul.mubr.bf16.gmra.mrb[0].mxu0 %v735
        %v2577 = vpop.f32.mrb[0].mxu0
        %v2578 = vadd.f32 %v2417, %v2577
        %v2579 = vpop.f32.mrb[0].mxu0
        %v2580 = vpop.f32.mrb[0].mxu0
        %v2581 = vadd.f32 %v2420, %v2580
        %v2582 = vpop.f32.mrb[0].mxu0
        %2583 = vmatprep.mubr.bf16.mxu0 0
        %2584 = vmatmul.mubr.bf16.gmra.mrb[0].mxu0 %v736
        %v2585 = vpop.f32.mrb[0].mxu0
        %v2586 = vadd.f32 %v2425, %v2585
        %v2587 = vpop.f32.mrb[0].mxu0
        %v2588 = vpop.f32.mrb[0].mxu0
        %v2589 = vadd.f32 %v2428, %v2588
        %v2590 = vpop.f32.mrb[0].mxu0
        %2591 = vmatprep.mubr.bf16.mxu0 0
        %2592 = vmatmul.mubr.bf16.gmra.mrb[0].mxu0 %v737
        %v2593 = vpop.f32.mrb[0].mxu0
        %v2594 = vadd.f32 %v2433, %v2593
        %v2595 = vpop.f32.mrb[0].mxu0
        %v2596 = vpop.f32.mrb[0].mxu0
        %v2597 = vadd.f32 %v2436, %v2596
        %v2598 = vpop.f32.mrb[0].mxu0
        %2599 = vdwg.mxu0
        %v2600 = vld [vmem:[%s237] sm:$0xe]
        %v2601 = vld [vmem:[%s237 + $0xc] sm:$0xe]
        %v2602 = vld [vmem:[%s237 + $0x18] sm:$0xe]
        %v2603 = vld [vmem:[%s237 + $0x24] sm:$0xe]
        %v2604 = vld [vmem:[%s237 + $0x30] sm:$0xe]
        %v2605 = vld [vmem:[%s237 + $0x3c] sm:$0xe]
        %v2606 = vld [vmem:[%s237 + $0x48] sm:$0xe]
        %v2607 = vld [vmem:[%s237 + $0x54] sm:$0xe]
        %v2608 = vld [vmem:[%s237 + $0x60] sm:$0xe]
        %v2609 = vld [vmem:[%s237 + $0x6c] sm:$0xe]
        %v2610 = vld [vmem:[%s237 + $0x78] sm:$0xe]
        %v2611 = vld [vmem:[%s237 + $0x84] sm:$0xe]
        %v2612 = vld [vmem:[%s237 + $0x90] sm:$0xe]
        %v2613 = vld [vmem:[%s237 + $0x9c] sm:$0xe]
        %v2614 = vld [vmem:[%s237 + $0xa8] sm:$0xe]
        %v2615 = vld [vmem:[%s237 + $0xb4] sm:$0xe]
        %v2616 = vld [vmem:[%s400] sm:$0xe]
        %v2617 = vld [vmem:[%s400 + $0xc] sm:$0xe]
        %v2618 = vld [vmem:[%s400 + $0x18] sm:$0xe]
        %v2619 = vld [vmem:[%s400 + $0x24] sm:$0xe]
        %v2620 = vld [vmem:[%s400 + $0x30] sm:$0xe]
        %v2621 = vld [vmem:[%s400 + $0x3c] sm:$0xe]
        %v2622 = vld [vmem:[%s400 + $0x48] sm:$0xe]
        %v2623 = vld [vmem:[%s400 + $0x54] sm:$0xe]
        %v2624 = vld [vmem:[%s400 + $0x60] sm:$0xe]
        %v2625 = vld [vmem:[%s400 + $0x6c] sm:$0xe]
        %v2626 = vld [vmem:[%s400 + $0x78] sm:$0xe]
        %v2627 = vld [vmem:[%s400 + $0x84] sm:$0xe]
        %v2628 = vld [vmem:[%s400 + $0x90] sm:$0xe]
        %v2629 = vld [vmem:[%s400 + $0x9c] sm:$0xe]
        %v2630 = vld [vmem:[%s400 + $0xa8] sm:$0xe]
        %v2631 = vld [vmem:[%s400 + $0xb4] sm:$0xe]
        %v2632 = vld [vmem:[%s433] sm:$0xe]
        %v2633 = vld [vmem:[%s433 + $0xc] sm:$0xe]
        %v2634 = vld [vmem:[%s433 + $0x18] sm:$0xe]
        %v2635 = vld [vmem:[%s433 + $0x24] sm:$0xe]
        %v2636 = vld [vmem:[%s433 + $0x30] sm:$0xe]
        %v2637 = vld [vmem:[%s433 + $0x3c] sm:$0xe]
        %v2638 = vld [vmem:[%s433 + $0x48] sm:$0xe]
        %v2639 = vld [vmem:[%s433 + $0x54] sm:$0xe]
        %v2640 = vld [vmem:[%s433 + $0x60] sm:$0xe]
        %v2641 = vld [vmem:[%s433 + $0x6c] sm:$0xe]
        %v2642 = vld [vmem:[%s433 + $0x78] sm:$0xe]
        %v2643 = vld [vmem:[%s433 + $0x84] sm:$0xe]
        %v2644 = vld [vmem:[%s433 + $0x90] sm:$0xe]
        %v2645 = vld [vmem:[%s433 + $0x9c] sm:$0xe]
        %v2646 = vld [vmem:[%s433 + $0xa8] sm:$0xe]
        %v2647 = vld [vmem:[%s433 + $0xb4] sm:$0xe]
        %v2664 = vunpack.c.l.b16 %v2600
        %v2665 = vunpack.c.l.b16 %v2601
        %v2666 = vunpack.c.l.b16 %v2602
        %v2667 = vunpack.c.l.b16 %v2603
        %v2668 = vunpack.c.l.b16 %v2604
        %v2669 = vunpack.c.l.b16 %v2605
        %v2670 = vunpack.c.l.b16 %v2606
        %v2671 = vunpack.c.l.b16 %v2607
        %v2672 = vunpack.c.l.b16 %v2608
        %v2673 = vunpack.c.l.b16 %v2609
        %v2674 = vunpack.c.l.b16 %v2610
        %v2675 = vunpack.c.l.b16 %v2611
        %v2676 = vunpack.c.l.b16 %v2612
        %v2677 = vunpack.c.l.b16 %v2613
        %v2678 = vunpack.c.l.b16 %v2614
        %v2679 = vunpack.c.l.b16 %v2615
        %v2680 = vpack.c.b16 %v499, %v2664
        %v2681 = vpack.c.b16 %v501, %v2665
        %v2682 = vpack.c.b16 %v503, %v2666
        %v2683 = vpack.c.b16 %v505, %v2667
        %v2684 = vpack.c.b16 %v507, %v2668
        %v2685 = vpack.c.b16 %v509, %v2669
        %v2686 = vpack.c.b16 %v511, %v2670
        %v2687 = vpack.c.b16 %v513, %v2671
        %v2688 = vpack.c.b16 %v515, %v2672
        %v2689 = vpack.c.b16 %v517, %v2673
        %v2690 = vpack.c.b16 %v519, %v2674
        %v2691 = vpack.c.b16 %v521, %v2675
        %v2692 = vpack.c.b16 %v523, %v2676
        %v2693 = vpack.c.b16 %v525, %v2677
        %v2694 = vpack.c.b16 %v527, %v2678
        %v2695 = vpack.c.b16 %v529, %v2679
        %v2712 = vunpack.c.l.b16 %v2616
        %v2713 = vunpack.c.l.b16 %v2617
        %v2714 = vunpack.c.l.b16 %v2618
        %v2715 = vunpack.c.l.b16 %v2619
        %v2716 = vunpack.c.l.b16 %v2620
        %v2717 = vunpack.c.l.b16 %v2621
        %v2718 = vunpack.c.l.b16 %v2622
        %v2719 = vunpack.c.l.b16 %v2623
        %v2720 = vunpack.c.l.b16 %v2624
        %v2721 = vunpack.c.l.b16 %v2625
        %v2722 = vunpack.c.l.b16 %v2626
        %v2723 = vunpack.c.l.b16 %v2627
        %v2724 = vunpack.c.l.b16 %v2628
        %v2725 = vunpack.c.l.b16 %v2629
        %v2726 = vunpack.c.l.b16 %v2630
        %v2727 = vunpack.c.l.b16 %v2631
        %v2728 = vpack.c.b16 %v595, %v2712
        %v2729 = vpack.c.b16 %v597, %v2713
        %v2730 = vpack.c.b16 %v599, %v2714
        %v2731 = vpack.c.b16 %v601, %v2715
        %v2732 = vpack.c.b16 %v603, %v2716
        %v2733 = vpack.c.b16 %v605, %v2717
        %v2734 = vpack.c.b16 %v607, %v2718
        %v2735 = vpack.c.b16 %v609, %v2719
        %v2736 = vpack.c.b16 %v611, %v2720
        %v2737 = vpack.c.b16 %v613, %v2721
        %v2738 = vpack.c.b16 %v615, %v2722
        %v2739 = vpack.c.b16 %v617, %v2723
        %v2740 = vpack.c.b16 %v619, %v2724
        %v2741 = vpack.c.b16 %v621, %v2725
        %v2742 = vpack.c.b16 %v623, %v2726
        %v2743 = vpack.c.b16 %v625, %v2727
        %v2760 = vunpack.c.l.b16 %v2632
        %v2761 = vunpack.c.l.b16 %v2633
        %v2762 = vunpack.c.l.b16 %v2634
        %v2763 = vunpack.c.l.b16 %v2635
        %v2764 = vunpack.c.l.b16 %v2636
        %v2765 = vunpack.c.l.b16 %v2637
        %v2766 = vunpack.c.l.b16 %v2638
        %v2767 = vunpack.c.l.b16 %v2639
        %v2768 = vunpack.c.l.b16 %v2640
        %v2769 = vunpack.c.l.b16 %v2641
        %v2770 = vunpack.c.l.b16 %v2642
        %v2771 = vunpack.c.l.b16 %v2643
        %v2772 = vunpack.c.l.b16 %v2644
        %v2773 = vunpack.c.l.b16 %v2645
        %v2774 = vunpack.c.l.b16 %v2646
        %v2775 = vunpack.c.l.b16 %v2647
        %v2776 = vpack.c.b16 %v691, %v2760
        %v2777 = vpack.c.b16 %v693, %v2761
        %v2778 = vpack.c.b16 %v695, %v2762
        %v2779 = vpack.c.b16 %v697, %v2763
        %v2780 = vpack.c.b16 %v699, %v2764
        %v2781 = vpack.c.b16 %v701, %v2765
        %v2782 = vpack.c.b16 %v703, %v2766
        %v2783 = vpack.c.b16 %v705, %v2767
        %v2784 = vpack.c.b16 %v707, %v2768
        %v2785 = vpack.c.b16 %v709, %v2769
        %v2786 = vpack.c.b16 %v711, %v2770
        %v2787 = vpack.c.b16 %v713, %v2771
        %v2788 = vpack.c.b16 %v715, %v2772
        %v2789 = vpack.c.b16 %v717, %v2773
        %v2790 = vpack.c.b16 %v719, %v2774
        %v2791 = vpack.c.b16 %v721, %v2775
        %vm2792 = vcmask 1046528
        %v2793 = vrot.slane %v2680, 1
        %v2794 = vrot.slane %v882, 1
        %v2795 = vsel %vm2792, %v2793, %v2794
        %v2796 = vrot.slane %v2728, 1
        %v2797 = vrot.slane %v930, 1
        %v2798 = vsel %vm2792, %v2796, %v2797
        %v2799 = vrot.slane %v2776, 1
        %v2800 = vrot.slane %v978, 1
        %v2801 = vsel %vm2792, %v2799, %v2800
        %v2802 = vrot.slane %v2681, 1
        %v2803 = vrot.slane %v883, 1
        %v2804 = vsel %vm2792, %v2802, %v2803
        %v2805 = vrot.slane %v2729, 1
        %v2806 = vrot.slane %v931, 1
        %v2807 = vsel %vm2792, %v2805, %v2806
        %v2808 = vrot.slane %v2777, 1
        %v2809 = vrot.slane %v979, 1
        %v2810 = vsel %vm2792, %v2808, %v2809
        %v2811 = vrot.slane %v2682, 1
        %v2812 = vrot.slane %v884, 1
        %v2813 = vsel %vm2792, %v2811, %v2812
        %v2814 = vrot.slane %v2730, 1
        %v2815 = vrot.slane %v932, 1
        %v2816 = vsel %vm2792, %v2814, %v2815
        %v2817 = vrot.slane %v2778, 1
        %v2818 = vrot.slane %v980, 1
        %v2819 = vsel %vm2792, %v2817, %v2818
        %v2820 = vrot.slane %v2683, 1
        %v2821 = vrot.slane %v885, 1
        %v2822 = vsel %vm2792, %v2820, %v2821
        %v2823 = vrot.slane %v2731, 1
        %v2824 = vrot.slane %v933, 1
        %v2825 = vsel %vm2792, %v2823, %v2824
        %v2826 = vrot.slane %v2779, 1
        %v2827 = vrot.slane %v981, 1
        %v2828 = vsel %vm2792, %v2826, %v2827
        %v2829 = vrot.slane %v2684, 1
        %v2830 = vrot.slane %v886, 1
        %v2831 = vsel %vm2792, %v2829, %v2830
        %v2832 = vrot.slane %v2732, 1
        %v2833 = vrot.slane %v934, 1
        %v2834 = vsel %vm2792, %v2832, %v2833
        %v2835 = vrot.slane %v2780, 1
        %v2836 = vrot.slane %v982, 1
        %v2837 = vsel %vm2792, %v2835, %v2836
        %v2838 = vrot.slane %v2685, 1
        %v2839 = vrot.slane %v887, 1
        %v2840 = vsel %vm2792, %v2838, %v2839
        %v2841 = vrot.slane %v2733, 1
        %v2842 = vrot.slane %v935, 1
        %v2843 = vsel %vm2792, %v2841, %v2842
        %v2844 = vrot.slane %v2781, 1
        %v2845 = vrot.slane %v983, 1
        %v2846 = vsel %vm2792, %v2844, %v2845
        %v2847 = vrot.slane %v2686, 1
        %v2848 = vrot.slane %v888, 1
        %v2849 = vsel %vm2792, %v2847, %v2848
        %v2850 = vrot.slane %v2734, 1
        %v2851 = vrot.slane %v936, 1
        %v2852 = vsel %vm2792, %v2850, %v2851
        %v2853 = vrot.slane %v2782, 1
        %v2854 = vrot.slane %v984, 1
        %v2855 = vsel %vm2792, %v2853, %v2854
        %v2856 = vrot.slane %v2687, 1
        %v2857 = vrot.slane %v889, 1
        %v2858 = vsel %vm2792, %v2856, %v2857
        %v2859 = vrot.slane %v2735, 1
        %v2860 = vrot.slane %v937, 1
        %v2861 = vsel %vm2792, %v2859, %v2860
        %v2862 = vrot.slane %v2783, 1
        %v2863 = vrot.slane %v985, 1
        %v2864 = vsel %vm2792, %v2862, %v2863
        %v2865 = vrot.slane %v2688, 1
        %v2866 = vrot.slane %v890, 1
        %v2867 = vsel %vm2792, %v2865, %v2866
        %v2868 = vrot.slane %v2736, 1
        %v2869 = vrot.slane %v938, 1
        %v2870 = vsel %vm2792, %v2868, %v2869
        %v2871 = vrot.slane %v2784, 1
        %v2872 = vrot.slane %v986, 1
        %v2873 = vsel %vm2792, %v2871, %v2872
        %v2874 = vrot.slane %v2689, 1
        %v2875 = vrot.slane %v891, 1
        %v2876 = vsel %vm2792, %v2874, %v2875
        %v2877 = vrot.slane %v2737, 1
        %v2878 = vrot.slane %v939, 1
        %v2879 = vsel %vm2792, %v2877, %v2878
        %v2880 = vrot.slane %v2785, 1
        %v2881 = vrot.slane %v987, 1
        %v2882 = vsel %vm2792, %v2880, %v2881
        %v2883 = vrot.slane %v2690, 1
        %v2884 = vrot.slane %v892, 1
        %v2885 = vsel %vm2792, %v2883, %v2884
        %v2886 = vrot.slane %v2738, 1
        %v2887 = vrot.slane %v940, 1
        %v2888 = vsel %vm2792, %v2886, %v2887
        %v2889 = vrot.slane %v2786, 1
        %v2890 = vrot.slane %v988, 1
        %v2891 = vsel %vm2792, %v2889, %v2890
        %v2892 = vrot.slane %v2691, 1
        %v2893 = vrot.slane %v893, 1
        %v2894 = vsel %vm2792, %v2892, %v2893
        %v2895 = vrot.slane %v2739, 1
        %v2896 = vrot.slane %v941, 1
        %v2897 = vsel %vm2792, %v2895, %v2896
        %v2898 = vrot.slane %v2787, 1
        %v2899 = vrot.slane %v989, 1
        %v2900 = vsel %vm2792, %v2898, %v2899
        %v2901 = vrot.slane %v2692, 1
        %v2902 = vrot.slane %v894, 1
        %v2903 = vsel %vm2792, %v2901, %v2902
        %v2904 = vrot.slane %v2740, 1
        %v2905 = vrot.slane %v942, 1
        %v2906 = vsel %vm2792, %v2904, %v2905
        %v2907 = vrot.slane %v2788, 1
        %v2908 = vrot.slane %v990, 1
        %v2909 = vsel %vm2792, %v2907, %v2908
        %v2910 = vrot.slane %v2693, 1
        %v2911 = vrot.slane %v895, 1
        %v2912 = vsel %vm2792, %v2910, %v2911
        %v2913 = vrot.slane %v2741, 1
        %v2914 = vrot.slane %v943, 1
        %v2915 = vsel %vm2792, %v2913, %v2914
        %v2916 = vrot.slane %v2789, 1
        %v2917 = vrot.slane %v991, 1
        %v2918 = vsel %vm2792, %v2916, %v2917
        %v2919 = vrot.slane %v2694, 1
        %v2920 = vrot.slane %v896, 1
        %v2921 = vsel %vm2792, %v2919, %v2920
        %v2922 = vrot.slane %v2742, 1
        %v2923 = vrot.slane %v944, 1
        %v2924 = vsel %vm2792, %v2922, %v2923
        %v2925 = vrot.slane %v2790, 1
        %v2926 = vrot.slane %v992, 1
        %v2927 = vsel %vm2792, %v2925, %v2926
        %v2928 = vrot.slane %v2695, 1
        %v2929 = vrot.slane %v897, 1
        %v2930 = vsel %vm2792, %v2928, %v2929
        %v2931 = vrot.slane %v2743, 1
        %v2932 = vrot.slane %v945, 1
        %v2933 = vsel %vm2792, %v2931, %v2932
        %v2934 = vrot.slane %v2791, 1
        %v2935 = vrot.slane %v993, 1
        %v2936 = vsel %vm2792, %v2934, %v2935
        %s2985 = scalar_lea.vmem %s1, 384
        %v2986 = vld [vmem:[%s2985] sm:$0xf]
        %v2987 = vld [vmem:[%s2985 + $0x4] sm:$0xf]
        %v2988 = vld [vmem:[%s2985 + $0x8] sm:$0xf]
        %v2989 = vld [vmem:[%s2985 + $0xc] sm:$0xf]
        %v2990 = vld [vmem:[%s2985 + $0x10] sm:$0xf]
        %v2991 = vld [vmem:[%s2985 + $0x14] sm:$0xf]
        %v2992 = vld [vmem:[%s2985 + $0x18] sm:$0xf]
        %v2993 = vld [vmem:[%s2985 + $0x1c] sm:$0xf]
        %v2994 = vld [vmem:[%s2985 + $0x20] sm:$0xf]
        %v2995 = vld [vmem:[%s2985 + $0x24] sm:$0xf]
        %v2996 = vld [vmem:[%s2985 + $0x28] sm:$0xf]
        %v2997 = vld [vmem:[%s2985 + $0x2c] sm:$0xf]
        %v2998 = vld [vmem:[%s2985 + $0x30] sm:$0xf]
        %v2999 = vld [vmem:[%s2985 + $0x34] sm:$0xf]
        %v3000 = vld [vmem:[%s2985 + $0x38] sm:$0xf]
        %v3001 = vld [vmem:[%s2985 + $0x3c] sm:$0xf]
        %v3002 = vld [vmem:[%s2985 + $0x40] sm:$0xf]
        %v3003 = vld [vmem:[%s2985 + $0x44] sm:$0xf]
        %v3004 = vld [vmem:[%s2985 + $0x48] sm:$0xf]
        %v3005 = vld [vmem:[%s2985 + $0x4c] sm:$0xf]
        %v3006 = vld [vmem:[%s2985 + $0x50] sm:$0xf]
        %v3007 = vld [vmem:[%s2985 + $0x54] sm:$0xf]
        %v3008 = vld [vmem:[%s2985 + $0x58] sm:$0xf]
        %v3009 = vld [vmem:[%s2985 + $0x5c] sm:$0xf]
        %v3010 = vld [vmem:[%s2985 + $0x60] sm:$0xf]
        %v3011 = vld [vmem:[%s2985 + $0x64] sm:$0xf]
        %v3012 = vld [vmem:[%s2985 + $0x68] sm:$0xf]
        %v3013 = vld [vmem:[%s2985 + $0x6c] sm:$0xf]
        %v3014 = vld [vmem:[%s2985 + $0x70] sm:$0xf]
        %v3015 = vld [vmem:[%s2985 + $0x74] sm:$0xf]
        %v3016 = vld [vmem:[%s2985 + $0x78] sm:$0xf]
        %v3017 = vld [vmem:[%s2985 + $0x7c] sm:$0xf]
        %v3018 = vld [vmem:[%s2985 + $0x80] sm:$0xf]
        %v3019 = vld [vmem:[%s2985 + $0x84] sm:$0xf]
        %v3020 = vld [vmem:[%s2985 + $0x88] sm:$0xf]
        %v3021 = vld [vmem:[%s2985 + $0x8c] sm:$0xf]
        %v3022 = vld [vmem:[%s2985 + $0x90] sm:$0xf]
        %v3023 = vld [vmem:[%s2985 + $0x94] sm:$0xf]
        %v3024 = vld [vmem:[%s2985 + $0x98] sm:$0xf]
        %v3025 = vld [vmem:[%s2985 + $0x9c] sm:$0xf]
        %v3026 = vld [vmem:[%s2985 + $0xa0] sm:$0xf]
        %v3027 = vld [vmem:[%s2985 + $0xa4] sm:$0xf]
        %v3028 = vld [vmem:[%s2985 + $0xa8] sm:$0xf]
        %v3029 = vld [vmem:[%s2985 + $0xac] sm:$0xf]
        %v3030 = vld [vmem:[%s2985 + $0xb0] sm:$0xf]
        %v3031 = vld [vmem:[%s2985 + $0xb4] sm:$0xf]
        %v3032 = vld [vmem:[%s2985 + $0xb8] sm:$0xf]
        %v3033 = vld [vmem:[%s2985 + $0xbc] sm:$0xf]
        %v3082 = vunpack.c.l.b16 %v2986
        %v3083 = vunpack.c.l.b16 %v2987
        %v3084 = vunpack.c.l.b16 %v2988
        %v3085 = vunpack.c.l.b16 %v2989
        %v3086 = vunpack.c.l.b16 %v2990
        %v3087 = vunpack.c.l.b16 %v2991
        %v3088 = vunpack.c.l.b16 %v2992
        %v3089 = vunpack.c.l.b16 %v2993
        %v3090 = vunpack.c.l.b16 %v2994
        %v3091 = vunpack.c.l.b16 %v2995
        %v3092 = vunpack.c.l.b16 %v2996
        %v3093 = vunpack.c.l.b16 %v2997
        %v3094 = vunpack.c.l.b16 %v2998
        %v3095 = vunpack.c.l.b16 %v2999
        %v3096 = vunpack.c.l.b16 %v3000
        %v3097 = vunpack.c.l.b16 %v3001
        %v3098 = vunpack.c.l.b16 %v3002
        %v3099 = vunpack.c.l.b16 %v3003
        %v3100 = vunpack.c.l.b16 %v3004
        %v3101 = vunpack.c.l.b16 %v3005
        %v3102 = vunpack.c.l.b16 %v3006
        %v3103 = vunpack.c.l.b16 %v3007
        %v3104 = vunpack.c.l.b16 %v3008
        %v3105 = vunpack.c.l.b16 %v3009
        %v3106 = vunpack.c.l.b16 %v3010
        %v3107 = vunpack.c.l.b16 %v3011
        %v3108 = vunpack.c.l.b16 %v3012
        %v3109 = vunpack.c.l.b16 %v3013
        %v3110 = vunpack.c.l.b16 %v3014
        %v3111 = vunpack.c.l.b16 %v3015
        %v3112 = vunpack.c.l.b16 %v3016
        %v3113 = vunpack.c.l.b16 %v3017
        %v3114 = vunpack.c.l.b16 %v3018
        %v3115 = vunpack.c.l.b16 %v3019
        %v3116 = vunpack.c.l.b16 %v3020
        %v3117 = vunpack.c.l.b16 %v3021
        %v3118 = vunpack.c.l.b16 %v3022
        %v3119 = vunpack.c.l.b16 %v3023
        %v3120 = vunpack.c.l.b16 %v3024
        %v3121 = vunpack.c.l.b16 %v3025
        %v3122 = vunpack.c.l.b16 %v3026
        %v3123 = vunpack.c.l.b16 %v3027
        %v3124 = vunpack.c.l.b16 %v3028
        %v3125 = vunpack.c.l.b16 %v3029
        %v3126 = vunpack.c.l.b16 %v3030
        %v3127 = vunpack.c.l.b16 %v3031
        %v3128 = vunpack.c.l.b16 %v3032
        %v3129 = vunpack.c.l.b16 %v3033
        %v3130 = vpack.c.b16 %v3083, %v3082
        %v3131 = vpack.c.b16 %v3085, %v3084
        %v3132 = vpack.c.b16 %v3087, %v3086
        %v3133 = vpack.c.b16 %v3089, %v3088
        %v3134 = vpack.c.b16 %v3091, %v3090
        %v3135 = vpack.c.b16 %v3093, %v3092
        %v3136 = vpack.c.b16 %v3095, %v3094
        %v3137 = vpack.c.b16 %v3097, %v3096
        %v3138 = vpack.c.b16 %v3099, %v3098
        %v3139 = vpack.c.b16 %v3101, %v3100
        %v3140 = vpack.c.b16 %v3103, %v3102
        %v3141 = vpack.c.b16 %v3105, %v3104
        %v3142 = vpack.c.b16 %v3107, %v3106
        %v3143 = vpack.c.b16 %v3109, %v3108
        %v3144 = vpack.c.b16 %v3111, %v3110
        %v3145 = vpack.c.b16 %v3113, %v3112
        %v3146 = vpack.c.b16 %v3115, %v3114
        %v3147 = vpack.c.b16 %v3117, %v3116
        %v3148 = vpack.c.b16 %v3119, %v3118
        %v3149 = vpack.c.b16 %v3121, %v3120
        %v3150 = vpack.c.b16 %v3123, %v3122
        %v3151 = vpack.c.b16 %v3125, %v3124
        %v3152 = vpack.c.b16 %v3127, %v3126
        %v3153 = vpack.c.b16 %v3129, %v3128
        %3178 = vmatprep.subr.bf16.mxu0 0
        %3179 = vmatpush1.bf16.msra.mxu0 %v3130
        %3180 = vmatprep.subr.bf16.mxu0 0
        %3181 = vmatpush1.bf16.msra.mxu0 %v3131
        %3182 = vmatprep.subr.bf16.mxu0 0
        %3183 = vmatpush1.bf16.msra.mxu0 %v3132
        %3184 = vmatprep.subr.bf16.mxu0 0
        %3185 = vmatpush1.bf16.msra.mxu0 %v3133
        %3186 = vmatprep.subr.bf16.mxu0 0
        %3187 = vmatpush1.bf16.msra.mxu0 %v3134
        %3188 = vmatprep.subr.bf16.mxu0 0
        %3189 = vmatpush1.bf16.msra.mxu0 %v3135
        %3190 = vmatprep.subr.bf16.mxu0 0
        %3191 = vmatpush1.bf16.msra.mxu0 %v3136
        %3192 = vmatprep.subr.bf16.mxu0 0
        %3193 = vmatpush1.bf16.msra.mxu0 %v3137
        %3194 = vmatprep.subr.bf16.mxu0 0
        %3195 = vmatpush1.bf16.msra.mxu0 %v3138
        %3196 = vmatprep.subr.bf16.mxu0 0
        %3197 = vmatpush1.bf16.msra.mxu0 %v3139
        %3198 = vmatprep.subr.bf16.mxu0 0
        %3199 = vmatpush1.bf16.msra.mxu0 %v3140
        %3200 = vmatprep.subr.bf16.mxu0 0
        %3201 = vmatpush1.bf16.msra.mxu0 %v3141
        %3202 = vmatprep.subr.bf16.mxu0 0
        %3203 = vmatpush1.bf16.msra.mxu0 %v3142
        %3204 = vmatprep.subr.bf16.mxu0 0
        %3205 = vmatpush1.bf16.msra.mxu0 %v3143
        %3206 = vmatprep.subr.bf16.mxu0 0
        %3207 = vmatpush1.bf16.msra.mxu0 %v3144
        %3208 = vmatprep.subr.bf16.mxu0 0
        %3209 = vmatpush1.bf16.msra.mxu0 %v3145
        %3210 = vmatprep.mubr.bf16.mxu0 %v2798
        %3211 = vmatmul.mubr.bf16.gmra.mrb[0].mxu0 %v2795
        %v3212 = vpop.f32.mrb[0].mxu0
        %v3213 = vadd.f32 0.0, %v3212
        %v3214 = vpop.f32.mrb[0].mxu0
        %v3215 = vpop.f32.mrb[0].mxu0
        %v3216 = vadd.f32 0.0, %v3215
        %v3217 = vpop.f32.mrb[0].mxu0
        %3218 = vmatprep.mubr.bf16.mxu0 %v2807
        %3219 = vmatmul.mubr.bf16.gmra.mrb[0].mxu0 %v2804
        %v3220 = vpop.f32.mrb[0].mxu0
        %v3221 = vadd.f32 0.0, %v3220
        %v3222 = vpop.f32.mrb[0].mxu0
        %v3223 = vpop.f32.mrb[0].mxu0
        %v3224 = vadd.f32 0.0, %v3223
        %v3225 = vpop.f32.mrb[0].mxu0
        %3226 = vmatprep.mubr.bf16.mxu0 %v2816
        %3227 = vmatmul.mubr.bf16.gmra.mrb[0].mxu0 %v2813
        %v3228 = vpop.f32.mrb[0].mxu0
        %v3229 = vadd.f32 0.0, %v3228
        %v3230 = vpop.f32.mrb[0].mxu0
        %v3231 = vpop.f32.mrb[0].mxu0
        %v3232 = vadd.f32 0.0, %v3231
        %v3233 = vpop.f32.mrb[0].mxu0
        %3234 = vmatprep.mubr.bf16.mxu0 %v2825
        %3235 = vmatmul.mubr.bf16.gmra.mrb[0].mxu0 %v2822
        %v3236 = vpop.f32.mrb[0].mxu0
        %v3237 = vadd.f32 0.0, %v3236
        %v3238 = vpop.f32.mrb[0].mxu0
        %v3239 = vpop.f32.mrb[0].mxu0
        %v3240 = vadd.f32 0.0, %v3239
        %v3241 = vpop.f32.mrb[0].mxu0
        %3242 = vmatprep.mubr.bf16.mxu0 %v2834
        %3243 = vmatmul.mubr.bf16.gmra.mrb[0].mxu0 %v2831
        %v3244 = vpop.f32.mrb[0].mxu0
        %v3245 = vadd.f32 0.0, %v3244
        %v3246 = vpop.f32.mrb[0].mxu0
        %v3247 = vpop.f32.mrb[0].mxu0
        %v3248 = vadd.f32 0.0, %v3247
        %v3249 = vpop.f32.mrb[0].mxu0
        %3250 = vmatprep.mubr.bf16.mxu0 %v2843
        %3251 = vmatmul.mubr.bf16.gmra.mrb[0].mxu0 %v2840
        %v3252 = vpop.f32.mrb[0].mxu0
        %v3253 = vadd.f32 0.0, %v3252
        %v3254 = vpop.f32.mrb[0].mxu0
        %v3255 = vpop.f32.mrb[0].mxu0
        %v3256 = vadd.f32 0.0, %v3255
        %v3257 = vpop.f32.mrb[0].mxu0
        %3258 = vmatprep.mubr.bf16.mxu0 %v2852
        %3259 = vmatmul.mubr.bf16.gmra.mrb[0].mxu0 %v2849
        %v3260 = vpop.f32.mrb[0].mxu0
        %v3261 = vadd.f32 0.0, %v3260
        %v3262 = vpop.f32.mrb[0].mxu0
        %v3263 = vpop.f32.mrb[0].mxu0
        %v3264 = vadd.f32 0.0, %v3263
        %v3265 = vpop.f32.mrb[0].mxu0
        %3266 = vmatprep.mubr.bf16.mxu0 %v2861
        %3267 = vmatmul.mubr.bf16.gmra.mrb[0].mxu0 %v2858
        %v3268 = vpop.f32.mrb[0].mxu0
        %v3269 = vadd.f32 0.0, %v3268
        %v3270 = vpop.f32.mrb[0].mxu0
        %v3271 = vpop.f32.mrb[0].mxu0
        %v3272 = vadd.f32 0.0, %v3271
        %v3273 = vpop.f32.mrb[0].mxu0
        %3274 = vmatprep.mubr.bf16.mxu0 %v2870
        %3275 = vmatmul.mubr.bf16.gmra.mrb[0].mxu0 %v2867
        %v3276 = vpop.f32.mrb[0].mxu0
        %v3277 = vadd.f32 0.0, %v3276
        %v3278 = vpop.f32.mrb[0].mxu0
        %v3279 = vpop.f32.mrb[0].mxu0
        %v3280 = vadd.f32 0.0, %v3279
        %v3281 = vpop.f32.mrb[0].mxu0
        %3282 = vmatprep.mubr.bf16.mxu0 %v2879
        %3283 = vmatmul.mubr.bf16.gmra.mrb[0].mxu0 %v2876
        %v3284 = vpop.f32.mrb[0].mxu0
        %v3285 = vadd.f32 0.0, %v3284
        %v3286 = vpop.f32.mrb[0].mxu0
        %v3287 = vpop.f32.mrb[0].mxu0
        %v3288 = vadd.f32 0.0, %v3287
        %v3289 = vpop.f32.mrb[0].mxu0
        %3290 = vmatprep.mubr.bf16.mxu0 %v2888
        %3291 = vmatmul.mubr.bf16.gmra.mrb[0].mxu0 %v2885
        %v3292 = vpop.f32.mrb[0].mxu0
        %v3293 = vadd.f32 0.0, %v3292
        %v3294 = vpop.f32.mrb[0].mxu0
        %v3295 = vpop.f32.mrb[0].mxu0
        %v3296 = vadd.f32 0.0, %v3295
        %v3297 = vpop.f32.mrb[0].mxu0
        %3298 = vmatprep.mubr.bf16.mxu0 %v2897
        %3299 = vmatmul.mubr.bf16.gmra.mrb[0].mxu0 %v2894
        %v3300 = vpop.f32.mrb[0].mxu0
        %v3301 = vadd.f32 0.0, %v3300
        %v3302 = vpop.f32.mrb[0].mxu0
        %v3303 = vpop.f32.mrb[0].mxu0
        %v3304 = vadd.f32 0.0, %v3303
        %v3305 = vpop.f32.mrb[0].mxu0
        %3306 = vmatprep.mubr.bf16.mxu0 %v2906
        %3307 = vmatmul.mubr.bf16.gmra.mrb[0].mxu0 %v2903
        %v3308 = vpop.f32.mrb[0].mxu0
        %v3309 = vadd.f32 0.0, %v3308
        %v3310 = vpop.f32.mrb[0].mxu0
        %v3311 = vpop.f32.mrb[0].mxu0
        %v3312 = vadd.f32 0.0, %v3311
        %v3313 = vpop.f32.mrb[0].mxu0
        %3314 = vmatprep.mubr.bf16.mxu0 %v2915
        %3315 = vmatmul.mubr.bf16.gmra.mrb[0].mxu0 %v2912
        %v3316 = vpop.f32.mrb[0].mxu0
        %v3317 = vadd.f32 0.0, %v3316
        %v3318 = vpop.f32.mrb[0].mxu0
        %v3319 = vpop.f32.mrb[0].mxu0
        %v3320 = vadd.f32 0.0, %v3319
        %v3321 = vpop.f32.mrb[0].mxu0
        %3322 = vmatprep.mubr.bf16.mxu0 %v2924
        %3323 = vmatmul.mubr.bf16.gmra.mrb[0].mxu0 %v2921
        %v3324 = vpop.f32.mrb[0].mxu0
        %v3325 = vadd.f32 0.0, %v3324
        %v3326 = vpop.f32.mrb[0].mxu0
        %v3327 = vpop.f32.mrb[0].mxu0
        %v3328 = vadd.f32 0.0, %v3327
        %v3329 = vpop.f32.mrb[0].mxu0
        %3330 = vmatprep.mubr.bf16.mxu0 %v2933
        %3331 = vmatmul.mubr.bf16.gmra.mrb[0].mxu0 %v2930
        %v3332 = vpop.f32.mrb[0].mxu0
        %v3333 = vadd.f32 0.0, %v3332
        %v3334 = vpop.f32.mrb[0].mxu0
        %v3335 = vpop.f32.mrb[0].mxu0
        %v3336 = vadd.f32 0.0, %v3335
        %v3337 = vpop.f32.mrb[0].mxu0
        %3338 = vdwg.mxu0
        %3339 = vmatprep.subr.bf16.mxu0 0
        %3340 = vmatpush1.bf16.msra.mxu0 %v3146
        %3341 = vmatprep.subr.bf16.mxu0 0
        %3342 = vmatpush1.bf16.msra.mxu0 %v3147
        %3343 = vmatprep.subr.bf16.mxu0 0
        %3344 = vmatpush1.bf16.msra.mxu0 %v3148
        %3345 = vmatprep.subr.bf16.mxu0 0
        %3346 = vmatpush1.bf16.msra.mxu0 %v3149
        %3347 = vmatprep.subr.bf16.mxu0 0
        %3348 = vmatpush1.bf16.msra.mxu0 %v3150
        %3349 = vmatprep.subr.bf16.mxu0 0
        %3350 = vmatpush1.bf16.msra.mxu0 %v3151
        %3351 = vmatprep.subr.bf16.mxu0 0
        %3352 = vmatpush1.bf16.msra.mxu0 %v3152
        %3353 = vmatprep.subr.bf16.mxu0 0
        %3354 = vmatpush1.bf16.msra.mxu0 %v3153
        %3355 = vmatprep.subr.bf16.mxu0 0
        %3356 = vmatpush1.bf16.msra.mxu0 0
        %3357 = vmatprep.subr.bf16.mxu0 0
        %3358 = vmatpush1.bf16.msra.mxu0 0
        %3359 = vmatprep.subr.bf16.mxu0 0
        %3360 = vmatpush1.bf16.msra.mxu0 0
        %3361 = vmatprep.subr.bf16.mxu0 0
        %3362 = vmatpush1.bf16.msra.mxu0 0
        %3363 = vmatprep.subr.bf16.mxu0 0
        %3364 = vmatpush1.bf16.msra.mxu0 0
        %3365 = vmatprep.subr.bf16.mxu0 0
        %3366 = vmatpush1.bf16.msra.mxu0 0
        %3367 = vmatprep.subr.bf16.mxu0 0
        %3368 = vmatpush1.bf16.msra.mxu0 0
        %3369 = vmatprep.subr.bf16.mxu0 0
        %3370 = vmatpush1.bf16.msra.mxu0 0
        %3371 = vmatprep.mubr.bf16.mxu0 0
        %3372 = vmatmul.mubr.bf16.gmra.mrb[0].mxu0 %v2801
        %v3373 = vpop.f32.mrb[0].mxu0
        %v3374 = vadd.f32 %v3213, %v3373
        %v3375 = vpop.f32.mrb[0].mxu0
        %v3376 = vpop.f32.mrb[0].mxu0
        %v3377 = vadd.f32 %v3216, %v3376
        %v3378 = vpop.f32.mrb[0].mxu0
        %3379 = vmatprep.mubr.bf16.mxu0 0
        %3380 = vmatmul.mubr.bf16.gmra.mrb[0].mxu0 %v2810
        %v3381 = vpop.f32.mrb[0].mxu0
        %v3382 = vadd.f32 %v3221, %v3381
        %v3383 = vpop.f32.mrb[0].mxu0
        %v3384 = vpop.f32.mrb[0].mxu0
        %v3385 = vadd.f32 %v3224, %v3384
        %v3386 = vpop.f32.mrb[0].mxu0
        %3387 = vmatprep.mubr.bf16.mxu0 0
        %3388 = vmatmul.mubr.bf16.gmra.mrb[0].mxu0 %v2819
        %v3389 = vpop.f32.mrb[0].mxu0
        %v3390 = vadd.f32 %v3229, %v3389
        %v3391 = vpop.f32.mrb[0].mxu0
        %v3392 = vpop.f32.mrb[0].mxu0
        %v3393 = vadd.f32 %v3232, %v3392
        %v3394 = vpop.f32.mrb[0].mxu0
        %3395 = vmatprep.mubr.bf16.mxu0 0
        %3396 = vmatmul.mubr.bf16.gmra.mrb[0].mxu0 %v2828
        %v3397 = vpop.f32.mrb[0].mxu0
        %v3398 = vadd.f32 %v3237, %v3397
        %v3399 = vpop.f32.mrb[0].mxu0
        %v3400 = vpop.f32.mrb[0].mxu0
        %v3401 = vadd.f32 %v3240, %v3400
        %v3402 = vpop.f32.mrb[0].mxu0
        %3403 = vmatprep.mubr.bf16.mxu0 0
        %3404 = vmatmul.mubr.bf16.gmra.mrb[0].mxu0 %v2837
        %v3405 = vpop.f32.mrb[0].mxu0
        %v3406 = vadd.f32 %v3245, %v3405
        %v3407 = vpop.f32.mrb[0].mxu0
        %v3408 = vpop.f32.mrb[0].mxu0
        %v3409 = vadd.f32 %v3248, %v3408
        %v3410 = vpop.f32.mrb[0].mxu0
        %3411 = vmatprep.mubr.bf16.mxu0 0
        %3412 = vmatmul.mubr.bf16.gmra.mrb[0].mxu0 %v2846
        %v3413 = vpop.f32.mrb[0].mxu0
        %v3414 = vadd.f32 %v3253, %v3413
        %v3415 = vpop.f32.mrb[0].mxu0
        %v3416 = vpop.f32.mrb[0].mxu0
        %v3417 = vadd.f32 %v3256, %v3416
        %v3418 = vpop.f32.mrb[0].mxu0
        %3419 = vmatprep.mubr.bf16.mxu0 0
        %3420 = vmatmul.mubr.bf16.gmra.mrb[0].mxu0 %v2855
        %v3421 = vpop.f32.mrb[0].mxu0
        %v3422 = vadd.f32 %v3261, %v3421
        %v3423 = vpop.f32.mrb[0].mxu0
        %v3424 = vpop.f32.mrb[0].mxu0
        %v3425 = vadd.f32 %v3264, %v3424
        %v3426 = vpop.f32.mrb[0].mxu0
        %3427 = vmatprep.mubr.bf16.mxu0 0
        %3428 = vmatmul.mubr.bf16.gmra.mrb[0].mxu0 %v2864
        %v3429 = vpop.f32.mrb[0].mxu0
        %v3430 = vadd.f32 %v3269, %v3429
        %v3431 = vpop.f32.mrb[0].mxu0
        %v3432 = vpop.f32.mrb[0].mxu0
        %v3433 = vadd.f32 %v3272, %v3432
        %v3434 = vpop.f32.mrb[0].mxu0
        %3435 = vmatprep.mubr.bf16.mxu0 0
        %3436 = vmatmul.mubr.bf16.gmra.mrb[0].mxu0 %v2873
        %v3437 = vpop.f32.mrb[0].mxu0
        %v3438 = vadd.f32 %v3277, %v3437
        %v3439 = vpop.f32.mrb[0].mxu0
        %v3440 = vpop.f32.mrb[0].mxu0
        %v3441 = vadd.f32 %v3280, %v3440
        %v3442 = vpop.f32.mrb[0].mxu0
        %3443 = vmatprep.mubr.bf16.mxu0 0
        %3444 = vmatmul.mubr.bf16.gmra.mrb[0].mxu0 %v2882
        %v3445 = vpop.f32.mrb[0].mxu0
        %v3446 = vadd.f32 %v3285, %v3445
        %v3447 = vpop.f32.mrb[0].mxu0
        %v3448 = vpop.f32.mrb[0].mxu0
        %v3449 = vadd.f32 %v3288, %v3448
        %v3450 = vpop.f32.mrb[0].mxu0
        %3451 = vmatprep.mubr.bf16.mxu0 0
        %3452 = vmatmul.mubr.bf16.gmra.mrb[0].mxu0 %v2891
        %v3453 = vpop.f32.mrb[0].mxu0
        %v3454 = vadd.f32 %v3293, %v3453
        %v3455 = vpop.f32.mrb[0].mxu0
        %v3456 = vpop.f32.mrb[0].mxu0
        %v3457 = vadd.f32 %v3296, %v3456
        %v3458 = vpop.f32.mrb[0].mxu0
        %3459 = vmatprep.mubr.bf16.mxu0 0
        %3460 = vmatmul.mubr.bf16.gmra.mrb[0].mxu0 %v2900
        %v3461 = vpop.f32.mrb[0].mxu0
        %v3462 = vadd.f32 %v3301, %v3461
        %v3463 = vpop.f32.mrb[0].mxu0
        %v3464 = vpop.f32.mrb[0].mxu0
        %v3465 = vadd.f32 %v3304, %v3464
        %v3466 = vpop.f32.mrb[0].mxu0
        %3467 = vmatprep.mubr.bf16.mxu0 0
        %3468 = vmatmul.mubr.bf16.gmra.mrb[0].mxu0 %v2909
        %v3469 = vpop.f32.mrb[0].mxu0
        %v3470 = vadd.f32 %v3309, %v3469
        %v3471 = vpop.f32.mrb[0].mxu0
        %v3472 = vpop.f32.mrb[0].mxu0
        %v3473 = vadd.f32 %v3312, %v3472
        %v3474 = vpop.f32.mrb[0].mxu0
        %3475 = vmatprep.mubr.bf16.mxu0 0
        %3476 = vmatmul.mubr.bf16.gmra.mrb[0].mxu0 %v2918
        %v3477 = vpop.f32.mrb[0].mxu0
        %v3478 = vadd.f32 %v3317, %v3477
        %v3479 = vpop.f32.mrb[0].mxu0
        %v3480 = vpop.f32.mrb[0].mxu0
        %v3481 = vadd.f32 %v3320, %v3480
        %v3482 = vpop.f32.mrb[0].mxu0
        %3483 = vmatprep.mubr.bf16.mxu0 0
        %3484 = vmatmul.mubr.bf16.gmra.mrb[0].mxu0 %v2927
        %v3485 = vpop.f32.mrb[0].mxu0
        %v3486 = vadd.f32 %v3325, %v3485
        %v3487 = vpop.f32.mrb[0].mxu0
        %v3488 = vpop.f32.mrb[0].mxu0
        %v3489 = vadd.f32 %v3328, %v3488
        %v3490 = vpop.f32.mrb[0].mxu0
        %3491 = vmatprep.mubr.bf16.mxu0 0
        %3492 = vmatmul.mubr.bf16.gmra.mrb[0].mxu0 %v2936
        %v3493 = vpop.f32.mrb[0].mxu0
        %v3494 = vadd.f32 %v3333, %v3493
        %v3495 = vpop.f32.mrb[0].mxu0
        %v3496 = vpop.f32.mrb[0].mxu0
        %v3497 = vadd.f32 %v3336, %v3496
        %v3498 = vpop.f32.mrb[0].mxu0
        %3499 = vdwg.mxu0
        %v3500 = vadd.f32 %v2474, %v3374
        %v3501 = vadd.f32 %v2477, %v3377
        %v3502 = vadd.f32 %v2482, %v3382
        %v3503 = vadd.f32 %v2485, %v3385
        %v3504 = vadd.f32 %v2490, %v3390
        %v3505 = vadd.f32 %v2493, %v3393
        %v3506 = vadd.f32 %v2498, %v3398
        %v3507 = vadd.f32 %v2501, %v3401
        %v3508 = vadd.f32 %v2506, %v3406
        %v3509 = vadd.f32 %v2509, %v3409
        %v3510 = vadd.f32 %v2514, %v3414
        %v3511 = vadd.f32 %v2517, %v3417
        %v3512 = vadd.f32 %v2522, %v3422
        %v3513 = vadd.f32 %v2525, %v3425
        %v3514 = vadd.f32 %v2530, %v3430
        %v3515 = vadd.f32 %v2533, %v3433
        %v3516 = vadd.f32 %v2538, %v3438
        %v3517 = vadd.f32 %v2541, %v3441
        %v3518 = vadd.f32 %v2546, %v3446
        %v3519 = vadd.f32 %v2549, %v3449
        %v3520 = vadd.f32 %v2554, %v3454
        %v3521 = vadd.f32 %v2557, %v3457
        %v3522 = vadd.f32 %v2562, %v3462
        %v3523 = vadd.f32 %v2565, %v3465
        %v3524 = vadd.f32 %v2570, %v3470
        %v3525 = vadd.f32 %v2573, %v3473
        %v3526 = vadd.f32 %v2578, %v3478
        %v3527 = vadd.f32 %v2581, %v3481
        %v3528 = vadd.f32 %v2586, %v3486
        %v3529 = vadd.f32 %v2589, %v3489
        %v3530 = vadd.f32 %v2594, %v3494
        %v3531 = vadd.f32 %v2597, %v3497
        %v3532 = vld [vmem:[%s2] sm:$0x1]
        %v3534 = vlaneseq
        %v3535 = vshrl.u32 %v3534, 7
        %v3536 = vsub.s32 0, %v3535
        %v3537 = vrot.slane %v3532, %v3536
        %v3539 = vadd.f32 %v3500, %v3537
        %v3540 = vadd.f32 %v3501, %v3537
        %v3541 = vadd.f32 %v3502, %v3537
        %v3542 = vadd.f32 %v3503, %v3537
        %v3543 = vadd.f32 %v3504, %v3537
        %v3544 = vadd.f32 %v3505, %v3537
        %v3545 = vadd.f32 %v3506, %v3537
        %v3546 = vadd.f32 %v3507, %v3537
        %v3547 = vadd.f32 %v3508, %v3537
        %v3548 = vadd.f32 %v3509, %v3537
        %v3549 = vadd.f32 %v3510, %v3537
        %v3550 = vadd.f32 %v3511, %v3537
        %v3551 = vadd.f32 %v3512, %v3537
        %v3552 = vadd.f32 %v3513, %v3537
        %v3553 = vadd.f32 %v3514, %v3537
        %v3554 = vadd.f32 %v3515, %v3537
        %v3555 = vadd.f32 %v3516, %v3537
        %v3556 = vadd.f32 %v3517, %v3537
        %v3557 = vadd.f32 %v3518, %v3537
        %v3558 = vadd.f32 %v3519, %v3537
        %v3559 = vadd.f32 %v3520, %v3537
        %v3560 = vadd.f32 %v3521, %v3537
        %v3561 = vadd.f32 %v3522, %v3537
        %v3562 = vadd.f32 %v3523, %v3537
        %v3563 = vadd.f32 %v3524, %v3537
        %v3564 = vadd.f32 %v3525, %v3537
        %v3565 = vadd.f32 %v3526, %v3537
        %v3566 = vadd.f32 %v3527, %v3537
        %v3567 = vadd.f32 %v3528, %v3537
        %v3568 = vadd.f32 %v3529, %v3537
        %v3569 = vadd.f32 %v3530, %v3537
        %v3570 = vadd.f32 %v3531, %v3537
        %v3571 = vmax.f32 %v3539, 0.0
        %v3572 = vmax.f32 %v3540, 0.0
        %v3573 = vmax.f32 %v3541, 0.0
        %v3574 = vmax.f32 %v3542, 0.0
        %v3575 = vmax.f32 %v3543, 0.0
        %v3576 = vmax.f32 %v3544, 0.0
        %v3577 = vmax.f32 %v3545, 0.0
        %v3578 = vmax.f32 %v3546, 0.0
        %v3579 = vmax.f32 %v3547, 0.0
        %v3580 = vmax.f32 %v3548, 0.0
        %v3581 = vmax.f32 %v3549, 0.0
        %v3582 = vmax.f32 %v3550, 0.0
        %v3583 = vmax.f32 %v3551, 0.0
        %v3584 = vmax.f32 %v3552, 0.0
        %v3585 = vmax.f32 %v3553, 0.0
        %v3586 = vmax.f32 %v3554, 0.0
        %v3587 = vmax.f32 %v3555, 0.0
        %v3588 = vmax.f32 %v3556, 0.0
        %v3589 = vmax.f32 %v3557, 0.0
        %v3590 = vmax.f32 %v3558, 0.0
        %v3591 = vmax.f32 %v3559, 0.0
        %v3592 = vmax.f32 %v3560, 0.0
        %v3593 = vmax.f32 %v3561, 0.0
        %v3594 = vmax.f32 %v3562, 0.0
        %v3595 = vmax.f32 %v3563, 0.0
        %v3596 = vmax.f32 %v3564, 0.0
        %v3597 = vmax.f32 %v3565, 0.0
        %v3598 = vmax.f32 %v3566, 0.0
        %v3599 = vmax.f32 %v3567, 0.0
        %v3600 = vmax.f32 %v3568, 0.0
        %v3601 = vmax.f32 %v3569, 0.0
        %v3602 = vmax.f32 %v3570, 0.0
        %v3603 = vpack.c.bf16 %v3572, %v3571
        %v3604 = vpack.c.bf16 %v3574, %v3573
        %v3605 = vpack.c.bf16 %v3576, %v3575
        %v3606 = vpack.c.bf16 %v3578, %v3577
        %v3607 = vpack.c.bf16 %v3580, %v3579
        %v3608 = vpack.c.bf16 %v3582, %v3581
        %v3609 = vpack.c.bf16 %v3584, %v3583
        %v3610 = vpack.c.bf16 %v3586, %v3585
        %v3611 = vpack.c.bf16 %v3588, %v3587
        %v3612 = vpack.c.bf16 %v3590, %v3589
        %v3613 = vpack.c.bf16 %v3592, %v3591
        %v3614 = vpack.c.bf16 %v3594, %v3593
        %v3615 = vpack.c.bf16 %v3596, %v3595
        %v3616 = vpack.c.bf16 %v3598, %v3597
        %v3617 = vpack.c.bf16 %v3600, %v3599
        %v3618 = vpack.c.bf16 %v3602, %v3601
        %v3635 = vunpack.c.l.b16 %v3603
        %v3636 = vunpack.c.h.b16 %v3603
        %v3637 = vunpack.c.l.b16 %v3604
        %v3638 = vunpack.c.h.b16 %v3604
        %v3639 = vunpack.c.l.b16 %v3605
        %v3640 = vunpack.c.h.b16 %v3605
        %v3641 = vunpack.c.l.b16 %v3606
        %v3642 = vunpack.c.h.b16 %v3606
        %v3643 = vunpack.c.l.b16 %v3607
        %v3644 = vunpack.c.h.b16 %v3607
        %v3645 = vunpack.c.l.b16 %v3608
        %v3646 = vunpack.c.h.b16 %v3608
        %v3647 = vunpack.c.l.b16 %v3609
        %v3648 = vunpack.c.h.b16 %v3609
        %v3649 = vunpack.c.l.b16 %v3610
        %v3650 = vunpack.c.h.b16 %v3610
        %v3651 = vunpack.c.l.b16 %v3611
        %v3652 = vunpack.c.h.b16 %v3611
        %v3653 = vunpack.c.l.b16 %v3612
        %v3654 = vunpack.c.h.b16 %v3612
        %v3655 = vunpack.c.l.b16 %v3613
        %v3656 = vunpack.c.h.b16 %v3613
        %v3657 = vunpack.c.l.b16 %v3614
        %v3658 = vunpack.c.h.b16 %v3614
        %v3659 = vunpack.c.l.b16 %v3615
        %v3660 = vunpack.c.h.b16 %v3615
        %v3661 = vunpack.c.l.b16 %v3616
        %v3662 = vunpack.c.h.b16 %v3616
        %v3663 = vunpack.c.l.b16 %v3617
        %v3664 = vunpack.c.h.b16 %v3617
        %v3665 = vunpack.c.l.b16 %v3618
        %v3666 = vunpack.c.h.b16 %v3618
        %v3667 = vpack.c.b16 %v3635, %v3635
        %v3668 = vpack.c.b16 %v3636, %v3636
        %v3669 = vpack.c.b16 %v3637, %v3637
        %v3670 = vpack.c.b16 %v3638, %v3638
        %v3671 = vpack.c.b16 %v3639, %v3639
        %v3672 = vpack.c.b16 %v3640, %v3640
        %v3673 = vpack.c.b16 %v3641, %v3641
        %v3674 = vpack.c.b16 %v3642, %v3642
        %v3675 = vpack.c.b16 %v3643, %v3643
        %v3676 = vpack.c.b16 %v3644, %v3644
        %v3677 = vpack.c.b16 %v3645, %v3645
        %v3678 = vpack.c.b16 %v3646, %v3646
        %v3679 = vpack.c.b16 %v3647, %v3647
        %v3680 = vpack.c.b16 %v3648, %v3648
        %v3681 = vpack.c.b16 %v3649, %v3649
        %v3682 = vpack.c.b16 %v3650, %v3650
        %v3683 = vpack.c.b16 %v3651, %v3651
        %v3684 = vpack.c.b16 %v3652, %v3652
        %v3685 = vpack.c.b16 %v3653, %v3653
        %v3686 = vpack.c.b16 %v3654, %v3654
        %v3687 = vpack.c.b16 %v3655, %v3655
        %v3688 = vpack.c.b16 %v3656, %v3656
        %v3689 = vpack.c.b16 %v3657, %v3657
        %v3690 = vpack.c.b16 %v3658, %v3658
        %v3691 = vpack.c.b16 %v3659, %v3659
        %v3692 = vpack.c.b16 %v3660, %v3660
        %v3693 = vpack.c.b16 %v3661, %v3661
        %v3694 = vpack.c.b16 %v3662, %v3662
        %v3695 = vpack.c.b16 %v3663, %v3663
        %v3696 = vpack.c.b16 %v3664, %v3664
        %v3697 = vpack.c.b16 %v3665, %v3665
        %v3698 = vpack.c.b16 %v3666, %v3666
        %s3731 = scalar_lea.vmem [#allocation2], 20
        %3732 = vst [vmem:[%s3731 + $0x8] sm:$0xf] %v3667
        %3733 = vst [vmem:[%s3731 + $0xc] sm:$0xf] %v3668
        %3734 = vst [vmem:[%s3731 + $0x1c] sm:$0xf] %v3669
        %3735 = vst [vmem:[%s3731 + $0x20] sm:$0xf] %v3670
        %3736 = vst [vmem:[%s3731 + $0x30] sm:$0xf] %v3671
        %3737 = vst [vmem:[%s3731 + $0x34] sm:$0xf] %v3672
        %3738 = vst [vmem:[%s3731 + $0x44] sm:$0xf] %v3673
        %3739 = vst [vmem:[%s3731 + $0x48] sm:$0xf] %v3674
        %3740 = vst [vmem:[%s3731 + $0x58] sm:$0xf] %v3675
        %3741 = vst [vmem:[%s3731 + $0x5c] sm:$0xf] %v3676
        %3742 = vst [vmem:[%s3731 + $0x6c] sm:$0xf] %v3677
        %3743 = vst [vmem:[%s3731 + $0x70] sm:$0xf] %v3678
        %3744 = vst [vmem:[%s3731 + $0x80] sm:$0xf] %v3679
        %3745 = vst [vmem:[%s3731 + $0x84] sm:$0xf] %v3680
        %3746 = vst [vmem:[%s3731 + $0x94] sm:$0xf] %v3681
        %3747 = vst [vmem:[%s3731 + $0x98] sm:$0xf] %v3682
        %3748 = vst [vmem:[%s3731 + $0xa8] sm:$0xf] %v3683
        %3749 = vst [vmem:[%s3731 + $0xac] sm:$0xf] %v3684
        %3750 = vst [vmem:[%s3731 + $0xbc] sm:$0xf] %v3685
        %3751 = vst [vmem:[%s3731 + $0xc0] sm:$0xf] %v3686
        %3752 = vst [vmem:[%s3731 + $0xd0] sm:$0xf] %v3687
        %3753 = vst [vmem:[%s3731 + $0xd4] sm:$0xf] %v3688
        %3754 = vst [vmem:[%s3731 + $0xe4] sm:$0xf] %v3689
        %3755 = vst [vmem:[%s3731 + $0xe8] sm:$0xf] %v3690
        %3756 = vst [vmem:[%s3731 + $0xf8] sm:$0xf] %v3691
        %3757 = vst [vmem:[%s3731 + $0xfc] sm:$0xf] %v3692
        %3758 = vst [vmem:[%s3731 + $0x10c] sm:$0xf] %v3693
        %3759 = vst [vmem:[%s3731 + $0x110] sm:$0xf] %v3694
        %3760 = vst [vmem:[%s3731 + $0x120] sm:$0xf] %v3695
        %3761 = vst [vmem:[%s3731 + $0x124] sm:$0xf] %v3696
        %3762 = vst [vmem:[%s3731 + $0x134] sm:$0xf] %v3697
        %3763 = vst [vmem:[%s3731 + $0x138] sm:$0xf] %v3698
        %v3764 = vld [vmem:[#allocation2 + $0x4] sm:$0x8]
        %v3765 = vld [vmem:[#allocation2 + $0x8] sm:$0xf]
        %v3766 = vld [vmem:[#allocation2 + $0xc] sm:$0xf]
        %v3767 = vld [vmem:[#allocation2 + $0x18] sm:$0x8]
        %v3768 = vld [vmem:[#allocation2 + $0x1c] sm:$0xf]
        %v3769 = vld [vmem:[#allocation2 + $0x20] sm:$0xf]
        %v3770 = vld [vmem:[#allocation2 + $0x2c] sm:$0x8]
        %v3771 = vld [vmem:[#allocation2 + $0x30] sm:$0xf]
        %v3772 = vld [vmem:[#allocation2 + $0x34] sm:$0xf]
        %v3773 = vld [vmem:[#allocation2 + $0x40] sm:$0x8]
        %v3774 = vld [vmem:[#allocation2 + $0x44] sm:$0xf]
        %v3775 = vld [vmem:[#allocation2 + $0x48] sm:$0xf]
        %v3776 = vld [vmem:[#allocation2 + $0x54] sm:$0x8]
        %v3777 = vld [vmem:[#allocation2 + $0x58] sm:$0xf]
        %v3778 = vld [vmem:[#allocation2 + $0x5c] sm:$0xf]
        %v3779 = vld [vmem:[#allocation2 + $0x68] sm:$0x8]
        %v3780 = vld [vmem:[#allocation2 + $0x6c] sm:$0xf]
        %v3781 = vld [vmem:[#allocation2 + $0x70] sm:$0xf]
        %v3782 = vld [vmem:[#allocation2 + $0x7c] sm:$0x8]
        %v3783 = vld [vmem:[#allocation2 + $0x80] sm:$0xf]
        %v3784 = vld [vmem:[#allocation2 + $0x84] sm:$0xf]
        %v3785 = vld [vmem:[#allocation2 + $0x90] sm:$0x8]
        %v3786 = vld [vmem:[#allocation2 + $0x94] sm:$0xf]
        %v3787 = vld [vmem:[#allocation2 + $0x98] sm:$0xf]
        %v3788 = vld [vmem:[#allocation2 + $0xa4] sm:$0x8]
        %v3789 = vld [vmem:[#allocation2 + $0xa8] sm:$0xf]
        %v3790 = vld [vmem:[#allocation2 + $0xac] sm:$0xf]
        %v3791 = vld [vmem:[#allocation2 + $0xb8] sm:$0x8]
        %v3792 = vld [vmem:[#allocation2 + $0xbc] sm:$0xf]
        %v3793 = vld [vmem:[#allocation2 + $0xc0] sm:$0xf]
        %v3794 = vld [vmem:[#allocation2 + $0xcc] sm:$0x8]
        %v3795 = vld [vmem:[#allocation2 + $0xd0] sm:$0xf]
        %v3796 = vld [vmem:[#allocation2 + $0xd4] sm:$0xf]
        %v3797 = vld [vmem:[#allocation2 + $0xe0] sm:$0x8]
        %v3798 = vld [vmem:[#allocation2 + $0xe4] sm:$0xf]
        %v3799 = vld [vmem:[#allocation2 + $0xe8] sm:$0xf]
        %v3800 = vld [vmem:[#allocation2 + $0xf4] sm:$0x8]
        %v3801 = vld [vmem:[#allocation2 + $0xf8] sm:$0xf]
        %v3802 = vld [vmem:[#allocation2 + $0xfc] sm:$0xf]
        %v3803 = vld [vmem:[#allocation2 + $0x108] sm:$0x8]
        %v3804 = vld [vmem:[#allocation2 + $0x10c] sm:$0xf]
        %v3805 = vld [vmem:[#allocation2 + $0x110] sm:$0xf]
        %v3806 = vld [vmem:[#allocation2 + $0x11c] sm:$0x8]
        %v3807 = vld [vmem:[#allocation2 + $0x120] sm:$0xf]
        %v3808 = vld [vmem:[#allocation2 + $0x124] sm:$0xf]
        %v3809 = vld [vmem:[#allocation2 + $0x130] sm:$0x8]
        %v3810 = vld [vmem:[#allocation2 + $0x134] sm:$0xf]
        %v3811 = vld [vmem:[#allocation2 + $0x138] sm:$0xf]
        %v3812 = vld [vmem:[%s3731 + $0x4] sm:$0x8]
        %v3813 = vld [vmem:[%s3731 + $0x8] sm:$0xf]
        %v3814 = vld [vmem:[%s3731 + $0xc] sm:$0xf]
        %v3815 = vld [vmem:[%s3731 + $0x18] sm:$0x8]
        %v3816 = vld [vmem:[%s3731 + $0x1c] sm:$0xf]
        %v3817 = vld [vmem:[%s3731 + $0x20] sm:$0xf]
        %v3818 = vld [vmem:[%s3731 + $0x2c] sm:$0x8]
        %v3819 = vld [vmem:[%s3731 + $0x30] sm:$0xf]
        %v3820 = vld [vmem:[%s3731 + $0x34] sm:$0xf]
        %v3821 = vld [vmem:[%s3731 + $0x40] sm:$0x8]
        %v3822 = vld [vmem:[%s3731 + $0x44] sm:$0xf]
        %v3823 = vld [vmem:[%s3731 + $0x48] sm:$0xf]
        %v3824 = vld [vmem:[%s3731 + $0x54] sm:$0x8]
        %v3825 = vld [vmem:[%s3731 + $0x58] sm:$0xf]
        %v3826 = vld [vmem:[%s3731 + $0x5c] sm:$0xf]
        %v3827 = vld [vmem:[%s3731 + $0x68] sm:$0x8]
        %v3828 = vld [vmem:[%s3731 + $0x6c] sm:$0xf]
        %v3829 = vld [vmem:[%s3731 + $0x70] sm:$0xf]
        %v3830 = vld [vmem:[%s3731 + $0x7c] sm:$0x8]
        %v3831 = vld [vmem:[%s3731 + $0x80] sm:$0xf]
        %v3832 = vld [vmem:[%s3731 + $0x84] sm:$0xf]
        %v3833 = vld [vmem:[%s3731 + $0x90] sm:$0x8]
        %v3834 = vld [vmem:[%s3731 + $0x94] sm:$0xf]
        %v3835 = vld [vmem:[%s3731 + $0x98] sm:$0xf]
        %v3836 = vld [vmem:[%s3731 + $0xa4] sm:$0x8]
        %v3837 = vld [vmem:[%s3731 + $0xa8] sm:$0xf]
        %v3838 = vld [vmem:[%s3731 + $0xac] sm:$0xf]
        %v3839 = vld [vmem:[%s3731 + $0xb8] sm:$0x8]
        %v3840 = vld [vmem:[%s3731 + $0xbc] sm:$0xf]
        %v3841 = vld [vmem:[%s3731 + $0xc0] sm:$0xf]
        %v3842 = vld [vmem:[%s3731 + $0xcc] sm:$0x8]
        %v3843 = vld [vmem:[%s3731 + $0xd0] sm:$0xf]
        %v3844 = vld [vmem:[%s3731 + $0xd4] sm:$0xf]
        %v3845 = vld [vmem:[%s3731 + $0xe0] sm:$0x8]
        %v3846 = vld [vmem:[%s3731 + $0xe4] sm:$0xf]
        %v3847 = vld [vmem:[%s3731 + $0xe8] sm:$0xf]
        %v3848 = vld [vmem:[%s3731 + $0xf4] sm:$0x8]
        %v3849 = vld [vmem:[%s3731 + $0xf8] sm:$0xf]
        %v3850 = vld [vmem:[%s3731 + $0xfc] sm:$0xf]
        %v3851 = vld [vmem:[%s3731 + $0x108] sm:$0x8]
        %v3852 = vld [vmem:[%s3731 + $0x10c] sm:$0xf]
        %v3853 = vld [vmem:[%s3731 + $0x110] sm:$0xf]
        %v3854 = vld [vmem:[%s3731 + $0x11c] sm:$0x8]
        %v3855 = vld [vmem:[%s3731 + $0x120] sm:$0xf]
        %v3856 = vld [vmem:[%s3731 + $0x124] sm:$0xf]
        %v3857 = vld [vmem:[%s3731 + $0x130] sm:$0x8]
        %v3858 = vld [vmem:[%s3731 + $0x134] sm:$0xf]
        %v3859 = vld [vmem:[%s3731 + $0x138] sm:$0xf]
        %s3860 = scalar_lea.vmem [#allocation2], 40
        %v3861 = vld [vmem:[%s3860 + $0x4] sm:$0x8]
        %v3862 = vld [vmem:[%s3860 + $0x8] sm:$0xf]
        %v3863 = vld [vmem:[%s3860 + $0xc] sm:$0xf]
        %v3864 = vld [vmem:[%s3860 + $0x18] sm:$0x8]
        %v3865 = vld [vmem:[%s3860 + $0x1c] sm:$0xf]
        %v3866 = vld [vmem:[%s3860 + $0x20] sm:$0xf]
        %v3867 = vld [vmem:[%s3860 + $0x2c] sm:$0x8]
        %v3868 = vld [vmem:[%s3860 + $0x30] sm:$0xf]
        %v3869 = vld [vmem:[%s3860 + $0x34] sm:$0xf]
        %v3870 = vld [vmem:[%s3860 + $0x40] sm:$0x8]
        %v3871 = vld [vmem:[%s3860 + $0x44] sm:$0xf]
        %v3872 = vld [vmem:[%s3860 + $0x48] sm:$0xf]
        %v3873 = vld [vmem:[%s3860 + $0x54] sm:$0x8]
        %v3874 = vld [vmem:[%s3860 + $0x58] sm:$0xf]
        %v3875 = vld [vmem:[%s3860 + $0x5c] sm:$0xf]
        %v3876 = vld [vmem:[%s3860 + $0x68] sm:$0x8]
        %v3877 = vld [vmem:[%s3860 + $0x6c] sm:$0xf]
        %v3878 = vld [vmem:[%s3860 + $0x70] sm:$0xf]
        %v3879 = vld [vmem:[%s3860 + $0x7c] sm:$0x8]
        %v3880 = vld [vmem:[%s3860 + $0x80] sm:$0xf]
        %v3881 = vld [vmem:[%s3860 + $0x84] sm:$0xf]
        %v3882 = vld [vmem:[%s3860 + $0x90] sm:$0x8]
        %v3883 = vld [vmem:[%s3860 + $0x94] sm:$0xf]
        %v3884 = vld [vmem:[%s3860 + $0x98] sm:$0xf]
        %v3885 = vld [vmem:[%s3860 + $0xa4] sm:$0x8]
        %v3886 = vld [vmem:[%s3860 + $0xa8] sm:$0xf]
        %v3887 = vld [vmem:[%s3860 + $0xac] sm:$0xf]
        %v3888 = vld [vmem:[%s3860 + $0xb8] sm:$0x8]
        %v3889 = vld [vmem:[%s3860 + $0xbc] sm:$0xf]
        %v3890 = vld [vmem:[%s3860 + $0xc0] sm:$0xf]
        %v3891 = vld [vmem:[%s3860 + $0xcc] sm:$0x8]
        %v3892 = vld [vmem:[%s3860 + $0xd0] sm:$0xf]
        %v3893 = vld [vmem:[%s3860 + $0xd4] sm:$0xf]
        %v3894 = vld [vmem:[%s3860 + $0xe0] sm:$0x8]
        %v3895 = vld [vmem:[%s3860 + $0xe4] sm:$0xf]
        %v3896 = vld [vmem:[%s3860 + $0xe8] sm:$0xf]
        %v3897 = vld [vmem:[%s3860 + $0xf4] sm:$0x8]
        %v3898 = vld [vmem:[%s3860 + $0xf8] sm:$0xf]
        %v3899 = vld [vmem:[%s3860 + $0xfc] sm:$0xf]
        %v3900 = vld [vmem:[%s3860 + $0x108] sm:$0x8]
        %v3901 = vld [vmem:[%s3860 + $0x10c] sm:$0xf]
        %v3902 = vld [vmem:[%s3860 + $0x110] sm:$0xf]
        %v3903 = vld [vmem:[%s3860 + $0x11c] sm:$0x8]
        %v3904 = vld [vmem:[%s3860 + $0x120] sm:$0xf]
        %v3905 = vld [vmem:[%s3860 + $0x124] sm:$0xf]
        %v3906 = vld [vmem:[%s3860 + $0x130] sm:$0x8]
        %v3907 = vld [vmem:[%s3860 + $0x134] sm:$0xf]
        %v3908 = vld [vmem:[%s3860 + $0x138] sm:$0xf]
        %v3957 = vunpack.c.l.b16 %v3764
        %v3958 = vunpack.c.l.b16 %v3765
        %v3959 = vunpack.c.l.b16 %v3766
        %v3960 = vunpack.c.l.b16 %v3767
        %v3961 = vunpack.c.l.b16 %v3768
        %v3962 = vunpack.c.l.b16 %v3769
        %v3963 = vunpack.c.l.b16 %v3770
        %v3964 = vunpack.c.l.b16 %v3771
        %v3965 = vunpack.c.l.b16 %v3772
        %v3966 = vunpack.c.l.b16 %v3773
        %v3967 = vunpack.c.l.b16 %v3774
        %v3968 = vunpack.c.l.b16 %v3775
        %v3969 = vunpack.c.l.b16 %v3776
        %v3970 = vunpack.c.l.b16 %v3777
        %v3971 = vunpack.c.l.b16 %v3778
        %v3972 = vunpack.c.l.b16 %v3779
        %v3973 = vunpack.c.l.b16 %v3780
        %v3974 = vunpack.c.l.b16 %v3781
        %v3975 = vunpack.c.l.b16 %v3782
        %v3976 = vunpack.c.l.b16 %v3783
        %v3977 = vunpack.c.l.b16 %v3784
        %v3978 = vunpack.c.l.b16 %v3785
        %v3979 = vunpack.c.l.b16 %v3786
        %v3980 = vunpack.c.l.b16 %v3787
        %v3981 = vunpack.c.l.b16 %v3788
        %v3982 = vunpack.c.l.b16 %v3789
        %v3983 = vunpack.c.l.b16 %v3790
        %v3984 = vunpack.c.l.b16 %v3791
        %v3985 = vunpack.c.l.b16 %v3792
        %v3986 = vunpack.c.l.b16 %v3793
        %v3987 = vunpack.c.l.b16 %v3794
        %v3988 = vunpack.c.l.b16 %v3795
        %v3989 = vunpack.c.l.b16 %v3796
        %v3990 = vunpack.c.l.b16 %v3797
        %v3991 = vunpack.c.l.b16 %v3798
        %v3992 = vunpack.c.l.b16 %v3799
        %v3993 = vunpack.c.l.b16 %v3800
        %v3994 = vunpack.c.l.b16 %v3801
        %v3995 = vunpack.c.l.b16 %v3802
        %v3996 = vunpack.c.l.b16 %v3803
        %v3997 = vunpack.c.l.b16 %v3804
        %v3998 = vunpack.c.l.b16 %v3805
        %v3999 = vunpack.c.l.b16 %v3806
        %v4000 = vunpack.c.l.b16 %v3807
        %v4001 = vunpack.c.l.b16 %v3808
        %v4002 = vunpack.c.l.b16 %v3809
        %v4003 = vunpack.c.l.b16 %v3810
        %v4004 = vunpack.c.l.b16 %v3811
        %v4005 = vpack.c.b16 %v3958, %v3957
        %v4006 = vpack.c.b16 %v3959, %v3959
        %v4007 = vpack.c.b16 %v3961, %v3960
        %v4008 = vpack.c.b16 %v3962, %v3962
        %v4009 = vpack.c.b16 %v3964, %v3963
        %v4010 = vpack.c.b16 %v3965, %v3965
        %v4011 = vpack.c.b16 %v3967, %v3966
        %v4012 = vpack.c.b16 %v3968, %v3968
        %v4013 = vpack.c.b16 %v3970, %v3969
        %v4014 = vpack.c.b16 %v3971, %v3971
        %v4015 = vpack.c.b16 %v3973, %v3972
        %v4016 = vpack.c.b16 %v3974, %v3974
        %v4017 = vpack.c.b16 %v3976, %v3975
        %v4018 = vpack.c.b16 %v3977, %v3977
        %v4019 = vpack.c.b16 %v3979, %v3978
        %v4020 = vpack.c.b16 %v3980, %v3980
        %v4021 = vpack.c.b16 %v3982, %v3981
        %v4022 = vpack.c.b16 %v3983, %v3983
        %v4023 = vpack.c.b16 %v3985, %v3984
        %v4024 = vpack.c.b16 %v3986, %v3986
        %v4025 = vpack.c.b16 %v3988, %v3987
        %v4026 = vpack.c.b16 %v3989, %v3989
        %v4027 = vpack.c.b16 %v3991, %v3990
        %v4028 = vpack.c.b16 %v3992, %v3992
        %v4029 = vpack.c.b16 %v3994, %v3993
        %v4030 = vpack.c.b16 %v3995, %v3995
        %v4031 = vpack.c.b16 %v3997, %v3996
        %v4032 = vpack.c.b16 %v3998, %v3998
        %v4033 = vpack.c.b16 %v4000, %v3999
        %v4034 = vpack.c.b16 %v4001, %v4001
        %v4035 = vpack.c.b16 %v4003, %v4002
        %v4036 = vpack.c.b16 %v4004, %v4004
        %v4085 = vunpack.c.l.b16 %v3812
        %v4086 = vunpack.c.l.b16 %v3813
        %v4087 = vunpack.c.l.b16 %v3814
        %v4088 = vunpack.c.l.b16 %v3815
        %v4089 = vunpack.c.l.b16 %v3816
        %v4090 = vunpack.c.l.b16 %v3817
        %v4091 = vunpack.c.l.b16 %v3818
        %v4092 = vunpack.c.l.b16 %v3819
        %v4093 = vunpack.c.l.b16 %v3820
        %v4094 = vunpack.c.l.b16 %v3821
        %v4095 = vunpack.c.l.b16 %v3822
        %v4096 = vunpack.c.l.b16 %v3823
        %v4097 = vunpack.c.l.b16 %v3824
        %v4098 = vunpack.c.l.b16 %v3825
        %v4099 = vunpack.c.l.b16 %v3826
        %v4100 = vunpack.c.l.b16 %v3827
        %v4101 = vunpack.c.l.b16 %v3828
        %v4102 = vunpack.c.l.b16 %v3829
        %v4103 = vunpack.c.l.b16 %v3830
        %v4104 = vunpack.c.l.b16 %v3831
        %v4105 = vunpack.c.l.b16 %v3832
        %v4106 = vunpack.c.l.b16 %v3833
        %v4107 = vunpack.c.l.b16 %v3834
        %v4108 = vunpack.c.l.b16 %v3835
        %v4109 = vunpack.c.l.b16 %v3836
        %v4110 = vunpack.c.l.b16 %v3837
        %v4111 = vunpack.c.l.b16 %v3838
        %v4112 = vunpack.c.l.b16 %v3839
        %v4113 = vunpack.c.l.b16 %v3840
        %v4114 = vunpack.c.l.b16 %v3841
        %v4115 = vunpack.c.l.b16 %v3842
        %v4116 = vunpack.c.l.b16 %v3843
        %v4117 = vunpack.c.l.b16 %v3844
        %v4118 = vunpack.c.l.b16 %v3845
        %v4119 = vunpack.c.l.b16 %v3846
        %v4120 = vunpack.c.l.b16 %v3847
        %v4121 = vunpack.c.l.b16 %v3848
        %v4122 = vunpack.c.l.b16 %v3849
        %v4123 = vunpack.c.l.b16 %v3850
        %v4124 = vunpack.c.l.b16 %v3851
        %v4125 = vunpack.c.l.b16 %v3852
        %v4126 = vunpack.c.l.b16 %v3853
        %v4127 = vunpack.c.l.b16 %v3854
        %v4128 = vunpack.c.l.b16 %v3855
        %v4129 = vunpack.c.l.b16 %v3856
        %v4130 = vunpack.c.l.b16 %v3857
        %v4131 = vunpack.c.l.b16 %v3858
        %v4132 = vunpack.c.l.b16 %v3859
        %v4133 = vpack.c.b16 %v4086, %v4085
        %v4134 = vpack.c.b16 %v4087, %v4087
        %v4135 = vpack.c.b16 %v4089, %v4088
        %v4136 = vpack.c.b16 %v4090, %v4090
        %v4137 = vpack.c.b16 %v4092, %v4091
        %v4138 = vpack.c.b16 %v4093, %v4093
        %v4139 = vpack.c.b16 %v4095, %v4094
        %v4140 = vpack.c.b16 %v4096, %v4096
        %v4141 = vpack.c.b16 %v4098, %v4097
        %v4142 = vpack.c.b16 %v4099, %v4099
        %v4143 = vpack.c.b16 %v4101, %v4100
        %v4144 = vpack.c.b16 %v4102, %v4102
        %v4145 = vpack.c.b16 %v4104, %v4103
        %v4146 = vpack.c.b16 %v4105, %v4105
        %v4147 = vpack.c.b16 %v4107, %v4106
        %v4148 = vpack.c.b16 %v4108, %v4108
        %v4149 = vpack.c.b16 %v4110, %v4109
        %v4150 = vpack.c.b16 %v4111, %v4111
        %v4151 = vpack.c.b16 %v4113, %v4112
        %v4152 = vpack.c.b16 %v4114, %v4114
        %v4153 = vpack.c.b16 %v4116, %v4115
        %v4154 = vpack.c.b16 %v4117, %v4117
        %v4155 = vpack.c.b16 %v4119, %v4118
        %v4156 = vpack.c.b16 %v4120, %v4120
        %v4157 = vpack.c.b16 %v4122, %v4121
        %v4158 = vpack.c.b16 %v4123, %v4123
        %v4159 = vpack.c.b16 %v4125, %v4124
        %v4160 = vpack.c.b16 %v4126, %v4126
        %v4161 = vpack.c.b16 %v4128, %v4127
        %v4162 = vpack.c.b16 %v4129, %v4129
        %v4163 = vpack.c.b16 %v4131, %v4130
        %v4164 = vpack.c.b16 %v4132, %v4132
        %v4213 = vunpack.c.l.b16 %v3861
        %v4214 = vunpack.c.l.b16 %v3862
        %v4215 = vunpack.c.l.b16 %v3863
        %v4216 = vunpack.c.l.b16 %v3864
        %v4217 = vunpack.c.l.b16 %v3865
        %v4218 = vunpack.c.l.b16 %v3866
        %v4219 = vunpack.c.l.b16 %v3867
        %v4220 = vunpack.c.l.b16 %v3868
        %v4221 = vunpack.c.l.b16 %v3869
        %v4222 = vunpack.c.l.b16 %v3870
        %v4223 = vunpack.c.l.b16 %v3871
        %v4224 = vunpack.c.l.b16 %v3872
        %v4225 = vunpack.c.l.b16 %v3873
        %v4226 = vunpack.c.l.b16 %v3874
        %v4227 = vunpack.c.l.b16 %v3875
        %v4228 = vunpack.c.l.b16 %v3876
        %v4229 = vunpack.c.l.b16 %v3877
        %v4230 = vunpack.c.l.b16 %v3878
        %v4231 = vunpack.c.l.b16 %v3879
        %v4232 = vunpack.c.l.b16 %v3880
        %v4233 = vunpack.c.l.b16 %v3881
        %v4234 = vunpack.c.l.b16 %v3882
        %v4235 = vunpack.c.l.b16 %v3883
        %v4236 = vunpack.c.l.b16 %v3884
        %v4237 = vunpack.c.l.b16 %v3885
        %v4238 = vunpack.c.l.b16 %v3886
        %v4239 = vunpack.c.l.b16 %v3887
        %v4240 = vunpack.c.l.b16 %v3888
        %v4241 = vunpack.c.l.b16 %v3889
        %v4242 = vunpack.c.l.b16 %v3890
        %v4243 = vunpack.c.l.b16 %v3891
        %v4244 = vunpack.c.l.b16 %v3892
        %v4245 = vunpack.c.l.b16 %v3893
        %v4246 = vunpack.c.l.b16 %v3894
        %v4247 = vunpack.c.l.b16 %v3895
        %v4248 = vunpack.c.l.b16 %v3896
        %v4249 = vunpack.c.l.b16 %v3897
        %v4250 = vunpack.c.l.b16 %v3898
        %v4251 = vunpack.c.l.b16 %v3899
        %v4252 = vunpack.c.l.b16 %v3900
        %v4253 = vunpack.c.l.b16 %v3901
        %v4254 = vunpack.c.l.b16 %v3902
        %v4255 = vunpack.c.l.b16 %v3903
        %v4256 = vunpack.c.l.b16 %v3904
        %v4257 = vunpack.c.l.b16 %v3905
        %v4258 = vunpack.c.l.b16 %v3906
        %v4259 = vunpack.c.l.b16 %v3907
        %v4260 = vunpack.c.l.b16 %v3908
        %v4261 = vpack.c.b16 %v4214, %v4213
        %v4262 = vpack.c.b16 %v4215, %v4215
        %v4263 = vpack.c.b16 %v4217, %v4216
        %v4264 = vpack.c.b16 %v4218, %v4218
        %v4265 = vpack.c.b16 %v4220, %v4219
        %v4266 = vpack.c.b16 %v4221, %v4221
        %v4267 = vpack.c.b16 %v4223, %v4222
        %v4268 = vpack.c.b16 %v4224, %v4224
        %v4269 = vpack.c.b16 %v4226, %v4225
        %v4270 = vpack.c.b16 %v4227, %v4227
        %v4271 = vpack.c.b16 %v4229, %v4228
        %v4272 = vpack.c.b16 %v4230, %v4230
        %v4273 = vpack.c.b16 %v4232, %v4231
        %v4274 = vpack.c.b16 %v4233, %v4233
        %v4275 = vpack.c.b16 %v4235, %v4234
        %v4276 = vpack.c.b16 %v4236, %v4236
        %v4277 = vpack.c.b16 %v4238, %v4237
        %v4278 = vpack.c.b16 %v4239, %v4239
        %v4279 = vpack.c.b16 %v4241, %v4240
        %v4280 = vpack.c.b16 %v4242, %v4242
        %v4281 = vpack.c.b16 %v4244, %v4243
        %v4282 = vpack.c.b16 %v4245, %v4245
        %v4283 = vpack.c.b16 %v4247, %v4246
        %v4284 = vpack.c.b16 %v4248, %v4248
        %v4285 = vpack.c.b16 %v4250, %v4249
        %v4286 = vpack.c.b16 %v4251, %v4251
        %v4287 = vpack.c.b16 %v4253, %v4252
        %v4288 = vpack.c.b16 %v4254, %v4254
        %v4289 = vpack.c.b16 %v4256, %v4255
        %v4290 = vpack.c.b16 %v4257, %v4257
        %v4291 = vpack.c.b16 %v4259, %v4258
        %v4292 = vpack.c.b16 %v4260, %v4260
        %vm4293 = vsmask.f32 4352
        %v4295 = vshrl.u32 %v4005, 16
        %v4297 = vrot.slane %v4295, 3
        %v4298 = vshll.u32 %v4005, 16
        %v4300 = vrot.slane %v4298, 4
        %v4301 = vor.u32 %v4297, %v4300
        %v4303 = vshrl.u32 %v4006, 16
        %v4305 = vrot.slane %v4303, 3
        %v4306 = vshll.u32 %v4006, 16
        %v4308 = vrot.slane %v4306, 4
        %v4309 = vor.u32 %v4305, %v4308
        %v4310 = vsel %vm4293, %v4301, %v4309
        %v4312 = vshrl.u32 %v4133, 16
        %v4314 = vrot.slane %v4312, 3
        %v4315 = vshll.u32 %v4133, 16
        %v4317 = vrot.slane %v4315, 4
        %v4318 = vor.u32 %v4314, %v4317
        %v4320 = vshrl.u32 %v4134, 16
        %v4322 = vrot.slane %v4320, 3
        %v4323 = vshll.u32 %v4134, 16
        %v4325 = vrot.slane %v4323, 4
        %v4326 = vor.u32 %v4322, %v4325
        %v4327 = vsel %vm4293, %v4318, %v4326
        %v4329 = vshrl.u32 %v4261, 16
        %v4331 = vrot.slane %v4329, 3
        %v4332 = vshll.u32 %v4261, 16
        %v4334 = vrot.slane %v4332, 4
        %v4335 = vor.u32 %v4331, %v4334
        %v4337 = vshrl.u32 %v4262, 16
        %v4339 = vrot.slane %v4337, 3
        %v4340 = vshll.u32 %v4262, 16
        %v4342 = vrot.slane %v4340, 4
        %v4343 = vor.u32 %v4339, %v4342
        %v4344 = vsel %vm4293, %v4335, %v4343
        %v4346 = vshrl.u32 %v4007, 16
        %v4348 = vrot.slane %v4346, 3
        %v4349 = vshll.u32 %v4007, 16
        %v4351 = vrot.slane %v4349, 4
        %v4352 = vor.u32 %v4348, %v4351
        %v4354 = vshrl.u32 %v4008, 16
        %v4356 = vrot.slane %v4354, 3
        %v4357 = vshll.u32 %v4008, 16
        %v4359 = vrot.slane %v4357, 4
        %v4360 = vor.u32 %v4356, %v4359
        %v4361 = vsel %vm4293, %v4352, %v4360
        %v4363 = vshrl.u32 %v4135, 16
        %v4365 = vrot.slane %v4363, 3
        %v4366 = vshll.u32 %v4135, 16
        %v4368 = vrot.slane %v4366, 4
        %v4369 = vor.u32 %v4365, %v4368
        %v4371 = vshrl.u32 %v4136, 16
        %v4373 = vrot.slane %v4371, 3
        %v4374 = vshll.u32 %v4136, 16
        %v4376 = vrot.slane %v4374, 4
        %v4377 = vor.u32 %v4373, %v4376
        %v4378 = vsel %vm4293, %v4369, %v4377
        %v4380 = vshrl.u32 %v4263, 16
        %v4382 = vrot.slane %v4380, 3
        %v4383 = vshll.u32 %v4263, 16
        %v4385 = vrot.slane %v4383, 4
        %v4386 = vor.u32 %v4382, %v4385
        %v4388 = vshrl.u32 %v4264, 16
        %v4390 = vrot.slane %v4388, 3
        %v4391 = vshll.u32 %v4264, 16
        %v4393 = vrot.slane %v4391, 4
        %v4394 = vor.u32 %v4390, %v4393
        %v4395 = vsel %vm4293, %v4386, %v4394
        %v4397 = vshrl.u32 %v4009, 16
        %v4399 = vrot.slane %v4397, 3
        %v4400 = vshll.u32 %v4009, 16
        %v4402 = vrot.slane %v4400, 4
        %v4403 = vor.u32 %v4399, %v4402
        %v4405 = vshrl.u32 %v4010, 16
        %v4407 = vrot.slane %v4405, 3
        %v4408 = vshll.u32 %v4010, 16
        %v4410 = vrot.slane %v4408, 4
        %v4411 = vor.u32 %v4407, %v4410
        %v4412 = vsel %vm4293, %v4403, %v4411
        %v4414 = vshrl.u32 %v4137, 16
        %v4416 = vrot.slane %v4414, 3
        %v4417 = vshll.u32 %v4137, 16
        %v4419 = vrot.slane %v4417, 4
        %v4420 = vor.u32 %v4416, %v4419
        %v4422 = vshrl.u32 %v4138, 16
        %v4424 = vrot.slane %v4422, 3
        %v4425 = vshll.u32 %v4138, 16
        %v4427 = vrot.slane %v4425, 4
        %v4428 = vor.u32 %v4424, %v4427
        %v4429 = vsel %vm4293, %v4420, %v4428
        %v4431 = vshrl.u32 %v4265, 16
        %v4433 = vrot.slane %v4431, 3
        %v4434 = vshll.u32 %v4265, 16
        %v4436 = vrot.slane %v4434, 4
        %v4437 = vor.u32 %v4433, %v4436
        %v4439 = vshrl.u32 %v4266, 16
        %v4441 = vrot.slane %v4439, 3
        %v4442 = vshll.u32 %v4266, 16
        %v4444 = vrot.slane %v4442, 4
        %v4445 = vor.u32 %v4441, %v4444
        %v4446 = vsel %vm4293, %v4437, %v4445
        %v4448 = vshrl.u32 %v4011, 16
        %v4450 = vrot.slane %v4448, 3
        %v4451 = vshll.u32 %v4011, 16
        %v4453 = vrot.slane %v4451, 4
        %v4454 = vor.u32 %v4450, %v4453
        %v4456 = vshrl.u32 %v4012, 16
        %v4458 = vrot.slane %v4456, 3
        %v4459 = vshll.u32 %v4012, 16
        %v4461 = vrot.slane %v4459, 4
        %v4462 = vor.u32 %v4458, %v4461
        %v4463 = vsel %vm4293, %v4454, %v4462
        %v4465 = vshrl.u32 %v4139, 16
        %v4467 = vrot.slane %v4465, 3
        %v4468 = vshll.u32 %v4139, 16
        %v4470 = vrot.slane %v4468, 4
        %v4471 = vor.u32 %v4467, %v4470
        %v4473 = vshrl.u32 %v4140, 16
        %v4475 = vrot.slane %v4473, 3
        %v4476 = vshll.u32 %v4140, 16
        %v4478 = vrot.slane %v4476, 4
        %v4479 = vor.u32 %v4475, %v4478
        %v4480 = vsel %vm4293, %v4471, %v4479
        %v4482 = vshrl.u32 %v4267, 16
        %v4484 = vrot.slane %v4482, 3
        %v4485 = vshll.u32 %v4267, 16
        %v4487 = vrot.slane %v4485, 4
        %v4488 = vor.u32 %v4484, %v4487
        %v4490 = vshrl.u32 %v4268, 16
        %v4492 = vrot.slane %v4490, 3
        %v4493 = vshll.u32 %v4268, 16
        %v4495 = vrot.slane %v4493, 4
        %v4496 = vor.u32 %v4492, %v4495
        %v4497 = vsel %vm4293, %v4488, %v4496
        %v4499 = vshrl.u32 %v4013, 16
        %v4501 = vrot.slane %v4499, 3
        %v4502 = vshll.u32 %v4013, 16
        %v4504 = vrot.slane %v4502, 4
        %v4505 = vor.u32 %v4501, %v4504
        %v4507 = vshrl.u32 %v4014, 16
        %v4509 = vrot.slane %v4507, 3
        %v4510 = vshll.u32 %v4014, 16
        %v4512 = vrot.slane %v4510, 4
        %v4513 = vor.u32 %v4509, %v4512
        %v4514 = vsel %vm4293, %v4505, %v4513
        %v4516 = vshrl.u32 %v4141, 16
        %v4518 = vrot.slane %v4516, 3
        %v4519 = vshll.u32 %v4141, 16
        %v4521 = vrot.slane %v4519, 4
        %v4522 = vor.u32 %v4518, %v4521
        %v4524 = vshrl.u32 %v4142, 16
        %v4526 = vrot.slane %v4524, 3
        %v4527 = vshll.u32 %v4142, 16
        %v4529 = vrot.slane %v4527, 4
        %v4530 = vor.u32 %v4526, %v4529
        %v4531 = vsel %vm4293, %v4522, %v4530
        %v4533 = vshrl.u32 %v4269, 16
        %v4535 = vrot.slane %v4533, 3
        %v4536 = vshll.u32 %v4269, 16
        %v4538 = vrot.slane %v4536, 4
        %v4539 = vor.u32 %v4535, %v4538
        %v4541 = vshrl.u32 %v4270, 16
        %v4543 = vrot.slane %v4541, 3
        %v4544 = vshll.u32 %v4270, 16
        %v4546 = vrot.slane %v4544, 4
        %v4547 = vor.u32 %v4543, %v4546
        %v4548 = vsel %vm4293, %v4539, %v4547
        %v4550 = vshrl.u32 %v4015, 16
        %v4552 = vrot.slane %v4550, 3
        %v4553 = vshll.u32 %v4015, 16
        %v4555 = vrot.slane %v4553, 4
        %v4556 = vor.u32 %v4552, %v4555
        %v4558 = vshrl.u32 %v4016, 16
        %v4560 = vrot.slane %v4558, 3
        %v4561 = vshll.u32 %v4016, 16
        %v4563 = vrot.slane %v4561, 4
        %v4564 = vor.u32 %v4560, %v4563
        %v4565 = vsel %vm4293, %v4556, %v4564
        %v4567 = vshrl.u32 %v4143, 16
        %v4569 = vrot.slane %v4567, 3
        %v4570 = vshll.u32 %v4143, 16
        %v4572 = vrot.slane %v4570, 4
        %v4573 = vor.u32 %v4569, %v4572
        %v4575 = vshrl.u32 %v4144, 16
        %v4577 = vrot.slane %v4575, 3
        %v4578 = vshll.u32 %v4144, 16
        %v4580 = vrot.slane %v4578, 4
        %v4581 = vor.u32 %v4577, %v4580
        %v4582 = vsel %vm4293, %v4573, %v4581
        %v4584 = vshrl.u32 %v4271, 16
        %v4586 = vrot.slane %v4584, 3
        %v4587 = vshll.u32 %v4271, 16
        %v4589 = vrot.slane %v4587, 4
        %v4590 = vor.u32 %v4586, %v4589
        %v4592 = vshrl.u32 %v4272, 16
        %v4594 = vrot.slane %v4592, 3
        %v4595 = vshll.u32 %v4272, 16
        %v4597 = vrot.slane %v4595, 4
        %v4598 = vor.u32 %v4594, %v4597
        %v4599 = vsel %vm4293, %v4590, %v4598
        %v4601 = vshrl.u32 %v4017, 16
        %v4603 = vrot.slane %v4601, 3
        %v4604 = vshll.u32 %v4017, 16
        %v4606 = vrot.slane %v4604, 4
        %v4607 = vor.u32 %v4603, %v4606
        %v4609 = vshrl.u32 %v4018, 16
        %v4611 = vrot.slane %v4609, 3
        %v4612 = vshll.u32 %v4018, 16
        %v4614 = vrot.slane %v4612, 4
        %v4615 = vor.u32 %v4611, %v4614
        %v4616 = vsel %vm4293, %v4607, %v4615
        %v4618 = vshrl.u32 %v4145, 16
        %v4620 = vrot.slane %v4618, 3
        %v4621 = vshll.u32 %v4145, 16
        %v4623 = vrot.slane %v4621, 4
        %v4624 = vor.u32 %v4620, %v4623
        %v4626 = vshrl.u32 %v4146, 16
        %v4628 = vrot.slane %v4626, 3
        %v4629 = vshll.u32 %v4146, 16
        %v4631 = vrot.slane %v4629, 4
        %v4632 = vor.u32 %v4628, %v4631
        %v4633 = vsel %vm4293, %v4624, %v4632
        %v4635 = vshrl.u32 %v4273, 16
        %v4637 = vrot.slane %v4635, 3
        %v4638 = vshll.u32 %v4273, 16
        %v4640 = vrot.slane %v4638, 4
        %v4641 = vor.u32 %v4637, %v4640
        %v4643 = vshrl.u32 %v4274, 16
        %v4645 = vrot.slane %v4643, 3
        %v4646 = vshll.u32 %v4274, 16
        %v4648 = vrot.slane %v4646, 4
        %v4649 = vor.u32 %v4645, %v4648
        %v4650 = vsel %vm4293, %v4641, %v4649
        %v4652 = vshrl.u32 %v4019, 16
        %v4654 = vrot.slane %v4652, 3
        %v4655 = vshll.u32 %v4019, 16
        %v4657 = vrot.slane %v4655, 4
        %v4658 = vor.u32 %v4654, %v4657
        %v4660 = vshrl.u32 %v4020, 16
        %v4662 = vrot.slane %v4660, 3
        %v4663 = vshll.u32 %v4020, 16
        %v4665 = vrot.slane %v4663, 4
        %v4666 = vor.u32 %v4662, %v4665
        %v4667 = vsel %vm4293, %v4658, %v4666
        %v4669 = vshrl.u32 %v4147, 16
        %v4671 = vrot.slane %v4669, 3
        %v4672 = vshll.u32 %v4147, 16
        %v4674 = vrot.slane %v4672, 4
        %v4675 = vor.u32 %v4671, %v4674
        %v4677 = vshrl.u32 %v4148, 16
        %v4679 = vrot.slane %v4677, 3
        %v4680 = vshll.u32 %v4148, 16
        %v4682 = vrot.slane %v4680, 4
        %v4683 = vor.u32 %v4679, %v4682
        %v4684 = vsel %vm4293, %v4675, %v4683
        %v4686 = vshrl.u32 %v4275, 16
        %v4688 = vrot.slane %v4686, 3
        %v4689 = vshll.u32 %v4275, 16
        %v4691 = vrot.slane %v4689, 4
        %v4692 = vor.u32 %v4688, %v4691
        %v4694 = vshrl.u32 %v4276, 16
        %v4696 = vrot.slane %v4694, 3
        %v4697 = vshll.u32 %v4276, 16
        %v4699 = vrot.slane %v4697, 4
        %v4700 = vor.u32 %v4696, %v4699
        %v4701 = vsel %vm4293, %v4692, %v4700
        %v4703 = vshrl.u32 %v4021, 16
        %v4705 = vrot.slane %v4703, 3
        %v4706 = vshll.u32 %v4021, 16
        %v4708 = vrot.slane %v4706, 4
        %v4709 = vor.u32 %v4705, %v4708
        %v4711 = vshrl.u32 %v4022, 16
        %v4713 = vrot.slane %v4711, 3
        %v4714 = vshll.u32 %v4022, 16
        %v4716 = vrot.slane %v4714, 4
        %v4717 = vor.u32 %v4713, %v4716
        %v4718 = vsel %vm4293, %v4709, %v4717
        %v4720 = vshrl.u32 %v4149, 16
        %v4722 = vrot.slane %v4720, 3
        %v4723 = vshll.u32 %v4149, 16
        %v4725 = vrot.slane %v4723, 4
        %v4726 = vor.u32 %v4722, %v4725
        %v4728 = vshrl.u32 %v4150, 16
        %v4730 = vrot.slane %v4728, 3
        %v4731 = vshll.u32 %v4150, 16
        %v4733 = vrot.slane %v4731, 4
        %v4734 = vor.u32 %v4730, %v4733
        %v4735 = vsel %vm4293, %v4726, %v4734
        %v4737 = vshrl.u32 %v4277, 16
        %v4739 = vrot.slane %v4737, 3
        %v4740 = vshll.u32 %v4277, 16
        %v4742 = vrot.slane %v4740, 4
        %v4743 = vor.u32 %v4739, %v4742
        %v4745 = vshrl.u32 %v4278, 16
        %v4747 = vrot.slane %v4745, 3
        %v4748 = vshll.u32 %v4278, 16
        %v4750 = vrot.slane %v4748, 4
        %v4751 = vor.u32 %v4747, %v4750
        %v4752 = vsel %vm4293, %v4743, %v4751
        %v4754 = vshrl.u32 %v4023, 16
        %v4756 = vrot.slane %v4754, 3
        %v4757 = vshll.u32 %v4023, 16
        %v4759 = vrot.slane %v4757, 4
        %v4760 = vor.u32 %v4756, %v4759
        %v4762 = vshrl.u32 %v4024, 16
        %v4764 = vrot.slane %v4762, 3
        %v4765 = vshll.u32 %v4024, 16
        %v4767 = vrot.slane %v4765, 4
        %v4768 = vor.u32 %v4764, %v4767
        %v4769 = vsel %vm4293, %v4760, %v4768
        %v4771 = vshrl.u32 %v4151, 16
        %v4773 = vrot.slane %v4771, 3
        %v4774 = vshll.u32 %v4151, 16
        %v4776 = vrot.slane %v4774, 4
        %v4777 = vor.u32 %v4773, %v4776
        %v4779 = vshrl.u32 %v4152, 16
        %v4781 = vrot.slane %v4779, 3
        %v4782 = vshll.u32 %v4152, 16
        %v4784 = vrot.slane %v4782, 4
        %v4785 = vor.u32 %v4781, %v4784
        %v4786 = vsel %vm4293, %v4777, %v4785
        %v4788 = vshrl.u32 %v4279, 16
        %v4790 = vrot.slane %v4788, 3
        %v4791 = vshll.u32 %v4279, 16
        %v4793 = vrot.slane %v4791, 4
        %v4794 = vor.u32 %v4790, %v4793
        %v4796 = vshrl.u32 %v4280, 16
        %v4798 = vrot.slane %v4796, 3
        %v4799 = vshll.u32 %v4280, 16
        %v4801 = vrot.slane %v4799, 4
        %v4802 = vor.u32 %v4798, %v4801
        %v4803 = vsel %vm4293, %v4794, %v4802
        %v4805 = vshrl.u32 %v4025, 16
        %v4807 = vrot.slane %v4805, 3
        %v4808 = vshll.u32 %v4025, 16
        %v4810 = vrot.slane %v4808, 4
        %v4811 = vor.u32 %v4807, %v4810
        %v4813 = vshrl.u32 %v4026, 16
        %v4815 = vrot.slane %v4813, 3
        %v4816 = vshll.u32 %v4026, 16
        %v4818 = vrot.slane %v4816, 4
        %v4819 = vor.u32 %v4815, %v4818
        %v4820 = vsel %vm4293, %v4811, %v4819
        %v4822 = vshrl.u32 %v4153, 16
        %v4824 = vrot.slane %v4822, 3
        %v4825 = vshll.u32 %v4153, 16
        %v4827 = vrot.slane %v4825, 4
        %v4828 = vor.u32 %v4824, %v4827
        %v4830 = vshrl.u32 %v4154, 16
        %v4832 = vrot.slane %v4830, 3
        %v4833 = vshll.u32 %v4154, 16
        %v4835 = vrot.slane %v4833, 4
        %v4836 = vor.u32 %v4832, %v4835
        %v4837 = vsel %vm4293, %v4828, %v4836
        %v4839 = vshrl.u32 %v4281, 16
        %v4841 = vrot.slane %v4839, 3
        %v4842 = vshll.u32 %v4281, 16
        %v4844 = vrot.slane %v4842, 4
        %v4845 = vor.u32 %v4841, %v4844
        %v4847 = vshrl.u32 %v4282, 16
        %v4849 = vrot.slane %v4847, 3
        %v4850 = vshll.u32 %v4282, 16
        %v4852 = vrot.slane %v4850, 4
        %v4853 = vor.u32 %v4849, %v4852
        %v4854 = vsel %vm4293, %v4845, %v4853
        %v4856 = vshrl.u32 %v4027, 16
        %v4858 = vrot.slane %v4856, 3
        %v4859 = vshll.u32 %v4027, 16
        %v4861 = vrot.slane %v4859, 4
        %v4862 = vor.u32 %v4858, %v4861
        %v4864 = vshrl.u32 %v4028, 16
        %v4866 = vrot.slane %v4864, 3
        %v4867 = vshll.u32 %v4028, 16
        %v4869 = vrot.slane %v4867, 4
        %v4870 = vor.u32 %v4866, %v4869
        %v4871 = vsel %vm4293, %v4862, %v4870
        %v4873 = vshrl.u32 %v4155, 16
        %v4875 = vrot.slane %v4873, 3
        %v4876 = vshll.u32 %v4155, 16
        %v4878 = vrot.slane %v4876, 4
        %v4879 = vor.u32 %v4875, %v4878
        %v4881 = vshrl.u32 %v4156, 16
        %v4883 = vrot.slane %v4881, 3
        %v4884 = vshll.u32 %v4156, 16
        %v4886 = vrot.slane %v4884, 4
        %v4887 = vor.u32 %v4883, %v4886
        %v4888 = vsel %vm4293, %v4879, %v4887
        %v4890 = vshrl.u32 %v4283, 16
        %v4892 = vrot.slane %v4890, 3
        %v4893 = vshll.u32 %v4283, 16
        %v4895 = vrot.slane %v4893, 4
        %v4896 = vor.u32 %v4892, %v4895
        %v4898 = vshrl.u32 %v4284, 16
        %v4900 = vrot.slane %v4898, 3
        %v4901 = vshll.u32 %v4284, 16
        %v4903 = vrot.slane %v4901, 4
        %v4904 = vor.u32 %v4900, %v4903
        %v4905 = vsel %vm4293, %v4896, %v4904
        %v4907 = vshrl.u32 %v4029, 16
        %v4909 = vrot.slane %v4907, 3
        %v4910 = vshll.u32 %v4029, 16
        %v4912 = vrot.slane %v4910, 4
        %v4913 = vor.u32 %v4909, %v4912
        %v4915 = vshrl.u32 %v4030, 16
        %v4917 = vrot.slane %v4915, 3
        %v4918 = vshll.u32 %v4030, 16
        %v4920 = vrot.slane %v4918, 4
        %v4921 = vor.u32 %v4917, %v4920
        %v4922 = vsel %vm4293, %v4913, %v4921
        %v4924 = vshrl.u32 %v4157, 16
        %v4926 = vrot.slane %v4924, 3
        %v4927 = vshll.u32 %v4157, 16
        %v4929 = vrot.slane %v4927, 4
        %v4930 = vor.u32 %v4926, %v4929
        %v4932 = vshrl.u32 %v4158, 16
        %v4934 = vrot.slane %v4932, 3
        %v4935 = vshll.u32 %v4158, 16
        %v4937 = vrot.slane %v4935, 4
        %v4938 = vor.u32 %v4934, %v4937
        %v4939 = vsel %vm4293, %v4930, %v4938
        %v4941 = vshrl.u32 %v4285, 16
        %v4943 = vrot.slane %v4941, 3
        %v4944 = vshll.u32 %v4285, 16
        %v4946 = vrot.slane %v4944, 4
        %v4947 = vor.u32 %v4943, %v4946
        %v4949 = vshrl.u32 %v4286, 16
        %v4951 = vrot.slane %v4949, 3
        %v4952 = vshll.u32 %v4286, 16
        %v4954 = vrot.slane %v4952, 4
        %v4955 = vor.u32 %v4951, %v4954
        %v4956 = vsel %vm4293, %v4947, %v4955
        %v4958 = vshrl.u32 %v4031, 16
        %v4960 = vrot.slane %v4958, 3
        %v4961 = vshll.u32 %v4031, 16
        %v4963 = vrot.slane %v4961, 4
        %v4964 = vor.u32 %v4960, %v4963
        %v4966 = vshrl.u32 %v4032, 16
        %v4968 = vrot.slane %v4966, 3
        %v4969 = vshll.u32 %v4032, 16
        %v4971 = vrot.slane %v4969, 4
        %v4972 = vor.u32 %v4968, %v4971
        %v4973 = vsel %vm4293, %v4964, %v4972
        %v4975 = vshrl.u32 %v4159, 16
        %v4977 = vrot.slane %v4975, 3
        %v4978 = vshll.u32 %v4159, 16
        %v4980 = vrot.slane %v4978, 4
        %v4981 = vor.u32 %v4977, %v4980
        %v4983 = vshrl.u32 %v4160, 16
        %v4985 = vrot.slane %v4983, 3
        %v4986 = vshll.u32 %v4160, 16
        %v4988 = vrot.slane %v4986, 4
        %v4989 = vor.u32 %v4985, %v4988
        %v4990 = vsel %vm4293, %v4981, %v4989
        %v4992 = vshrl.u32 %v4287, 16
        %v4994 = vrot.slane %v4992, 3
        %v4995 = vshll.u32 %v4287, 16
        %v4997 = vrot.slane %v4995, 4
        %v4998 = vor.u32 %v4994, %v4997
        %v5000 = vshrl.u32 %v4288, 16
        %v5002 = vrot.slane %v5000, 3
        %v5003 = vshll.u32 %v4288, 16
        %v5005 = vrot.slane %v5003, 4
        %v5006 = vor.u32 %v5002, %v5005
        %v5007 = vsel %vm4293, %v4998, %v5006
        %v5009 = vshrl.u32 %v4033, 16
        %v5011 = vrot.slane %v5009, 3
        %v5012 = vshll.u32 %v4033, 16
        %v5014 = vrot.slane %v5012, 4
        %v5015 = vor.u32 %v5011, %v5014
        %v5017 = vshrl.u32 %v4034, 16
        %v5019 = vrot.slane %v5017, 3
        %v5020 = vshll.u32 %v4034, 16
        %v5022 = vrot.slane %v5020, 4
        %v5023 = vor.u32 %v5019, %v5022
        %v5024 = vsel %vm4293, %v5015, %v5023
        %v5026 = vshrl.u32 %v4161, 16
        %v5028 = vrot.slane %v5026, 3
        %v5029 = vshll.u32 %v4161, 16
        %v5031 = vrot.slane %v5029, 4
        %v5032 = vor.u32 %v5028, %v5031
        %v5034 = vshrl.u32 %v4162, 16
        %v5036 = vrot.slane %v5034, 3
        %v5037 = vshll.u32 %v4162, 16
        %v5039 = vrot.slane %v5037, 4
        %v5040 = vor.u32 %v5036, %v5039
        %v5041 = vsel %vm4293, %v5032, %v5040
        %v5043 = vshrl.u32 %v4289, 16
        %v5045 = vrot.slane %v5043, 3
        %v5046 = vshll.u32 %v4289, 16
        %v5048 = vrot.slane %v5046, 4
        %v5049 = vor.u32 %v5045, %v5048
        %v5051 = vshrl.u32 %v4290, 16
        %v5053 = vrot.slane %v5051, 3
        %v5054 = vshll.u32 %v4290, 16
        %v5056 = vrot.slane %v5054, 4
        %v5057 = vor.u32 %v5053, %v5056
        %v5058 = vsel %vm4293, %v5049, %v5057
        %v5060 = vshrl.u32 %v4035, 16
        %v5062 = vrot.slane %v5060, 3
        %v5063 = vshll.u32 %v4035, 16
        %v5065 = vrot.slane %v5063, 4
        %v5066 = vor.u32 %v5062, %v5065
        %v5068 = vshrl.u32 %v4036, 16
        %v5070 = vrot.slane %v5068, 3
        %v5071 = vshll.u32 %v4036, 16
        %v5073 = vrot.slane %v5071, 4
        %v5074 = vor.u32 %v5070, %v5073
        %v5075 = vsel %vm4293, %v5066, %v5074
        %v5077 = vshrl.u32 %v4163, 16
        %v5079 = vrot.slane %v5077, 3
        %v5080 = vshll.u32 %v4163, 16
        %v5082 = vrot.slane %v5080, 4
        %v5083 = vor.u32 %v5079, %v5082
        %v5085 = vshrl.u32 %v4164, 16
        %v5087 = vrot.slane %v5085, 3
        %v5088 = vshll.u32 %v4164, 16
        %v5090 = vrot.slane %v5088, 4
        %v5091 = vor.u32 %v5087, %v5090
        %v5092 = vsel %vm4293, %v5083, %v5091
        %v5094 = vshrl.u32 %v4291, 16
        %v5096 = vrot.slane %v5094, 3
        %v5097 = vshll.u32 %v4291, 16
        %v5099 = vrot.slane %v5097, 4
        %v5100 = vor.u32 %v5096, %v5099
        %v5102 = vshrl.u32 %v4292, 16
        %v5104 = vrot.slane %v5102, 3
        %v5105 = vshll.u32 %v4292, 16
        %v5107 = vrot.slane %v5105, 4
        %v5108 = vor.u32 %v5104, %v5107
        %v5109 = vsel %vm4293, %v5100, %v5108
        %v5158 = vld [vmem:[#allocation3] sm:$0xf]
        %v5159 = vld [vmem:[#allocation3 + $0x4] sm:$0xf]
        %v5160 = vld [vmem:[#allocation3 + $0x8] sm:$0xf]
        %v5161 = vld [vmem:[#allocation3 + $0xc] sm:$0xf]
        %v5162 = vld [vmem:[#allocation3 + $0x10] sm:$0xf]
        %v5163 = vld [vmem:[#allocation3 + $0x14] sm:$0xf]
        %v5164 = vld [vmem:[#allocation3 + $0x18] sm:$0xf]
        %v5165 = vld [vmem:[#allocation3 + $0x1c] sm:$0xf]
        %v5166 = vld [vmem:[#allocation3 + $0x20] sm:$0xf]
        %v5167 = vld [vmem:[#allocation3 + $0x24] sm:$0xf]
        %v5168 = vld [vmem:[#allocation3 + $0x28] sm:$0xf]
        %v5169 = vld [vmem:[#allocation3 + $0x2c] sm:$0xf]
        %v5170 = vld [vmem:[#allocation3 + $0x30] sm:$0xf]
        %v5171 = vld [vmem:[#allocation3 + $0x34] sm:$0xf]
        %v5172 = vld [vmem:[#allocation3 + $0x38] sm:$0xf]
        %v5173 = vld [vmem:[#allocation3 + $0x3c] sm:$0xf]
        %v5174 = vld [vmem:[#allocation3 + $0x40] sm:$0xf]
        %v5175 = vld [vmem:[#allocation3 + $0x44] sm:$0xf]
        %v5176 = vld [vmem:[#allocation3 + $0x48] sm:$0xf]
        %v5177 = vld [vmem:[#allocation3 + $0x4c] sm:$0xf]
        %v5178 = vld [vmem:[#allocation3 + $0x50] sm:$0xf]
        %v5179 = vld [vmem:[#allocation3 + $0x54] sm:$0xf]
        %v5180 = vld [vmem:[#allocation3 + $0x58] sm:$0xf]
        %v5181 = vld [vmem:[#allocation3 + $0x5c] sm:$0xf]
        %v5182 = vld [vmem:[#allocation3 + $0x60] sm:$0xf]
        %v5183 = vld [vmem:[#allocation3 + $0x64] sm:$0xf]
        %v5184 = vld [vmem:[#allocation3 + $0x68] sm:$0xf]
        %v5185 = vld [vmem:[#allocation3 + $0x6c] sm:$0xf]
        %v5186 = vld [vmem:[#allocation3 + $0x70] sm:$0xf]
        %v5187 = vld [vmem:[#allocation3 + $0x74] sm:$0xf]
        %v5188 = vld [vmem:[#allocation3 + $0x78] sm:$0xf]
        %v5189 = vld [vmem:[#allocation3 + $0x7c] sm:$0xf]
        %v5190 = vld [vmem:[#allocation3 + $0x80] sm:$0xf]
        %v5191 = vld [vmem:[#allocation3 + $0x84] sm:$0xf]
        %v5192 = vld [vmem:[#allocation3 + $0x88] sm:$0xf]
        %v5193 = vld [vmem:[#allocation3 + $0x8c] sm:$0xf]
        %v5194 = vld [vmem:[#allocation3 + $0x90] sm:$0xf]
        %v5195 = vld [vmem:[#allocation3 + $0x94] sm:$0xf]
        %v5196 = vld [vmem:[#allocation3 + $0x98] sm:$0xf]
        %v5197 = vld [vmem:[#allocation3 + $0x9c] sm:$0xf]
        %v5198 = vld [vmem:[#allocation3 + $0xa0] sm:$0xf]
        %v5199 = vld [vmem:[#allocation3 + $0xa4] sm:$0xf]
        %v5200 = vld [vmem:[#allocation3 + $0xa8] sm:$0xf]
        %v5201 = vld [vmem:[#allocation3 + $0xac] sm:$0xf]
        %v5202 = vld [vmem:[#allocation3 + $0xb0] sm:$0xf]
        %v5203 = vld [vmem:[#allocation3 + $0xb4] sm:$0xf]
        %v5204 = vld [vmem:[#allocation3 + $0xb8] sm:$0xf]
        %v5205 = vld [vmem:[#allocation3 + $0xbc] sm:$0xf]
        %v5206 = vpack.c.b16 %v3959, %v3958
        %v5207 = vpack.c.b16 %v3962, %v3961
        %v5208 = vpack.c.b16 %v3965, %v3964
        %v5209 = vpack.c.b16 %v3968, %v3967
        %v5210 = vpack.c.b16 %v3971, %v3970
        %v5211 = vpack.c.b16 %v3974, %v3973
        %v5212 = vpack.c.b16 %v3977, %v3976
        %v5213 = vpack.c.b16 %v3980, %v3979
        %v5214 = vpack.c.b16 %v3983, %v3982
        %v5215 = vpack.c.b16 %v3986, %v3985
        %v5216 = vpack.c.b16 %v3989, %v3988
        %v5217 = vpack.c.b16 %v3992, %v3991
        %v5218 = vpack.c.b16 %v3995, %v3994
        %v5219 = vpack.c.b16 %v3998, %v3997
        %v5220 = vpack.c.b16 %v4001, %v4000
        %v5221 = vpack.c.b16 %v4004, %v4003
        %v5238 = vpack.c.b16 %v4087, %v4086
        %v5239 = vpack.c.b16 %v4090, %v4089
        %v5240 = vpack.c.b16 %v4093, %v4092
        %v5241 = vpack.c.b16 %v4096, %v4095
        %v5242 = vpack.c.b16 %v4099, %v4098
        %v5243 = vpack.c.b16 %v4102, %v4101
        %v5244 = vpack.c.b16 %v4105, %v4104
        %v5245 = vpack.c.b16 %v4108, %v4107
        %v5246 = vpack.c.b16 %v4111, %v4110
        %v5247 = vpack.c.b16 %v4114, %v4113
        %v5248 = vpack.c.b16 %v4117, %v4116
        %v5249 = vpack.c.b16 %v4120, %v4119
        %v5250 = vpack.c.b16 %v4123, %v4122
        %v5251 = vpack.c.b16 %v4126, %v4125
        %v5252 = vpack.c.b16 %v4129, %v4128
        %v5253 = vpack.c.b16 %v4132, %v4131
        %v5270 = vpack.c.b16 %v4215, %v4214
        %v5271 = vpack.c.b16 %v4218, %v4217
        %v5272 = vpack.c.b16 %v4221, %v4220
        %v5273 = vpack.c.b16 %v4224, %v4223
        %v5274 = vpack.c.b16 %v4227, %v4226
        %v5275 = vpack.c.b16 %v4230, %v4229
        %v5276 = vpack.c.b16 %v4233, %v4232
        %v5277 = vpack.c.b16 %v4236, %v4235
        %v5278 = vpack.c.b16 %v4239, %v4238
        %v5279 = vpack.c.b16 %v4242, %v4241
        %v5280 = vpack.c.b16 %v4245, %v4244
        %v5281 = vpack.c.b16 %v4248, %v4247
        %v5282 = vpack.c.b16 %v4251, %v4250
        %v5283 = vpack.c.b16 %v4254, %v4253
        %v5284 = vpack.c.b16 %v4257, %v4256
        %v5285 = vpack.c.b16 %v4260, %v4259
        %s5302 = scalar_lea.vmem [#allocation3], 192
        %v5303 = vld [vmem:[%s5302] sm:$0xf]
        %v5304 = vld [vmem:[%s5302 + $0x4] sm:$0xf]
        %v5305 = vld [vmem:[%s5302 + $0x8] sm:$0xf]
        %v5306 = vld [vmem:[%s5302 + $0xc] sm:$0xf]
        %v5307 = vld [vmem:[%s5302 + $0x10] sm:$0xf]
        %v5308 = vld [vmem:[%s5302 + $0x14] sm:$0xf]
        %v5309 = vld [vmem:[%s5302 + $0x18] sm:$0xf]
        %v5310 = vld [vmem:[%s5302 + $0x1c] sm:$0xf]
        %v5311 = vld [vmem:[%s5302 + $0x20] sm:$0xf]
        %v5312 = vld [vmem:[%s5302 + $0x24] sm:$0xf]
        %v5313 = vld [vmem:[%s5302 + $0x28] sm:$0xf]
        %v5314 = vld [vmem:[%s5302 + $0x2c] sm:$0xf]
        %v5315 = vld [vmem:[%s5302 + $0x30] sm:$0xf]
        %v5316 = vld [vmem:[%s5302 + $0x34] sm:$0xf]
        %v5317 = vld [vmem:[%s5302 + $0x38] sm:$0xf]
        %v5318 = vld [vmem:[%s5302 + $0x3c] sm:$0xf]
        %v5319 = vld [vmem:[%s5302 + $0x40] sm:$0xf]
        %v5320 = vld [vmem:[%s5302 + $0x44] sm:$0xf]
        %v5321 = vld [vmem:[%s5302 + $0x48] sm:$0xf]
        %v5322 = vld [vmem:[%s5302 + $0x4c] sm:$0xf]
        %v5323 = vld [vmem:[%s5302 + $0x50] sm:$0xf]
        %v5324 = vld [vmem:[%s5302 + $0x54] sm:$0xf]
        %v5325 = vld [vmem:[%s5302 + $0x58] sm:$0xf]
        %v5326 = vld [vmem:[%s5302 + $0x5c] sm:$0xf]
        %v5327 = vld [vmem:[%s5302 + $0x60] sm:$0xf]
        %v5328 = vld [vmem:[%s5302 + $0x64] sm:$0xf]
        %v5329 = vld [vmem:[%s5302 + $0x68] sm:$0xf]
        %v5330 = vld [vmem:[%s5302 + $0x6c] sm:$0xf]
        %v5331 = vld [vmem:[%s5302 + $0x70] sm:$0xf]
        %v5332 = vld [vmem:[%s5302 + $0x74] sm:$0xf]
        %v5333 = vld [vmem:[%s5302 + $0x78] sm:$0xf]
        %v5334 = vld [vmem:[%s5302 + $0x7c] sm:$0xf]
        %v5335 = vld [vmem:[%s5302 + $0x80] sm:$0xf]
        %v5336 = vld [vmem:[%s5302 + $0x84] sm:$0xf]
        %v5337 = vld [vmem:[%s5302 + $0x88] sm:$0xf]
        %v5338 = vld [vmem:[%s5302 + $0x8c] sm:$0xf]
        %v5339 = vld [vmem:[%s5302 + $0x90] sm:$0xf]
        %v5340 = vld [vmem:[%s5302 + $0x94] sm:$0xf]
        %v5341 = vld [vmem:[%s5302 + $0x98] sm:$0xf]
        %v5342 = vld [vmem:[%s5302 + $0x9c] sm:$0xf]
        %v5343 = vld [vmem:[%s5302 + $0xa0] sm:$0xf]
        %v5344 = vld [vmem:[%s5302 + $0xa4] sm:$0xf]
        %v5345 = vld [vmem:[%s5302 + $0xa8] sm:$0xf]
        %v5346 = vld [vmem:[%s5302 + $0xac] sm:$0xf]
        %v5347 = vld [vmem:[%s5302 + $0xb0] sm:$0xf]
        %v5348 = vld [vmem:[%s5302 + $0xb4] sm:$0xf]
        %v5349 = vld [vmem:[%s5302 + $0xb8] sm:$0xf]
        %v5350 = vld [vmem:[%s5302 + $0xbc] sm:$0xf]
        %v5399 = vunpack.c.l.b16 %v5303
        %v5400 = vunpack.c.l.b16 %v5304
        %v5401 = vunpack.c.l.b16 %v5305
        %v5402 = vunpack.c.l.b16 %v5306
        %v5403 = vunpack.c.l.b16 %v5307
        %v5404 = vunpack.c.l.b16 %v5308
        %v5405 = vunpack.c.l.b16 %v5309
        %v5406 = vunpack.c.l.b16 %v5310
        %v5407 = vunpack.c.l.b16 %v5311
        %v5408 = vunpack.c.l.b16 %v5312
        %v5409 = vunpack.c.l.b16 %v5313
        %v5410 = vunpack.c.l.b16 %v5314
        %v5411 = vunpack.c.l.b16 %v5315
        %v5412 = vunpack.c.l.b16 %v5316
        %v5413 = vunpack.c.l.b16 %v5317
        %v5414 = vunpack.c.l.b16 %v5318
        %v5415 = vunpack.c.l.b16 %v5319
        %v5416 = vunpack.c.l.b16 %v5320
        %v5417 = vunpack.c.l.b16 %v5321
        %v5418 = vunpack.c.l.b16 %v5322
        %v5419 = vunpack.c.l.b16 %v5323
        %v5420 = vunpack.c.l.b16 %v5324
        %v5421 = vunpack.c.l.b16 %v5325
        %v5422 = vunpack.c.l.b16 %v5326
        %v5423 = vunpack.c.l.b16 %v5327
        %v5424 = vunpack.c.l.b16 %v5328
        %v5425 = vunpack.c.l.b16 %v5329
        %v5426 = vunpack.c.l.b16 %v5330
        %v5427 = vunpack.c.l.b16 %v5331
        %v5428 = vunpack.c.l.b16 %v5332
        %v5429 = vunpack.c.l.b16 %v5333
        %v5430 = vunpack.c.l.b16 %v5334
        %v5431 = vunpack.c.l.b16 %v5335
        %v5432 = vunpack.c.l.b16 %v5336
        %v5433 = vunpack.c.l.b16 %v5337
        %v5434 = vunpack.c.l.b16 %v5338
        %v5435 = vunpack.c.l.b16 %v5339
        %v5436 = vunpack.c.l.b16 %v5340
        %v5437 = vunpack.c.l.b16 %v5341
        %v5438 = vunpack.c.l.b16 %v5342
        %v5439 = vunpack.c.l.b16 %v5343
        %v5440 = vunpack.c.l.b16 %v5344
        %v5441 = vunpack.c.l.b16 %v5345
        %v5442 = vunpack.c.l.b16 %v5346
        %v5443 = vunpack.c.l.b16 %v5347
        %v5444 = vunpack.c.l.b16 %v5348
        %v5445 = vunpack.c.l.b16 %v5349
        %v5446 = vunpack.c.l.b16 %v5350
        %v5447 = vpack.c.b16 %v5400, %v5399
        %v5448 = vpack.c.b16 %v5402, %v5401
        %v5449 = vpack.c.b16 %v5404, %v5403
        %v5450 = vpack.c.b16 %v5406, %v5405
        %v5451 = vpack.c.b16 %v5408, %v5407
        %v5452 = vpack.c.b16 %v5410, %v5409
        %v5453 = vpack.c.b16 %v5412, %v5411
        %v5454 = vpack.c.b16 %v5414, %v5413
        %v5455 = vpack.c.b16 %v5416, %v5415
        %v5456 = vpack.c.b16 %v5418, %v5417
        %v5457 = vpack.c.b16 %v5420, %v5419
        %v5458 = vpack.c.b16 %v5422, %v5421
        %v5459 = vpack.c.b16 %v5424, %v5423
        %v5460 = vpack.c.b16 %v5426, %v5425
        %v5461 = vpack.c.b16 %v5428, %v5427
        %v5462 = vpack.c.b16 %v5430, %v5429
        %v5463 = vpack.c.b16 %v5432, %v5431
        %v5464 = vpack.c.b16 %v5434, %v5433
        %v5465 = vpack.c.b16 %v5436, %v5435
        %v5466 = vpack.c.b16 %v5438, %v5437
        %v5467 = vpack.c.b16 %v5440, %v5439
        %v5468 = vpack.c.b16 %v5442, %v5441
        %v5469 = vpack.c.b16 %v5444, %v5443
        %v5470 = vpack.c.b16 %v5446, %v5445
        %5495 = vmatprep.subr.bf16.mxu0 0
        %5496 = vmatpush1.bf16.msra.mxu0 %v5447
        %5497 = vmatprep.subr.bf16.mxu0 0
        %5498 = vmatpush1.bf16.msra.mxu0 %v5448
        %5499 = vmatprep.subr.bf16.mxu0 0
        %5500 = vmatpush1.bf16.msra.mxu0 %v5449
        %5501 = vmatprep.subr.bf16.mxu0 0
        %5502 = vmatpush1.bf16.msra.mxu0 %v5450
        %5503 = vmatprep.subr.bf16.mxu0 0
        %5504 = vmatpush1.bf16.msra.mxu0 %v5451
        %5505 = vmatprep.subr.bf16.mxu0 0
        %5506 = vmatpush1.bf16.msra.mxu0 %v5452
        %5507 = vmatprep.subr.bf16.mxu0 0
        %5508 = vmatpush1.bf16.msra.mxu0 %v5453
        %5509 = vmatprep.subr.bf16.mxu0 0
        %5510 = vmatpush1.bf16.msra.mxu0 %v5454
        %5511 = vmatprep.subr.bf16.mxu0 0
        %5512 = vmatpush1.bf16.msra.mxu0 %v5455
        %5513 = vmatprep.subr.bf16.mxu0 0
        %5514 = vmatpush1.bf16.msra.mxu0 %v5456
        %5515 = vmatprep.subr.bf16.mxu0 0
        %5516 = vmatpush1.bf16.msra.mxu0 %v5457
        %5517 = vmatprep.subr.bf16.mxu0 0
        %5518 = vmatpush1.bf16.msra.mxu0 %v5458
        %5519 = vmatprep.subr.bf16.mxu0 0
        %5520 = vmatpush1.bf16.msra.mxu0 %v5459
        %5521 = vmatprep.subr.bf16.mxu0 0
        %5522 = vmatpush1.bf16.msra.mxu0 %v5460
        %5523 = vmatprep.subr.bf16.mxu0 0
        %5524 = vmatpush1.bf16.msra.mxu0 %v5461
        %5525 = vmatprep.subr.bf16.mxu0 0
        %5526 = vmatpush1.bf16.msra.mxu0 %v5462
        %5527 = vmatprep.mubr.bf16.mxu0 %v5238
        %5528 = vmatmul.mubr.bf16.gmra.mrb[0].mxu0 %v5206
        %v5529 = vpop.f32.mrb[0].mxu0
        %v5530 = vadd.f32 0.0, %v5529
        %v5531 = vpop.f32.mrb[0].mxu0
        %v5532 = vpop.f32.mrb[0].mxu0
        %v5533 = vadd.f32 0.0, %v5532
        %v5534 = vpop.f32.mrb[0].mxu0
        %5535 = vmatprep.mubr.bf16.mxu0 %v5239
        %5536 = vmatmul.mubr.bf16.gmra.mrb[0].mxu0 %v5207
        %v5537 = vpop.f32.mrb[0].mxu0
        %v5538 = vadd.f32 0.0, %v5537
        %v5539 = vpop.f32.mrb[0].mxu0
        %v5540 = vpop.f32.mrb[0].mxu0
        %v5541 = vadd.f32 0.0, %v5540
        %v5542 = vpop.f32.mrb[0].mxu0
        %5543 = vmatprep.mubr.bf16.mxu0 %v5240
        %5544 = vmatmul.mubr.bf16.gmra.mrb[0].mxu0 %v5208
        %v5545 = vpop.f32.mrb[0].mxu0
        %v5546 = vadd.f32 0.0, %v5545
        %v5547 = vpop.f32.mrb[0].mxu0
        %v5548 = vpop.f32.mrb[0].mxu0
        %v5549 = vadd.f32 0.0, %v5548
        %v5550 = vpop.f32.mrb[0].mxu0
        %5551 = vmatprep.mubr.bf16.mxu0 %v5241
        %5552 = vmatmul.mubr.bf16.gmra.mrb[0].mxu0 %v5209
        %v5553 = vpop.f32.mrb[0].mxu0
        %v5554 = vadd.f32 0.0, %v5553
        %v5555 = vpop.f32.mrb[0].mxu0
        %v5556 = vpop.f32.mrb[0].mxu0
        %v5557 = vadd.f32 0.0, %v5556
        %v5558 = vpop.f32.mrb[0].mxu0
        %5559 = vmatprep.mubr.bf16.mxu0 %v5242
        %5560 = vmatmul.mubr.bf16.gmra.mrb[0].mxu0 %v5210
        %v5561 = vpop.f32.mrb[0].mxu0
        %v5562 = vadd.f32 0.0, %v5561
        %v5563 = vpop.f32.mrb[0].mxu0
        %v5564 = vpop.f32.mrb[0].mxu0
        %v5565 = vadd.f32 0.0, %v5564
        %v5566 = vpop.f32.mrb[0].mxu0
        %5567 = vmatprep.mubr.bf16.mxu0 %v5243
        %5568 = vmatmul.mubr.bf16.gmra.mrb[0].mxu0 %v5211
        %v5569 = vpop.f32.mrb[0].mxu0
        %v5570 = vadd.f32 0.0, %v5569
        %v5571 = vpop.f32.mrb[0].mxu0
        %v5572 = vpop.f32.mrb[0].mxu0
        %v5573 = vadd.f32 0.0, %v5572
        %v5574 = vpop.f32.mrb[0].mxu0
        %5575 = vmatprep.mubr.bf16.mxu0 %v5244
        %5576 = vmatmul.mubr.bf16.gmra.mrb[0].mxu0 %v5212
        %v5577 = vpop.f32.mrb[0].mxu0
        %v5578 = vadd.f32 0.0, %v5577
        %v5579 = vpop.f32.mrb[0].mxu0
        %v5580 = vpop.f32.mrb[0].mxu0
        %v5581 = vadd.f32 0.0, %v5580
        %v5582 = vpop.f32.mrb[0].mxu0
        %5583 = vmatprep.mubr.bf16.mxu0 %v5245
        %5584 = vmatmul.mubr.bf16.gmra.mrb[0].mxu0 %v5213
        %v5585 = vpop.f32.mrb[0].mxu0
        %v5586 = vadd.f32 0.0, %v5585
        %v5587 = vpop.f32.mrb[0].mxu0
        %v5588 = vpop.f32.mrb[0].mxu0
        %v5589 = vadd.f32 0.0, %v5588
        %v5590 = vpop.f32.mrb[0].mxu0
        %5591 = vmatprep.mubr.bf16.mxu0 %v5246
        %5592 = vmatmul.mubr.bf16.gmra.mrb[0].mxu0 %v5214
        %v5593 = vpop.f32.mrb[0].mxu0
        %v5594 = vadd.f32 0.0, %v5593
        %v5595 = vpop.f32.mrb[0].mxu0
        %v5596 = vpop.f32.mrb[0].mxu0
        %v5597 = vadd.f32 0.0, %v5596
        %v5598 = vpop.f32.mrb[0].mxu0
        %5599 = vmatprep.mubr.bf16.mxu0 %v5247
        %5600 = vmatmul.mubr.bf16.gmra.mrb[0].mxu0 %v5215
        %v5601 = vpop.f32.mrb[0].mxu0
        %v5602 = vadd.f32 0.0, %v5601
        %v5603 = vpop.f32.mrb[0].mxu0
        %v5604 = vpop.f32.mrb[0].mxu0
        %v5605 = vadd.f32 0.0, %v5604
        %v5606 = vpop.f32.mrb[0].mxu0
        %5607 = vmatprep.mubr.bf16.mxu0 %v5248
        %5608 = vmatmul.mubr.bf16.gmra.mrb[0].mxu0 %v5216
        %v5609 = vpop.f32.mrb[0].mxu0
        %v5610 = vadd.f32 0.0, %v5609
        %v5611 = vpop.f32.mrb[0].mxu0
        %v5612 = vpop.f32.mrb[0].mxu0
        %v5613 = vadd.f32 0.0, %v5612
        %v5614 = vpop.f32.mrb[0].mxu0
        %5615 = vmatprep.mubr.bf16.mxu0 %v5249
        %5616 = vmatmul.mubr.bf16.gmra.mrb[0].mxu0 %v5217
        %v5617 = vpop.f32.mrb[0].mxu0
        %v5618 = vadd.f32 0.0, %v5617
        %v5619 = vpop.f32.mrb[0].mxu0
        %v5620 = vpop.f32.mrb[0].mxu0
        %v5621 = vadd.f32 0.0, %v5620
        %v5622 = vpop.f32.mrb[0].mxu0
        %5623 = vmatprep.mubr.bf16.mxu0 %v5250
        %5624 = vmatmul.mubr.bf16.gmra.mrb[0].mxu0 %v5218
        %v5625 = vpop.f32.mrb[0].mxu0
        %v5626 = vadd.f32 0.0, %v5625
        %v5627 = vpop.f32.mrb[0].mxu0
        %v5628 = vpop.f32.mrb[0].mxu0
        %v5629 = vadd.f32 0.0, %v5628
        %v5630 = vpop.f32.mrb[0].mxu0
        %5631 = vmatprep.mubr.bf16.mxu0 %v5251
        %5632 = vmatmul.mubr.bf16.gmra.mrb[0].mxu0 %v5219
        %v5633 = vpop.f32.mrb[0].mxu0
        %v5634 = vadd.f32 0.0, %v5633
        %v5635 = vpop.f32.mrb[0].mxu0
        %v5636 = vpop.f32.mrb[0].mxu0
        %v5637 = vadd.f32 0.0, %v5636
        %v5638 = vpop.f32.mrb[0].mxu0
        %5639 = vmatprep.mubr.bf16.mxu0 %v5252
        %5640 = vmatmul.mubr.bf16.gmra.mrb[0].mxu0 %v5220
        %v5641 = vpop.f32.mrb[0].mxu0
        %v5642 = vadd.f32 0.0, %v5641
        %v5643 = vpop.f32.mrb[0].mxu0
        %v5644 = vpop.f32.mrb[0].mxu0
        %v5645 = vadd.f32 0.0, %v5644
        %v5646 = vpop.f32.mrb[0].mxu0
        %5647 = vmatprep.mubr.bf16.mxu0 %v5253
        %5648 = vmatmul.mubr.bf16.gmra.mrb[0].mxu0 %v5221
        %v5649 = vpop.f32.mrb[0].mxu0
        %v5650 = vadd.f32 0.0, %v5649
        %v5651 = vpop.f32.mrb[0].mxu0
        %v5652 = vpop.f32.mrb[0].mxu0
        %v5653 = vadd.f32 0.0, %v5652
        %v5654 = vpop.f32.mrb[0].mxu0
        %5655 = vdwg.mxu0
        %5656 = vmatprep.subr.bf16.mxu0 0
        %5657 = vmatpush1.bf16.msra.mxu0 %v5463
        %5658 = vmatprep.subr.bf16.mxu0 0
        %5659 = vmatpush1.bf16.msra.mxu0 %v5464
        %5660 = vmatprep.subr.bf16.mxu0 0
        %5661 = vmatpush1.bf16.msra.mxu0 %v5465
        %5662 = vmatprep.subr.bf16.mxu0 0
        %5663 = vmatpush1.bf16.msra.mxu0 %v5466
        %5664 = vmatprep.subr.bf16.mxu0 0
        %5665 = vmatpush1.bf16.msra.mxu0 %v5467
        %5666 = vmatprep.subr.bf16.mxu0 0
        %5667 = vmatpush1.bf16.msra.mxu0 %v5468
        %5668 = vmatprep.subr.bf16.mxu0 0
        %5669 = vmatpush1.bf16.msra.mxu0 %v5469
        %5670 = vmatprep.subr.bf16.mxu0 0
        %5671 = vmatpush1.bf16.msra.mxu0 %v5470
        %5672 = vmatprep.subr.bf16.mxu0 0
        %5673 = vmatpush1.bf16.msra.mxu0 0
        %5674 = vmatprep.subr.bf16.mxu0 0
        %5675 = vmatpush1.bf16.msra.mxu0 0
        %5676 = vmatprep.subr.bf16.mxu0 0
        %5677 = vmatpush1.bf16.msra.mxu0 0
        %5678 = vmatprep.subr.bf16.mxu0 0
        %5679 = vmatpush1.bf16.msra.mxu0 0
        %5680 = vmatprep.subr.bf16.mxu0 0
        %5681 = vmatpush1.bf16.msra.mxu0 0
        %5682 = vmatprep.subr.bf16.mxu0 0
        %5683 = vmatpush1.bf16.msra.mxu0 0
        %5684 = vmatprep.subr.bf16.mxu0 0
        %5685 = vmatpush1.bf16.msra.mxu0 0
        %5686 = vmatprep.subr.bf16.mxu0 0
        %5687 = vmatpush1.bf16.msra.mxu0 0
        %5688 = vmatprep.mubr.bf16.mxu0 0
        %5689 = vmatmul.mubr.bf16.gmra.mrb[0].mxu0 %v5270
        %v5690 = vpop.f32.mrb[0].mxu0
        %v5691 = vadd.f32 %v5530, %v5690
        %v5692 = vpop.f32.mrb[0].mxu0
        %v5693 = vpop.f32.mrb[0].mxu0
        %v5694 = vadd.f32 %v5533, %v5693
        %v5695 = vpop.f32.mrb[0].mxu0
        %5696 = vmatprep.mubr.bf16.mxu0 0
        %5697 = vmatmul.mubr.bf16.gmra.mrb[0].mxu0 %v5271
        %v5698 = vpop.f32.mrb[0].mxu0
        %v5699 = vadd.f32 %v5538, %v5698
        %v5700 = vpop.f32.mrb[0].mxu0
        %v5701 = vpop.f32.mrb[0].mxu0
        %v5702 = vadd.f32 %v5541, %v5701
        %v5703 = vpop.f32.mrb[0].mxu0
        %5704 = vmatprep.mubr.bf16.mxu0 0
        %5705 = vmatmul.mubr.bf16.gmra.mrb[0].mxu0 %v5272
        %v5706 = vpop.f32.mrb[0].mxu0
        %v5707 = vadd.f32 %v5546, %v5706
        %v5708 = vpop.f32.mrb[0].mxu0
        %v5709 = vpop.f32.mrb[0].mxu0
        %v5710 = vadd.f32 %v5549, %v5709
        %v5711 = vpop.f32.mrb[0].mxu0
        %5712 = vmatprep.mubr.bf16.mxu0 0
        %5713 = vmatmul.mubr.bf16.gmra.mrb[0].mxu0 %v5273
        %v5714 = vpop.f32.mrb[0].mxu0
        %v5715 = vadd.f32 %v5554, %v5714
        %v5716 = vpop.f32.mrb[0].mxu0
        %v5717 = vpop.f32.mrb[0].mxu0
        %v5718 = vadd.f32 %v5557, %v5717
        %v5719 = vpop.f32.mrb[0].mxu0
        %5720 = vmatprep.mubr.bf16.mxu0 0
        %5721 = vmatmul.mubr.bf16.gmra.mrb[0].mxu0 %v5274
        %v5722 = vpop.f32.mrb[0].mxu0
        %v5723 = vadd.f32 %v5562, %v5722
        %v5724 = vpop.f32.mrb[0].mxu0
        %v5725 = vpop.f32.mrb[0].mxu0
        %v5726 = vadd.f32 %v5565, %v5725
        %v5727 = vpop.f32.mrb[0].mxu0
        %5728 = vmatprep.mubr.bf16.mxu0 0
        %5729 = vmatmul.mubr.bf16.gmra.mrb[0].mxu0 %v5275
        %v5730 = vpop.f32.mrb[0].mxu0
        %v5731 = vadd.f32 %v5570, %v5730
        %v5732 = vpop.f32.mrb[0].mxu0
        %v5733 = vpop.f32.mrb[0].mxu0
        %v5734 = vadd.f32 %v5573, %v5733
        %v5735 = vpop.f32.mrb[0].mxu0
        %5736 = vmatprep.mubr.bf16.mxu0 0
        %5737 = vmatmul.mubr.bf16.gmra.mrb[0].mxu0 %v5276
        %v5738 = vpop.f32.mrb[0].mxu0
        %v5739 = vadd.f32 %v5578, %v5738
        %v5740 = vpop.f32.mrb[0].mxu0
        %v5741 = vpop.f32.mrb[0].mxu0
        %v5742 = vadd.f32 %v5581, %v5741
        %v5743 = vpop.f32.mrb[0].mxu0
        %5744 = vmatprep.mubr.bf16.mxu0 0
        %5745 = vmatmul.mubr.bf16.gmra.mrb[0].mxu0 %v5277
        %v5746 = vpop.f32.mrb[0].mxu0
        %v5747 = vadd.f32 %v5586, %v5746
        %v5748 = vpop.f32.mrb[0].mxu0
        %v5749 = vpop.f32.mrb[0].mxu0
        %v5750 = vadd.f32 %v5589, %v5749
        %v5751 = vpop.f32.mrb[0].mxu0
        %5752 = vmatprep.mubr.bf16.mxu0 0
        %5753 = vmatmul.mubr.bf16.gmra.mrb[0].mxu0 %v5278
        %v5754 = vpop.f32.mrb[0].mxu0
        %v5755 = vadd.f32 %v5594, %v5754
        %v5756 = vpop.f32.mrb[0].mxu0
        %v5757 = vpop.f32.mrb[0].mxu0
        %v5758 = vadd.f32 %v5597, %v5757
        %v5759 = vpop.f32.mrb[0].mxu0
        %5760 = vmatprep.mubr.bf16.mxu0 0
        %5761 = vmatmul.mubr.bf16.gmra.mrb[0].mxu0 %v5279
        %v5762 = vpop.f32.mrb[0].mxu0
        %v5763 = vadd.f32 %v5602, %v5762
        %v5764 = vpop.f32.mrb[0].mxu0
        %v5765 = vpop.f32.mrb[0].mxu0
        %v5766 = vadd.f32 %v5605, %v5765
        %v5767 = vpop.f32.mrb[0].mxu0
        %5768 = vmatprep.mubr.bf16.mxu0 0
        %5769 = vmatmul.mubr.bf16.gmra.mrb[0].mxu0 %v5280
        %v5770 = vpop.f32.mrb[0].mxu0
        %v5771 = vadd.f32 %v5610, %v5770
        %v5772 = vpop.f32.mrb[0].mxu0
        %v5773 = vpop.f32.mrb[0].mxu0
        %v5774 = vadd.f32 %v5613, %v5773
        %v5775 = vpop.f32.mrb[0].mxu0
        %5776 = vmatprep.mubr.bf16.mxu0 0
        %5777 = vmatmul.mubr.bf16.gmra.mrb[0].mxu0 %v5281
        %v5778 = vpop.f32.mrb[0].mxu0
        %v5779 = vadd.f32 %v5618, %v5778
        %v5780 = vpop.f32.mrb[0].mxu0
        %v5781 = vpop.f32.mrb[0].mxu0
        %v5782 = vadd.f32 %v5621, %v5781
        %v5783 = vpop.f32.mrb[0].mxu0
        %5784 = vmatprep.mubr.bf16.mxu0 0
        %5785 = vmatmul.mubr.bf16.gmra.mrb[0].mxu0 %v5282
        %v5786 = vpop.f32.mrb[0].mxu0
        %v5787 = vadd.f32 %v5626, %v5786
        %v5788 = vpop.f32.mrb[0].mxu0
        %v5789 = vpop.f32.mrb[0].mxu0
        %v5790 = vadd.f32 %v5629, %v5789
        %v5791 = vpop.f32.mrb[0].mxu0
        %5792 = vmatprep.mubr.bf16.mxu0 0
        %5793 = vmatmul.mubr.bf16.gmra.mrb[0].mxu0 %v5283
        %v5794 = vpop.f32.mrb[0].mxu0
        %v5795 = vadd.f32 %v5634, %v5794
        %v5796 = vpop.f32.mrb[0].mxu0
        %v5797 = vpop.f32.mrb[0].mxu0
        %v5798 = vadd.f32 %v5637, %v5797
        %v5799 = vpop.f32.mrb[0].mxu0
        %5800 = vmatprep.mubr.bf16.mxu0 0
        %5801 = vmatmul.mubr.bf16.gmra.mrb[0].mxu0 %v5284
        %v5802 = vpop.f32.mrb[0].mxu0
        %v5803 = vadd.f32 %v5642, %v5802
        %v5804 = vpop.f32.mrb[0].mxu0
        %v5805 = vpop.f32.mrb[0].mxu0
        %v5806 = vadd.f32 %v5645, %v5805
        %v5807 = vpop.f32.mrb[0].mxu0
        %5808 = vmatprep.mubr.bf16.mxu0 0
        %5809 = vmatmul.mubr.bf16.gmra.mrb[0].mxu0 %v5285
        %v5810 = vpop.f32.mrb[0].mxu0
        %v5811 = vadd.f32 %v5650, %v5810
        %v5812 = vpop.f32.mrb[0].mxu0
        %v5813 = vpop.f32.mrb[0].mxu0
        %v5814 = vadd.f32 %v5653, %v5813
        %v5815 = vpop.f32.mrb[0].mxu0
        %5816 = vdwg.mxu0
        %v5865 = vunpack.c.l.b16 %v5158
        %v5866 = vunpack.c.l.b16 %v5159
        %v5867 = vunpack.c.l.b16 %v5160
        %v5868 = vunpack.c.l.b16 %v5161
        %v5869 = vunpack.c.l.b16 %v5162
        %v5870 = vunpack.c.l.b16 %v5163
        %v5871 = vunpack.c.l.b16 %v5164
        %v5872 = vunpack.c.l.b16 %v5165
        %v5873 = vunpack.c.l.b16 %v5166
        %v5874 = vunpack.c.l.b16 %v5167
        %v5875 = vunpack.c.l.b16 %v5168
        %v5876 = vunpack.c.l.b16 %v5169
        %v5877 = vunpack.c.l.b16 %v5170
        %v5878 = vunpack.c.l.b16 %v5171
        %v5879 = vunpack.c.l.b16 %v5172
        %v5880 = vunpack.c.l.b16 %v5173
        %v5881 = vunpack.c.l.b16 %v5174
        %v5882 = vunpack.c.l.b16 %v5175
        %v5883 = vunpack.c.l.b16 %v5176
        %v5884 = vunpack.c.l.b16 %v5177
        %v5885 = vunpack.c.l.b16 %v5178
        %v5886 = vunpack.c.l.b16 %v5179
        %v5887 = vunpack.c.l.b16 %v5180
        %v5888 = vunpack.c.l.b16 %v5181
        %v5889 = vunpack.c.l.b16 %v5182
        %v5890 = vunpack.c.l.b16 %v5183
        %v5891 = vunpack.c.l.b16 %v5184
        %v5892 = vunpack.c.l.b16 %v5185
        %v5893 = vunpack.c.l.b16 %v5186
        %v5894 = vunpack.c.l.b16 %v5187
        %v5895 = vunpack.c.l.b16 %v5188
        %v5896 = vunpack.c.l.b16 %v5189
        %v5897 = vunpack.c.l.b16 %v5190
        %v5898 = vunpack.c.l.b16 %v5191
        %v5899 = vunpack.c.l.b16 %v5192
        %v5900 = vunpack.c.l.b16 %v5193
        %v5901 = vunpack.c.l.b16 %v5194
        %v5902 = vunpack.c.l.b16 %v5195
        %v5903 = vunpack.c.l.b16 %v5196
        %v5904 = vunpack.c.l.b16 %v5197
        %v5905 = vunpack.c.l.b16 %v5198
        %v5906 = vunpack.c.l.b16 %v5199
        %v5907 = vunpack.c.l.b16 %v5200
        %v5908 = vunpack.c.l.b16 %v5201
        %v5909 = vunpack.c.l.b16 %v5202
        %v5910 = vunpack.c.l.b16 %v5203
        %v5911 = vunpack.c.l.b16 %v5204
        %v5912 = vunpack.c.l.b16 %v5205
        %v5913 = vpack.c.b16 %v5866, %v5865
        %v5914 = vpack.c.b16 %v5868, %v5867
        %v5915 = vpack.c.b16 %v5870, %v5869
        %v5916 = vpack.c.b16 %v5872, %v5871
        %v5917 = vpack.c.b16 %v5874, %v5873
        %v5918 = vpack.c.b16 %v5876, %v5875
        %v5919 = vpack.c.b16 %v5878, %v5877
        %v5920 = vpack.c.b16 %v5880, %v5879
        %v5921 = vpack.c.b16 %v5882, %v5881
        %v5922 = vpack.c.b16 %v5884, %v5883
        %v5923 = vpack.c.b16 %v5886, %v5885
        %v5924 = vpack.c.b16 %v5888, %v5887
        %v5925 = vpack.c.b16 %v5890, %v5889
        %v5926 = vpack.c.b16 %v5892, %v5891
        %v5927 = vpack.c.b16 %v5894, %v5893
        %v5928 = vpack.c.b16 %v5896, %v5895
        %v5929 = vpack.c.b16 %v5898, %v5897
        %v5930 = vpack.c.b16 %v5900, %v5899
        %v5931 = vpack.c.b16 %v5902, %v5901
        %v5932 = vpack.c.b16 %v5904, %v5903
        %v5933 = vpack.c.b16 %v5906, %v5905
        %v5934 = vpack.c.b16 %v5908, %v5907
        %v5935 = vpack.c.b16 %v5910, %v5909
        %v5936 = vpack.c.b16 %v5912, %v5911
        %5961 = vmatprep.subr.bf16.mxu0 0
        %5962 = vmatpush1.bf16.msra.mxu0 %v5913
        %5963 = vmatprep.subr.bf16.mxu0 0
        %5964 = vmatpush1.bf16.msra.mxu0 %v5914
        %5965 = vmatprep.subr.bf16.mxu0 0
        %5966 = vmatpush1.bf16.msra.mxu0 %v5915
        %5967 = vmatprep.subr.bf16.mxu0 0
        %5968 = vmatpush1.bf16.msra.mxu0 %v5916
        %5969 = vmatprep.subr.bf16.mxu0 0
        %5970 = vmatpush1.bf16.msra.mxu0 %v5917
        %5971 = vmatprep.subr.bf16.mxu0 0
        %5972 = vmatpush1.bf16.msra.mxu0 %v5918
        %5973 = vmatprep.subr.bf16.mxu0 0
        %5974 = vmatpush1.bf16.msra.mxu0 %v5919
        %5975 = vmatprep.subr.bf16.mxu0 0
        %5976 = vmatpush1.bf16.msra.mxu0 %v5920
        %5977 = vmatprep.subr.bf16.mxu0 0
        %5978 = vmatpush1.bf16.msra.mxu0 %v5921
        %5979 = vmatprep.subr.bf16.mxu0 0
        %5980 = vmatpush1.bf16.msra.mxu0 %v5922
        %5981 = vmatprep.subr.bf16.mxu0 0
        %5982 = vmatpush1.bf16.msra.mxu0 %v5923
        %5983 = vmatprep.subr.bf16.mxu0 0
        %5984 = vmatpush1.bf16.msra.mxu0 %v5924
        %5985 = vmatprep.subr.bf16.mxu0 0
        %5986 = vmatpush1.bf16.msra.mxu0 %v5925
        %5987 = vmatprep.subr.bf16.mxu0 0
        %5988 = vmatpush1.bf16.msra.mxu0 %v5926
        %5989 = vmatprep.subr.bf16.mxu0 0
        %5990 = vmatpush1.bf16.msra.mxu0 %v5927
        %5991 = vmatprep.subr.bf16.mxu0 0
        %5992 = vmatpush1.bf16.msra.mxu0 %v5928
        %5993 = vmatprep.mubr.bf16.mxu0 %v4327
        %5994 = vmatmul.mubr.bf16.gmra.mrb[0].mxu0 %v4310
        %v5995 = vpop.f32.mrb[0].mxu0
        %v5996 = vadd.f32 %v5691, %v5995
        %v5997 = vpop.f32.mrb[0].mxu0
        %v5998 = vpop.f32.mrb[0].mxu0
        %v5999 = vadd.f32 %v5694, %v5998
        %v6000 = vpop.f32.mrb[0].mxu0
        %6001 = vmatprep.mubr.bf16.mxu0 %v4378
        %6002 = vmatmul.mubr.bf16.gmra.mrb[0].mxu0 %v4361
        %v6003 = vpop.f32.mrb[0].mxu0
        %v6004 = vadd.f32 %v5699, %v6003
        %v6005 = vpop.f32.mrb[0].mxu0
        %v6006 = vpop.f32.mrb[0].mxu0
        %v6007 = vadd.f32 %v5702, %v6006
        %v6008 = vpop.f32.mrb[0].mxu0
        %6009 = vmatprep.mubr.bf16.mxu0 %v4429
        %6010 = vmatmul.mubr.bf16.gmra.mrb[0].mxu0 %v4412
        %v6011 = vpop.f32.mrb[0].mxu0
        %v6012 = vadd.f32 %v5707, %v6011
        %v6013 = vpop.f32.mrb[0].mxu0
        %v6014 = vpop.f32.mrb[0].mxu0
        %v6015 = vadd.f32 %v5710, %v6014
        %v6016 = vpop.f32.mrb[0].mxu0
        %6017 = vmatprep.mubr.bf16.mxu0 %v4480
        %6018 = vmatmul.mubr.bf16.gmra.mrb[0].mxu0 %v4463
        %v6019 = vpop.f32.mrb[0].mxu0
        %v6020 = vadd.f32 %v5715, %v6019
        %v6021 = vpop.f32.mrb[0].mxu0
        %v6022 = vpop.f32.mrb[0].mxu0
        %v6023 = vadd.f32 %v5718, %v6022
        %v6024 = vpop.f32.mrb[0].mxu0
        %6025 = vmatprep.mubr.bf16.mxu0 %v4531
        %6026 = vmatmul.mubr.bf16.gmra.mrb[0].mxu0 %v4514
        %v6027 = vpop.f32.mrb[0].mxu0
        %v6028 = vadd.f32 %v5723, %v6027
        %v6029 = vpop.f32.mrb[0].mxu0
        %v6030 = vpop.f32.mrb[0].mxu0
        %v6031 = vadd.f32 %v5726, %v6030
        %v6032 = vpop.f32.mrb[0].mxu0
        %6033 = vmatprep.mubr.bf16.mxu0 %v4582
        %6034 = vmatmul.mubr.bf16.gmra.mrb[0].mxu0 %v4565
        %v6035 = vpop.f32.mrb[0].mxu0
        %v6036 = vadd.f32 %v5731, %v6035
        %v6037 = vpop.f32.mrb[0].mxu0
        %v6038 = vpop.f32.mrb[0].mxu0
        %v6039 = vadd.f32 %v5734, %v6038
        %v6040 = vpop.f32.mrb[0].mxu0
        %6041 = vmatprep.mubr.bf16.mxu0 %v4633
        %6042 = vmatmul.mubr.bf16.gmra.mrb[0].mxu0 %v4616
        %v6043 = vpop.f32.mrb[0].mxu0
        %v6044 = vadd.f32 %v5739, %v6043
        %v6045 = vpop.f32.mrb[0].mxu0
        %v6046 = vpop.f32.mrb[0].mxu0
        %v6047 = vadd.f32 %v5742, %v6046
        %v6048 = vpop.f32.mrb[0].mxu0
        %6049 = vmatprep.mubr.bf16.mxu0 %v4684
        %6050 = vmatmul.mubr.bf16.gmra.mrb[0].mxu0 %v4667
        %v6051 = vpop.f32.mrb[0].mxu0
        %v6052 = vadd.f32 %v5747, %v6051
        %v6053 = vpop.f32.mrb[0].mxu0
        %v6054 = vpop.f32.mrb[0].mxu0
        %v6055 = vadd.f32 %v5750, %v6054
        %v6056 = vpop.f32.mrb[0].mxu0
        %6057 = vmatprep.mubr.bf16.mxu0 %v4735
        %6058 = vmatmul.mubr.bf16.gmra.mrb[0].mxu0 %v4718
        %v6059 = vpop.f32.mrb[0].mxu0
        %v6060 = vadd.f32 %v5755, %v6059
        %v6061 = vpop.f32.mrb[0].mxu0
        %v6062 = vpop.f32.mrb[0].mxu0
        %v6063 = vadd.f32 %v5758, %v6062
        %v6064 = vpop.f32.mrb[0].mxu0
        %6065 = vmatprep.mubr.bf16.mxu0 %v4786
        %6066 = vmatmul.mubr.bf16.gmra.mrb[0].mxu0 %v4769
        %v6067 = vpop.f32.mrb[0].mxu0
        %v6068 = vadd.f32 %v5763, %v6067
        %v6069 = vpop.f32.mrb[0].mxu0
        %v6070 = vpop.f32.mrb[0].mxu0
        %v6071 = vadd.f32 %v5766, %v6070
        %v6072 = vpop.f32.mrb[0].mxu0
        %6073 = vmatprep.mubr.bf16.mxu0 %v4837
        %6074 = vmatmul.mubr.bf16.gmra.mrb[0].mxu0 %v4820
        %v6075 = vpop.f32.mrb[0].mxu0
        %v6076 = vadd.f32 %v5771, %v6075
        %v6077 = vpop.f32.mrb[0].mxu0
        %v6078 = vpop.f32.mrb[0].mxu0
        %v6079 = vadd.f32 %v5774, %v6078
        %v6080 = vpop.f32.mrb[0].mxu0
        %6081 = vmatprep.mubr.bf16.mxu0 %v4888
        %6082 = vmatmul.mubr.bf16.gmra.mrb[0].mxu0 %v4871
        %v6083 = vpop.f32.mrb[0].mxu0
        %v6084 = vadd.f32 %v5779, %v6083
        %v6085 = vpop.f32.mrb[0].mxu0
        %v6086 = vpop.f32.mrb[0].mxu0
        %v6087 = vadd.f32 %v5782, %v6086
        %v6088 = vpop.f32.mrb[0].mxu0
        %6089 = vmatprep.mubr.bf16.mxu0 %v4939
        %6090 = vmatmul.mubr.bf16.gmra.mrb[0].mxu0 %v4922
        %v6091 = vpop.f32.mrb[0].mxu0
        %v6092 = vadd.f32 %v5787, %v6091
        %v6093 = vpop.f32.mrb[0].mxu0
        %v6094 = vpop.f32.mrb[0].mxu0
        %v6095 = vadd.f32 %v5790, %v6094
        %v6096 = vpop.f32.mrb[0].mxu0
        %6097 = vmatprep.mubr.bf16.mxu0 %v4990
        %6098 = vmatmul.mubr.bf16.gmra.mrb[0].mxu0 %v4973
        %v6099 = vpop.f32.mrb[0].mxu0
        %v6100 = vadd.f32 %v5795, %v6099
        %v6101 = vpop.f32.mrb[0].mxu0
        %v6102 = vpop.f32.mrb[0].mxu0
        %v6103 = vadd.f32 %v5798, %v6102
        %v6104 = vpop.f32.mrb[0].mxu0
        %6105 = vmatprep.mubr.bf16.mxu0 %v5041
        %6106 = vmatmul.mubr.bf16.gmra.mrb[0].mxu0 %v5024
        %v6107 = vpop.f32.mrb[0].mxu0
        %v6108 = vadd.f32 %v5803, %v6107
        %v6109 = vpop.f32.mrb[0].mxu0
        %v6110 = vpop.f32.mrb[0].mxu0
        %v6111 = vadd.f32 %v5806, %v6110
        %v6112 = vpop.f32.mrb[0].mxu0
        %6113 = vmatprep.mubr.bf16.mxu0 %v5092
        %6114 = vmatmul.mubr.bf16.gmra.mrb[0].mxu0 %v5075
        %v6115 = vpop.f32.mrb[0].mxu0
        %v6116 = vadd.f32 %v5811, %v6115
        %v6117 = vpop.f32.mrb[0].mxu0
        %v6118 = vpop.f32.mrb[0].mxu0
        %v6119 = vadd.f32 %v5814, %v6118
        %v6120 = vpop.f32.mrb[0].mxu0
        %6121 = vdwg.mxu0
        %6122 = vmatprep.subr.bf16.mxu0 0
        %6123 = vmatpush1.bf16.msra.mxu0 %v5929
        %6124 = vmatprep.subr.bf16.mxu0 0
        %6125 = vmatpush1.bf16.msra.mxu0 %v5930
        %6126 = vmatprep.subr.bf16.mxu0 0
        %6127 = vmatpush1.bf16.msra.mxu0 %v5931
        %6128 = vmatprep.subr.bf16.mxu0 0
        %6129 = vmatpush1.bf16.msra.mxu0 %v5932
        %6130 = vmatprep.subr.bf16.mxu0 0
        %6131 = vmatpush1.bf16.msra.mxu0 %v5933
        %6132 = vmatprep.subr.bf16.mxu0 0
        %6133 = vmatpush1.bf16.msra.mxu0 %v5934
        %6134 = vmatprep.subr.bf16.mxu0 0
        %6135 = vmatpush1.bf16.msra.mxu0 %v5935
        %6136 = vmatprep.subr.bf16.mxu0 0
        %6137 = vmatpush1.bf16.msra.mxu0 %v5936
        %6138 = vmatprep.subr.bf16.mxu0 0
        %6139 = vmatpush1.bf16.msra.mxu0 0
        %6140 = vmatprep.subr.bf16.mxu0 0
        %6141 = vmatpush1.bf16.msra.mxu0 0
        %6142 = vmatprep.subr.bf16.mxu0 0
        %6143 = vmatpush1.bf16.msra.mxu0 0
        %6144 = vmatprep.subr.bf16.mxu0 0
        %6145 = vmatpush1.bf16.msra.mxu0 0
        %6146 = vmatprep.subr.bf16.mxu0 0
        %6147 = vmatpush1.bf16.msra.mxu0 0
        %6148 = vmatprep.subr.bf16.mxu0 0
        %6149 = vmatpush1.bf16.msra.mxu0 0
        %6150 = vmatprep.subr.bf16.mxu0 0
        %6151 = vmatpush1.bf16.msra.mxu0 0
        %6152 = vmatprep.subr.bf16.mxu0 0
        %6153 = vmatpush1.bf16.msra.mxu0 0
        %6154 = vmatprep.mubr.bf16.mxu0 0
        %6155 = vmatmul.mubr.bf16.gmra.mrb[0].mxu0 %v4344
        %v6156 = vpop.f32.mrb[0].mxu0
        %v6157 = vadd.f32 %v5996, %v6156
        %v6158 = vpop.f32.mrb[0].mxu0
        %v6159 = vpop.f32.mrb[0].mxu0
        %v6160 = vadd.f32 %v5999, %v6159
        %v6161 = vpop.f32.mrb[0].mxu0
        %6162 = vmatprep.mubr.bf16.mxu0 0
        %6163 = vmatmul.mubr.bf16.gmra.mrb[0].mxu0 %v4395
        %v6164 = vpop.f32.mrb[0].mxu0
        %v6165 = vadd.f32 %v6004, %v6164
        %v6166 = vpop.f32.mrb[0].mxu0
        %v6167 = vpop.f32.mrb[0].mxu0
        %v6168 = vadd.f32 %v6007, %v6167
        %v6169 = vpop.f32.mrb[0].mxu0
        %6170 = vmatprep.mubr.bf16.mxu0 0
        %6171 = vmatmul.mubr.bf16.gmra.mrb[0].mxu0 %v4446
        %v6172 = vpop.f32.mrb[0].mxu0
        %v6173 = vadd.f32 %v6012, %v6172
        %v6174 = vpop.f32.mrb[0].mxu0
        %v6175 = vpop.f32.mrb[0].mxu0
        %v6176 = vadd.f32 %v6015, %v6175
        %v6177 = vpop.f32.mrb[0].mxu0
        %6178 = vmatprep.mubr.bf16.mxu0 0
        %6179 = vmatmul.mubr.bf16.gmra.mrb[0].mxu0 %v4497
        %v6180 = vpop.f32.mrb[0].mxu0
        %v6181 = vadd.f32 %v6020, %v6180
        %v6182 = vpop.f32.mrb[0].mxu0
        %v6183 = vpop.f32.mrb[0].mxu0
        %v6184 = vadd.f32 %v6023, %v6183
        %v6185 = vpop.f32.mrb[0].mxu0
        %6186 = vmatprep.mubr.bf16.mxu0 0
        %6187 = vmatmul.mubr.bf16.gmra.mrb[0].mxu0 %v4548
        %v6188 = vpop.f32.mrb[0].mxu0
        %v6189 = vadd.f32 %v6028, %v6188
        %v6190 = vpop.f32.mrb[0].mxu0
        %v6191 = vpop.f32.mrb[0].mxu0
        %v6192 = vadd.f32 %v6031, %v6191
        %v6193 = vpop.f32.mrb[0].mxu0
        %6194 = vmatprep.mubr.bf16.mxu0 0
        %6195 = vmatmul.mubr.bf16.gmra.mrb[0].mxu0 %v4599
        %v6196 = vpop.f32.mrb[0].mxu0
        %v6197 = vadd.f32 %v6036, %v6196
        %v6198 = vpop.f32.mrb[0].mxu0
        %v6199 = vpop.f32.mrb[0].mxu0
        %v6200 = vadd.f32 %v6039, %v6199
        %v6201 = vpop.f32.mrb[0].mxu0
        %6202 = vmatprep.mubr.bf16.mxu0 0
        %6203 = vmatmul.mubr.bf16.gmra.mrb[0].mxu0 %v4650
        %v6204 = vpop.f32.mrb[0].mxu0
        %v6205 = vadd.f32 %v6044, %v6204
        %v6206 = vpop.f32.mrb[0].mxu0
        %v6207 = vpop.f32.mrb[0].mxu0
        %v6208 = vadd.f32 %v6047, %v6207
        %v6209 = vpop.f32.mrb[0].mxu0
        %6210 = vmatprep.mubr.bf16.mxu0 0
        %6211 = vmatmul.mubr.bf16.gmra.mrb[0].mxu0 %v4701
        %v6212 = vpop.f32.mrb[0].mxu0
        %v6213 = vadd.f32 %v6052, %v6212
        %v6214 = vpop.f32.mrb[0].mxu0
        %v6215 = vpop.f32.mrb[0].mxu0
        %v6216 = vadd.f32 %v6055, %v6215
        %v6217 = vpop.f32.mrb[0].mxu0
        %6218 = vmatprep.mubr.bf16.mxu0 0
        %6219 = vmatmul.mubr.bf16.gmra.mrb[0].mxu0 %v4752
        %v6220 = vpop.f32.mrb[0].mxu0
        %v6221 = vadd.f32 %v6060, %v6220
        %v6222 = vpop.f32.mrb[0].mxu0
        %v6223 = vpop.f32.mrb[0].mxu0
        %v6224 = vadd.f32 %v6063, %v6223
        %v6225 = vpop.f32.mrb[0].mxu0
        %6226 = vmatprep.mubr.bf16.mxu0 0
        %6227 = vmatmul.mubr.bf16.gmra.mrb[0].mxu0 %v4803
        %v6228 = vpop.f32.mrb[0].mxu0
        %v6229 = vadd.f32 %v6068, %v6228
        %v6230 = vpop.f32.mrb[0].mxu0
        %v6231 = vpop.f32.mrb[0].mxu0
        %v6232 = vadd.f32 %v6071, %v6231
        %v6233 = vpop.f32.mrb[0].mxu0
        %6234 = vmatprep.mubr.bf16.mxu0 0
        %6235 = vmatmul.mubr.bf16.gmra.mrb[0].mxu0 %v4854
        %v6236 = vpop.f32.mrb[0].mxu0
        %v6237 = vadd.f32 %v6076, %v6236
        %v6238 = vpop.f32.mrb[0].mxu0
        %v6239 = vpop.f32.mrb[0].mxu0
        %v6240 = vadd.f32 %v6079, %v6239
        %v6241 = vpop.f32.mrb[0].mxu0
        %6242 = vmatprep.mubr.bf16.mxu0 0
        %6243 = vmatmul.mubr.bf16.gmra.mrb[0].mxu0 %v4905
        %v6244 = vpop.f32.mrb[0].mxu0
        %v6245 = vadd.f32 %v6084, %v6244
        %v6246 = vpop.f32.mrb[0].mxu0
        %v6247 = vpop.f32.mrb[0].mxu0
        %v6248 = vadd.f32 %v6087, %v6247
        %v6249 = vpop.f32.mrb[0].mxu0
        %6250 = vmatprep.mubr.bf16.mxu0 0
        %6251 = vmatmul.mubr.bf16.gmra.mrb[0].mxu0 %v4956
        %v6252 = vpop.f32.mrb[0].mxu0
        %v6253 = vadd.f32 %v6092, %v6252
        %v6254 = vpop.f32.mrb[0].mxu0
        %v6255 = vpop.f32.mrb[0].mxu0
        %v6256 = vadd.f32 %v6095, %v6255
        %v6257 = vpop.f32.mrb[0].mxu0
        %6258 = vmatprep.mubr.bf16.mxu0 0
        %6259 = vmatmul.mubr.bf16.gmra.mrb[0].mxu0 %v5007
        %v6260 = vpop.f32.mrb[0].mxu0
        %v6261 = vadd.f32 %v6100, %v6260
        %v6262 = vpop.f32.mrb[0].mxu0
        %v6263 = vpop.f32.mrb[0].mxu0
        %v6264 = vadd.f32 %v6103, %v6263
        %v6265 = vpop.f32.mrb[0].mxu0
        %6266 = vmatprep.mubr.bf16.mxu0 0
        %6267 = vmatmul.mubr.bf16.gmra.mrb[0].mxu0 %v5058
        %v6268 = vpop.f32.mrb[0].mxu0
        %v6269 = vadd.f32 %v6108, %v6268
        %v6270 = vpop.f32.mrb[0].mxu0
        %v6271 = vpop.f32.mrb[0].mxu0
        %v6272 = vadd.f32 %v6111, %v6271
        %v6273 = vpop.f32.mrb[0].mxu0
        %6274 = vmatprep.mubr.bf16.mxu0 0
        %6275 = vmatmul.mubr.bf16.gmra.mrb[0].mxu0 %v5109
        %v6276 = vpop.f32.mrb[0].mxu0
        %v6277 = vadd.f32 %v6116, %v6276
        %v6278 = vpop.f32.mrb[0].mxu0
        %v6279 = vpop.f32.mrb[0].mxu0
        %v6280 = vadd.f32 %v6119, %v6279
        %v6281 = vpop.f32.mrb[0].mxu0
        %6282 = vdwg.mxu0
        %v6283 = vld [vmem:[#allocation2 + $0x8] sm:$0xf]
        %v6284 = vld [vmem:[#allocation2 + $0xc] sm:$0xf]
        %v6285 = vld [vmem:[#allocation2 + $0x10] sm:$0x1]
        %v6286 = vld [vmem:[#allocation2 + $0x1c] sm:$0xf]
        %v6287 = vld [vmem:[#allocation2 + $0x20] sm:$0xf]
        %v6288 = vld [vmem:[#allocation2 + $0x24] sm:$0x1]
        %v6289 = vld [vmem:[#allocation2 + $0x30] sm:$0xf]
        %v6290 = vld [vmem:[#allocation2 + $0x34] sm:$0xf]
        %v6291 = vld [vmem:[#allocation2 + $0x38] sm:$0x1]
        %v6292 = vld [vmem:[#allocation2 + $0x44] sm:$0xf]
        %v6293 = vld [vmem:[#allocation2 + $0x48] sm:$0xf]
        %v6294 = vld [vmem:[#allocation2 + $0x4c] sm:$0x1]
        %v6295 = vld [vmem:[#allocation2 + $0x58] sm:$0xf]
        %v6296 = vld [vmem:[#allocation2 + $0x5c] sm:$0xf]
        %v6297 = vld [vmem:[#allocation2 + $0x60] sm:$0x1]
        %v6298 = vld [vmem:[#allocation2 + $0x6c] sm:$0xf]
        %v6299 = vld [vmem:[#allocation2 + $0x70] sm:$0xf]
        %v6300 = vld [vmem:[#allocation2 + $0x74] sm:$0x1]
        %v6301 = vld [vmem:[#allocation2 + $0x80] sm:$0xf]
        %v6302 = vld [vmem:[#allocation2 + $0x84] sm:$0xf]
        %v6303 = vld [vmem:[#allocation2 + $0x88] sm:$0x1]
        %v6304 = vld [vmem:[#allocation2 + $0x94] sm:$0xf]
        %v6305 = vld [vmem:[#allocation2 + $0x98] sm:$0xf]
        %v6306 = vld [vmem:[#allocation2 + $0x9c] sm:$0x1]
        %v6307 = vld [vmem:[#allocation2 + $0xa8] sm:$0xf]
        %v6308 = vld [vmem:[#allocation2 + $0xac] sm:$0xf]
        %v6309 = vld [vmem:[#allocation2 + $0xb0] sm:$0x1]
        %v6310 = vld [vmem:[#allocation2 + $0xbc] sm:$0xf]
        %v6311 = vld [vmem:[#allocation2 + $0xc0] sm:$0xf]
        %v6312 = vld [vmem:[#allocation2 + $0xc4] sm:$0x1]
        %v6313 = vld [vmem:[#allocation2 + $0xd0] sm:$0xf]
        %v6314 = vld [vmem:[#allocation2 + $0xd4] sm:$0xf]
        %v6315 = vld [vmem:[#allocation2 + $0xd8] sm:$0x1]
        %v6316 = vld [vmem:[#allocation2 + $0xe4] sm:$0xf]
        %v6317 = vld [vmem:[#allocation2 + $0xe8] sm:$0xf]
        %v6318 = vld [vmem:[#allocation2 + $0xec] sm:$0x1]
        %v6319 = vld [vmem:[#allocation2 + $0xf8] sm:$0xf]
        %v6320 = vld [vmem:[#allocation2 + $0xfc] sm:$0xf]
        %v6321 = vld [vmem:[#allocation2 + $0x100] sm:$0x1]
        %v6322 = vld [vmem:[#allocation2 + $0x10c] sm:$0xf]
        %v6323 = vld [vmem:[#allocation2 + $0x110] sm:$0xf]
        %v6324 = vld [vmem:[#allocation2 + $0x114] sm:$0x1]
        %v6325 = vld [vmem:[#allocation2 + $0x120] sm:$0xf]
        %v6326 = vld [vmem:[#allocation2 + $0x124] sm:$0xf]
        %v6327 = vld [vmem:[#allocation2 + $0x128] sm:$0x1]
        %v6328 = vld [vmem:[#allocation2 + $0x134] sm:$0xf]
        %v6329 = vld [vmem:[#allocation2 + $0x138] sm:$0xf]
        %v6330 = vld [vmem:[#allocation2 + $0x13c] sm:$0x1]
        %v6331 = vld [vmem:[%s3731 + $0x8] sm:$0xf]
        %v6332 = vld [vmem:[%s3731 + $0xc] sm:$0xf]
        %v6333 = vld [vmem:[%s3731 + $0x10] sm:$0x1]
        %v6334 = vld [vmem:[%s3731 + $0x1c] sm:$0xf]
        %v6335 = vld [vmem:[%s3731 + $0x20] sm:$0xf]
        %v6336 = vld [vmem:[%s3731 + $0x24] sm:$0x1]
        %v6337 = vld [vmem:[%s3731 + $0x30] sm:$0xf]
        %v6338 = vld [vmem:[%s3731 + $0x34] sm:$0xf]
        %v6339 = vld [vmem:[%s3731 + $0x38] sm:$0x1]
        %v6340 = vld [vmem:[%s3731 + $0x44] sm:$0xf]
        %v6341 = vld [vmem:[%s3731 + $0x48] sm:$0xf]
        %v6342 = vld [vmem:[%s3731 + $0x4c] sm:$0x1]
        %v6343 = vld [vmem:[%s3731 + $0x58] sm:$0xf]
        %v6344 = vld [vmem:[%s3731 + $0x5c] sm:$0xf]
        %v6345 = vld [vmem:[%s3731 + $0x60] sm:$0x1]
        %v6346 = vld [vmem:[%s3731 + $0x6c] sm:$0xf]
        %v6347 = vld [vmem:[%s3731 + $0x70] sm:$0xf]
        %v6348 = vld [vmem:[%s3731 + $0x74] sm:$0x1]
        %v6349 = vld [vmem:[%s3731 + $0x80] sm:$0xf]
        %v6350 = vld [vmem:[%s3731 + $0x84] sm:$0xf]
        %v6351 = vld [vmem:[%s3731 + $0x88] sm:$0x1]
        %v6352 = vld [vmem:[%s3731 + $0x94] sm:$0xf]
        %v6353 = vld [vmem:[%s3731 + $0x98] sm:$0xf]
        %v6354 = vld [vmem:[%s3731 + $0x9c] sm:$0x1]
        %v6355 = vld [vmem:[%s3731 + $0xa8] sm:$0xf]
        %v6356 = vld [vmem:[%s3731 + $0xac] sm:$0xf]
        %v6357 = vld [vmem:[%s3731 + $0xb0] sm:$0x1]
        %v6358 = vld [vmem:[%s3731 + $0xbc] sm:$0xf]
        %v6359 = vld [vmem:[%s3731 + $0xc0] sm:$0xf]
        %v6360 = vld [vmem:[%s3731 + $0xc4] sm:$0x1]
        %v6361 = vld [vmem:[%s3731 + $0xd0] sm:$0xf]
        %v6362 = vld [vmem:[%s3731 + $0xd4] sm:$0xf]
        %v6363 = vld [vmem:[%s3731 + $0xd8] sm:$0x1]
        %v6364 = vld [vmem:[%s3731 + $0xe4] sm:$0xf]
        %v6365 = vld [vmem:[%s3731 + $0xe8] sm:$0xf]
        %v6366 = vld [vmem:[%s3731 + $0xec] sm:$0x1]
        %v6367 = vld [vmem:[%s3731 + $0xf8] sm:$0xf]
        %v6368 = vld [vmem:[%s3731 + $0xfc] sm:$0xf]
        %v6369 = vld [vmem:[%s3731 + $0x100] sm:$0x1]
        %v6370 = vld [vmem:[%s3731 + $0x10c] sm:$0xf]
        %v6371 = vld [vmem:[%s3731 + $0x110] sm:$0xf]
        %v6372 = vld [vmem:[%s3731 + $0x114] sm:$0x1]
        %v6373 = vld [vmem:[%s3731 + $0x120] sm:$0xf]
        %v6374 = vld [vmem:[%s3731 + $0x124] sm:$0xf]
        %v6375 = vld [vmem:[%s3731 + $0x128] sm:$0x1]
        %v6376 = vld [vmem:[%s3731 + $0x134] sm:$0xf]
        %v6377 = vld [vmem:[%s3731 + $0x138] sm:$0xf]
        %v6378 = vld [vmem:[%s3731 + $0x13c] sm:$0x1]
        %v6379 = vld [vmem:[%s3860 + $0x8] sm:$0xf]
        %v6380 = vld [vmem:[%s3860 + $0xc] sm:$0xf]
        %v6381 = vld [vmem:[%s3860 + $0x10] sm:$0x1]
        %v6382 = vld [vmem:[%s3860 + $0x1c] sm:$0xf]
        %v6383 = vld [vmem:[%s3860 + $0x20] sm:$0xf]
        %v6384 = vld [vmem:[%s3860 + $0x24] sm:$0x1]
        %v6385 = vld [vmem:[%s3860 + $0x30] sm:$0xf]
        %v6386 = vld [vmem:[%s3860 + $0x34] sm:$0xf]
        %v6387 = vld [vmem:[%s3860 + $0x38] sm:$0x1]
        %v6388 = vld [vmem:[%s3860 + $0x44] sm:$0xf]
        %v6389 = vld [vmem:[%s3860 + $0x48] sm:$0xf]
        %v6390 = vld [vmem:[%s3860 + $0x4c] sm:$0x1]
        %v6391 = vld [vmem:[%s3860 + $0x58] sm:$0xf]
        %v6392 = vld [vmem:[%s3860 + $0x5c] sm:$0xf]
        %v6393 = vld [vmem:[%s3860 + $0x60] sm:$0x1]
        %v6394 = vld [vmem:[%s3860 + $0x6c] sm:$0xf]
        %v6395 = vld [vmem:[%s3860 + $0x70] sm:$0xf]
        %v6396 = vld [vmem:[%s3860 + $0x74] sm:$0x1]
        %v6397 = vld [vmem:[%s3860 + $0x80] sm:$0xf]
        %v6398 = vld [vmem:[%s3860 + $0x84] sm:$0xf]
        %v6399 = vld [vmem:[%s3860 + $0x88] sm:$0x1]
        %v6400 = vld [vmem:[%s3860 + $0x94] sm:$0xf]
        %v6401 = vld [vmem:[%s3860 + $0x98] sm:$0xf]
        %v6402 = vld [vmem:[%s3860 + $0x9c] sm:$0x1]
        %v6403 = vld [vmem:[%s3860 + $0xa8] sm:$0xf]
        %v6404 = vld [vmem:[%s3860 + $0xac] sm:$0xf]
        %v6405 = vld [vmem:[%s3860 + $0xb0] sm:$0x1]
        %v6406 = vld [vmem:[%s3860 + $0xbc] sm:$0xf]
        %v6407 = vld [vmem:[%s3860 + $0xc0] sm:$0xf]
        %v6408 = vld [vmem:[%s3860 + $0xc4] sm:$0x1]
        %v6409 = vld [vmem:[%s3860 + $0xd0] sm:$0xf]
        %v6410 = vld [vmem:[%s3860 + $0xd4] sm:$0xf]
        %v6411 = vld [vmem:[%s3860 + $0xd8] sm:$0x1]
        %v6412 = vld [vmem:[%s3860 + $0xe4] sm:$0xf]
        %v6413 = vld [vmem:[%s3860 + $0xe8] sm:$0xf]
        %v6414 = vld [vmem:[%s3860 + $0xec] sm:$0x1]
        %v6415 = vld [vmem:[%s3860 + $0xf8] sm:$0xf]
        %v6416 = vld [vmem:[%s3860 + $0xfc] sm:$0xf]
        %v6417 = vld [vmem:[%s3860 + $0x100] sm:$0x1]
        %v6418 = vld [vmem:[%s3860 + $0x10c] sm:$0xf]
        %v6419 = vld [vmem:[%s3860 + $0x110] sm:$0xf]
        %v6420 = vld [vmem:[%s3860 + $0x114] sm:$0x1]
        %v6421 = vld [vmem:[%s3860 + $0x120] sm:$0xf]
        %v6422 = vld [vmem:[%s3860 + $0x124] sm:$0xf]
        %v6423 = vld [vmem:[%s3860 + $0x128] sm:$0x1]
        %v6424 = vld [vmem:[%s3860 + $0x134] sm:$0xf]
        %v6425 = vld [vmem:[%s3860 + $0x138] sm:$0xf]
        %v6426 = vld [vmem:[%s3860 + $0x13c] sm:$0x1]
        %v6475 = vunpack.c.l.b16 %v6283
        %v6476 = vunpack.c.l.b16 %v6284
        %v6477 = vunpack.c.l.b16 %v6285
        %v6478 = vunpack.c.l.b16 %v6286
        %v6479 = vunpack.c.l.b16 %v6287
        %v6480 = vunpack.c.l.b16 %v6288
        %v6481 = vunpack.c.l.b16 %v6289
        %v6482 = vunpack.c.l.b16 %v6290
        %v6483 = vunpack.c.l.b16 %v6291
        %v6484 = vunpack.c.l.b16 %v6292
        %v6485 = vunpack.c.l.b16 %v6293
        %v6486 = vunpack.c.l.b16 %v6294
        %v6487 = vunpack.c.l.b16 %v6295
        %v6488 = vunpack.c.l.b16 %v6296
        %v6489 = vunpack.c.l.b16 %v6297
        %v6490 = vunpack.c.l.b16 %v6298
        %v6491 = vunpack.c.l.b16 %v6299
        %v6492 = vunpack.c.l.b16 %v6300
        %v6493 = vunpack.c.l.b16 %v6301
        %v6494 = vunpack.c.l.b16 %v6302
        %v6495 = vunpack.c.l.b16 %v6303
        %v6496 = vunpack.c.l.b16 %v6304
        %v6497 = vunpack.c.l.b16 %v6305
        %v6498 = vunpack.c.l.b16 %v6306
        %v6499 = vunpack.c.l.b16 %v6307
        %v6500 = vunpack.c.l.b16 %v6308
        %v6501 = vunpack.c.l.b16 %v6309
        %v6502 = vunpack.c.l.b16 %v6310
        %v6503 = vunpack.c.l.b16 %v6311
        %v6504 = vunpack.c.l.b16 %v6312
        %v6505 = vunpack.c.l.b16 %v6313
        %v6506 = vunpack.c.l.b16 %v6314
        %v6507 = vunpack.c.l.b16 %v6315
        %v6508 = vunpack.c.l.b16 %v6316
        %v6509 = vunpack.c.l.b16 %v6317
        %v6510 = vunpack.c.l.b16 %v6318
        %v6511 = vunpack.c.l.b16 %v6319
        %v6512 = vunpack.c.l.b16 %v6320
        %v6513 = vunpack.c.l.b16 %v6321
        %v6514 = vunpack.c.l.b16 %v6322
        %v6515 = vunpack.c.l.b16 %v6323
        %v6516 = vunpack.c.l.b16 %v6324
        %v6517 = vunpack.c.l.b16 %v6325
        %v6518 = vunpack.c.l.b16 %v6326
        %v6519 = vunpack.c.l.b16 %v6327
        %v6520 = vunpack.c.l.b16 %v6328
        %v6521 = vunpack.c.l.b16 %v6329
        %v6522 = vunpack.c.l.b16 %v6330
        %v6523 = vpack.c.b16 %v6476, %v6475
        %v6524 = vpack.c.b16 %v6477, %v6477
        %v6525 = vpack.c.b16 %v6479, %v6478
        %v6526 = vpack.c.b16 %v6480, %v6480
        %v6527 = vpack.c.b16 %v6482, %v6481
        %v6528 = vpack.c.b16 %v6483, %v6483
        %v6529 = vpack.c.b16 %v6485, %v6484
        %v6530 = vpack.c.b16 %v6486, %v6486
        %v6531 = vpack.c.b16 %v6488, %v6487
        %v6532 = vpack.c.b16 %v6489, %v6489
        %v6533 = vpack.c.b16 %v6491, %v6490
        %v6534 = vpack.c.b16 %v6492, %v6492
        %v6535 = vpack.c.b16 %v6494, %v6493
        %v6536 = vpack.c.b16 %v6495, %v6495
        %v6537 = vpack.c.b16 %v6497, %v6496
        %v6538 = vpack.c.b16 %v6498, %v6498
        %v6539 = vpack.c.b16 %v6500, %v6499
        %v6540 = vpack.c.b16 %v6501, %v6501
        %v6541 = vpack.c.b16 %v6503, %v6502
        %v6542 = vpack.c.b16 %v6504, %v6504
        %v6543 = vpack.c.b16 %v6506, %v6505
        %v6544 = vpack.c.b16 %v6507, %v6507
        %v6545 = vpack.c.b16 %v6509, %v6508
        %v6546 = vpack.c.b16 %v6510, %v6510
        %v6547 = vpack.c.b16 %v6512, %v6511
        %v6548 = vpack.c.b16 %v6513, %v6513
        %v6549 = vpack.c.b16 %v6515, %v6514
        %v6550 = vpack.c.b16 %v6516, %v6516
        %v6551 = vpack.c.b16 %v6518, %v6517
        %v6552 = vpack.c.b16 %v6519, %v6519
        %v6553 = vpack.c.b16 %v6521, %v6520
        %v6554 = vpack.c.b16 %v6522, %v6522
        %v6603 = vunpack.c.l.b16 %v6331
        %v6604 = vunpack.c.l.b16 %v6332
        %v6605 = vunpack.c.l.b16 %v6333
        %v6606 = vunpack.c.l.b16 %v6334
        %v6607 = vunpack.c.l.b16 %v6335
        %v6608 = vunpack.c.l.b16 %v6336
        %v6609 = vunpack.c.l.b16 %v6337
        %v6610 = vunpack.c.l.b16 %v6338
        %v6611 = vunpack.c.l.b16 %v6339
        %v6612 = vunpack.c.l.b16 %v6340
        %v6613 = vunpack.c.l.b16 %v6341
        %v6614 = vunpack.c.l.b16 %v6342
        %v6615 = vunpack.c.l.b16 %v6343
        %v6616 = vunpack.c.l.b16 %v6344
        %v6617 = vunpack.c.l.b16 %v6345
        %v6618 = vunpack.c.l.b16 %v6346
        %v6619 = vunpack.c.l.b16 %v6347
        %v6620 = vunpack.c.l.b16 %v6348
        %v6621 = vunpack.c.l.b16 %v6349
        %v6622 = vunpack.c.l.b16 %v6350
        %v6623 = vunpack.c.l.b16 %v6351
        %v6624 = vunpack.c.l.b16 %v6352
        %v6625 = vunpack.c.l.b16 %v6353
        %v6626 = vunpack.c.l.b16 %v6354
        %v6627 = vunpack.c.l.b16 %v6355
        %v6628 = vunpack.c.l.b16 %v6356
        %v6629 = vunpack.c.l.b16 %v6357
        %v6630 = vunpack.c.l.b16 %v6358
        %v6631 = vunpack.c.l.b16 %v6359
        %v6632 = vunpack.c.l.b16 %v6360
        %v6633 = vunpack.c.l.b16 %v6361
        %v6634 = vunpack.c.l.b16 %v6362
        %v6635 = vunpack.c.l.b16 %v6363
        %v6636 = vunpack.c.l.b16 %v6364
        %v6637 = vunpack.c.l.b16 %v6365
        %v6638 = vunpack.c.l.b16 %v6366
        %v6639 = vunpack.c.l.b16 %v6367
        %v6640 = vunpack.c.l.b16 %v6368
        %v6641 = vunpack.c.l.b16 %v6369
        %v6642 = vunpack.c.l.b16 %v6370
        %v6643 = vunpack.c.l.b16 %v6371
        %v6644 = vunpack.c.l.b16 %v6372
        %v6645 = vunpack.c.l.b16 %v6373
        %v6646 = vunpack.c.l.b16 %v6374
        %v6647 = vunpack.c.l.b16 %v6375
        %v6648 = vunpack.c.l.b16 %v6376
        %v6649 = vunpack.c.l.b16 %v6377
        %v6650 = vunpack.c.l.b16 %v6378
        %v6651 = vpack.c.b16 %v6604, %v6603
        %v6652 = vpack.c.b16 %v6605, %v6605
        %v6653 = vpack.c.b16 %v6607, %v6606
        %v6654 = vpack.c.b16 %v6608, %v6608
        %v6655 = vpack.c.b16 %v6610, %v6609
        %v6656 = vpack.c.b16 %v6611, %v6611
        %v6657 = vpack.c.b16 %v6613, %v6612
        %v6658 = vpack.c.b16 %v6614, %v6614
        %v6659 = vpack.c.b16 %v6616, %v6615
        %v6660 = vpack.c.b16 %v6617, %v6617
        %v6661 = vpack.c.b16 %v6619, %v6618
        %v6662 = vpack.c.b16 %v6620, %v6620
        %v6663 = vpack.c.b16 %v6622, %v6621
        %v6664 = vpack.c.b16 %v6623, %v6623
        %v6665 = vpack.c.b16 %v6625, %v6624
        %v6666 = vpack.c.b16 %v6626, %v6626
        %v6667 = vpack.c.b16 %v6628, %v6627
        %v6668 = vpack.c.b16 %v6629, %v6629
        %v6669 = vpack.c.b16 %v6631, %v6630
        %v6670 = vpack.c.b16 %v6632, %v6632
        %v6671 = vpack.c.b16 %v6634, %v6633
        %v6672 = vpack.c.b16 %v6635, %v6635
        %v6673 = vpack.c.b16 %v6637, %v6636
        %v6674 = vpack.c.b16 %v6638, %v6638
        %v6675 = vpack.c.b16 %v6640, %v6639
        %v6676 = vpack.c.b16 %v6641, %v6641
        %v6677 = vpack.c.b16 %v6643, %v6642
        %v6678 = vpack.c.b16 %v6644, %v6644
        %v6679 = vpack.c.b16 %v6646, %v6645
        %v6680 = vpack.c.b16 %v6647, %v6647
        %v6681 = vpack.c.b16 %v6649, %v6648
        %v6682 = vpack.c.b16 %v6650, %v6650
        %v6731 = vunpack.c.l.b16 %v6379
        %v6732 = vunpack.c.l.b16 %v6380
        %v6733 = vunpack.c.l.b16 %v6381
        %v6734 = vunpack.c.l.b16 %v6382
        %v6735 = vunpack.c.l.b16 %v6383
        %v6736 = vunpack.c.l.b16 %v6384
        %v6737 = vunpack.c.l.b16 %v6385
        %v6738 = vunpack.c.l.b16 %v6386
        %v6739 = vunpack.c.l.b16 %v6387
        %v6740 = vunpack.c.l.b16 %v6388
        %v6741 = vunpack.c.l.b16 %v6389
        %v6742 = vunpack.c.l.b16 %v6390
        %v6743 = vunpack.c.l.b16 %v6391
        %v6744 = vunpack.c.l.b16 %v6392
        %v6745 = vunpack.c.l.b16 %v6393
        %v6746 = vunpack.c.l.b16 %v6394
        %v6747 = vunpack.c.l.b16 %v6395
        %v6748 = vunpack.c.l.b16 %v6396
        %v6749 = vunpack.c.l.b16 %v6397
        %v6750 = vunpack.c.l.b16 %v6398
        %v6751 = vunpack.c.l.b16 %v6399
        %v6752 = vunpack.c.l.b16 %v6400
        %v6753 = vunpack.c.l.b16 %v6401
        %v6754 = vunpack.c.l.b16 %v6402
        %v6755 = vunpack.c.l.b16 %v6403
        %v6756 = vunpack.c.l.b16 %v6404
        %v6757 = vunpack.c.l.b16 %v6405
        %v6758 = vunpack.c.l.b16 %v6406
        %v6759 = vunpack.c.l.b16 %v6407
        %v6760 = vunpack.c.l.b16 %v6408
        %v6761 = vunpack.c.l.b16 %v6409
        %v6762 = vunpack.c.l.b16 %v6410
        %v6763 = vunpack.c.l.b16 %v6411
        %v6764 = vunpack.c.l.b16 %v6412
        %v6765 = vunpack.c.l.b16 %v6413
        %v6766 = vunpack.c.l.b16 %v6414
        %v6767 = vunpack.c.l.b16 %v6415
        %v6768 = vunpack.c.l.b16 %v6416
        %v6769 = vunpack.c.l.b16 %v6417
        %v6770 = vunpack.c.l.b16 %v6418
        %v6771 = vunpack.c.l.b16 %v6419
        %v6772 = vunpack.c.l.b16 %v6420
        %v6773 = vunpack.c.l.b16 %v6421
        %v6774 = vunpack.c.l.b16 %v6422
        %v6775 = vunpack.c.l.b16 %v6423
        %v6776 = vunpack.c.l.b16 %v6424
        %v6777 = vunpack.c.l.b16 %v6425
        %v6778 = vunpack.c.l.b16 %v6426
        %v6779 = vpack.c.b16 %v6732, %v6731
        %v6780 = vpack.c.b16 %v6733, %v6733
        %v6781 = vpack.c.b16 %v6735, %v6734
        %v6782 = vpack.c.b16 %v6736, %v6736
        %v6783 = vpack.c.b16 %v6738, %v6737
        %v6784 = vpack.c.b16 %v6739, %v6739
        %v6785 = vpack.c.b16 %v6741, %v6740
        %v6786 = vpack.c.b16 %v6742, %v6742
        %v6787 = vpack.c.b16 %v6744, %v6743
        %v6788 = vpack.c.b16 %v6745, %v6745
        %v6789 = vpack.c.b16 %v6747, %v6746
        %v6790 = vpack.c.b16 %v6748, %v6748
        %v6791 = vpack.c.b16 %v6750, %v6749
        %v6792 = vpack.c.b16 %v6751, %v6751
        %v6793 = vpack.c.b16 %v6753, %v6752
        %v6794 = vpack.c.b16 %v6754, %v6754
        %v6795 = vpack.c.b16 %v6756, %v6755
        %v6796 = vpack.c.b16 %v6757, %v6757
        %v6797 = vpack.c.b16 %v6759, %v6758
        %v6798 = vpack.c.b16 %v6760, %v6760
        %v6799 = vpack.c.b16 %v6762, %v6761
        %v6800 = vpack.c.b16 %v6763, %v6763
        %v6801 = vpack.c.b16 %v6765, %v6764
        %v6802 = vpack.c.b16 %v6766, %v6766
        %v6803 = vpack.c.b16 %v6768, %v6767
        %v6804 = vpack.c.b16 %v6769, %v6769
        %v6805 = vpack.c.b16 %v6771, %v6770
        %v6806 = vpack.c.b16 %v6772, %v6772
        %v6807 = vpack.c.b16 %v6774, %v6773
        %v6808 = vpack.c.b16 %v6775, %v6775
        %v6809 = vpack.c.b16 %v6777, %v6776
        %v6810 = vpack.c.b16 %v6778, %v6778
        %v6812 = vshrl.u32 %v6523, 16
        %v6814 = vshll.u32 %v6523, 16
        %v6816 = vrot.slane %v6814, 1
        %v6817 = vor.u32 %v6812, %v6816
        %v6819 = vshll.u32 %v6524, 16
        %v6821 = vrot.slane %v6819, 1
        %v6822 = vsel %vm994, %v6817, %v6821
        %v6824 = vshrl.u32 %v6651, 16
        %v6826 = vshll.u32 %v6651, 16
        %v6828 = vrot.slane %v6826, 1
        %v6829 = vor.u32 %v6824, %v6828
        %v6831 = vshll.u32 %v6652, 16
        %v6833 = vrot.slane %v6831, 1
        %v6834 = vsel %vm994, %v6829, %v6833
        %v6836 = vshrl.u32 %v6779, 16
        %v6838 = vshll.u32 %v6779, 16
        %v6840 = vrot.slane %v6838, 1
        %v6841 = vor.u32 %v6836, %v6840
        %v6843 = vshll.u32 %v6780, 16
        %v6845 = vrot.slane %v6843, 1
        %v6846 = vsel %vm994, %v6841, %v6845
        %v6848 = vshrl.u32 %v6525, 16
        %v6850 = vshll.u32 %v6525, 16
        %v6852 = vrot.slane %v6850, 1
        %v6853 = vor.u32 %v6848, %v6852
        %v6855 = vshll.u32 %v6526, 16
        %v6857 = vrot.slane %v6855, 1
        %v6858 = vsel %vm994, %v6853, %v6857
        %v6860 = vshrl.u32 %v6653, 16
        %v6862 = vshll.u32 %v6653, 16
        %v6864 = vrot.slane %v6862, 1
        %v6865 = vor.u32 %v6860, %v6864
        %v6867 = vshll.u32 %v6654, 16
        %v6869 = vrot.slane %v6867, 1
        %v6870 = vsel %vm994, %v6865, %v6869
        %v6872 = vshrl.u32 %v6781, 16
        %v6874 = vshll.u32 %v6781, 16
        %v6876 = vrot.slane %v6874, 1
        %v6877 = vor.u32 %v6872, %v6876
        %v6879 = vshll.u32 %v6782, 16
        %v6881 = vrot.slane %v6879, 1
        %v6882 = vsel %vm994, %v6877, %v6881
        %v6884 = vshrl.u32 %v6527, 16
        %v6886 = vshll.u32 %v6527, 16
        %v6888 = vrot.slane %v6886, 1
        %v6889 = vor.u32 %v6884, %v6888
        %v6891 = vshll.u32 %v6528, 16
        %v6893 = vrot.slane %v6891, 1
        %v6894 = vsel %vm994, %v6889, %v6893
        %v6896 = vshrl.u32 %v6655, 16
        %v6898 = vshll.u32 %v6655, 16
        %v6900 = vrot.slane %v6898, 1
        %v6901 = vor.u32 %v6896, %v6900
        %v6903 = vshll.u32 %v6656, 16
        %v6905 = vrot.slane %v6903, 1
        %v6906 = vsel %vm994, %v6901, %v6905
        %v6908 = vshrl.u32 %v6783, 16
        %v6910 = vshll.u32 %v6783, 16
        %v6912 = vrot.slane %v6910, 1
        %v6913 = vor.u32 %v6908, %v6912
        %v6915 = vshll.u32 %v6784, 16
        %v6917 = vrot.slane %v6915, 1
        %v6918 = vsel %vm994, %v6913, %v6917
        %v6920 = vshrl.u32 %v6529, 16
        %v6922 = vshll.u32 %v6529, 16
        %v6924 = vrot.slane %v6922, 1
        %v6925 = vor.u32 %v6920, %v6924
        %v6927 = vshll.u32 %v6530, 16
        %v6929 = vrot.slane %v6927, 1
        %v6930 = vsel %vm994, %v6925, %v6929
        %v6932 = vshrl.u32 %v6657, 16
        %v6934 = vshll.u32 %v6657, 16
        %v6936 = vrot.slane %v6934, 1
        %v6937 = vor.u32 %v6932, %v6936
        %v6939 = vshll.u32 %v6658, 16
        %v6941 = vrot.slane %v6939, 1
        %v6942 = vsel %vm994, %v6937, %v6941
        %v6944 = vshrl.u32 %v6785, 16
        %v6946 = vshll.u32 %v6785, 16
        %v6948 = vrot.slane %v6946, 1
        %v6949 = vor.u32 %v6944, %v6948
        %v6951 = vshll.u32 %v6786, 16
        %v6953 = vrot.slane %v6951, 1
        %v6954 = vsel %vm994, %v6949, %v6953
        %v6956 = vshrl.u32 %v6531, 16
        %v6958 = vshll.u32 %v6531, 16
        %v6960 = vrot.slane %v6958, 1
        %v6961 = vor.u32 %v6956, %v6960
        %v6963 = vshll.u32 %v6532, 16
        %v6965 = vrot.slane %v6963, 1
        %v6966 = vsel %vm994, %v6961, %v6965
        %v6968 = vshrl.u32 %v6659, 16
        %v6970 = vshll.u32 %v6659, 16
        %v6972 = vrot.slane %v6970, 1
        %v6973 = vor.u32 %v6968, %v6972
        %v6975 = vshll.u32 %v6660, 16
        %v6977 = vrot.slane %v6975, 1
        %v6978 = vsel %vm994, %v6973, %v6977
        %v6980 = vshrl.u32 %v6787, 16
        %v6982 = vshll.u32 %v6787, 16
        %v6984 = vrot.slane %v6982, 1
        %v6985 = vor.u32 %v6980, %v6984
        %v6987 = vshll.u32 %v6788, 16
        %v6989 = vrot.slane %v6987, 1
        %v6990 = vsel %vm994, %v6985, %v6989
        %v6992 = vshrl.u32 %v6533, 16
        %v6994 = vshll.u32 %v6533, 16
        %v6996 = vrot.slane %v6994, 1
        %v6997 = vor.u32 %v6992, %v6996
        %v6999 = vshll.u32 %v6534, 16
        %v7001 = vrot.slane %v6999, 1
        %v7002 = vsel %vm994, %v6997, %v7001
        %v7004 = vshrl.u32 %v6661, 16
        %v7006 = vshll.u32 %v6661, 16
        %v7008 = vrot.slane %v7006, 1
        %v7009 = vor.u32 %v7004, %v7008
        %v7011 = vshll.u32 %v6662, 16
        %v7013 = vrot.slane %v7011, 1
        %v7014 = vsel %vm994, %v7009, %v7013
        %v7016 = vshrl.u32 %v6789, 16
        %v7018 = vshll.u32 %v6789, 16
        %v7020 = vrot.slane %v7018, 1
        %v7021 = vor.u32 %v7016, %v7020
        %v7023 = vshll.u32 %v6790, 16
        %v7025 = vrot.slane %v7023, 1
        %v7026 = vsel %vm994, %v7021, %v7025
        %v7028 = vshrl.u32 %v6535, 16
        %v7030 = vshll.u32 %v6535, 16
        %v7032 = vrot.slane %v7030, 1
        %v7033 = vor.u32 %v7028, %v7032
        %v7035 = vshll.u32 %v6536, 16
        %v7037 = vrot.slane %v7035, 1
        %v7038 = vsel %vm994, %v7033, %v7037
        %v7040 = vshrl.u32 %v6663, 16
        %v7042 = vshll.u32 %v6663, 16
        %v7044 = vrot.slane %v7042, 1
        %v7045 = vor.u32 %v7040, %v7044
        %v7047 = vshll.u32 %v6664, 16
        %v7049 = vrot.slane %v7047, 1
        %v7050 = vsel %vm994, %v7045, %v7049
        %v7052 = vshrl.u32 %v6791, 16
        %v7054 = vshll.u32 %v6791, 16
        %v7056 = vrot.slane %v7054, 1
        %v7057 = vor.u32 %v7052, %v7056
        %v7059 = vshll.u32 %v6792, 16
        %v7061 = vrot.slane %v7059, 1
        %v7062 = vsel %vm994, %v7057, %v7061
        %v7064 = vshrl.u32 %v6537, 16
        %v7066 = vshll.u32 %v6537, 16
        %v7068 = vrot.slane %v7066, 1
        %v7069 = vor.u32 %v7064, %v7068
        %v7071 = vshll.u32 %v6538, 16
        %v7073 = vrot.slane %v7071, 1
        %v7074 = vsel %vm994, %v7069, %v7073
        %v7076 = vshrl.u32 %v6665, 16
        %v7078 = vshll.u32 %v6665, 16
        %v7080 = vrot.slane %v7078, 1
        %v7081 = vor.u32 %v7076, %v7080
        %v7083 = vshll.u32 %v6666, 16
        %v7085 = vrot.slane %v7083, 1
        %v7086 = vsel %vm994, %v7081, %v7085
        %v7088 = vshrl.u32 %v6793, 16
        %v7090 = vshll.u32 %v6793, 16
        %v7092 = vrot.slane %v7090, 1
        %v7093 = vor.u32 %v7088, %v7092
        %v7095 = vshll.u32 %v6794, 16
        %v7097 = vrot.slane %v7095, 1
        %v7098 = vsel %vm994, %v7093, %v7097
        %v7100 = vshrl.u32 %v6539, 16
        %v7102 = vshll.u32 %v6539, 16
        %v7104 = vrot.slane %v7102, 1
        %v7105 = vor.u32 %v7100, %v7104
        %v7107 = vshll.u32 %v6540, 16
        %v7109 = vrot.slane %v7107, 1
        %v7110 = vsel %vm994, %v7105, %v7109
        %v7112 = vshrl.u32 %v6667, 16
        %v7114 = vshll.u32 %v6667, 16
        %v7116 = vrot.slane %v7114, 1
        %v7117 = vor.u32 %v7112, %v7116
        %v7119 = vshll.u32 %v6668, 16
        %v7121 = vrot.slane %v7119, 1
        %v7122 = vsel %vm994, %v7117, %v7121
        %v7124 = vshrl.u32 %v6795, 16
        %v7126 = vshll.u32 %v6795, 16
        %v7128 = vrot.slane %v7126, 1
        %v7129 = vor.u32 %v7124, %v7128
        %v7131 = vshll.u32 %v6796, 16
        %v7133 = vrot.slane %v7131, 1
        %v7134 = vsel %vm994, %v7129, %v7133
        %v7136 = vshrl.u32 %v6541, 16
        %v7138 = vshll.u32 %v6541, 16
        %v7140 = vrot.slane %v7138, 1
        %v7141 = vor.u32 %v7136, %v7140
        %v7143 = vshll.u32 %v6542, 16
        %v7145 = vrot.slane %v7143, 1
        %v7146 = vsel %vm994, %v7141, %v7145
        %v7148 = vshrl.u32 %v6669, 16
        %v7150 = vshll.u32 %v6669, 16
        %v7152 = vrot.slane %v7150, 1
        %v7153 = vor.u32 %v7148, %v7152
        %v7155 = vshll.u32 %v6670, 16
        %v7157 = vrot.slane %v7155, 1
        %v7158 = vsel %vm994, %v7153, %v7157
        %v7160 = vshrl.u32 %v6797, 16
        %v7162 = vshll.u32 %v6797, 16
        %v7164 = vrot.slane %v7162, 1
        %v7165 = vor.u32 %v7160, %v7164
        %v7167 = vshll.u32 %v6798, 16
        %v7169 = vrot.slane %v7167, 1
        %v7170 = vsel %vm994, %v7165, %v7169
        %v7172 = vshrl.u32 %v6543, 16
        %v7174 = vshll.u32 %v6543, 16
        %v7176 = vrot.slane %v7174, 1
        %v7177 = vor.u32 %v7172, %v7176
        %v7179 = vshll.u32 %v6544, 16
        %v7181 = vrot.slane %v7179, 1
        %v7182 = vsel %vm994, %v7177, %v7181
        %v7184 = vshrl.u32 %v6671, 16
        %v7186 = vshll.u32 %v6671, 16
        %v7188 = vrot.slane %v7186, 1
        %v7189 = vor.u32 %v7184, %v7188
        %v7191 = vshll.u32 %v6672, 16
        %v7193 = vrot.slane %v7191, 1
        %v7194 = vsel %vm994, %v7189, %v7193
        %v7196 = vshrl.u32 %v6799, 16
        %v7198 = vshll.u32 %v6799, 16
        %v7200 = vrot.slane %v7198, 1
        %v7201 = vor.u32 %v7196, %v7200
        %v7203 = vshll.u32 %v6800, 16
        %v7205 = vrot.slane %v7203, 1
        %v7206 = vsel %vm994, %v7201, %v7205
        %v7208 = vshrl.u32 %v6545, 16
        %v7210 = vshll.u32 %v6545, 16
        %v7212 = vrot.slane %v7210, 1
        %v7213 = vor.u32 %v7208, %v7212
        %v7215 = vshll.u32 %v6546, 16
        %v7217 = vrot.slane %v7215, 1
        %v7218 = vsel %vm994, %v7213, %v7217
        %v7220 = vshrl.u32 %v6673, 16
        %v7222 = vshll.u32 %v6673, 16
        %v7224 = vrot.slane %v7222, 1
        %v7225 = vor.u32 %v7220, %v7224
        %v7227 = vshll.u32 %v6674, 16
        %v7229 = vrot.slane %v7227, 1
        %v7230 = vsel %vm994, %v7225, %v7229
        %v7232 = vshrl.u32 %v6801, 16
        %v7234 = vshll.u32 %v6801, 16
        %v7236 = vrot.slane %v7234, 1
        %v7237 = vor.u32 %v7232, %v7236
        %v7239 = vshll.u32 %v6802, 16
        %v7241 = vrot.slane %v7239, 1
        %v7242 = vsel %vm994, %v7237, %v7241
        %v7244 = vshrl.u32 %v6547, 16
        %v7246 = vshll.u32 %v6547, 16
        %v7248 = vrot.slane %v7246, 1
        %v7249 = vor.u32 %v7244, %v7248
        %v7251 = vshll.u32 %v6548, 16
        %v7253 = vrot.slane %v7251, 1
        %v7254 = vsel %vm994, %v7249, %v7253
        %v7256 = vshrl.u32 %v6675, 16
        %v7258 = vshll.u32 %v6675, 16
        %v7260 = vrot.slane %v7258, 1
        %v7261 = vor.u32 %v7256, %v7260
        %v7263 = vshll.u32 %v6676, 16
        %v7265 = vrot.slane %v7263, 1
        %v7266 = vsel %vm994, %v7261, %v7265
        %v7268 = vshrl.u32 %v6803, 16
        %v7270 = vshll.u32 %v6803, 16
        %v7272 = vrot.slane %v7270, 1
        %v7273 = vor.u32 %v7268, %v7272
        %v7275 = vshll.u32 %v6804, 16
        %v7277 = vrot.slane %v7275, 1
        %v7278 = vsel %vm994, %v7273, %v7277
        %v7280 = vshrl.u32 %v6549, 16
        %v7282 = vshll.u32 %v6549, 16
        %v7284 = vrot.slane %v7282, 1
        %v7285 = vor.u32 %v7280, %v7284
        %v7287 = vshll.u32 %v6550, 16
        %v7289 = vrot.slane %v7287, 1
        %v7290 = vsel %vm994, %v7285, %v7289
        %v7292 = vshrl.u32 %v6677, 16
        %v7294 = vshll.u32 %v6677, 16
        %v7296 = vrot.slane %v7294, 1
        %v7297 = vor.u32 %v7292, %v7296
        %v7299 = vshll.u32 %v6678, 16
        %v7301 = vrot.slane %v7299, 1
        %v7302 = vsel %vm994, %v7297, %v7301
        %v7304 = vshrl.u32 %v6805, 16
        %v7306 = vshll.u32 %v6805, 16
        %v7308 = vrot.slane %v7306, 1
        %v7309 = vor.u32 %v7304, %v7308
        %v7311 = vshll.u32 %v6806, 16
        %v7313 = vrot.slane %v7311, 1
        %v7314 = vsel %vm994, %v7309, %v7313
        %v7316 = vshrl.u32 %v6551, 16
        %v7318 = vshll.u32 %v6551, 16
        %v7320 = vrot.slane %v7318, 1
        %v7321 = vor.u32 %v7316, %v7320
        %v7323 = vshll.u32 %v6552, 16
        %v7325 = vrot.slane %v7323, 1
        %v7326 = vsel %vm994, %v7321, %v7325
        %v7328 = vshrl.u32 %v6679, 16
        %v7330 = vshll.u32 %v6679, 16
        %v7332 = vrot.slane %v7330, 1
        %v7333 = vor.u32 %v7328, %v7332
        %v7335 = vshll.u32 %v6680, 16
        %v7337 = vrot.slane %v7335, 1
        %v7338 = vsel %vm994, %v7333, %v7337
        %v7340 = vshrl.u32 %v6807, 16
        %v7342 = vshll.u32 %v6807, 16
        %v7344 = vrot.slane %v7342, 1
        %v7345 = vor.u32 %v7340, %v7344
        %v7347 = vshll.u32 %v6808, 16
        %v7349 = vrot.slane %v7347, 1
        %v7350 = vsel %vm994, %v7345, %v7349
        %v7352 = vshrl.u32 %v6553, 16
        %v7354 = vshll.u32 %v6553, 16
        %v7356 = vrot.slane %v7354, 1
        %v7357 = vor.u32 %v7352, %v7356
        %v7359 = vshll.u32 %v6554, 16
        %v7361 = vrot.slane %v7359, 1
        %v7362 = vsel %vm994, %v7357, %v7361
        %v7364 = vshrl.u32 %v6681, 16
        %v7366 = vshll.u32 %v6681, 16
        %v7368 = vrot.slane %v7366, 1
        %v7369 = vor.u32 %v7364, %v7368
        %v7371 = vshll.u32 %v6682, 16
        %v7373 = vrot.slane %v7371, 1
        %v7374 = vsel %vm994, %v7369, %v7373
        %v7376 = vshrl.u32 %v6809, 16
        %v7378 = vshll.u32 %v6809, 16
        %v7380 = vrot.slane %v7378, 1
        %v7381 = vor.u32 %v7376, %v7380
        %v7383 = vshll.u32 %v6810, 16
        %v7385 = vrot.slane %v7383, 1
        %v7386 = vsel %vm994, %v7381, %v7385
        %s7435 = scalar_lea.vmem [#allocation3], 384
        %v7436 = vld [vmem:[%s7435] sm:$0xf]
        %v7437 = vld [vmem:[%s7435 + $0x4] sm:$0xf]
        %v7438 = vld [vmem:[%s7435 + $0x8] sm:$0xf]
        %v7439 = vld [vmem:[%s7435 + $0xc] sm:$0xf]
        %v7440 = vld [vmem:[%s7435 + $0x10] sm:$0xf]
        %v7441 = vld [vmem:[%s7435 + $0x14] sm:$0xf]
        %v7442 = vld [vmem:[%s7435 + $0x18] sm:$0xf]
        %v7443 = vld [vmem:[%s7435 + $0x1c] sm:$0xf]
        %v7444 = vld [vmem:[%s7435 + $0x20] sm:$0xf]
        %v7445 = vld [vmem:[%s7435 + $0x24] sm:$0xf]
        %v7446 = vld [vmem:[%s7435 + $0x28] sm:$0xf]
        %v7447 = vld [vmem:[%s7435 + $0x2c] sm:$0xf]
        %v7448 = vld [vmem:[%s7435 + $0x30] sm:$0xf]
        %v7449 = vld [vmem:[%s7435 + $0x34] sm:$0xf]
        %v7450 = vld [vmem:[%s7435 + $0x38] sm:$0xf]
        %v7451 = vld [vmem:[%s7435 + $0x3c] sm:$0xf]
        %v7452 = vld [vmem:[%s7435 + $0x40] sm:$0xf]
        %v7453 = vld [vmem:[%s7435 + $0x44] sm:$0xf]
        %v7454 = vld [vmem:[%s7435 + $0x48] sm:$0xf]
        %v7455 = vld [vmem:[%s7435 + $0x4c] sm:$0xf]
        %v7456 = vld [vmem:[%s7435 + $0x50] sm:$0xf]
        %v7457 = vld [vmem:[%s7435 + $0x54] sm:$0xf]
        %v7458 = vld [vmem:[%s7435 + $0x58] sm:$0xf]
        %v7459 = vld [vmem:[%s7435 + $0x5c] sm:$0xf]
        %v7460 = vld [vmem:[%s7435 + $0x60] sm:$0xf]
        %v7461 = vld [vmem:[%s7435 + $0x64] sm:$0xf]
        %v7462 = vld [vmem:[%s7435 + $0x68] sm:$0xf]
        %v7463 = vld [vmem:[%s7435 + $0x6c] sm:$0xf]
        %v7464 = vld [vmem:[%s7435 + $0x70] sm:$0xf]
        %v7465 = vld [vmem:[%s7435 + $0x74] sm:$0xf]
        %v7466 = vld [vmem:[%s7435 + $0x78] sm:$0xf]
        %v7467 = vld [vmem:[%s7435 + $0x7c] sm:$0xf]
        %v7468 = vld [vmem:[%s7435 + $0x80] sm:$0xf]
        %v7469 = vld [vmem:[%s7435 + $0x84] sm:$0xf]
        %v7470 = vld [vmem:[%s7435 + $0x88] sm:$0xf]
        %v7471 = vld [vmem:[%s7435 + $0x8c] sm:$0xf]
        %v7472 = vld [vmem:[%s7435 + $0x90] sm:$0xf]
        %v7473 = vld [vmem:[%s7435 + $0x94] sm:$0xf]
        %v7474 = vld [vmem:[%s7435 + $0x98] sm:$0xf]
        %v7475 = vld [vmem:[%s7435 + $0x9c] sm:$0xf]
        %v7476 = vld [vmem:[%s7435 + $0xa0] sm:$0xf]
        %v7477 = vld [vmem:[%s7435 + $0xa4] sm:$0xf]
        %v7478 = vld [vmem:[%s7435 + $0xa8] sm:$0xf]
        %v7479 = vld [vmem:[%s7435 + $0xac] sm:$0xf]
        %v7480 = vld [vmem:[%s7435 + $0xb0] sm:$0xf]
        %v7481 = vld [vmem:[%s7435 + $0xb4] sm:$0xf]
        %v7482 = vld [vmem:[%s7435 + $0xb8] sm:$0xf]
        %v7483 = vld [vmem:[%s7435 + $0xbc] sm:$0xf]
        %v7532 = vunpack.c.l.b16 %v7436
        %v7533 = vunpack.c.l.b16 %v7437
        %v7534 = vunpack.c.l.b16 %v7438
        %v7535 = vunpack.c.l.b16 %v7439
        %v7536 = vunpack.c.l.b16 %v7440
        %v7537 = vunpack.c.l.b16 %v7441
        %v7538 = vunpack.c.l.b16 %v7442
        %v7539 = vunpack.c.l.b16 %v7443
        %v7540 = vunpack.c.l.b16 %v7444
        %v7541 = vunpack.c.l.b16 %v7445
        %v7542 = vunpack.c.l.b16 %v7446
        %v7543 = vunpack.c.l.b16 %v7447
        %v7544 = vunpack.c.l.b16 %v7448
        %v7545 = vunpack.c.l.b16 %v7449
        %v7546 = vunpack.c.l.b16 %v7450
        %v7547 = vunpack.c.l.b16 %v7451
        %v7548 = vunpack.c.l.b16 %v7452
        %v7549 = vunpack.c.l.b16 %v7453
        %v7550 = vunpack.c.l.b16 %v7454
        %v7551 = vunpack.c.l.b16 %v7455
        %v7552 = vunpack.c.l.b16 %v7456
        %v7553 = vunpack.c.l.b16 %v7457
        %v7554 = vunpack.c.l.b16 %v7458
        %v7555 = vunpack.c.l.b16 %v7459
        %v7556 = vunpack.c.l.b16 %v7460
        %v7557 = vunpack.c.l.b16 %v7461
        %v7558 = vunpack.c.l.b16 %v7462
        %v7559 = vunpack.c.l.b16 %v7463
        %v7560 = vunpack.c.l.b16 %v7464
        %v7561 = vunpack.c.l.b16 %v7465
        %v7562 = vunpack.c.l.b16 %v7466
        %v7563 = vunpack.c.l.b16 %v7467
        %v7564 = vunpack.c.l.b16 %v7468
        %v7565 = vunpack.c.l.b16 %v7469
        %v7566 = vunpack.c.l.b16 %v7470
        %v7567 = vunpack.c.l.b16 %v7471
        %v7568 = vunpack.c.l.b16 %v7472
        %v7569 = vunpack.c.l.b16 %v7473
        %v7570 = vunpack.c.l.b16 %v7474
        %v7571 = vunpack.c.l.b16 %v7475
        %v7572 = vunpack.c.l.b16 %v7476
        %v7573 = vunpack.c.l.b16 %v7477
        %v7574 = vunpack.c.l.b16 %v7478
        %v7575 = vunpack.c.l.b16 %v7479
        %v7576 = vunpack.c.l.b16 %v7480
        %v7577 = vunpack.c.l.b16 %v7481
        %v7578 = vunpack.c.l.b16 %v7482
        %v7579 = vunpack.c.l.b16 %v7483
        %v7580 = vpack.c.b16 %v7533, %v7532
        %v7581 = vpack.c.b16 %v7535, %v7534
        %v7582 = vpack.c.b16 %v7537, %v7536
        %v7583 = vpack.c.b16 %v7539, %v7538
        %v7584 = vpack.c.b16 %v7541, %v7540
        %v7585 = vpack.c.b16 %v7543, %v7542
        %v7586 = vpack.c.b16 %v7545, %v7544
        %v7587 = vpack.c.b16 %v7547, %v7546
        %v7588 = vpack.c.b16 %v7549, %v7548
        %v7589 = vpack.c.b16 %v7551, %v7550
        %v7590 = vpack.c.b16 %v7553, %v7552
        %v7591 = vpack.c.b16 %v7555, %v7554
        %v7592 = vpack.c.b16 %v7557, %v7556
        %v7593 = vpack.c.b16 %v7559, %v7558
        %v7594 = vpack.c.b16 %v7561, %v7560
        %v7595 = vpack.c.b16 %v7563, %v7562
        %v7596 = vpack.c.b16 %v7565, %v7564
        %v7597 = vpack.c.b16 %v7567, %v7566
        %v7598 = vpack.c.b16 %v7569, %v7568
        %v7599 = vpack.c.b16 %v7571, %v7570
        %v7600 = vpack.c.b16 %v7573, %v7572
        %v7601 = vpack.c.b16 %v7575, %v7574
        %v7602 = vpack.c.b16 %v7577, %v7576
        %v7603 = vpack.c.b16 %v7579, %v7578
        %7628 = vmatprep.subr.bf16.mxu0 0
        %7629 = vmatpush1.bf16.msra.mxu0 %v7580
        %7630 = vmatprep.subr.bf16.mxu0 0
        %7631 = vmatpush1.bf16.msra.mxu0 %v7581
        %7632 = vmatprep.subr.bf16.mxu0 0
        %7633 = vmatpush1.bf16.msra.mxu0 %v7582
        %7634 = vmatprep.subr.bf16.mxu0 0
        %7635 = vmatpush1.bf16.msra.mxu0 %v7583
        %7636 = vmatprep.subr.bf16.mxu0 0
        %7637 = vmatpush1.bf16.msra.mxu0 %v7584
        %7638 = vmatprep.subr.bf16.mxu0 0
        %7639 = vmatpush1.bf16.msra.mxu0 %v7585
        %7640 = vmatprep.subr.bf16.mxu0 0
        %7641 = vmatpush1.bf16.msra.mxu0 %v7586
        %7642 = vmatprep.subr.bf16.mxu0 0
        %7643 = vmatpush1.bf16.msra.mxu0 %v7587
        %7644 = vmatprep.subr.bf16.mxu0 0
        %7645 = vmatpush1.bf16.msra.mxu0 %v7588
        %7646 = vmatprep.subr.bf16.mxu0 0
        %7647 = vmatpush1.bf16.msra.mxu0 %v7589
        %7648 = vmatprep.subr.bf16.mxu0 0
        %7649 = vmatpush1.bf16.msra.mxu0 %v7590
        %7650 = vmatprep.subr.bf16.mxu0 0
        %7651 = vmatpush1.bf16.msra.mxu0 %v7591
        %7652 = vmatprep.subr.bf16.mxu0 0
        %7653 = vmatpush1.bf16.msra.mxu0 %v7592
        %7654 = vmatprep.subr.bf16.mxu0 0
        %7655 = vmatpush1.bf16.msra.mxu0 %v7593
        %7656 = vmatprep.subr.bf16.mxu0 0
        %7657 = vmatpush1.bf16.msra.mxu0 %v7594
        %7658 = vmatprep.subr.bf16.mxu0 0
        %7659 = vmatpush1.bf16.msra.mxu0 %v7595
        %7660 = vmatprep.mubr.bf16.mxu0 %v6834
        %7661 = vmatmul.mubr.bf16.gmra.mrb[0].mxu0 %v6822
        %v7662 = vpop.f32.mrb[0].mxu0
        %v7663 = vadd.f32 0.0, %v7662
        %v7664 = vpop.f32.mrb[0].mxu0
        %v7665 = vpop.f32.mrb[0].mxu0
        %v7666 = vadd.f32 0.0, %v7665
        %v7667 = vpop.f32.mrb[0].mxu0
        %7668 = vmatprep.mubr.bf16.mxu0 %v6870
        %7669 = vmatmul.mubr.bf16.gmra.mrb[0].mxu0 %v6858
        %v7670 = vpop.f32.mrb[0].mxu0
        %v7671 = vadd.f32 0.0, %v7670
        %v7672 = vpop.f32.mrb[0].mxu0
        %v7673 = vpop.f32.mrb[0].mxu0
        %v7674 = vadd.f32 0.0, %v7673
        %v7675 = vpop.f32.mrb[0].mxu0
        %7676 = vmatprep.mubr.bf16.mxu0 %v6906
        %7677 = vmatmul.mubr.bf16.gmra.mrb[0].mxu0 %v6894
        %v7678 = vpop.f32.mrb[0].mxu0
        %v7679 = vadd.f32 0.0, %v7678
        %v7680 = vpop.f32.mrb[0].mxu0
        %v7681 = vpop.f32.mrb[0].mxu0
        %v7682 = vadd.f32 0.0, %v7681
        %v7683 = vpop.f32.mrb[0].mxu0
        %7684 = vmatprep.mubr.bf16.mxu0 %v6942
        %7685 = vmatmul.mubr.bf16.gmra.mrb[0].mxu0 %v6930
        %v7686 = vpop.f32.mrb[0].mxu0
        %v7687 = vadd.f32 0.0, %v7686
        %v7688 = vpop.f32.mrb[0].mxu0
        %v7689 = vpop.f32.mrb[0].mxu0
        %v7690 = vadd.f32 0.0, %v7689
        %v7691 = vpop.f32.mrb[0].mxu0
        %7692 = vmatprep.mubr.bf16.mxu0 %v6978
        %7693 = vmatmul.mubr.bf16.gmra.mrb[0].mxu0 %v6966
        %v7694 = vpop.f32.mrb[0].mxu0
        %v7695 = vadd.f32 0.0, %v7694
        %v7696 = vpop.f32.mrb[0].mxu0
        %v7697 = vpop.f32.mrb[0].mxu0
        %v7698 = vadd.f32 0.0, %v7697
        %v7699 = vpop.f32.mrb[0].mxu0
        %7700 = vmatprep.mubr.bf16.mxu0 %v7014
        %7701 = vmatmul.mubr.bf16.gmra.mrb[0].mxu0 %v7002
        %v7702 = vpop.f32.mrb[0].mxu0
        %v7703 = vadd.f32 0.0, %v7702
        %v7704 = vpop.f32.mrb[0].mxu0
        %v7705 = vpop.f32.mrb[0].mxu0
        %v7706 = vadd.f32 0.0, %v7705
        %v7707 = vpop.f32.mrb[0].mxu0
        %7708 = vmatprep.mubr.bf16.mxu0 %v7050
        %7709 = vmatmul.mubr.bf16.gmra.mrb[0].mxu0 %v7038
        %v7710 = vpop.f32.mrb[0].mxu0
        %v7711 = vadd.f32 0.0, %v7710
        %v7712 = vpop.f32.mrb[0].mxu0
        %v7713 = vpop.f32.mrb[0].mxu0
        %v7714 = vadd.f32 0.0, %v7713
        %v7715 = vpop.f32.mrb[0].mxu0
        %7716 = vmatprep.mubr.bf16.mxu0 %v7086
        %7717 = vmatmul.mubr.bf16.gmra.mrb[0].mxu0 %v7074
        %v7718 = vpop.f32.mrb[0].mxu0
        %v7719 = vadd.f32 0.0, %v7718
        %v7720 = vpop.f32.mrb[0].mxu0
        %v7721 = vpop.f32.mrb[0].mxu0
        %v7722 = vadd.f32 0.0, %v7721
        %v7723 = vpop.f32.mrb[0].mxu0
        %7724 = vmatprep.mubr.bf16.mxu0 %v7122
        %7725 = vmatmul.mubr.bf16.gmra.mrb[0].mxu0 %v7110
        %v7726 = vpop.f32.mrb[0].mxu0
        %v7727 = vadd.f32 0.0, %v7726
        %v7728 = vpop.f32.mrb[0].mxu0
        %v7729 = vpop.f32.mrb[0].mxu0
        %v7730 = vadd.f32 0.0, %v7729
        %v7731 = vpop.f32.mrb[0].mxu0
        %7732 = vmatprep.mubr.bf16.mxu0 %v7158
        %7733 = vmatmul.mubr.bf16.gmra.mrb[0].mxu0 %v7146
        %v7734 = vpop.f32.mrb[0].mxu0
        %v7735 = vadd.f32 0.0, %v7734
        %v7736 = vpop.f32.mrb[0].mxu0
        %v7737 = vpop.f32.mrb[0].mxu0
        %v7738 = vadd.f32 0.0, %v7737
        %v7739 = vpop.f32.mrb[0].mxu0
        %7740 = vmatprep.mubr.bf16.mxu0 %v7194
        %7741 = vmatmul.mubr.bf16.gmra.mrb[0].mxu0 %v7182
        %v7742 = vpop.f32.mrb[0].mxu0
        %v7743 = vadd.f32 0.0, %v7742
        %v7744 = vpop.f32.mrb[0].mxu0
        %v7745 = vpop.f32.mrb[0].mxu0
        %v7746 = vadd.f32 0.0, %v7745
        %v7747 = vpop.f32.mrb[0].mxu0
        %7748 = vmatprep.mubr.bf16.mxu0 %v7230
        %7749 = vmatmul.mubr.bf16.gmra.mrb[0].mxu0 %v7218
        %v7750 = vpop.f32.mrb[0].mxu0
        %v7751 = vadd.f32 0.0, %v7750
        %v7752 = vpop.f32.mrb[0].mxu0
        %v7753 = vpop.f32.mrb[0].mxu0
        %v7754 = vadd.f32 0.0, %v7753
        %v7755 = vpop.f32.mrb[0].mxu0
        %7756 = vmatprep.mubr.bf16.mxu0 %v7266
        %7757 = vmatmul.mubr.bf16.gmra.mrb[0].mxu0 %v7254
        %v7758 = vpop.f32.mrb[0].mxu0
        %v7759 = vadd.f32 0.0, %v7758
        %v7760 = vpop.f32.mrb[0].mxu0
        %v7761 = vpop.f32.mrb[0].mxu0
        %v7762 = vadd.f32 0.0, %v7761
        %v7763 = vpop.f32.mrb[0].mxu0
        %7764 = vmatprep.mubr.bf16.mxu0 %v7302
        %7765 = vmatmul.mubr.bf16.gmra.mrb[0].mxu0 %v7290
        %v7766 = vpop.f32.mrb[0].mxu0
        %v7767 = vadd.f32 0.0, %v7766
        %v7768 = vpop.f32.mrb[0].mxu0
        %v7769 = vpop.f32.mrb[0].mxu0
        %v7770 = vadd.f32 0.0, %v7769
        %v7771 = vpop.f32.mrb[0].mxu0
        %7772 = vmatprep.mubr.bf16.mxu0 %v7338
        %7773 = vmatmul.mubr.bf16.gmra.mrb[0].mxu0 %v7326
        %v7774 = vpop.f32.mrb[0].mxu0
        %v7775 = vadd.f32 0.0, %v7774
        %v7776 = vpop.f32.mrb[0].mxu0
        %v7777 = vpop.f32.mrb[0].mxu0
        %v7778 = vadd.f32 0.0, %v7777
        %v7779 = vpop.f32.mrb[0].mxu0
        %7780 = vmatprep.mubr.bf16.mxu0 %v7374
        %7781 = vmatmul.mubr.bf16.gmra.mrb[0].mxu0 %v7362
        %v7782 = vpop.f32.mrb[0].mxu0
        %v7783 = vadd.f32 0.0, %v7782
        %v7784 = vpop.f32.mrb[0].mxu0
        %v7785 = vpop.f32.mrb[0].mxu0
        %v7786 = vadd.f32 0.0, %v7785
        %v7787 = vpop.f32.mrb[0].mxu0
        %7788 = vdwg.mxu0
        %7789 = vmatprep.subr.bf16.mxu0 0
        %7790 = vmatpush1.bf16.msra.mxu0 %v7596
        %7791 = vmatprep.subr.bf16.mxu0 0
        %7792 = vmatpush1.bf16.msra.mxu0 %v7597
        %7793 = vmatprep.subr.bf16.mxu0 0
        %7794 = vmatpush1.bf16.msra.mxu0 %v7598
        %7795 = vmatprep.subr.bf16.mxu0 0
        %7796 = vmatpush1.bf16.msra.mxu0 %v7599
        %7797 = vmatprep.subr.bf16.mxu0 0
        %7798 = vmatpush1.bf16.msra.mxu0 %v7600
        %7799 = vmatprep.subr.bf16.mxu0 0
        %7800 = vmatpush1.bf16.msra.mxu0 %v7601
        %7801 = vmatprep.subr.bf16.mxu0 0
        %7802 = vmatpush1.bf16.msra.mxu0 %v7602
        %7803 = vmatprep.subr.bf16.mxu0 0
        %7804 = vmatpush1.bf16.msra.mxu0 %v7603
        %7805 = vmatprep.subr.bf16.mxu0 0
        %7806 = vmatpush1.bf16.msra.mxu0 0
        %7807 = vmatprep.subr.bf16.mxu0 0
        %7808 = vmatpush1.bf16.msra.mxu0 0
        %7809 = vmatprep.subr.bf16.mxu0 0
        %7810 = vmatpush1.bf16.msra.mxu0 0
        %7811 = vmatprep.subr.bf16.mxu0 0
        %7812 = vmatpush1.bf16.msra.mxu0 0
        %7813 = vmatprep.subr.bf16.mxu0 0
        %7814 = vmatpush1.bf16.msra.mxu0 0
        %7815 = vmatprep.subr.bf16.mxu0 0
        %7816 = vmatpush1.bf16.msra.mxu0 0
        %7817 = vmatprep.subr.bf16.mxu0 0
        %7818 = vmatpush1.bf16.msra.mxu0 0
        %7819 = vmatprep.subr.bf16.mxu0 0
        %7820 = vmatpush1.bf16.msra.mxu0 0
        %7821 = vmatprep.mubr.bf16.mxu0 0
        %7822 = vmatmul.mubr.bf16.gmra.mrb[0].mxu0 %v6846
        %v7823 = vpop.f32.mrb[0].mxu0
        %v7824 = vadd.f32 %v7663, %v7823
        %v7825 = vpop.f32.mrb[0].mxu0
        %v7826 = vpop.f32.mrb[0].mxu0
        %v7827 = vadd.f32 %v7666, %v7826
        %v7828 = vpop.f32.mrb[0].mxu0
        %7829 = vmatprep.mubr.bf16.mxu0 0
        %7830 = vmatmul.mubr.bf16.gmra.mrb[0].mxu0 %v6882
        %v7831 = vpop.f32.mrb[0].mxu0
        %v7832 = vadd.f32 %v7671, %v7831
        %v7833 = vpop.f32.mrb[0].mxu0
        %v7834 = vpop.f32.mrb[0].mxu0
        %v7835 = vadd.f32 %v7674, %v7834
        %v7836 = vpop.f32.mrb[0].mxu0
        %7837 = vmatprep.mubr.bf16.mxu0 0
        %7838 = vmatmul.mubr.bf16.gmra.mrb[0].mxu0 %v6918
        %v7839 = vpop.f32.mrb[0].mxu0
        %v7840 = vadd.f32 %v7679, %v7839
        %v7841 = vpop.f32.mrb[0].mxu0
        %v7842 = vpop.f32.mrb[0].mxu0
        %v7843 = vadd.f32 %v7682, %v7842
        %v7844 = vpop.f32.mrb[0].mxu0
        %7845 = vmatprep.mubr.bf16.mxu0 0
        %7846 = vmatmul.mubr.bf16.gmra.mrb[0].mxu0 %v6954
        %v7847 = vpop.f32.mrb[0].mxu0
        %v7848 = vadd.f32 %v7687, %v7847
        %v7849 = vpop.f32.mrb[0].mxu0
        %v7850 = vpop.f32.mrb[0].mxu0
        %v7851 = vadd.f32 %v7690, %v7850
        %v7852 = vpop.f32.mrb[0].mxu0
        %7853 = vmatprep.mubr.bf16.mxu0 0
        %7854 = vmatmul.mubr.bf16.gmra.mrb[0].mxu0 %v6990
        %v7855 = vpop.f32.mrb[0].mxu0
        %v7856 = vadd.f32 %v7695, %v7855
        %v7857 = vpop.f32.mrb[0].mxu0
        %v7858 = vpop.f32.mrb[0].mxu0
        %v7859 = vadd.f32 %v7698, %v7858
        %v7860 = vpop.f32.mrb[0].mxu0
        %7861 = vmatprep.mubr.bf16.mxu0 0
        %7862 = vmatmul.mubr.bf16.gmra.mrb[0].mxu0 %v7026
        %v7863 = vpop.f32.mrb[0].mxu0
        %v7864 = vadd.f32 %v7703, %v7863
        %v7865 = vpop.f32.mrb[0].mxu0
        %v7866 = vpop.f32.mrb[0].mxu0
        %v7867 = vadd.f32 %v7706, %v7866
        %v7868 = vpop.f32.mrb[0].mxu0
        %7869 = vmatprep.mubr.bf16.mxu0 0
        %7870 = vmatmul.mubr.bf16.gmra.mrb[0].mxu0 %v7062
        %v7871 = vpop.f32.mrb[0].mxu0
        %v7872 = vadd.f32 %v7711, %v7871
        %v7873 = vpop.f32.mrb[0].mxu0
        %v7874 = vpop.f32.mrb[0].mxu0
        %v7875 = vadd.f32 %v7714, %v7874
        %v7876 = vpop.f32.mrb[0].mxu0
        %7877 = vmatprep.mubr.bf16.mxu0 0
        %7878 = vmatmul.mubr.bf16.gmra.mrb[0].mxu0 %v7098
        %v7879 = vpop.f32.mrb[0].mxu0
        %v7880 = vadd.f32 %v7719, %v7879
        %v7881 = vpop.f32.mrb[0].mxu0
        %v7882 = vpop.f32.mrb[0].mxu0
        %v7883 = vadd.f32 %v7722, %v7882
        %v7884 = vpop.f32.mrb[0].mxu0
        %7885 = vmatprep.mubr.bf16.mxu0 0
        %7886 = vmatmul.mubr.bf16.gmra.mrb[0].mxu0 %v7134
        %v7887 = vpop.f32.mrb[0].mxu0
        %v7888 = vadd.f32 %v7727, %v7887
        %v7889 = vpop.f32.mrb[0].mxu0
        %v7890 = vpop.f32.mrb[0].mxu0
        %v7891 = vadd.f32 %v7730, %v7890
        %v7892 = vpop.f32.mrb[0].mxu0
        %7893 = vmatprep.mubr.bf16.mxu0 0
        %7894 = vmatmul.mubr.bf16.gmra.mrb[0].mxu0 %v7170
        %v7895 = vpop.f32.mrb[0].mxu0
        %v7896 = vadd.f32 %v7735, %v7895
        %v7897 = vpop.f32.mrb[0].mxu0
        %v7898 = vpop.f32.mrb[0].mxu0
        %v7899 = vadd.f32 %v7738, %v7898
        %v7900 = vpop.f32.mrb[0].mxu0
        %7901 = vmatprep.mubr.bf16.mxu0 0
        %7902 = vmatmul.mubr.bf16.gmra.mrb[0].mxu0 %v7206
        %v7903 = vpop.f32.mrb[0].mxu0
        %v7904 = vadd.f32 %v7743, %v7903
        %v7905 = vpop.f32.mrb[0].mxu0
        %v7906 = vpop.f32.mrb[0].mxu0
        %v7907 = vadd.f32 %v7746, %v7906
        %v7908 = vpop.f32.mrb[0].mxu0
        %7909 = vmatprep.mubr.bf16.mxu0 0
        %7910 = vmatmul.mubr.bf16.gmra.mrb[0].mxu0 %v7242
        %v7911 = vpop.f32.mrb[0].mxu0
        %v7912 = vadd.f32 %v7751, %v7911
        %v7913 = vpop.f32.mrb[0].mxu0
        %v7914 = vpop.f32.mrb[0].mxu0
        %v7915 = vadd.f32 %v7754, %v7914
        %v7916 = vpop.f32.mrb[0].mxu0
        %7917 = vmatprep.mubr.bf16.mxu0 0
        %7918 = vmatmul.mubr.bf16.gmra.mrb[0].mxu0 %v7278
        %v7919 = vpop.f32.mrb[0].mxu0
        %v7920 = vadd.f32 %v7759, %v7919
        %v7921 = vpop.f32.mrb[0].mxu0
        %v7922 = vpop.f32.mrb[0].mxu0
        %v7923 = vadd.f32 %v7762, %v7922
        %v7924 = vpop.f32.mrb[0].mxu0
        %7925 = vmatprep.mubr.bf16.mxu0 0
        %7926 = vmatmul.mubr.bf16.gmra.mrb[0].mxu0 %v7314
        %v7927 = vpop.f32.mrb[0].mxu0
        %v7928 = vadd.f32 %v7767, %v7927
        %v7929 = vpop.f32.mrb[0].mxu0
        %v7930 = vpop.f32.mrb[0].mxu0
        %v7931 = vadd.f32 %v7770, %v7930
        %v7932 = vpop.f32.mrb[0].mxu0
        %7933 = vmatprep.mubr.bf16.mxu0 0
        %7934 = vmatmul.mubr.bf16.gmra.mrb[0].mxu0 %v7350
        %v7935 = vpop.f32.mrb[0].mxu0
        %v7936 = vadd.f32 %v7775, %v7935
        %v7937 = vpop.f32.mrb[0].mxu0
        %v7938 = vpop.f32.mrb[0].mxu0
        %v7939 = vadd.f32 %v7778, %v7938
        %v7940 = vpop.f32.mrb[0].mxu0
        %7941 = vmatprep.mubr.bf16.mxu0 0
        %7942 = vmatmul.mubr.bf16.gmra.mrb[0].mxu0 %v7386
        %v7943 = vpop.f32.mrb[0].mxu0
        %v7944 = vadd.f32 %v7783, %v7943
        %v7945 = vpop.f32.mrb[0].mxu0
        %v7946 = vpop.f32.mrb[0].mxu0
        %v7947 = vadd.f32 %v7786, %v7946
        %v7948 = vpop.f32.mrb[0].mxu0
        %7949 = vdwg.mxu0
        %v7950 = vadd.f32 %v6157, %v7824
        %v7951 = vadd.f32 %v6160, %v7827
        %v7952 = vadd.f32 %v6165, %v7832
        %v7953 = vadd.f32 %v6168, %v7835
        %v7954 = vadd.f32 %v6173, %v7840
        %v7955 = vadd.f32 %v6176, %v7843
        %v7956 = vadd.f32 %v6181, %v7848
        %v7957 = vadd.f32 %v6184, %v7851
        %v7958 = vadd.f32 %v6189, %v7856
        %v7959 = vadd.f32 %v6192, %v7859
        %v7960 = vadd.f32 %v6197, %v7864
        %v7961 = vadd.f32 %v6200, %v7867
        %v7962 = vadd.f32 %v6205, %v7872
        %v7963 = vadd.f32 %v6208, %v7875
        %v7964 = vadd.f32 %v6213, %v7880
        %v7965 = vadd.f32 %v6216, %v7883
        %v7966 = vadd.f32 %v6221, %v7888
        %v7967 = vadd.f32 %v6224, %v7891
        %v7968 = vadd.f32 %v6229, %v7896
        %v7969 = vadd.f32 %v6232, %v7899
        %v7970 = vadd.f32 %v6237, %v7904
        %v7971 = vadd.f32 %v6240, %v7907
        %v7972 = vadd.f32 %v6245, %v7912
        %v7973 = vadd.f32 %v6248, %v7915
        %v7974 = vadd.f32 %v6253, %v7920
        %v7975 = vadd.f32 %v6256, %v7923
        %v7976 = vadd.f32 %v6261, %v7928
        %v7977 = vadd.f32 %v6264, %v7931
        %v7978 = vadd.f32 %v6269, %v7936
        %v7979 = vadd.f32 %v6272, %v7939
        %v7980 = vadd.f32 %v6277, %v7944
        %v7981 = vadd.f32 %v6280, %v7947
        %v7982 = vld [vmem:[%s4] sm:$0x1]
        %v7984 = vlaneseq
        %v7985 = vshrl.u32 %v7984, 7
        %v7986 = vsub.s32 0, %v7985
        %v7987 = vrot.slane %v7982, %v7986
        %v7989 = vadd.f32 %v7950, %v7987
        %v7990 = vadd.f32 %v7951, %v7987
        %v7991 = vadd.f32 %v7952, %v7987
        %v7992 = vadd.f32 %v7953, %v7987
        %v7993 = vadd.f32 %v7954, %v7987
        %v7994 = vadd.f32 %v7955, %v7987
        %v7995 = vadd.f32 %v7956, %v7987
        %v7996 = vadd.f32 %v7957, %v7987
        %v7997 = vadd.f32 %v7958, %v7987
        %v7998 = vadd.f32 %v7959, %v7987
        %v7999 = vadd.f32 %v7960, %v7987
        %v8000 = vadd.f32 %v7961, %v7987
        %v8001 = vadd.f32 %v7962, %v7987
        %v8002 = vadd.f32 %v7963, %v7987
        %v8003 = vadd.f32 %v7964, %v7987
        %v8004 = vadd.f32 %v7965, %v7987
        %v8005 = vadd.f32 %v7966, %v7987
        %v8006 = vadd.f32 %v7967, %v7987
        %v8007 = vadd.f32 %v7968, %v7987
        %v8008 = vadd.f32 %v7969, %v7987
        %v8009 = vadd.f32 %v7970, %v7987
        %v8010 = vadd.f32 %v7971, %v7987
        %v8011 = vadd.f32 %v7972, %v7987
        %v8012 = vadd.f32 %v7973, %v7987
        %v8013 = vadd.f32 %v7974, %v7987
        %v8014 = vadd.f32 %v7975, %v7987
        %v8015 = vadd.f32 %v7976, %v7987
        %v8016 = vadd.f32 %v7977, %v7987
        %v8017 = vadd.f32 %v7978, %v7987
        %v8018 = vadd.f32 %v7979, %v7987
        %v8019 = vadd.f32 %v7980, %v7987
        %v8020 = vadd.f32 %v7981, %v7987
        %v8021 = vld [vmem:[%s400] sm:$0xf]
        %v8022 = vld [vmem:[%s400 + $0x4] sm:$0xf]
        %v8023 = vld [vmem:[%s400 + $0x8] sm:$0x1]
        %v8024 = vld [vmem:[%s400 + $0xc] sm:$0xf]
        %v8025 = vld [vmem:[%s400 + $0x10] sm:$0xf]
        %v8026 = vld [vmem:[%s400 + $0x14] sm:$0x1]
        %v8027 = vld [vmem:[%s400 + $0x18] sm:$0xf]
        %v8028 = vld [vmem:[%s400 + $0x1c] sm:$0xf]
        %v8029 = vld [vmem:[%s400 + $0x20] sm:$0x1]
        %v8030 = vld [vmem:[%s400 + $0x24] sm:$0xf]
        %v8031 = vld [vmem:[%s400 + $0x28] sm:$0xf]
        %v8032 = vld [vmem:[%s400 + $0x2c] sm:$0x1]
        %v8033 = vld [vmem:[%s400 + $0x30] sm:$0xf]
        %v8034 = vld [vmem:[%s400 + $0x34] sm:$0xf]
        %v8035 = vld [vmem:[%s400 + $0x38] sm:$0x1]
        %v8036 = vld [vmem:[%s400 + $0x3c] sm:$0xf]
        %v8037 = vld [vmem:[%s400 + $0x40] sm:$0xf]
        %v8038 = vld [vmem:[%s400 + $0x44] sm:$0x1]
        %v8039 = vld [vmem:[%s400 + $0x48] sm:$0xf]
        %v8040 = vld [vmem:[%s400 + $0x4c] sm:$0xf]
        %v8041 = vld [vmem:[%s400 + $0x50] sm:$0x1]
        %v8042 = vld [vmem:[%s400 + $0x54] sm:$0xf]
        %v8043 = vld [vmem:[%s400 + $0x58] sm:$0xf]
        %v8044 = vld [vmem:[%s400 + $0x5c] sm:$0x1]
        %v8045 = vld [vmem:[%s400 + $0x60] sm:$0xf]
        %v8046 = vld [vmem:[%s400 + $0x64] sm:$0xf]
        %v8047 = vld [vmem:[%s400 + $0x68] sm:$0x1]
        %v8048 = vld [vmem:[%s400 + $0x6c] sm:$0xf]
        %v8049 = vld [vmem:[%s400 + $0x70] sm:$0xf]
        %v8050 = vld [vmem:[%s400 + $0x74] sm:$0x1]
        %v8051 = vld [vmem:[%s400 + $0x78] sm:$0xf]
        %v8052 = vld [vmem:[%s400 + $0x7c] sm:$0xf]
        %v8053 = vld [vmem:[%s400 + $0x80] sm:$0x1]
        %v8054 = vld [vmem:[%s400 + $0x84] sm:$0xf]
        %v8055 = vld [vmem:[%s400 + $0x88] sm:$0xf]
        %v8056 = vld [vmem:[%s400 + $0x8c] sm:$0x1]
        %v8057 = vld [vmem:[%s400 + $0x90] sm:$0xf]
        %v8058 = vld [vmem:[%s400 + $0x94] sm:$0xf]
        %v8059 = vld [vmem:[%s400 + $0x98] sm:$0x1]
        %v8060 = vld [vmem:[%s400 + $0x9c] sm:$0xf]
        %v8061 = vld [vmem:[%s400 + $0xa0] sm:$0xf]
        %v8062 = vld [vmem:[%s400 + $0xa4] sm:$0x1]
        %v8063 = vld [vmem:[%s400 + $0xa8] sm:$0xf]
        %v8064 = vld [vmem:[%s400 + $0xac] sm:$0xf]
        %v8065 = vld [vmem:[%s400 + $0xb0] sm:$0x1]
        %v8066 = vld [vmem:[%s400 + $0xb4] sm:$0xf]
        %v8067 = vld [vmem:[%s400 + $0xb8] sm:$0xf]
        %v8068 = vld [vmem:[%s400 + $0xbc] sm:$0x1]
        %vm8069 = vsmask.f32 3328
        %vm8070 = vsmask.f32 7440
        %vm8071 = vmor %vm8069, %vm8070
        %v8073 = vshrl.u32 %v8021, 16
        %v8075 = vrot.slane %v8073, 4
        %v8076 = vshll.u32 %v8021, 16
        %v8078 = vrot.slane %v8076, 5
        %v8079 = vor.u32 %v8075, %v8078
        %v8080 = vrot.slane %v8079, 4
        %v8082 = vshll.u32 %v8022, 16
        %v8084 = vrot.slane %v8082, 5
        %v8085 = vsel %vm8071, %v8080, %v8084
        %v8086 = vshrl.u32 %v8022, 16
        %v8088 = vrot.slane %v8086, 4
        %v8089 = vor.u32 %v8088, %v8084
        %v8090 = vrot.slane %v8089, 4
        %v8092 = vshll.u32 %v8023, 16
        %v8094 = vrot.slane %v8092, 5
        %v8095 = vsel %vm8071, %v8090, %v8094
        %v8097 = vshrl.u32 %v8024, 16
        %v8099 = vrot.slane %v8097, 4
        %v8100 = vshll.u32 %v8024, 16
        %v8102 = vrot.slane %v8100, 5
        %v8103 = vor.u32 %v8099, %v8102
        %v8104 = vrot.slane %v8103, 4
        %v8106 = vshll.u32 %v8025, 16
        %v8108 = vrot.slane %v8106, 5
        %v8109 = vsel %vm8071, %v8104, %v8108
        %v8110 = vshrl.u32 %v8025, 16
        %v8112 = vrot.slane %v8110, 4
        %v8113 = vor.u32 %v8112, %v8108
        %v8114 = vrot.slane %v8113, 4
        %v8116 = vshll.u32 %v8026, 16
        %v8118 = vrot.slane %v8116, 5
        %v8119 = vsel %vm8071, %v8114, %v8118
        %v8121 = vshrl.u32 %v8027, 16
        %v8123 = vrot.slane %v8121, 4
        %v8124 = vshll.u32 %v8027, 16
        %v8126 = vrot.slane %v8124, 5
        %v8127 = vor.u32 %v8123, %v8126
        %v8128 = vrot.slane %v8127, 4
        %v8130 = vshll.u32 %v8028, 16
        %v8132 = vrot.slane %v8130, 5
        %v8133 = vsel %vm8071, %v8128, %v8132
        %v8134 = vshrl.u32 %v8028, 16
        %v8136 = vrot.slane %v8134, 4
        %v8137 = vor.u32 %v8136, %v8132
        %v8138 = vrot.slane %v8137, 4
        %v8140 = vshll.u32 %v8029, 16
        %v8142 = vrot.slane %v8140, 5
        %v8143 = vsel %vm8071, %v8138, %v8142
        %v8145 = vshrl.u32 %v8030, 16
        %v8147 = vrot.slane %v8145, 4
        %v8148 = vshll.u32 %v8030, 16
        %v8150 = vrot.slane %v8148, 5
        %v8151 = vor.u32 %v8147, %v8150
        %v8152 = vrot.slane %v8151, 4
        %v8154 = vshll.u32 %v8031, 16
        %v8156 = vrot.slane %v8154, 5
        %v8157 = vsel %vm8071, %v8152, %v8156
        %v8158 = vshrl.u32 %v8031, 16
        %v8160 = vrot.slane %v8158, 4
        %v8161 = vor.u32 %v8160, %v8156
        %v8162 = vrot.slane %v8161, 4
        %v8164 = vshll.u32 %v8032, 16
        %v8166 = vrot.slane %v8164, 5
        %v8167 = vsel %vm8071, %v8162, %v8166
        %v8169 = vshrl.u32 %v8033, 16
        %v8171 = vrot.slane %v8169, 4
        %v8172 = vshll.u32 %v8033, 16
        %v8174 = vrot.slane %v8172, 5
        %v8175 = vor.u32 %v8171, %v8174
        %v8176 = vrot.slane %v8175, 4
        %v8178 = vshll.u32 %v8034, 16
        %v8180 = vrot.slane %v8178, 5
        %v8181 = vsel %vm8071, %v8176, %v8180
        %v8182 = vshrl.u32 %v8034, 16
        %v8184 = vrot.slane %v8182, 4
        %v8185 = vor.u32 %v8184, %v8180
        %v8186 = vrot.slane %v8185, 4
        %v8188 = vshll.u32 %v8035, 16
        %v8190 = vrot.slane %v8188, 5
        %v8191 = vsel %vm8071, %v8186, %v8190
        %v8193 = vshrl.u32 %v8036, 16
        %v8195 = vrot.slane %v8193, 4
        %v8196 = vshll.u32 %v8036, 16
        %v8198 = vrot.slane %v8196, 5
        %v8199 = vor.u32 %v8195, %v8198
        %v8200 = vrot.slane %v8199, 4
        %v8202 = vshll.u32 %v8037, 16
        %v8204 = vrot.slane %v8202, 5
        %v8205 = vsel %vm8071, %v8200, %v8204
        %v8206 = vshrl.u32 %v8037, 16
        %v8208 = vrot.slane %v8206, 4
        %v8209 = vor.u32 %v8208, %v8204
        %v8210 = vrot.slane %v8209, 4
        %v8212 = vshll.u32 %v8038, 16
        %v8214 = vrot.slane %v8212, 5
        %v8215 = vsel %vm8071, %v8210, %v8214
        %v8217 = vshrl.u32 %v8039, 16
        %v8219 = vrot.slane %v8217, 4
        %v8220 = vshll.u32 %v8039, 16
        %v8222 = vrot.slane %v8220, 5
        %v8223 = vor.u32 %v8219, %v8222
        %v8224 = vrot.slane %v8223, 4
        %v8226 = vshll.u32 %v8040, 16
        %v8228 = vrot.slane %v8226, 5
        %v8229 = vsel %vm8071, %v8224, %v8228
        %v8230 = vshrl.u32 %v8040, 16
        %v8232 = vrot.slane %v8230, 4
        %v8233 = vor.u32 %v8232, %v8228
        %v8234 = vrot.slane %v8233, 4
        %v8236 = vshll.u32 %v8041, 16
        %v8238 = vrot.slane %v8236, 5
        %v8239 = vsel %vm8071, %v8234, %v8238
        %v8241 = vshrl.u32 %v8042, 16
        %v8243 = vrot.slane %v8241, 4
        %v8244 = vshll.u32 %v8042, 16
        %v8246 = vrot.slane %v8244, 5
        %v8247 = vor.u32 %v8243, %v8246
        %v8248 = vrot.slane %v8247, 4
        %v8250 = vshll.u32 %v8043, 16
        %v8252 = vrot.slane %v8250, 5
        %v8253 = vsel %vm8071, %v8248, %v8252
        %v8254 = vshrl.u32 %v8043, 16
        %v8256 = vrot.slane %v8254, 4
        %v8257 = vor.u32 %v8256, %v8252
        %v8258 = vrot.slane %v8257, 4
        %v8260 = vshll.u32 %v8044, 16
        %v8262 = vrot.slane %v8260, 5
        %v8263 = vsel %vm8071, %v8258, %v8262
        %v8265 = vshrl.u32 %v8045, 16
        %v8267 = vrot.slane %v8265, 4
        %v8268 = vshll.u32 %v8045, 16
        %v8270 = vrot.slane %v8268, 5
        %v8271 = vor.u32 %v8267, %v8270
        %v8272 = vrot.slane %v8271, 4
        %v8274 = vshll.u32 %v8046, 16
        %v8276 = vrot.slane %v8274, 5
        %v8277 = vsel %vm8071, %v8272, %v8276
        %v8278 = vshrl.u32 %v8046, 16
        %v8280 = vrot.slane %v8278, 4
        %v8281 = vor.u32 %v8280, %v8276
        %v8282 = vrot.slane %v8281, 4
        %v8284 = vshll.u32 %v8047, 16
        %v8286 = vrot.slane %v8284, 5
        %v8287 = vsel %vm8071, %v8282, %v8286
        %v8289 = vshrl.u32 %v8048, 16
        %v8291 = vrot.slane %v8289, 4
        %v8292 = vshll.u32 %v8048, 16
        %v8294 = vrot.slane %v8292, 5
        %v8295 = vor.u32 %v8291, %v8294
        %v8296 = vrot.slane %v8295, 4
        %v8298 = vshll.u32 %v8049, 16
        %v8300 = vrot.slane %v8298, 5
        %v8301 = vsel %vm8071, %v8296, %v8300
        %v8302 = vshrl.u32 %v8049, 16
        %v8304 = vrot.slane %v8302, 4
        %v8305 = vor.u32 %v8304, %v8300
        %v8306 = vrot.slane %v8305, 4
        %v8308 = vshll.u32 %v8050, 16
        %v8310 = vrot.slane %v8308, 5
        %v8311 = vsel %vm8071, %v8306, %v8310
        %v8313 = vshrl.u32 %v8051, 16
        %v8315 = vrot.slane %v8313, 4
        %v8316 = vshll.u32 %v8051, 16
        %v8318 = vrot.slane %v8316, 5
        %v8319 = vor.u32 %v8315, %v8318
        %v8320 = vrot.slane %v8319, 4
        %v8322 = vshll.u32 %v8052, 16
        %v8324 = vrot.slane %v8322, 5
        %v8325 = vsel %vm8071, %v8320, %v8324
        %v8326 = vshrl.u32 %v8052, 16
        %v8328 = vrot.slane %v8326, 4
        %v8329 = vor.u32 %v8328, %v8324
        %v8330 = vrot.slane %v8329, 4
        %v8332 = vshll.u32 %v8053, 16
        %v8334 = vrot.slane %v8332, 5
        %v8335 = vsel %vm8071, %v8330, %v8334
        %v8337 = vshrl.u32 %v8054, 16
        %v8339 = vrot.slane %v8337, 4
        %v8340 = vshll.u32 %v8054, 16
        %v8342 = vrot.slane %v8340, 5
        %v8343 = vor.u32 %v8339, %v8342
        %v8344 = vrot.slane %v8343, 4
        %v8346 = vshll.u32 %v8055, 16
        %v8348 = vrot.slane %v8346, 5
        %v8349 = vsel %vm8071, %v8344, %v8348
        %v8350 = vshrl.u32 %v8055, 16
        %v8352 = vrot.slane %v8350, 4
        %v8353 = vor.u32 %v8352, %v8348
        %v8354 = vrot.slane %v8353, 4
        %v8356 = vshll.u32 %v8056, 16
        %v8358 = vrot.slane %v8356, 5
        %v8359 = vsel %vm8071, %v8354, %v8358
        %v8361 = vshrl.u32 %v8057, 16
        %v8363 = vrot.slane %v8361, 4
        %v8364 = vshll.u32 %v8057, 16
        %v8366 = vrot.slane %v8364, 5
        %v8367 = vor.u32 %v8363, %v8366
        %v8368 = vrot.slane %v8367, 4
        %v8370 = vshll.u32 %v8058, 16
        %v8372 = vrot.slane %v8370, 5
        %v8373 = vsel %vm8071, %v8368, %v8372
        %v8374 = vshrl.u32 %v8058, 16
        %v8376 = vrot.slane %v8374, 4
        %v8377 = vor.u32 %v8376, %v8372
        %v8378 = vrot.slane %v8377, 4
        %v8380 = vshll.u32 %v8059, 16
        %v8382 = vrot.slane %v8380, 5
        %v8383 = vsel %vm8071, %v8378, %v8382
        %v8385 = vshrl.u32 %v8060, 16
        %v8387 = vrot.slane %v8385, 4
        %v8388 = vshll.u32 %v8060, 16
        %v8390 = vrot.slane %v8388, 5
        %v8391 = vor.u32 %v8387, %v8390
        %v8392 = vrot.slane %v8391, 4
        %v8394 = vshll.u32 %v8061, 16
        %v8396 = vrot.slane %v8394, 5
        %v8397 = vsel %vm8071, %v8392, %v8396
        %v8398 = vshrl.u32 %v8061, 16
        %v8400 = vrot.slane %v8398, 4
        %v8401 = vor.u32 %v8400, %v8396
        %v8402 = vrot.slane %v8401, 4
        %v8404 = vshll.u32 %v8062, 16
        %v8406 = vrot.slane %v8404, 5
        %v8407 = vsel %vm8071, %v8402, %v8406
        %v8409 = vshrl.u32 %v8063, 16
        %v8411 = vrot.slane %v8409, 4
        %v8412 = vshll.u32 %v8063, 16
        %v8414 = vrot.slane %v8412, 5
        %v8415 = vor.u32 %v8411, %v8414
        %v8416 = vrot.slane %v8415, 4
        %v8418 = vshll.u32 %v8064, 16
        %v8420 = vrot.slane %v8418, 5
        %v8421 = vsel %vm8071, %v8416, %v8420
        %v8422 = vshrl.u32 %v8064, 16
        %v8424 = vrot.slane %v8422, 4
        %v8425 = vor.u32 %v8424, %v8420
        %v8426 = vrot.slane %v8425, 4
        %v8428 = vshll.u32 %v8065, 16
        %v8430 = vrot.slane %v8428, 5
        %v8431 = vsel %vm8071, %v8426, %v8430
        %v8433 = vshrl.u32 %v8066, 16
        %v8435 = vrot.slane %v8433, 4
        %v8436 = vshll.u32 %v8066, 16
        %v8438 = vrot.slane %v8436, 5
        %v8439 = vor.u32 %v8435, %v8438
        %v8440 = vrot.slane %v8439, 4
        %v8442 = vshll.u32 %v8067, 16
        %v8444 = vrot.slane %v8442, 5
        %v8445 = vsel %vm8071, %v8440, %v8444
        %v8446 = vshrl.u32 %v8067, 16
        %v8448 = vrot.slane %v8446, 4
        %v8449 = vor.u32 %v8448, %v8444
        %v8450 = vrot.slane %v8449, 4
        %v8452 = vshll.u32 %v8068, 16
        %v8454 = vrot.slane %v8452, 5
        %v8455 = vsel %vm8071, %v8450, %v8454
        %v8488 = vunpack.c.l.bf16 %v8085
        %v8489 = vunpack.c.l.bf16 %v8095
        %v8490 = vunpack.c.l.bf16 %v8109
        %v8491 = vunpack.c.l.bf16 %v8119
        %v8492 = vunpack.c.l.bf16 %v8133
        %v8493 = vunpack.c.l.bf16 %v8143
        %v8494 = vunpack.c.l.bf16 %v8157
        %v8495 = vunpack.c.l.bf16 %v8167
        %v8496 = vunpack.c.l.bf16 %v8181
        %v8497 = vunpack.c.l.bf16 %v8191
        %v8498 = vunpack.c.l.bf16 %v8205
        %v8499 = vunpack.c.l.bf16 %v8215
        %v8500 = vunpack.c.l.bf16 %v8229
        %v8501 = vunpack.c.l.bf16 %v8239
        %v8502 = vunpack.c.l.bf16 %v8253
        %v8503 = vunpack.c.l.bf16 %v8263
        %v8504 = vunpack.c.l.bf16 %v8277
        %v8505 = vunpack.c.l.bf16 %v8287
        %v8506 = vunpack.c.l.bf16 %v8301
        %v8507 = vunpack.c.l.bf16 %v8311
        %v8508 = vunpack.c.l.bf16 %v8325
        %v8509 = vunpack.c.l.bf16 %v8335
        %v8510 = vunpack.c.l.bf16 %v8349
        %v8511 = vunpack.c.l.bf16 %v8359
        %v8512 = vunpack.c.l.bf16 %v8373
        %v8513 = vunpack.c.l.bf16 %v8383
        %v8514 = vunpack.c.l.bf16 %v8397
        %v8515 = vunpack.c.l.bf16 %v8407
        %v8516 = vunpack.c.l.bf16 %v8421
        %v8517 = vunpack.c.l.bf16 %v8431
        %v8518 = vunpack.c.l.bf16 %v8445
        %v8519 = vunpack.c.l.bf16 %v8455
        %v8520 = vadd.f32 %v7989, %v8488
        %v8521 = vadd.f32 %v7990, %v8489
        %v8522 = vadd.f32 %v7991, %v8490
        %v8523 = vadd.f32 %v7992, %v8491
        %v8524 = vadd.f32 %v7993, %v8492
        %v8525 = vadd.f32 %v7994, %v8493
        %v8526 = vadd.f32 %v7995, %v8494
        %v8527 = vadd.f32 %v7996, %v8495
        %v8528 = vadd.f32 %v7997, %v8496
        %v8529 = vadd.f32 %v7998, %v8497
        %v8530 = vadd.f32 %v7999, %v8498
        %v8531 = vadd.f32 %v8000, %v8499
        %v8532 = vadd.f32 %v8001, %v8500
        %v8533 = vadd.f32 %v8002, %v8501
        %v8534 = vadd.f32 %v8003, %v8502
        %v8535 = vadd.f32 %v8004, %v8503
        %v8536 = vadd.f32 %v8005, %v8504
        %v8537 = vadd.f32 %v8006, %v8505
        %v8538 = vadd.f32 %v8007, %v8506
        %v8539 = vadd.f32 %v8008, %v8507
        %v8540 = vadd.f32 %v8009, %v8508
        %v8541 = vadd.f32 %v8010, %v8509
        %v8542 = vadd.f32 %v8011, %v8510
        %v8543 = vadd.f32 %v8012, %v8511
        %v8544 = vadd.f32 %v8013, %v8512
        %v8545 = vadd.f32 %v8014, %v8513
        %v8546 = vadd.f32 %v8015, %v8514
        %v8547 = vadd.f32 %v8016, %v8515
        %v8548 = vadd.f32 %v8017, %v8516
        %v8549 = vadd.f32 %v8018, %v8517
        %v8550 = vadd.f32 %v8019, %v8518
        %v8551 = vadd.f32 %v8020, %v8519
        %v8552 = vmax.f32 %v8520, 0.0
        %v8553 = vmax.f32 %v8521, 0.0
        %v8554 = vmax.f32 %v8522, 0.0
        %v8555 = vmax.f32 %v8523, 0.0
        %v8556 = vmax.f32 %v8524, 0.0
        %v8557 = vmax.f32 %v8525, 0.0
        %v8558 = vmax.f32 %v8526, 0.0
        %v8559 = vmax.f32 %v8527, 0.0
        %v8560 = vmax.f32 %v8528, 0.0
        %v8561 = vmax.f32 %v8529, 0.0
        %v8562 = vmax.f32 %v8530, 0.0
        %v8563 = vmax.f32 %v8531, 0.0
        %v8564 = vmax.f32 %v8532, 0.0
        %v8565 = vmax.f32 %v8533, 0.0
        %v8566 = vmax.f32 %v8534, 0.0
        %v8567 = vmax.f32 %v8535, 0.0
        %v8568 = vmax.f32 %v8536, 0.0
        %v8569 = vmax.f32 %v8537, 0.0
        %v8570 = vmax.f32 %v8538, 0.0
        %v8571 = vmax.f32 %v8539, 0.0
        %v8572 = vmax.f32 %v8540, 0.0
        %v8573 = vmax.f32 %v8541, 0.0
        %v8574 = vmax.f32 %v8542, 0.0
        %v8575 = vmax.f32 %v8543, 0.0
        %v8576 = vmax.f32 %v8544, 0.0
        %v8577 = vmax.f32 %v8545, 0.0
        %v8578 = vmax.f32 %v8546, 0.0
        %v8579 = vmax.f32 %v8547, 0.0
        %v8580 = vmax.f32 %v8548, 0.0
        %v8581 = vmax.f32 %v8549, 0.0
        %v8582 = vmax.f32 %v8550, 0.0
        %v8583 = vmax.f32 %v8551, 0.0
        %v8584 = vpack.c.bf16 %v8553, %v8552
        %v8585 = vpack.c.bf16 %v8555, %v8554
        %v8586 = vpack.c.bf16 %v8557, %v8556
        %v8587 = vpack.c.bf16 %v8559, %v8558
        %v8588 = vpack.c.bf16 %v8561, %v8560
        %v8589 = vpack.c.bf16 %v8563, %v8562
        %v8590 = vpack.c.bf16 %v8565, %v8564
        %v8591 = vpack.c.bf16 %v8567, %v8566
        %v8592 = vpack.c.bf16 %v8569, %v8568
        %v8593 = vpack.c.bf16 %v8571, %v8570
        %v8594 = vpack.c.bf16 %v8573, %v8572
        %v8595 = vpack.c.bf16 %v8575, %v8574
        %v8596 = vpack.c.bf16 %v8577, %v8576
        %v8597 = vpack.c.bf16 %v8579, %v8578
        %v8598 = vpack.c.bf16 %v8581, %v8580
        %v8599 = vpack.c.bf16 %v8583, %v8582
        %v8616 = vunpack.c.l.b16 %v8584
        %v8617 = vunpack.c.h.b16 %v8584
        %v8618 = vunpack.c.l.b16 %v8585
        %v8619 = vunpack.c.h.b16 %v8585
        %v8620 = vunpack.c.l.b16 %v8586
        %v8621 = vunpack.c.h.b16 %v8586
        %v8622 = vunpack.c.l.b16 %v8587
        %v8623 = vunpack.c.h.b16 %v8587
        %v8624 = vunpack.c.l.b16 %v8588
        %v8625 = vunpack.c.h.b16 %v8588
        %v8626 = vunpack.c.l.b16 %v8589
        %v8627 = vunpack.c.h.b16 %v8589
        %v8628 = vunpack.c.l.b16 %v8590
        %v8629 = vunpack.c.h.b16 %v8590
        %v8630 = vunpack.c.l.b16 %v8591
        %v8631 = vunpack.c.h.b16 %v8591
        %v8632 = vunpack.c.l.b16 %v8592
        %v8633 = vunpack.c.h.b16 %v8592
        %v8634 = vunpack.c.l.b16 %v8593
        %v8635 = vunpack.c.h.b16 %v8593
        %v8636 = vunpack.c.l.b16 %v8594
        %v8637 = vunpack.c.h.b16 %v8594
        %v8638 = vunpack.c.l.b16 %v8595
        %v8639 = vunpack.c.h.b16 %v8595
        %v8640 = vunpack.c.l.b16 %v8596
        %v8641 = vunpack.c.h.b16 %v8596
        %v8642 = vunpack.c.l.b16 %v8597
        %v8643 = vunpack.c.h.b16 %v8597
        %v8644 = vunpack.c.l.b16 %v8598
        %v8645 = vunpack.c.h.b16 %v8598
        %v8646 = vunpack.c.l.b16 %v8599
        %v8647 = vunpack.c.h.b16 %v8599
        %v8648 = vpack.c.b16 %v8616, %v8616
        %v8649 = vpack.c.b16 %v8617, %v8617
        %v8650 = vpack.c.b16 %v8618, %v8618
        %v8651 = vpack.c.b16 %v8619, %v8619
        %v8652 = vpack.c.b16 %v8620, %v8620
        %v8653 = vpack.c.b16 %v8621, %v8621
        %v8654 = vpack.c.b16 %v8622, %v8622
        %v8655 = vpack.c.b16 %v8623, %v8623
        %v8656 = vpack.c.b16 %v8624, %v8624
        %v8657 = vpack.c.b16 %v8625, %v8625
        %v8658 = vpack.c.b16 %v8626, %v8626
        %v8659 = vpack.c.b16 %v8627, %v8627
        %v8660 = vpack.c.b16 %v8628, %v8628
        %v8661 = vpack.c.b16 %v8629, %v8629
        %v8662 = vpack.c.b16 %v8630, %v8630
        %v8663 = vpack.c.b16 %v8631, %v8631
        %v8664 = vpack.c.b16 %v8632, %v8632
        %v8665 = vpack.c.b16 %v8633, %v8633
        %v8666 = vpack.c.b16 %v8634, %v8634
        %v8667 = vpack.c.b16 %v8635, %v8635
        %v8668 = vpack.c.b16 %v8636, %v8636
        %v8669 = vpack.c.b16 %v8637, %v8637
        %v8670 = vpack.c.b16 %v8638, %v8638
        %v8671 = vpack.c.b16 %v8639, %v8639
        %v8672 = vpack.c.b16 %v8640, %v8640
        %v8673 = vpack.c.b16 %v8641, %v8641
        %v8674 = vpack.c.b16 %v8642, %v8642
        %v8675 = vpack.c.b16 %v8643, %v8643
        %v8676 = vpack.c.b16 %v8644, %v8644
        %v8677 = vpack.c.b16 %v8645, %v8645
        %v8678 = vpack.c.b16 %v8646, %v8646
        %v8679 = vpack.c.b16 %v8647, %v8647
        %8712 = vst [vmem:[%s232] sm:$0xf] %v8648
        %8713 = vst [vmem:[%s232 + $0x4] sm:$0xf] %v8649
        %8714 = vst [vmem:[%s232 + $0x8] sm:$0xf] %v8650
        %8715 = vst [vmem:[%s232 + $0xc] sm:$0xf] %v8651
        %8716 = vst [vmem:[%s232 + $0x10] sm:$0xf] %v8652
        %8717 = vst [vmem:[%s232 + $0x14] sm:$0xf] %v8653
        %8718 = vst [vmem:[%s232 + $0x18] sm:$0xf] %v8654
        %8719 = vst [vmem:[%s232 + $0x1c] sm:$0xf] %v8655
        %8720 = vst [vmem:[%s232 + $0x20] sm:$0xf] %v8656
        %8721 = vst [vmem:[%s232 + $0x24] sm:$0xf] %v8657
        %8722 = vst [vmem:[%s232 + $0x28] sm:$0xf] %v8658
        %8723 = vst [vmem:[%s232 + $0x2c] sm:$0xf] %v8659
        %8724 = vst [vmem:[%s232 + $0x30] sm:$0xf] %v8660
        %8725 = vst [vmem:[%s232 + $0x34] sm:$0xf] %v8661
        %8726 = vst [vmem:[%s232 + $0x38] sm:$0xf] %v8662
        %8727 = vst [vmem:[%s232 + $0x3c] sm:$0xf] %v8663
        %8728 = vst [vmem:[%s232 + $0x40] sm:$0xf] %v8664
        %8729 = vst [vmem:[%s232 + $0x44] sm:$0xf] %v8665
        %8730 = vst [vmem:[%s232 + $0x48] sm:$0xf] %v8666
        %8731 = vst [vmem:[%s232 + $0x4c] sm:$0xf] %v8667
        %8732 = vst [vmem:[%s232 + $0x50] sm:$0xf] %v8668
        %8733 = vst [vmem:[%s232 + $0x54] sm:$0xf] %v8669
        %8734 = vst [vmem:[%s232 + $0x58] sm:$0xf] %v8670
        %8735 = vst [vmem:[%s232 + $0x5c] sm:$0xf] %v8671
        %8736 = vst [vmem:[%s232 + $0x60] sm:$0xf] %v8672
        %8737 = vst [vmem:[%s232 + $0x64] sm:$0xf] %v8673
        %8738 = vst [vmem:[%s232 + $0x68] sm:$0xf] %v8674
        %8739 = vst [vmem:[%s232 + $0x6c] sm:$0xf] %v8675
        %8740 = vst [vmem:[%s232 + $0x70] sm:$0xf] %v8676
        %8741 = vst [vmem:[%s232 + $0x74] sm:$0xf] %v8677
        %8742 = vst [vmem:[%s232 + $0x78] sm:$0xf] %v8678
        %8743 = vst [vmem:[%s232 + $0x7c] sm:$0xf] %v8679
        %s8744 = sand.u32 %s138, 1
        %s8745 = scalar_lea.sflag [#allocation5], %s8744
        %s8746 = sand.u32 %s138, 1
        %s8747 = smul.addr %s8746, 128
        %s8748 = scalar_lea.vmem [#allocation6], %s8747
        // Predicated region
        $region45: #{tpu_custom_call.1} parent=39 // pred_check
          %p8749 = pneg %p148
        $region46: #{tpu_custom_call.1} parent=39 // pred_check_branch
          %8751 = sbr.rel (%p8749) target = $region48
        $region47: #{tpu_custom_call.1} parent=39 // pred_region
          %s8753 = ssub.s32 2048, 2048
          %8754 = vsyncadd %s8745, %s8753
          %s8755 = smul.addr %s20, 32
          %s8756 = smul.addr %s8755, 64
          %s8757 = scalar_lea.hbm %s5, %s8756
          %s8758 = sshll.u32 %s8748, 4
          %s8759 = int_to_ptr.vmem [resolvable:$true] %s8758
          %8764 = dma.vmem_to_hbm [thread:$0]  %s8759, 2048, %s8757, %s8745, 64, 64, 4
        $region48: #{tpu_custom_call.1} parent=39 // pred_fallthru
          _
      $region40: #{tpu_custom_call.1} parent=5 // pred_fallthru
        _
      %p8765 = scmp.le.s32.totalorder 2, %s15
      // Predicated region
      $region49: #{tpu_custom_call.1} parent=5 // pred_check
        %p8766 = pneg %p8765
      $region50: #{tpu_custom_call.1} parent=5 // pred_check_branch
        %8768 = sbr.rel (%p8766) target = $region52
      $region51: #{tpu_custom_call.1} parent=5 // pred_region
        %s8769 = ssub.s32 %s15, 2
        // Predicated region
        $region53: #{tpu_custom_call.1} parent=51 // pred_check
          %p8770 = pneg %p154
        $region54: #{tpu_custom_call.1} parent=51 // pred_check_branch
          %8772 = sbr.rel (%p8770) target = $region56
        $region55: #{tpu_custom_call.1} parent=51 // pred_region
          %s8773 = sand.u32 %s139, 1
          %s8774 = scalar_lea.sflag [#allocation5], %s8773
          %s8775 = sand.u32 %s139, 1
          %s8776 = smul.addr %s8775, 128
          %s8777 = scalar_lea.vmem [#allocation6], %s8776
          %8778 = dma.done %s8774, 2048
        $region56: #{tpu_custom_call.1} parent=51 // pred_fallthru
          _
      $region52: #{tpu_custom_call.1} parent=5 // pred_fallthru
        _
    $region6: #{tpu_custom_call.1} parent=1 // loop_footer
      %s19 = sadd.s32 1, %s15
    $region7: #{tpu_custom_call.1} parent=1 // loop_footer_branch
      %14 = sbr.rel target = $region3
    $region8: #{tpu_custom_call.1} parent=1 // loop_exit
      _
    %8779 = vsyncpa [#allocation4], 1
    %s8780 = scalar_lea.sflag [#allocation4], 1
    %8781 = vsyncpa %s8780, 1
    %8782 = vsyncpa [#allocation5], 1
    %s8783 = scalar_lea.sflag [#allocation5], 1
    %8784 = vsyncpa %s8783, 1

</llo_original>
